<compile_context>
chip_gen: v5e
topology: v5e:2x2
jax: 0.10.0
libtpu: 0.0.40
codegen_flags: <defaults>
</compile_context>

<pallas_src>
import numpy as np
import jax
import jax.numpy as jnp
from jax.experimental import pallas as pl
from jax.experimental.pallas import tpu as pltpu


# --------------------- parameters in PyTorch layouts ----------------------- #
def init_generator_params(key, latent_dim):
    """Linear: (out,in); ConvTranspose2d: (Cin,Cout,K,K); Conv2d: (Cout,Cin,K,K)."""
    ks = jax.random.split(key, 8)
    s = 0.05
    return {
        "fc1_w": jax.random.normal(ks[0], (7 * 7 * 64, latent_dim), jnp.float32) * s,
        "fc1_b": jax.random.normal(ks[1], (7 * 7 * 64,), jnp.float32) * s,
        "ct1_w": jax.random.normal(ks[2], (64, 32, 4, 4), jnp.float32) * s,
        "ct1_b": jax.random.normal(ks[3], (32,), jnp.float32) * s,
        "ct2_w": jax.random.normal(ks[4], (32, 16, 4, 4), jnp.float32) * s,
        "ct2_b": jax.random.normal(ks[5], (16,), jnp.float32) * s,
        "c1_w": jax.random.normal(ks[6], (1, 16, 7, 7), jnp.float32) * s,
        "c1_b": jax.random.normal(ks[7], (1,), jnp.float32) * s,
    }


# -------------------- one-time host-side weight re-layout ------------------ #
def _ct_toeplitz(wt, b, hw_in):
    """torch ConvTranspose2d weight (Cin,Cout,4,4), stride 2, padding 0.

    Returns
      M: (4, W_in*Cin, W_out*Cout)  per-kernel-row width-Toeplitz matmul weight
         (encodes the stride-2 upsampling + conv along width, channels packed
          col = wo*Cout + co, row = wi*Cin + ci)
      P: (4, H_out, H_in) 0/1 row-scatter matrices, P[kh, 2*hi+kh, hi] = 1
      bias_row: (1, W_out*Cout)
    so that  out2d = sum_kh P[kh] @ (x2d @ M[kh]) + bias_row.
    """
    wt = np.asarray(wt, np.float32)
    Cin, Cout, K, _ = wt.shape
    s = 2
    W_in = hw_in
    W_out = (W_in - 1) * s + K
    H_in, H_out = W_in, W_out
    M = np.zeros((K, W_in * Cin, W_out * Cout), np.float32)
    for kh in range(K):
        for wi in range(W_in):
            for kw in range(K):
                wo = s * wi + kw
                M[kh, wi * Cin:(wi + 1) * Cin, wo * Cout:(wo + 1) * Cout] = wt[:, :, kh, kw]
    P = np.zeros((K, H_out, H_in), np.float32)
    for kh in range(K):
        for hi in range(H_in):
            P[kh, s * hi + kh, hi] = 1.0
    bias_row = np.tile(np.asarray(b, np.float32), W_out)[None, :]
    return M, P, bias_row


def _conv_toeplitz(wc, b, hw_in):
    """torch Conv2d weight (Cout,Cin,K,K), stride 1, padding 0 (valid).

    Returns T: (K, W_in*Cin, W_out*Cout), S: (K, H_out, H_in) with
    S[kh, ho, ho+kh] = 1, bias_row: (1, W_out*Cout), so that
      out2d = sum_kh S[kh] @ (x2d @ T[kh]) + bias_row.
    """
    wc = np.asarray(wc, np.float32)
    Cout, Cin, K, _ = wc.shape
    W_in = hw_in
    W_out = W_in - K + 1
    H_in, H_out = W_in, W_out
    T = np.zeros((K, W_in * Cin, W_out * Cout), np.float32)
    for kh in range(K):
        for wo in range(W_out):
            for kw in range(K):
                wi = wo + kw
                T[kh, wi * Cin:(wi + 1) * Cin, wo * Cout:(wo + 1) * Cout] = wc[:, :, kh, kw].T
    S = np.zeros((K, H_out, H_in), np.float32)
    for kh in range(K):
        for ho in range(H_out):
            S[kh, ho, ho + kh] = 1.0
    bias_row = np.tile(np.asarray(b, np.float32), W_out)[None, :]
    return T, S, bias_row


def prepare_params(p):
    """Re-layout torch-style params for the fused TPU kernel (one-time, host)."""
    latent = p["fc1_w"].shape[1]
    W = np.asarray(p["fc1_w"], np.float32)             # (3136, latent), row o = c*49 + h*7 + w
    bfc = np.asarray(p["fc1_b"], np.float32)
    # fc1 weight so that (expanded x) @ w1 is directly the (7, 7*64) NHWC slab:
    #   w1[h*latent + l, w*64 + c] = W[c*49 + h*7 + w, l]
    w1 = W.reshape(64, 7, 7, latent).transpose(1, 3, 2, 0).reshape(7 * latent, 7 * 64)
    b1 = bfc.reshape(64, 7, 7).transpose(1, 2, 0).reshape(7, 7 * 64)

    m1, p1, bias1 = _ct_toeplitz(p["ct1_w"], p["ct1_b"], 7)    # (4,448,512),(4,16,7),(1,512)
    m2, p2, bias2 = _ct_toeplitz(p["ct2_w"], p["ct2_b"], 16)   # (4,512,544),(4,34,16),(1,544)
    t3, s3, bias3 = _conv_toeplitz(p["c1_w"], p["c1_b"], 34)   # (7,544,28),(7,28,34),(1,28)

    f32, bf16 = jnp.float32, jnp.bfloat16
    return {
        "w1": jnp.asarray(w1, bf16), "b1": jnp.asarray(b1, f32),
        "m1": jnp.asarray(m1, bf16), "p1": jnp.asarray(p1, f32), "bias1": jnp.asarray(bias1, f32),
        "m2": jnp.asarray(m2, bf16), "p2": jnp.asarray(p2, f32), "bias2": jnp.asarray(bias2, f32),
        "t3": jnp.asarray(t3, bf16), "s3": jnp.asarray(s3, f32), "bias3": jnp.asarray(bias3, f32),
    }


# ------------------------------ fused kernel ------------------------------- #
def _generator_kernel(xexp_ref, w1_ref, b1_ref,
                      m1_ref, p1_ref, bias1_ref,
                      m2_ref, p2_ref, bias2_ref,
                      t3_ref, s3_ref, bias3_ref,
                      out_ref):
    """One image per grid step; all activations stay in VMEM/vregs."""
    f32 = jnp.float32

    # fc1 + ReLU -> (7, 7*64) NHWC slab (rows = h, cols = w*64 + c)
    h = jnp.dot(xexp_ref[...], w1_ref[...], preferred_element_type=f32)
    h = jnp.maximum(h + b1_ref[...], 0.0).astype(jnp.bfloat16)

    # ct1: ConvTranspose2d(64->32, k=4, s=2) + ReLU -> (16, 16*32)
    acc = jnp.zeros((16, 16 * 32), f32)
    for kh in range(4):
        z = jnp.dot(h, m1_ref[kh], preferred_element_type=f32)          # (7, 512)
        acc = acc + jnp.dot(p1_ref[kh], z, preferred_element_type=f32)  # scatter rows
    h = jnp.maximum(acc + bias1_ref[...], 0.0).astype(jnp.bfloat16)

    # ct2: ConvTranspose2d(32->16, k=4, s=2) + ReLU -> (34, 34*16)
    acc = jnp.zeros((34, 34 * 16), f32)
    for kh in range(4):
        z = jnp.dot(h, m2_ref[kh], preferred_element_type=f32)          # (16, 544)
        acc = acc + jnp.dot(p2_ref[kh], z, preferred_element_type=f32)
    h = jnp.maximum(acc + bias2_ref[...], 0.0).astype(jnp.bfloat16)

    # c1: Conv2d(16->1, k=7, valid), no activation -> (28, 28)
    acc = jnp.zeros((28, 28), f32)
    for kh in range(7):
        z = jnp.dot(h, t3_ref[kh], preferred_element_type=f32)          # (34, 28)
        acc = acc + jnp.dot(s3_ref[kh], z, preferred_element_type=f32)  # gather rows
    out_ref[...] = (acc + bias3_ref[...]).astype(out_ref.dtype)


def _fused_flops(B, latent):
    mm = lambda m, k, n: 2 * m * k * n
    per_image = (
        mm(7, 7 * latent, 448)
        + 4 * (mm(7, 448, 512) + mm(16, 7, 512))
        + 4 * (mm(16, 512, 544) + mm(34, 16, 544))
        + 7 * (mm(34, 544, 28) + mm(28, 34, 28)))
    return B * per_image


def generator_forward(params, x):
    """x: (B, latent_dim) -> (B, 1, 28, 28) NCHW, matching the torch module.
    `params` must be the prepared (TPU-layout) params."""
    B, latent = x.shape

    # Tiny host/XLA-side expansion so the kernel's per-image fc1 output is the
    # (7, 7*64) NHWC slab with a single matmul and no in-kernel reshape:
    #   xexp[b, h, h2*latent + l] = x[b, l] * (h == h2)
    eye7 = jnp.eye(7, dtype=jnp.float32)
    xexp = jnp.einsum("bl,hg->bhgl", x.astype(jnp.float32), eye7)
    xexp = xexp.reshape(B, 7, 7 * latent).astype(jnp.bfloat16)

    operands = (xexp, params["w1"], params["b1"],
                params["m1"], params["p1"], params["bias1"],
                params["m2"], params["p2"], params["bias2"],
                params["t3"], params["s3"], params["bias3"])

    def _full_block(a):
        # whole array resident in VMEM, loaded once (block index constant over grid)
        return pl.BlockSpec(a.shape, lambda b, _n=a.ndim: (0,) * _n)

    in_specs = [pl.BlockSpec((None, 7, 7 * latent), lambda b: (b, 0, 0))]
    in_specs += [_full_block(a) for a in operands[1:]]

    bytes_accessed = int(sum(int(a.size) * a.dtype.itemsize for a in operands)
                         + B * 28 * 28 * 4)
    cost = pl.CostEstimate(flops=_fused_flops(B, latent), transcendentals=0,
                           bytes_accessed=bytes_accessed)

    out = pl.pallas_call(
        _generator_kernel,
        out_shape=jax.ShapeDtypeStruct((B, 28, 28), jnp.float32),
        grid=(B,),
        in_specs=in_specs,
        out_specs=pl.BlockSpec((None, 28, 28), lambda b: (b, 0, 0)),
        compiler_params=pltpu.CompilerParams(
            dimension_semantics=("parallel",),   # v7x: 2 TensorCores split the batch
            vmem_limit_bytes=32 << 20,           # ~9 MB resident weights (double-buffered)
        ),
        cost_estimate=cost,
    )(*operands)

    # Cout == 1, so NCHW is just a new size-1 axis (metadata-only reshape).
    return out[:, None, :, :]


# -------------------- pure-XLA f32 reference (torch spec) ------------------ #
def generator_reference(p, x):
    h = x @ p["fc1_w"].T + p["fc1_b"]
    h = jax.nn.relu(h)
    h = h.reshape(-1, 64, 7, 7)

    def convt(h, w, b):  # torch ConvTranspose2d(k=4, stride=2, padding=0)
        K = w.shape[2]
        w_conv = jnp.flip(w, (2, 3)).transpose(1, 0, 2, 3)       # (Cout, Cin, kh, kw)
        y = jax.lax.conv_general_dilated(
            h, w_conv, window_strides=(1, 1),
            padding=((K - 1, K - 1), (K - 1, K - 1)), lhs_dilation=(2, 2),
            dimension_numbers=("NCHW", "OIHW", "NCHW"))
        return y + b[None, :, None, None]

    h = jax.nn.relu(convt(h, p["ct1_w"], p["ct1_b"]))
    h = jax.nn.relu(convt(h, p["ct2_w"], p["ct2_b"]))
    y = jax.lax.conv_general_dilated(
        h, p["c1_w"], window_strides=(1, 1), padding="VALID",
        dimension_numbers=("NCHW", "OIHW", "NCHW"))
    return y + p["c1_b"][None, :, None, None]


if __name__ == "__main__":
    latent_dim = 32
    batch = 2

    key = jax.random.PRNGKey(0)
    pkey, xkey = jax.random.split(key)
    torch_params = init_generator_params(pkey, latent_dim)
    params = prepare_params(torch_params)
    x = jax.random.normal(xkey, (batch, latent_dim), jnp.float32)

    out = jax.jit(generator_forward)(params, x)
    out = jax.block_until_ready(out)

    assert out.shape == (batch, 1, 28, 28), out.shape
    assert out.dtype == jnp.float32
    assert bool(jnp.all(jnp.isfinite(out)))

    # Numerical check against the f32 XLA reference of the PyTorch module
    # (bf16 matmul operands, f32 accumulate -> expect ~1e-3 abs error here).
    ref = jax.jit(generator_reference)(torch_params, x)
    ref = jax.block_until_ready(ref)
    err = float(jnp.max(jnp.abs(out - ref)))
    assert err < 3e-2, f"max abs error vs f32 reference too large: {err}"

    print("KERNEL_OK")
</pallas_src>

<mosaic_0001>
module attributes {stable_mosaic.version = 11 : i64} {
  func.func @_generator_kernel(%arg0: i32, %arg1: memref<1x7x224xbf16, #tpu.memory_space<vmem>>, %arg2: memref<224x448xbf16, #tpu.memory_space<vmem>>, %arg3: memref<7x448xf32, #tpu.memory_space<vmem>>, %arg4: memref<4x448x512xbf16, #tpu.memory_space<vmem>>, %arg5: memref<4x16x7xf32, #tpu.memory_space<vmem>>, %arg6: memref<1x512xf32, #tpu.memory_space<vmem>>, %arg7: memref<4x512x544xbf16, #tpu.memory_space<vmem>>, %arg8: memref<4x34x16xf32, #tpu.memory_space<vmem>>, %arg9: memref<1x544xf32, #tpu.memory_space<vmem>>, %arg10: memref<7x544x28xbf16, #tpu.memory_space<vmem>>, %arg11: memref<7x28x34xf32, #tpu.memory_space<vmem>>, %arg12: memref<1x28xf32, #tpu.memory_space<vmem>>, %arg13: memref<1x28x28xf32, #tpu.memory_space<vmem>>) attributes {dimension_semantics = [#tpu.dimension_semantics<parallel>], iteration_bounds = array<i64: 2>, scalar_prefetch = 0 : i64, scratch_operands = 0 : i64, tpu.core_type = #tpu.core_type<tc>, window_params = [{transform_indices = @transform_0, window_bounds = array<i64: 1, 7, 224>}, {pipeline_mode = #tpu.pipeline_mode<synchronous>, transform_indices = @transform_1, window_bounds = array<i64: 224, 448>}, {pipeline_mode = #tpu.pipeline_mode<synchronous>, transform_indices = @transform_2, window_bounds = array<i64: 7, 448>}, {pipeline_mode = #tpu.pipeline_mode<synchronous>, transform_indices = @transform_3, window_bounds = array<i64: 4, 448, 512>}, {pipeline_mode = #tpu.pipeline_mode<synchronous>, transform_indices = @transform_4, window_bounds = array<i64: 4, 16, 7>}, {pipeline_mode = #tpu.pipeline_mode<synchronous>, transform_indices = @transform_5, window_bounds = array<i64: 1, 512>}, {pipeline_mode = #tpu.pipeline_mode<synchronous>, transform_indices = @transform_6, window_bounds = array<i64: 4, 512, 544>}, {pipeline_mode = #tpu.pipeline_mode<synchronous>, transform_indices = @transform_7, window_bounds = array<i64: 4, 34, 16>}, {pipeline_mode = #tpu.pipeline_mode<synchronous>, transform_indices = @transform_8, window_bounds = array<i64: 1, 544>}, {pipeline_mode = #tpu.pipeline_mode<synchronous>, transform_indices = @transform_9, window_bounds = array<i64: 7, 544, 28>}, {pipeline_mode = #tpu.pipeline_mode<synchronous>, transform_indices = @transform_10, window_bounds = array<i64: 7, 28, 34>}, {pipeline_mode = #tpu.pipeline_mode<synchronous>, transform_indices = @transform_11, window_bounds = array<i64: 1, 28>}, {transform_indices = @transform_12, window_bounds = array<i64: 1, 28, 28>}]} {
    %c0 = arith.constant 0 : index
    %c0_0 = arith.constant 0 : index
    %c0_1 = arith.constant 0 : index
    %0 = vector.load %arg1[%c0, %c0_0, %c0_1] : memref<1x7x224xbf16, #tpu.memory_space<vmem>>, vector<1x7x224xbf16>
    %1 = vector.shape_cast %0 : vector<1x7x224xbf16> to vector<7x224xbf16>
    %c0_2 = arith.constant 0 : index
    %c0_3 = arith.constant 0 : index
    %2 = vector.load %arg2[%c0_2, %c0_3] : memref<224x448xbf16, #tpu.memory_space<vmem>>, vector<224x448xbf16>
    %cst = arith.constant dense<0.000000e+00> : vector<7x448xf32>
    %3 = tpu.matmul %1, %2, %cst {dimension_numbers = #tpu.dot_dimension_numbers<[1], [0], [0], [1], [0, 0, 1, 1], [], []>} : vector<7x224xbf16>, vector<224x448xbf16>, vector<7x448xf32> -> vector<7x448xf32>
    %c0_4 = arith.constant 0 : index
    %c0_5 = arith.constant 0 : index
    %4 = vector.load %arg3[%c0_4, %c0_5] : memref<7x448xf32, #tpu.memory_space<vmem>>, vector<7x448xf32>
    %5 = arith.addf %3, %4 : vector<7x448xf32>
    %cst_6 = arith.constant 0.000000e+00 : f32
    %6 = vector.broadcast %cst_6 : f32 to vector<7x448xf32>
    %7 = arith.maximumf %5, %6 : vector<7x448xf32>
    %8 = arith.truncf %7 : vector<7x448xf32> to vector<7x448xbf16>
    %cst_7 = arith.constant 0.000000e+00 : f32
    %9 = vector.broadcast %cst_7 : f32 to vector<16x512xf32>
    %c0_8 = arith.constant 0 : index
    %c0_9 = arith.constant 0 : index
    %c0_10 = arith.constant 0 : index
    %10 = vector.load %arg4[%c0_8, %c0_9, %c0_10] : memref<4x448x512xbf16, #tpu.memory_space<vmem>>, vector<1x448x512xbf16>
    %11 = vector.shape_cast %10 : vector<1x448x512xbf16> to vector<448x512xbf16>
    %cst_11 = arith.constant dense<0.000000e+00> : vector<7x512xf32>
    %12 = tpu.matmul %8, %11, %cst_11 {dimension_numbers = #tpu.dot_dimension_numbers<[1], [0], [0], [1], [0, 0, 1, 1], [], []>} : vector<7x448xbf16>, vector<448x512xbf16>, vector<7x512xf32> -> vector<7x512xf32>
    %c0_12 = arith.constant 0 : index
    %c0_13 = arith.constant 0 : index
    %c0_14 = arith.constant 0 : index
    %13 = vector.load %arg5[%c0_12, %c0_13, %c0_14] : memref<4x16x7xf32, #tpu.memory_space<vmem>>, vector<1x16x7xf32>
    %14 = vector.shape_cast %13 : vector<1x16x7xf32> to vector<16x7xf32>
    %cst_15 = arith.constant dense<0.000000e+00> : vector<16x512xf32>
    %15 = tpu.matmul %14, %12, %cst_15 {dimension_numbers = #tpu.dot_dimension_numbers<[1], [0], [0], [1], [0, 0, 1, 1], [], []>} : vector<16x7xf32>, vector<7x512xf32>, vector<16x512xf32> -> vector<16x512xf32>
    %16 = arith.addf %9, %15 : vector<16x512xf32>
    %c1 = arith.constant 1 : index
    %c0_16 = arith.constant 0 : index
    %c0_17 = arith.constant 0 : index
    %17 = vector.load %arg4[%c1, %c0_16, %c0_17] : memref<4x448x512xbf16, #tpu.memory_space<vmem>>, vector<1x448x512xbf16>
    %18 = vector.shape_cast %17 : vector<1x448x512xbf16> to vector<448x512xbf16>
    %cst_18 = arith.constant dense<0.000000e+00> : vector<7x512xf32>
    %19 = tpu.matmul %8, %18, %cst_18 {dimension_numbers = #tpu.dot_dimension_numbers<[1], [0], [0], [1], [0, 0, 1, 1], [], []>} : vector<7x448xbf16>, vector<448x512xbf16>, vector<7x512xf32> -> vector<7x512xf32>
    %c1_19 = arith.constant 1 : index
    %c0_20 = arith.constant 0 : index
    %c0_21 = arith.constant 0 : index
    %20 = vector.load %arg5[%c1_19, %c0_20, %c0_21] : memref<4x16x7xf32, #tpu.memory_space<vmem>>, vector<1x16x7xf32>
    %21 = vector.shape_cast %20 : vector<1x16x7xf32> to vector<16x7xf32>
    %cst_22 = arith.constant dense<0.000000e+00> : vector<16x512xf32>
    %22 = tpu.matmul %21, %19, %cst_22 {dimension_numbers = #tpu.dot_dimension_numbers<[1], [0], [0], [1], [0, 0, 1, 1], [], []>} : vector<16x7xf32>, vector<7x512xf32>, vector<16x512xf32> -> vector<16x512xf32>
    %23 = arith.addf %16, %22 : vector<16x512xf32>
    %c2 = arith.constant 2 : index
    %c0_23 = arith.constant 0 : index
    %c0_24 = arith.constant 0 : index
    %24 = vector.load %arg4[%c2, %c0_23, %c0_24] : memref<4x448x512xbf16, #tpu.memory_space<vmem>>, vector<1x448x512xbf16>
    %25 = vector.shape_cast %24 : vector<1x448x512xbf16> to vector<448x512xbf16>
    %cst_25 = arith.constant dense<0.000000e+00> : vector<7x512xf32>
    %26 = tpu.matmul %8, %25, %cst_25 {dimension_numbers = #tpu.dot_dimension_numbers<[1], [0], [0], [1], [0, 0, 1, 1], [], []>} : vector<7x448xbf16>, vector<448x512xbf16>, vector<7x512xf32> -> vector<7x512xf32>
    %c2_26 = arith.constant 2 : index
    %c0_27 = arith.constant 0 : index
    %c0_28 = arith.constant 0 : index
    %27 = vector.load %arg5[%c2_26, %c0_27, %c0_28] : memref<4x16x7xf32, #tpu.memory_space<vmem>>, vector<1x16x7xf32>
    %28 = vector.shape_cast %27 : vector<1x16x7xf32> to vector<16x7xf32>
    %cst_29 = arith.constant dense<0.000000e+00> : vector<16x512xf32>
    %29 = tpu.matmul %28, %26, %cst_29 {dimension_numbers = #tpu.dot_dimension_numbers<[1], [0], [0], [1], [0, 0, 1, 1], [], []>} : vector<16x7xf32>, vector<7x512xf32>, vector<16x512xf32> -> vector<16x512xf32>
    %30 = arith.addf %23, %29 : vector<16x512xf32>
    %c3 = arith.constant 3 : index
    %c0_30 = arith.constant 0 : index
    %c0_31 = arith.constant 0 : index
    %31 = vector.load %arg4[%c3, %c0_30, %c0_31] : memref<4x448x512xbf16, #tpu.memory_space<vmem>>, vector<1x448x512xbf16>
    %32 = vector.shape_cast %31 : vector<1x448x512xbf16> to vector<448x512xbf16>
    %cst_32 = arith.constant dense<0.000000e+00> : vector<7x512xf32>
    %33 = tpu.matmul %8, %32, %cst_32 {dimension_numbers = #tpu.dot_dimension_numbers<[1], [0], [0], [1], [0, 0, 1, 1], [], []>} : vector<7x448xbf16>, vector<448x512xbf16>, vector<7x512xf32> -> vector<7x512xf32>
    %c3_33 = arith.constant 3 : index
    %c0_34 = arith.constant 0 : index
    %c0_35 = arith.constant 0 : index
    %34 = vector.load %arg5[%c3_33, %c0_34, %c0_35] : memref<4x16x7xf32, #tpu.memory_space<vmem>>, vector<1x16x7xf32>
    %35 = vector.shape_cast %34 : vector<1x16x7xf32> to vector<16x7xf32>
    %cst_36 = arith.constant dense<0.000000e+00> : vector<16x512xf32>
    %36 = tpu.matmul %35, %33, %cst_36 {dimension_numbers = #tpu.dot_dimension_numbers<[1], [0], [0], [1], [0, 0, 1, 1], [], []>} : vector<16x7xf32>, vector<7x512xf32>, vector<16x512xf32> -> vector<16x512xf32>
    %37 = arith.addf %30, %36 : vector<16x512xf32>
    %c0_37 = arith.constant 0 : index
    %c0_38 = arith.constant 0 : index
    %38 = vector.load %arg6[%c0_37, %c0_38] : memref<1x512xf32, #tpu.memory_space<vmem>>, vector<1x512xf32>
    %39 = vector.broadcast %38 : vector<1x512xf32> to vector<16x512xf32>
    %40 = arith.addf %37, %39 : vector<16x512xf32>
    %cst_39 = arith.constant 0.000000e+00 : f32
    %41 = vector.broadcast %cst_39 : f32 to vector<16x512xf32>
    %42 = arith.maximumf %40, %41 : vector<16x512xf32>
    %43 = arith.truncf %42 : vector<16x512xf32> to vector<16x512xbf16>
    %cst_40 = arith.constant 0.000000e+00 : f32
    %44 = vector.broadcast %cst_40 : f32 to vector<34x544xf32>
    %c0_41 = arith.constant 0 : index
    %c0_42 = arith.constant 0 : index
    %c0_43 = arith.constant 0 : index
    %45 = vector.load %arg7[%c0_41, %c0_42, %c0_43] : memref<4x512x544xbf16, #tpu.memory_space<vmem>>, vector<1x512x544xbf16>
    %46 = vector.shape_cast %45 : vector<1x512x544xbf16> to vector<512x544xbf16>
    %cst_44 = arith.constant dense<0.000000e+00> : vector<16x544xf32>
    %47 = tpu.matmul %43, %46, %cst_44 {dimension_numbers = #tpu.dot_dimension_numbers<[1], [0], [0], [1], [0, 0, 1, 1], [], []>} : vector<16x512xbf16>, vector<512x544xbf16>, vector<16x544xf32> -> vector<16x544xf32>
    %c0_45 = arith.constant 0 : index
    %c0_46 = arith.constant 0 : index
    %c0_47 = arith.constant 0 : index
    %48 = vector.load %arg8[%c0_45, %c0_46, %c0_47] : memref<4x34x16xf32, #tpu.memory_space<vmem>>, vector<1x34x16xf32>
    %49 = vector.shape_cast %48 : vector<1x34x16xf32> to vector<34x16xf32>
    %cst_48 = arith.constant dense<0.000000e+00> : vector<34x544xf32>
    %50 = tpu.matmul %49, %47, %cst_48 {dimension_numbers = #tpu.dot_dimension_numbers<[1], [0], [0], [1], [0, 0, 1, 1], [], []>} : vector<34x16xf32>, vector<16x544xf32>, vector<34x544xf32> -> vector<34x544xf32>
    %51 = arith.addf %44, %50 : vector<34x544xf32>
    %c1_49 = arith.constant 1 : index
    %c0_50 = arith.constant 0 : index
    %c0_51 = arith.constant 0 : index
    %52 = vector.load %arg7[%c1_49, %c0_50, %c0_51] : memref<4x512x544xbf16, #tpu.memory_space<vmem>>, vector<1x512x544xbf16>
    %53 = vector.shape_cast %52 : vector<1x512x544xbf16> to vector<512x544xbf16>
    %cst_52 = arith.constant dense<0.000000e+00> : vector<16x544xf32>
    %54 = tpu.matmul %43, %53, %cst_52 {dimension_numbers = #tpu.dot_dimension_numbers<[1], [0], [0], [1], [0, 0, 1, 1], [], []>} : vector<16x512xbf16>, vector<512x544xbf16>, vector<16x544xf32> -> vector<16x544xf32>
    %c1_53 = arith.constant 1 : index
    %c0_54 = arith.constant 0 : index
    %c0_55 = arith.constant 0 : index
    %55 = vector.load %arg8[%c1_53, %c0_54, %c0_55] : memref<4x34x16xf32, #tpu.memory_space<vmem>>, vector<1x34x16xf32>
    %56 = vector.shape_cast %55 : vector<1x34x16xf32> to vector<34x16xf32>
    %cst_56 = arith.constant dense<0.000000e+00> : vector<34x544xf32>
    %57 = tpu.matmul %56, %54, %cst_56 {dimension_numbers = #tpu.dot_dimension_numbers<[1], [0], [0], [1], [0, 0, 1, 1], [], []>} : vector<34x16xf32>, vector<16x544xf32>, vector<34x544xf32> -> vector<34x544xf32>
    %58 = arith.addf %51, %57 : vector<34x544xf32>
    %c2_57 = arith.constant 2 : index
    %c0_58 = arith.constant 0 : index
    %c0_59 = arith.constant 0 : index
    %59 = vector.load %arg7[%c2_57, %c0_58, %c0_59] : memref<4x512x544xbf16, #tpu.memory_space<vmem>>, vector<1x512x544xbf16>
    %60 = vector.shape_cast %59 : vector<1x512x544xbf16> to vector<512x544xbf16>
    %cst_60 = arith.constant dense<0.000000e+00> : vector<16x544xf32>
    %61 = tpu.matmul %43, %60, %cst_60 {dimension_numbers = #tpu.dot_dimension_numbers<[1], [0], [0], [1], [0, 0, 1, 1], [], []>} : vector<16x512xbf16>, vector<512x544xbf16>, vector<16x544xf32> -> vector<16x544xf32>
    %c2_61 = arith.constant 2 : index
    %c0_62 = arith.constant 0 : index
    %c0_63 = arith.constant 0 : index
    %62 = vector.load %arg8[%c2_61, %c0_62, %c0_63] : memref<4x34x16xf32, #tpu.memory_space<vmem>>, vector<1x34x16xf32>
    %63 = vector.shape_cast %62 : vector<1x34x16xf32> to vector<34x16xf32>
    %cst_64 = arith.constant dense<0.000000e+00> : vector<34x544xf32>
    %64 = tpu.matmul %63, %61, %cst_64 {dimension_numbers = #tpu.dot_dimension_numbers<[1], [0], [0], [1], [0, 0, 1, 1], [], []>} : vector<34x16xf32>, vector<16x544xf32>, vector<34x544xf32> -> vector<34x544xf32>
    %65 = arith.addf %58, %64 : vector<34x544xf32>
    %c3_65 = arith.constant 3 : index
    %c0_66 = arith.constant 0 : index
    %c0_67 = arith.constant 0 : index
    %66 = vector.load %arg7[%c3_65, %c0_66, %c0_67] : memref<4x512x544xbf16, #tpu.memory_space<vmem>>, vector<1x512x544xbf16>
    %67 = vector.shape_cast %66 : vector<1x512x544xbf16> to vector<512x544xbf16>
    %cst_68 = arith.constant dense<0.000000e+00> : vector<16x544xf32>
    %68 = tpu.matmul %43, %67, %cst_68 {dimension_numbers = #tpu.dot_dimension_numbers<[1], [0], [0], [1], [0, 0, 1, 1], [], []>} : vector<16x512xbf16>, vector<512x544xbf16>, vector<16x544xf32> -> vector<16x544xf32>
    %c3_69 = arith.constant 3 : index
    %c0_70 = arith.constant 0 : index
    %c0_71 = arith.constant 0 : index
    %69 = vector.load %arg8[%c3_69, %c0_70, %c0_71] : memref<4x34x16xf32, #tpu.memory_space<vmem>>, vector<1x34x16xf32>
    %70 = vector.shape_cast %69 : vector<1x34x16xf32> to vector<34x16xf32>
    %cst_72 = arith.constant dense<0.000000e+00> : vector<34x544xf32>
    %71 = tpu.matmul %70, %68, %cst_72 {dimension_numbers = #tpu.dot_dimension_numbers<[1], [0], [0], [1], [0, 0, 1, 1], [], []>} : vector<34x16xf32>, vector<16x544xf32>, vector<34x544xf32> -> vector<34x544xf32>
    %72 = arith.addf %65, %71 : vector<34x544xf32>
    %c0_73 = arith.constant 0 : index
    %c0_74 = arith.constant 0 : index
    %73 = vector.load %arg9[%c0_73, %c0_74] : memref<1x544xf32, #tpu.memory_space<vmem>>, vector<1x544xf32>
    %74 = vector.broadcast %73 : vector<1x544xf32> to vector<34x544xf32>
    %75 = arith.addf %72, %74 : vector<34x544xf32>
    %cst_75 = arith.constant 0.000000e+00 : f32
    %76 = vector.broadcast %cst_75 : f32 to vector<34x544xf32>
    %77 = arith.maximumf %75, %76 : vector<34x544xf32>
    %78 = arith.truncf %77 : vector<34x544xf32> to vector<34x544xbf16>
    %cst_76 = arith.constant 0.000000e+00 : f32
    %79 = vector.broadcast %cst_76 : f32 to vector<28x28xf32>
    %c0_77 = arith.constant 0 : index
    %c0_78 = arith.constant 0 : index
    %c0_79 = arith.constant 0 : index
    %80 = vector.load %arg10[%c0_77, %c0_78, %c0_79] : memref<7x544x28xbf16, #tpu.memory_space<vmem>>, vector<1x544x28xbf16>
    %81 = vector.shape_cast %80 : vector<1x544x28xbf16> to vector<544x28xbf16>
    %cst_80 = arith.constant dense<0.000000e+00> : vector<34x28xf32>
    %82 = tpu.matmul %78, %81, %cst_80 {dimension_numbers = #tpu.dot_dimension_numbers<[1], [0], [0], [1], [0, 0, 1, 1], [], []>} : vector<34x544xbf16>, vector<544x28xbf16>, vector<34x28xf32> -> vector<34x28xf32>
    %c0_81 = arith.constant 0 : index
    %c0_82 = arith.constant 0 : index
    %c0_83 = arith.constant 0 : index
    %83 = vector.load %arg11[%c0_81, %c0_82, %c0_83] : memref<7x28x34xf32, #tpu.memory_space<vmem>>, vector<1x28x34xf32>
    %84 = vector.shape_cast %83 : vector<1x28x34xf32> to vector<28x34xf32>
    %cst_84 = arith.constant dense<0.000000e+00> : vector<28x28xf32>
    %85 = tpu.matmul %84, %82, %cst_84 {dimension_numbers = #tpu.dot_dimension_numbers<[1], [0], [0], [1], [0, 0, 1, 1], [], []>} : vector<28x34xf32>, vector<34x28xf32>, vector<28x28xf32> -> vector<28x28xf32>
    %86 = arith.addf %79, %85 : vector<28x28xf32>
    %c1_85 = arith.constant 1 : index
    %c0_86 = arith.constant 0 : index
    %c0_87 = arith.constant 0 : index
    %87 = vector.load %arg10[%c1_85, %c0_86, %c0_87] : memref<7x544x28xbf16, #tpu.memory_space<vmem>>, vector<1x544x28xbf16>
    %88 = vector.shape_cast %87 : vector<1x544x28xbf16> to vector<544x28xbf16>
    %cst_88 = arith.constant dense<0.000000e+00> : vector<34x28xf32>
    %89 = tpu.matmul %78, %88, %cst_88 {dimension_numbers = #tpu.dot_dimension_numbers<[1], [0], [0], [1], [0, 0, 1, 1], [], []>} : vector<34x544xbf16>, vector<544x28xbf16>, vector<34x28xf32> -> vector<34x28xf32>
    %c1_89 = arith.constant 1 : index
    %c0_90 = arith.constant 0 : index
    %c0_91 = arith.constant 0 : index
    %90 = vector.load %arg11[%c1_89, %c0_90, %c0_91] : memref<7x28x34xf32, #tpu.memory_space<vmem>>, vector<1x28x34xf32>
    %91 = vector.shape_cast %90 : vector<1x28x34xf32> to vector<28x34xf32>
    %cst_92 = arith.constant dense<0.000000e+00> : vector<28x28xf32>
    %92 = tpu.matmul %91, %89, %cst_92 {dimension_numbers = #tpu.dot_dimension_numbers<[1], [0], [0], [1], [0, 0, 1, 1], [], []>} : vector<28x34xf32>, vector<34x28xf32>, vector<28x28xf32> -> vector<28x28xf32>
    %93 = arith.addf %86, %92 : vector<28x28xf32>
    %c2_93 = arith.constant 2 : index
    %c0_94 = arith.constant 0 : index
    %c0_95 = arith.constant 0 : index
    %94 = vector.load %arg10[%c2_93, %c0_94, %c0_95] : memref<7x544x28xbf16, #tpu.memory_space<vmem>>, vector<1x544x28xbf16>
    %95 = vector.shape_cast %94 : vector<1x544x28xbf16> to vector<544x28xbf16>
    %cst_96 = arith.constant dense<0.000000e+00> : vector<34x28xf32>
    %96 = tpu.matmul %78, %95, %cst_96 {dimension_numbers = #tpu.dot_dimension_numbers<[1], [0], [0], [1], [0, 0, 1, 1], [], []>} : vector<34x544xbf16>, vector<544x28xbf16>, vector<34x28xf32> -> vector<34x28xf32>
    %c2_97 = arith.constant 2 : index
    %c0_98 = arith.constant 0 : index
    %c0_99 = arith.constant 0 : index
    %97 = vector.load %arg11[%c2_97, %c0_98, %c0_99] : memref<7x28x34xf32, #tpu.memory_space<vmem>>, vector<1x28x34xf32>
    %98 = vector.shape_cast %97 : vector<1x28x34xf32> to vector<28x34xf32>
    %cst_100 = arith.constant dense<0.000000e+00> : vector<28x28xf32>
    %99 = tpu.matmul %98, %96, %cst_100 {dimension_numbers = #tpu.dot_dimension_numbers<[1], [0], [0], [1], [0, 0, 1, 1], [], []>} : vector<28x34xf32>, vector<34x28xf32>, vector<28x28xf32> -> vector<28x28xf32>
    %100 = arith.addf %93, %99 : vector<28x28xf32>
    %c3_101 = arith.constant 3 : index
    %c0_102 = arith.constant 0 : index
    %c0_103 = arith.constant 0 : index
    %101 = vector.load %arg10[%c3_101, %c0_102, %c0_103] : memref<7x544x28xbf16, #tpu.memory_space<vmem>>, vector<1x544x28xbf16>
    %102 = vector.shape_cast %101 : vector<1x544x28xbf16> to vector<544x28xbf16>
    %cst_104 = arith.constant dense<0.000000e+00> : vector<34x28xf32>
    %103 = tpu.matmul %78, %102, %cst_104 {dimension_numbers = #tpu.dot_dimension_numbers<[1], [0], [0], [1], [0, 0, 1, 1], [], []>} : vector<34x544xbf16>, vector<544x28xbf16>, vector<34x28xf32> -> vector<34x28xf32>
    %c3_105 = arith.constant 3 : index
    %c0_106 = arith.constant 0 : index
    %c0_107 = arith.constant 0 : index
    %104 = vector.load %arg11[%c3_105, %c0_106, %c0_107] : memref<7x28x34xf32, #tpu.memory_space<vmem>>, vector<1x28x34xf32>
    %105 = vector.shape_cast %104 : vector<1x28x34xf32> to vector<28x34xf32>
    %cst_108 = arith.constant dense<0.000000e+00> : vector<28x28xf32>
    %106 = tpu.matmul %105, %103, %cst_108 {dimension_numbers = #tpu.dot_dimension_numbers<[1], [0], [0], [1], [0, 0, 1, 1], [], []>} : vector<28x34xf32>, vector<34x28xf32>, vector<28x28xf32> -> vector<28x28xf32>
    %107 = arith.addf %100, %106 : vector<28x28xf32>
    %c4 = arith.constant 4 : index
    %c0_109 = arith.constant 0 : index
    %c0_110 = arith.constant 0 : index
    %108 = vector.load %arg10[%c4, %c0_109, %c0_110] : memref<7x544x28xbf16, #tpu.memory_space<vmem>>, vector<1x544x28xbf16>
    %109 = vector.shape_cast %108 : vector<1x544x28xbf16> to vector<544x28xbf16>
    %cst_111 = arith.constant dense<0.000000e+00> : vector<34x28xf32>
    %110 = tpu.matmul %78, %109, %cst_111 {dimension_numbers = #tpu.dot_dimension_numbers<[1], [0], [0], [1], [0, 0, 1, 1], [], []>} : vector<34x544xbf16>, vector<544x28xbf16>, vector<34x28xf32> -> vector<34x28xf32>
    %c4_112 = arith.constant 4 : index
    %c0_113 = arith.constant 0 : index
    %c0_114 = arith.constant 0 : index
    %111 = vector.load %arg11[%c4_112, %c0_113, %c0_114] : memref<7x28x34xf32, #tpu.memory_space<vmem>>, vector<1x28x34xf32>
    %112 = vector.shape_cast %111 : vector<1x28x34xf32> to vector<28x34xf32>
    %cst_115 = arith.constant dense<0.000000e+00> : vector<28x28xf32>
    %113 = tpu.matmul %112, %110, %cst_115 {dimension_numbers = #tpu.dot_dimension_numbers<[1], [0], [0], [1], [0, 0, 1, 1], [], []>} : vector<28x34xf32>, vector<34x28xf32>, vector<28x28xf32> -> vector<28x28xf32>
    %114 = arith.addf %107, %113 : vector<28x28xf32>
    %c5 = arith.constant 5 : index
    %c0_116 = arith.constant 0 : index
    %c0_117 = arith.constant 0 : index
    %115 = vector.load %arg10[%c5, %c0_116, %c0_117] : memref<7x544x28xbf16, #tpu.memory_space<vmem>>, vector<1x544x28xbf16>
    %116 = vector.shape_cast %115 : vector<1x544x28xbf16> to vector<544x28xbf16>
    %cst_118 = arith.constant dense<0.000000e+00> : vector<34x28xf32>
    %117 = tpu.matmul %78, %116, %cst_118 {dimension_numbers = #tpu.dot_dimension_numbers<[1], [0], [0], [1], [0, 0, 1, 1], [], []>} : vector<34x544xbf16>, vector<544x28xbf16>, vector<34x28xf32> -> vector<34x28xf32>
    %c5_119 = arith.constant 5 : index
    %c0_120 = arith.constant 0 : index
    %c0_121 = arith.constant 0 : index
    %118 = vector.load %arg11[%c5_119, %c0_120, %c0_121] : memref<7x28x34xf32, #tpu.memory_space<vmem>>, vector<1x28x34xf32>
    %119 = vector.shape_cast %118 : vector<1x28x34xf32> to vector<28x34xf32>
    %cst_122 = arith.constant dense<0.000000e+00> : vector<28x28xf32>
    %120 = tpu.matmul %119, %117, %cst_122 {dimension_numbers = #tpu.dot_dimension_numbers<[1], [0], [0], [1], [0, 0, 1, 1], [], []>} : vector<28x34xf32>, vector<34x28xf32>, vector<28x28xf32> -> vector<28x28xf32>
    %121 = arith.addf %114, %120 : vector<28x28xf32>
    %c6 = arith.constant 6 : index
    %c0_123 = arith.constant 0 : index
    %c0_124 = arith.constant 0 : index
    %122 = vector.load %arg10[%c6, %c0_123, %c0_124] : memref<7x544x28xbf16, #tpu.memory_space<vmem>>, vector<1x544x28xbf16>
    %123 = vector.shape_cast %122 : vector<1x544x28xbf16> to vector<544x28xbf16>
    %cst_125 = arith.constant dense<0.000000e+00> : vector<34x28xf32>
    %124 = tpu.matmul %78, %123, %cst_125 {dimension_numbers = #tpu.dot_dimension_numbers<[1], [0], [0], [1], [0, 0, 1, 1], [], []>} : vector<34x544xbf16>, vector<544x28xbf16>, vector<34x28xf32> -> vector<34x28xf32>
    %c6_126 = arith.constant 6 : index
    %c0_127 = arith.constant 0 : index
    %c0_128 = arith.constant 0 : index
    %125 = vector.load %arg11[%c6_126, %c0_127, %c0_128] : memref<7x28x34xf32, #tpu.memory_space<vmem>>, vector<1x28x34xf32>
    %126 = vector.shape_cast %125 : vector<1x28x34xf32> to vector<28x34xf32>
    %cst_129 = arith.constant dense<0.000000e+00> : vector<28x28xf32>
    %127 = tpu.matmul %126, %124, %cst_129 {dimension_numbers = #tpu.dot_dimension_numbers<[1], [0], [0], [1], [0, 0, 1, 1], [], []>} : vector<28x34xf32>, vector<34x28xf32>, vector<28x28xf32> -> vector<28x28xf32>
    %128 = arith.addf %121, %127 : vector<28x28xf32>
    %c0_130 = arith.constant 0 : index
    %c0_131 = arith.constant 0 : index
    %129 = vector.load %arg12[%c0_130, %c0_131] : memref<1x28xf32, #tpu.memory_space<vmem>>, vector<1x28xf32>
    %130 = vector.broadcast %129 : vector<1x28xf32> to vector<28x28xf32>
    %131 = arith.addf %128, %130 : vector<28x28xf32>
    %c0_132 = arith.constant 0 : index
    %c0_133 = arith.constant 0 : index
    %c0_134 = arith.constant 0 : index
    %132 = vector.load %arg13[%c0_132, %c0_133, %c0_134] : memref<1x28x28xf32, #tpu.memory_space<vmem>>, vector<1x28x28xf32>
    %133 = vector.shape_cast %132 : vector<1x28x28xf32> to vector<28x28xf32>
    %134 = vector.shape_cast %131 : vector<28x28xf32> to vector<1x28x28xf32>
    tpu.vector_store %arg13[%c0_132, %c0_133, %c0_134], %134 {strides = array<i32>} : memref<1x28x28xf32, #tpu.memory_space<vmem>>, vector<1x28x28xf32>,
    return
  }
  func.func @transform_0(%arg0: i32) -> (i32, i32, i32) {
    %c0_i32 = arith.constant 0 : i32
    %c0_i32_0 = arith.constant 0 : i32
    %c0_i32_1 = arith.constant 0 : i32
    return %arg0, %c0_i32, %c0_i32_0 : i32, i32, i32
  }
  func.func @transform_1(%arg0: i32) -> (i32, i32) {
    %c0_i32 = arith.constant 0 : i32
    %c0_i32_0 = arith.constant 0 : i32
    %c0_i32_1 = arith.constant 0 : i32
    return %c0_i32, %c0_i32_0 : i32, i32
  }
  func.func @transform_2(%arg0: i32) -> (i32, i32) {
    %c0_i32 = arith.constant 0 : i32
    %c0_i32_0 = arith.constant 0 : i32
    %c0_i32_1 = arith.constant 0 : i32
    return %c0_i32, %c0_i32_0 : i32, i32
  }
  func.func @transform_3(%arg0: i32) -> (i32, i32, i32) {
    %c0_i32 = arith.constant 0 : i32
    %c0_i32_0 = arith.constant 0 : i32
    %c0_i32_1 = arith.constant 0 : i32
    %c0_i32_2 = arith.constant 0 : i32
    return %c0_i32, %c0_i32_0, %c0_i32_1 : i32, i32, i32
  }
  func.func @transform_4(%arg0: i32) -> (i32, i32, i32) {
    %c0_i32 = arith.constant 0 : i32
    %c0_i32_0 = arith.constant 0 : i32
    %c0_i32_1 = arith.constant 0 : i32
    %c0_i32_2 = arith.constant 0 : i32
    return %c0_i32, %c0_i32_0, %c0_i32_1 : i32, i32, i32
  }
  func.func @transform_5(%arg0: i32) -> (i32, i32) {
    %c0_i32 = arith.constant 0 : i32
    %c0_i32_0 = arith.constant 0 : i32
    %c0_i32_1 = arith.constant 0 : i32
    return %c0_i32, %c0_i32_0 : i32, i32
  }
  func.func @transform_6(%arg0: i32) -> (i32, i32, i32) {
    %c0_i32 = arith.constant 0 : i32
    %c0_i32_0 = arith.constant 0 : i32
    %c0_i32_1 = arith.constant 0 : i32
    %c0_i32_2 = arith.constant 0 : i32
    return %c0_i32, %c0_i32_0, %c0_i32_1 : i32, i32, i32
  }
  func.func @transform_7(%arg0: i32) -> (i32, i32, i32) {
    %c0_i32 = arith.constant 0 : i32
    %c0_i32_0 = arith.constant 0 : i32
    %c0_i32_1 = arith.constant 0 : i32
    %c0_i32_2 = arith.constant 0 : i32
    return %c0_i32, %c0_i32_0, %c0_i32_1 : i32, i32, i32
  }
  func.func @transform_8(%arg0: i32) -> (i32, i32) {
    %c0_i32 = arith.constant 0 : i32
    %c0_i32_0 = arith.constant 0 : i32
    %c0_i32_1 = arith.constant 0 : i32
    return %c0_i32, %c0_i32_0 : i32, i32
  }
  func.func @transform_9(%arg0: i32) -> (i32, i32, i32) {
    %c0_i32 = arith.constant 0 : i32
    %c0_i32_0 = arith.constant 0 : i32
    %c0_i32_1 = arith.constant 0 : i32
    %c0_i32_2 = arith.constant 0 : i32
    return %c0_i32, %c0_i32_0, %c0_i32_1 : i32, i32, i32
  }
  func.func @transform_10(%arg0: i32) -> (i32, i32, i32) {
    %c0_i32 = arith.constant 0 : i32
    %c0_i32_0 = arith.constant 0 : i32
    %c0_i32_1 = arith.constant 0 : i32
    %c0_i32_2 = arith.constant 0 : i32
    return %c0_i32, %c0_i32_0, %c0_i32_1 : i32, i32, i32
  }
  func.func @transform_11(%arg0: i32) -> (i32, i32) {
    %c0_i32 = arith.constant 0 : i32
    %c0_i32_0 = arith.constant 0 : i32
    %c0_i32_1 = arith.constant 0 : i32
    return %c0_i32, %c0_i32_0 : i32, i32
  }
  func.func @transform_12(%arg0: i32) -> (i32, i32, i32) {
    %c0_i32 = arith.constant 0 : i32
    %c0_i32_0 = arith.constant 0 : i32
    %c0_i32_1 = arith.constant 0 : i32
    return %arg0, %c0_i32, %c0_i32_0 : i32, i32, i32
  }
}

</mosaic_0001>

<llo_original>
// kernel: generator_forward.1
$region0: #{generator_forward.1}
  #allocation0 [shape = 'u32[]', space=smem, size = 0x4, offset = 0x4, fixed_abs, tag = 'smem constant byte address 0x4 - core index']
  #allocation1 [shape = 'u32[72,128]{1,0:T(1,128)}', space=vmem, size = 0x9000, scoped, tag = 'internal scratch']
  %s0 = inlined_call_operand.vmem [shape: bf16[2,7,224], index: 0, kind: input, shape index: {}]
  %s1 = inlined_call_operand.vmem [shape: bf16[224,448], index: 1, kind: input, shape index: {}]
  %s2 = inlined_call_operand.vmem [shape: f32[7,448], index: 2, kind: input, shape index: {}]
  %s3 = inlined_call_operand.vmem [shape: bf16[4,448,512], index: 3, kind: input, shape index: {}]
  %s4 = inlined_call_operand.vmem [shape: f32[4,16,7], index: 4, kind: input, shape index: {}]
  %s5 = inlined_call_operand.vmem [shape: f32[1,512], index: 5, kind: input, shape index: {}]
  %s6 = inlined_call_operand.vmem [shape: bf16[4,512,544], index: 6, kind: input, shape index: {}]
  %s7 = inlined_call_operand.vmem [shape: f32[4,34,16], index: 7, kind: input, shape index: {}]
  %s8 = inlined_call_operand.vmem [shape: f32[1,544], index: 8, kind: input, shape index: {}]
  %s9 = inlined_call_operand.vmem [shape: bf16[7,544,28], index: 9, kind: input, shape index: {}]
  %s10 = inlined_call_operand.vmem [shape: f32[7,28,34], index: 10, kind: input, shape index: {}]
  %s11 = inlined_call_operand.vmem [shape: f32[1,28], index: 11, kind: input, shape index: {}]
  %s12 = inlined_call_operand.vmem [shape: f32[2,28,28], index: 12, kind: output, shape index: {}]
  %s13 = sld [smem:[#allocation0]]
  $region81: #{generator_forward.1} parent=0
    _
  %s15 = ssub.s32 1, %s13
  %s16 = scalar_select 0, %s15, %s13
  loop: start=0, step=1, limit=4
  $region2: #{generator_forward.1} parent=0 // loop_pre_header
    _
  $region3: #{generator_forward.1} parent=0 // loop_header
    %s18 = sphi 0, %s22
    %p19 = scmp.ge.s32.totalorder %s18, 4
    %s28 = sphi 0, %s30
    %s31 = sphi 0, %s28
    %s32 = sphi 0, %s31
    %s48 = sphi 0, %s32
    %s52 = sphi 0, %s52
    %s54 = sphi 0, %s52
    %s55 = sphi 0, %s54
    %s69 = sphi 0, %s55
    %s73 = sphi 0, %s73
    %s75 = sphi 0, %s73
    %s76 = sphi 0, %s75
    %s90 = sphi 0, %s76
    %s94 = sphi 0, %s94
    %s96 = sphi 0, %s94
    %s97 = sphi 0, %s96
    %s111 = sphi 0, %s97
    %s115 = sphi 0, %s115
    %s117 = sphi 0, %s115
    %s118 = sphi 0, %s117
    %s132 = sphi 0, %s118
    %s136 = sphi 0, %s136
    %s138 = sphi 0, %s136
    %s139 = sphi 0, %s138
    %s153 = sphi 0, %s139
    %s157 = sphi 0, %s157
    %s159 = sphi 0, %s157
    %s160 = sphi 0, %s159
    %s174 = sphi 0, %s160
    %s178 = sphi 0, %s178
    %s180 = sphi 0, %s178
    %s181 = sphi 0, %s180
    %s195 = sphi 0, %s181
    %s199 = sphi 0, %s199
    %s201 = sphi 0, %s199
    %s202 = sphi 0, %s201
    %s216 = sphi 0, %s202
    %s220 = sphi 0, %s220
    %s222 = sphi 0, %s220
    %s223 = sphi 0, %s222
    %s237 = sphi 0, %s223
    %s241 = sphi 0, %s241
    %s243 = sphi 0, %s241
    %s244 = sphi 0, %s243
    %s258 = sphi 0, %s244
    %s262 = sphi 0, %s262
    %s264 = sphi 0, %s262
    %s265 = sphi 0, %s264
    %s279 = sphi 0, %s265
    %s285 = sphi 0, %s287
    %s288 = sphi 0, %s285
    %s289 = sphi 0, %s288
    %s305 = sphi 0, %s289
  $region4: #{generator_forward.1} parent=0 // loop_header_branch
    %21 = sbr.rel (%p19) target = $region8
  $region5: #{generator_forward.1} parent=0 // loop_body
    %s23 = ssub.s32 %s18, 1
    %s24 = ssub.s32 %s18, 2
    %s25 = sadd.s32 %s18, 1
    %s26 = ssub.s32 %s18, %s25
    %p27 = scmp.eq.s32.totalorder %s26, 0
    %s29 = sadd.s32 %s28, 1
    %s30 = scalar_select %p27, %s28, %s29
    %p33 = pneg %p27
    %p34 = scmp.eq.s32.totalorder %s18, 1
    %p35 = por %p33, %p34
    %p36 = scmp.ne.s32.totalorder %s28, %s31
    %p37 = scmp.eq.s32.totalorder %s18, 0
    %p38 = por %p36, %p37
    %p39 = scmp.ne.s32.totalorder %s28, %s31
    %p40 = scmp.eq.s32.totalorder %s23, 1
    %p41 = por %p39, %p40
    %p42 = scmp.ne.s32.totalorder %s31, %s32
    %p43 = scmp.eq.s32.totalorder %s23, 0
    %p44 = por %p42, %p43
    %p45 = scmp.ne.s32.totalorder %s31, %s32
    %p46 = scmp.eq.s32.totalorder %s24, 1
    %p47 = por %p45, %p46
    %p49 = scmp.ne.s32.totalorder %s32, %s48
    %p50 = scmp.eq.s32.totalorder %s24, 0
    %p51 = por %p49, %p50
    %s53 = sadd.s32 %s52, 1
    %p56 = scmp.eq.s32.totalorder %s18, 1
    %p57 = scmp.ne.s32.totalorder %s52, %s54
    %p58 = scmp.eq.s32.totalorder %s18, 0
    %p59 = por %p57, %p58
    %p60 = scmp.ne.s32.totalorder %s52, %s54
    %p61 = scmp.eq.s32.totalorder %s23, 1
    %p62 = por %p60, %p61
    %p63 = scmp.ne.s32.totalorder %s54, %s55
    %p64 = scmp.eq.s32.totalorder %s23, 0
    %p65 = por %p63, %p64
    %p66 = scmp.ne.s32.totalorder %s54, %s55
    %p67 = scmp.eq.s32.totalorder %s24, 1
    %p68 = por %p66, %p67
    %p70 = scmp.ne.s32.totalorder %s55, %s69
    %p71 = scmp.eq.s32.totalorder %s24, 0
    %p72 = por %p70, %p71
    %s74 = sadd.s32 %s73, 1
    %p77 = scmp.eq.s32.totalorder %s18, 1
    %p78 = scmp.ne.s32.totalorder %s73, %s75
    %p79 = scmp.eq.s32.totalorder %s18, 0
    %p80 = por %p78, %p79
    %p81 = scmp.ne.s32.totalorder %s73, %s75
    %p82 = scmp.eq.s32.totalorder %s23, 1
    %p83 = por %p81, %p82
    %p84 = scmp.ne.s32.totalorder %s75, %s76
    %p85 = scmp.eq.s32.totalorder %s23, 0
    %p86 = por %p84, %p85
    %p87 = scmp.ne.s32.totalorder %s75, %s76
    %p88 = scmp.eq.s32.totalorder %s24, 1
    %p89 = por %p87, %p88
    %p91 = scmp.ne.s32.totalorder %s76, %s90
    %p92 = scmp.eq.s32.totalorder %s24, 0
    %p93 = por %p91, %p92
    %s95 = sadd.s32 %s94, 1
    %p98 = scmp.eq.s32.totalorder %s18, 1
    %p99 = scmp.ne.s32.totalorder %s94, %s96
    %p100 = scmp.eq.s32.totalorder %s18, 0
    %p101 = por %p99, %p100
    %p102 = scmp.ne.s32.totalorder %s94, %s96
    %p103 = scmp.eq.s32.totalorder %s23, 1
    %p104 = por %p102, %p103
    %p105 = scmp.ne.s32.totalorder %s96, %s97
    %p106 = scmp.eq.s32.totalorder %s23, 0
    %p107 = por %p105, %p106
    %p108 = scmp.ne.s32.totalorder %s96, %s97
    %p109 = scmp.eq.s32.totalorder %s24, 1
    %p110 = por %p108, %p109
    %p112 = scmp.ne.s32.totalorder %s97, %s111
    %p113 = scmp.eq.s32.totalorder %s24, 0
    %p114 = por %p112, %p113
    %s116 = sadd.s32 %s115, 1
    %p119 = scmp.eq.s32.totalorder %s18, 1
    %p120 = scmp.ne.s32.totalorder %s115, %s117
    %p121 = scmp.eq.s32.totalorder %s18, 0
    %p122 = por %p120, %p121
    %p123 = scmp.ne.s32.totalorder %s115, %s117
    %p124 = scmp.eq.s32.totalorder %s23, 1
    %p125 = por %p123, %p124
    %p126 = scmp.ne.s32.totalorder %s117, %s118
    %p127 = scmp.eq.s32.totalorder %s23, 0
    %p128 = por %p126, %p127
    %p129 = scmp.ne.s32.totalorder %s117, %s118
    %p130 = scmp.eq.s32.totalorder %s24, 1
    %p131 = por %p129, %p130
    %p133 = scmp.ne.s32.totalorder %s118, %s132
    %p134 = scmp.eq.s32.totalorder %s24, 0
    %p135 = por %p133, %p134
    %s137 = sadd.s32 %s136, 1
    %p140 = scmp.eq.s32.totalorder %s18, 1
    %p141 = scmp.ne.s32.totalorder %s136, %s138
    %p142 = scmp.eq.s32.totalorder %s18, 0
    %p143 = por %p141, %p142
    %p144 = scmp.ne.s32.totalorder %s136, %s138
    %p145 = scmp.eq.s32.totalorder %s23, 1
    %p146 = por %p144, %p145
    %p147 = scmp.ne.s32.totalorder %s138, %s139
    %p148 = scmp.eq.s32.totalorder %s23, 0
    %p149 = por %p147, %p148
    %p150 = scmp.ne.s32.totalorder %s138, %s139
    %p151 = scmp.eq.s32.totalorder %s24, 1
    %p152 = por %p150, %p151
    %p154 = scmp.ne.s32.totalorder %s139, %s153
    %p155 = scmp.eq.s32.totalorder %s24, 0
    %p156 = por %p154, %p155
    %s158 = sadd.s32 %s157, 1
    %p161 = scmp.eq.s32.totalorder %s18, 1
    %p162 = scmp.ne.s32.totalorder %s157, %s159
    %p163 = scmp.eq.s32.totalorder %s18, 0
    %p164 = por %p162, %p163
    %p165 = scmp.ne.s32.totalorder %s157, %s159
    %p166 = scmp.eq.s32.totalorder %s23, 1
    %p167 = por %p165, %p166
    %p168 = scmp.ne.s32.totalorder %s159, %s160
    %p169 = scmp.eq.s32.totalorder %s23, 0
    %p170 = por %p168, %p169
    %p171 = scmp.ne.s32.totalorder %s159, %s160
    %p172 = scmp.eq.s32.totalorder %s24, 1
    %p173 = por %p171, %p172
    %p175 = scmp.ne.s32.totalorder %s160, %s174
    %p176 = scmp.eq.s32.totalorder %s24, 0
    %p177 = por %p175, %p176
    %s179 = sadd.s32 %s178, 1
    %p182 = scmp.eq.s32.totalorder %s18, 1
    %p183 = scmp.ne.s32.totalorder %s178, %s180
    %p184 = scmp.eq.s32.totalorder %s18, 0
    %p185 = por %p183, %p184
    %p186 = scmp.ne.s32.totalorder %s178, %s180
    %p187 = scmp.eq.s32.totalorder %s23, 1
    %p188 = por %p186, %p187
    %p189 = scmp.ne.s32.totalorder %s180, %s181
    %p190 = scmp.eq.s32.totalorder %s23, 0
    %p191 = por %p189, %p190
    %p192 = scmp.ne.s32.totalorder %s180, %s181
    %p193 = scmp.eq.s32.totalorder %s24, 1
    %p194 = por %p192, %p193
    %p196 = scmp.ne.s32.totalorder %s181, %s195
    %p197 = scmp.eq.s32.totalorder %s24, 0
    %p198 = por %p196, %p197
    %s200 = sadd.s32 %s199, 1
    %p203 = scmp.eq.s32.totalorder %s18, 1
    %p204 = scmp.ne.s32.totalorder %s199, %s201
    %p205 = scmp.eq.s32.totalorder %s18, 0
    %p206 = por %p204, %p205
    %p207 = scmp.ne.s32.totalorder %s199, %s201
    %p208 = scmp.eq.s32.totalorder %s23, 1
    %p209 = por %p207, %p208
    %p210 = scmp.ne.s32.totalorder %s201, %s202
    %p211 = scmp.eq.s32.totalorder %s23, 0
    %p212 = por %p210, %p211
    %p213 = scmp.ne.s32.totalorder %s201, %s202
    %p214 = scmp.eq.s32.totalorder %s24, 1
    %p215 = por %p213, %p214
    %p217 = scmp.ne.s32.totalorder %s202, %s216
    %p218 = scmp.eq.s32.totalorder %s24, 0
    %p219 = por %p217, %p218
    %s221 = sadd.s32 %s220, 1
    %p224 = scmp.eq.s32.totalorder %s18, 1
    %p225 = scmp.ne.s32.totalorder %s220, %s222
    %p226 = scmp.eq.s32.totalorder %s18, 0
    %p227 = por %p225, %p226
    %p228 = scmp.ne.s32.totalorder %s220, %s222
    %p229 = scmp.eq.s32.totalorder %s23, 1
    %p230 = por %p228, %p229
    %p231 = scmp.ne.s32.totalorder %s222, %s223
    %p232 = scmp.eq.s32.totalorder %s23, 0
    %p233 = por %p231, %p232
    %p234 = scmp.ne.s32.totalorder %s222, %s223
    %p235 = scmp.eq.s32.totalorder %s24, 1
    %p236 = por %p234, %p235
    %p238 = scmp.ne.s32.totalorder %s223, %s237
    %p239 = scmp.eq.s32.totalorder %s24, 0
    %p240 = por %p238, %p239
    %s242 = sadd.s32 %s241, 1
    %p245 = scmp.eq.s32.totalorder %s18, 1
    %p246 = scmp.ne.s32.totalorder %s241, %s243
    %p247 = scmp.eq.s32.totalorder %s18, 0
    %p248 = por %p246, %p247
    %p249 = scmp.ne.s32.totalorder %s241, %s243
    %p250 = scmp.eq.s32.totalorder %s23, 1
    %p251 = por %p249, %p250
    %p252 = scmp.ne.s32.totalorder %s243, %s244
    %p253 = scmp.eq.s32.totalorder %s23, 0
    %p254 = por %p252, %p253
    %p255 = scmp.ne.s32.totalorder %s243, %s244
    %p256 = scmp.eq.s32.totalorder %s24, 1
    %p257 = por %p255, %p256
    %p259 = scmp.ne.s32.totalorder %s244, %s258
    %p260 = scmp.eq.s32.totalorder %s24, 0
    %p261 = por %p259, %p260
    %s263 = sadd.s32 %s262, 1
    %p266 = scmp.eq.s32.totalorder %s18, 1
    %p267 = scmp.ne.s32.totalorder %s262, %s264
    %p268 = scmp.eq.s32.totalorder %s18, 0
    %p269 = por %p267, %p268
    %p270 = scmp.ne.s32.totalorder %s262, %s264
    %p271 = scmp.eq.s32.totalorder %s23, 1
    %p272 = por %p270, %p271
    %p273 = scmp.ne.s32.totalorder %s264, %s265
    %p274 = scmp.eq.s32.totalorder %s23, 0
    %p275 = por %p273, %p274
    %p276 = scmp.ne.s32.totalorder %s264, %s265
    %p277 = scmp.eq.s32.totalorder %s24, 1
    %p278 = por %p276, %p277
    %p280 = scmp.ne.s32.totalorder %s265, %s279
    %p281 = scmp.eq.s32.totalorder %s24, 0
    %p282 = por %p280, %p281
    %s283 = ssub.s32 %s18, %s25
    %p284 = scmp.eq.s32.totalorder %s283, 0
    %s286 = sadd.s32 %s285, 1
    %s287 = scalar_select %p284, %s285, %s286
    %p290 = pneg %p284
    %p291 = scmp.eq.s32.totalorder %s18, 1
    %p292 = por %p290, %p291
    %p293 = scmp.ne.s32.totalorder %s285, %s288
    %p294 = scmp.eq.s32.totalorder %s18, 0
    %p295 = por %p293, %p294
    %p296 = scmp.ne.s32.totalorder %s285, %s288
    %p297 = scmp.eq.s32.totalorder %s23, 1
    %p298 = por %p296, %p297
    %p299 = scmp.ne.s32.totalorder %s288, %s289
    %p300 = scmp.eq.s32.totalorder %s23, 0
    %p301 = por %p299, %p300
    %p302 = scmp.ne.s32.totalorder %s288, %s289
    %p303 = scmp.eq.s32.totalorder %s24, 1
    %p304 = por %p302, %p303
    %p306 = scmp.ne.s32.totalorder %s289, %s305
    %p307 = scmp.eq.s32.totalorder %s24, 0
    %p308 = por %p306, %p307
    %p309 = scmp.le.s32.totalorder 1, %s18
    %p310 = scmp.lt.s32.totalorder %s18, 3
    %p311 = pnand %p309, %p310
    %p312 = pneg %p311
    // Predicated region
    $region9: #{generator_forward.1} parent=5 // pred_check
      _
    $region10: #{generator_forward.1} parent=5 // pred_check_branch
      %314 = sbr.rel (%p311) target = $region12
    $region11: #{generator_forward.1} parent=5 // pred_region
      %s315 = ssub.s32 %s18, 1
      // Predicated region
      $region13: #{generator_forward.1} parent=11 // pred_check
        %p316 = pneg %p65
      $region14: #{generator_forward.1} parent=11 // pred_check_branch
        %318 = sbr.rel (%p316) target = $region16
      $region15: #{generator_forward.1} parent=11 // pred_region
        _
      $region16: #{generator_forward.1} parent=11 // pred_fallthru
        _
      // Predicated region
      $region17: #{generator_forward.1} parent=11 // pred_check
        %p319 = pneg %p86
      $region18: #{generator_forward.1} parent=11 // pred_check_branch
        %321 = sbr.rel (%p319) target = $region20
      $region19: #{generator_forward.1} parent=11 // pred_region
        _
      $region20: #{generator_forward.1} parent=11 // pred_fallthru
        _
      // Predicated region
      $region21: #{generator_forward.1} parent=11 // pred_check
        %p322 = pneg %p107
      $region22: #{generator_forward.1} parent=11 // pred_check_branch
        %324 = sbr.rel (%p322) target = $region24
      $region23: #{generator_forward.1} parent=11 // pred_region
        _
      $region24: #{generator_forward.1} parent=11 // pred_fallthru
        _
      // Predicated region
      $region25: #{generator_forward.1} parent=11 // pred_check
        %p325 = pneg %p128
      $region26: #{generator_forward.1} parent=11 // pred_check_branch
        %327 = sbr.rel (%p325) target = $region28
      $region27: #{generator_forward.1} parent=11 // pred_region
        _
      $region28: #{generator_forward.1} parent=11 // pred_fallthru
        _
      // Predicated region
      $region29: #{generator_forward.1} parent=11 // pred_check
        %p328 = pneg %p149
      $region30: #{generator_forward.1} parent=11 // pred_check_branch
        %330 = sbr.rel (%p328) target = $region32
      $region31: #{generator_forward.1} parent=11 // pred_region
        _
      $region32: #{generator_forward.1} parent=11 // pred_fallthru
        _
      // Predicated region
      $region33: #{generator_forward.1} parent=11 // pred_check
        %p331 = pneg %p170
      $region34: #{generator_forward.1} parent=11 // pred_check_branch
        %333 = sbr.rel (%p331) target = $region36
      $region35: #{generator_forward.1} parent=11 // pred_region
        _
      $region36: #{generator_forward.1} parent=11 // pred_fallthru
        _
      // Predicated region
      $region37: #{generator_forward.1} parent=11 // pred_check
        %p334 = pneg %p191
      $region38: #{generator_forward.1} parent=11 // pred_check_branch
        %336 = sbr.rel (%p334) target = $region40
      $region39: #{generator_forward.1} parent=11 // pred_region
        _
      $region40: #{generator_forward.1} parent=11 // pred_fallthru
        _
      // Predicated region
      $region41: #{generator_forward.1} parent=11 // pred_check
        %p337 = pneg %p212
      $region42: #{generator_forward.1} parent=11 // pred_check_branch
        %339 = sbr.rel (%p337) target = $region44
      $region43: #{generator_forward.1} parent=11 // pred_region
        _
      $region44: #{generator_forward.1} parent=11 // pred_fallthru
        _
      // Predicated region
      $region45: #{generator_forward.1} parent=11 // pred_check
        %p340 = pneg %p233
      $region46: #{generator_forward.1} parent=11 // pred_check_branch
        %342 = sbr.rel (%p340) target = $region48
      $region47: #{generator_forward.1} parent=11 // pred_region
        _
      $region48: #{generator_forward.1} parent=11 // pred_fallthru
        _
      // Predicated region
      $region49: #{generator_forward.1} parent=11 // pred_check
        %p343 = pneg %p254
      $region50: #{generator_forward.1} parent=11 // pred_check_branch
        %345 = sbr.rel (%p343) target = $region52
      $region51: #{generator_forward.1} parent=11 // pred_region
        _
      $region52: #{generator_forward.1} parent=11 // pred_fallthru
        _
      // Predicated region
      $region53: #{generator_forward.1} parent=11 // pred_check
        %p346 = pneg %p275
      $region54: #{generator_forward.1} parent=11 // pred_check_branch
        %348 = sbr.rel (%p346) target = $region56
      $region55: #{generator_forward.1} parent=11 // pred_region
        _
      $region56: #{generator_forward.1} parent=11 // pred_fallthru
        _
    $region12: #{generator_forward.1} parent=5 // pred_fallthru
      _
    %p349 = scmp.lt.s32.totalorder %s18, 2
    // Predicated region
    $region57: #{generator_forward.1} parent=5 // pred_check
      %p350 = pneg %p349
    $region58: #{generator_forward.1} parent=5 // pred_check_branch
      %352 = sbr.rel (%p350) target = $region60
    $region59: #{generator_forward.1} parent=5 // pred_region
      // Predicated region
      $region61: #{generator_forward.1} parent=59 // pred_check
        %p353 = pneg %p38
      $region62: #{generator_forward.1} parent=59 // pred_check_branch
        %355 = sbr.rel (%p353) target = $region64
      $region63: #{generator_forward.1} parent=59 // pred_region
        %p356 = scmp.lt.s32.totalorder %s18, 1
        %s357 = scalar_select %p356, %s18, 1
        %s358 = smul.addr %s357, 2
        %s359 = smul.addr %s358, 4
        %s360 = scalar_lea.vmem %s0, %s359
      $region64: #{generator_forward.1} parent=59 // pred_fallthru
        _
    $region60: #{generator_forward.1} parent=5 // pred_fallthru
      _
    %p361 = scmp.le.s32.totalorder 1, %s18
    %p362 = scmp.lt.s32.totalorder %s18, 3
    %p363 = pnand %p361, %p362
    %p364 = pneg %p363
    // Predicated region
    $region65: #{generator_forward.1} parent=5 // pred_check
      _
    $region66: #{generator_forward.1} parent=5 // pred_check_branch
      %366 = sbr.rel (%p363) target = $region68
    $region67: #{generator_forward.1} parent=5 // pred_region
      %s367 = ssub.s32 %s18, 1
      %p368 = scmp.lt.s32.totalorder %s23, 1
      %s369 = scalar_select %p368, %s23, 1
      %s370 = smul.addr %s369, 2
      %s371 = smul.addr %s370, 4
      %s372 = scalar_lea.vmem %s0, %s371
      %p373 = pneg %p44
      %p374 = pneg %p41
      %p375 = pneg %p65
      %p376 = pneg %p62
      %p377 = pneg %p86
      %p378 = pneg %p83
      %p379 = pneg %p107
      %p380 = pneg %p104
      %p381 = pneg %p128
      %p382 = pneg %p125
      %p383 = pneg %p149
      %p384 = pneg %p146
      %p385 = pneg %p170
      %p386 = pneg %p167
      %p387 = pneg %p191
      %p388 = pneg %p188
      %p389 = pneg %p212
      %p390 = pneg %p209
      %p391 = pneg %p233
      %p392 = pneg %p230
      %p393 = pneg %p254
      %p394 = pneg %p251
      %p395 = pneg %p275
      %p396 = pneg %p272
      %p397 = pneg %p301
      %p398 = pneg %p298
      %p399 = scmp.lt.s32.totalorder %s23, 1
      %s400 = scalar_select %p399, %s23, 1
      %s401 = smul.addr %s400, 4
      %s402 = smul.addr %s401, 8
      %s403 = scalar_lea.vmem %s12, %s402
      %p404 = scmp.lt.s32.totalorder %s23, 1
      %s405 = scalar_select %p404, %s23, 1
      %s406 = smul.addr %s405, 2
      %s407 = smul.addr %s406, 4
      %s408 = scalar_lea.vmem %s0, %s407
      %p409 = scmp.lt.s32.totalorder %s23, 1
      %s410 = scalar_select %p409, %s23, 1
      %s411 = smul.addr %s410, 4
      %s412 = smul.addr %s411, 8
      %s413 = scalar_lea.vmem %s12, %s412
      %v415 = vld [vmem:[%s408] sm:$0xff]
      %v416 = vld [vmem:[%s1] sm:$0xff]
      %v417 = vld [vmem:[%s1 + $0x8] sm:$0xff]
      %v418 = vld [vmem:[%s1 + $0x10] sm:$0xff]
      %v419 = vld [vmem:[%s1 + $0x18] sm:$0xff]
      %v420 = vld [vmem:[%s1 + $0x20] sm:$0xff]
      %v421 = vld [vmem:[%s1 + $0x28] sm:$0xff]
      %v422 = vld [vmem:[%s1 + $0x30] sm:$0xff]
      %v423 = vld [vmem:[%s1 + $0x38] sm:$0xff]
      %v424 = vld [vmem:[%s1 + $0x40] sm:$0xff]
      %v425 = vld [vmem:[%s1 + $0x48] sm:$0xff]
      %v426 = vld [vmem:[%s1 + $0x50] sm:$0xff]
      %v427 = vld [vmem:[%s1 + $0x58] sm:$0xff]
      %v428 = vld [vmem:[%s1 + $0x60] sm:$0xff]
      %v429 = vld [vmem:[%s1 + $0x68] sm:$0xff]
      %v430 = vld [vmem:[%s1 + $0x70] sm:$0xff]
      %v431 = vld [vmem:[%s1 + $0x78] sm:$0xff]
      %v432 = vld [vmem:[%s1 + $0x80] sm:$0xff]
      %v433 = vld [vmem:[%s1 + $0x88] sm:$0xff]
      %v434 = vld [vmem:[%s1 + $0x90] sm:$0xff]
      %v435 = vld [vmem:[%s1 + $0x98] sm:$0xff]
      %v436 = vld [vmem:[%s1 + $0xa0] sm:$0xff]
      %v437 = vld [vmem:[%s1 + $0xa8] sm:$0xff]
      %v438 = vld [vmem:[%s1 + $0xb0] sm:$0xff]
      %v439 = vld [vmem:[%s1 + $0xb8] sm:$0xff]
      %v440 = vld [vmem:[%s1 + $0xc0] sm:$0xff]
      %v441 = vld [vmem:[%s1 + $0xc8] sm:$0xff]
      %v442 = vld [vmem:[%s1 + $0xd0] sm:$0xff]
      %v443 = vld [vmem:[%s1 + $0xd8] sm:$0xff]
      %v444 = vld [vmem:[%s1 + $0xe0] sm:$0xff]
      %v445 = vld [vmem:[%s1 + $0xe8] sm:$0xff]
      %v446 = vld [vmem:[%s1 + $0xf0] sm:$0xff]
      %v447 = vld [vmem:[%s1 + $0xf8] sm:$0xff]
      %v448 = vld [vmem:[%s1 + $0x100] sm:$0xff]
      %v449 = vld [vmem:[%s1 + $0x108] sm:$0xff]
      %v450 = vld [vmem:[%s1 + $0x110] sm:$0xff]
      %v451 = vld [vmem:[%s1 + $0x118] sm:$0xff]
      %v452 = vld [vmem:[%s1 + $0x120] sm:$0xff]
      %v453 = vld [vmem:[%s1 + $0x128] sm:$0xff]
      %v454 = vld [vmem:[%s1 + $0x130] sm:$0xff]
      %v455 = vld [vmem:[%s1 + $0x138] sm:$0xff]
      %v456 = vld [vmem:[%s1 + $0x140] sm:$0xff]
      %v457 = vld [vmem:[%s1 + $0x148] sm:$0xff]
      %v458 = vld [vmem:[%s1 + $0x150] sm:$0xff]
      %v459 = vld [vmem:[%s1 + $0x158] sm:$0xff]
      %v460 = vld [vmem:[%s1 + $0x160] sm:$0xff]
      %v461 = vld [vmem:[%s1 + $0x168] sm:$0xff]
      %v462 = vld [vmem:[%s1 + $0x170] sm:$0xff]
      %v463 = vld [vmem:[%s1 + $0x178] sm:$0xff]
      %v464 = vld [vmem:[%s1 + $0x180] sm:$0xff]
      %v465 = vld [vmem:[%s1 + $0x188] sm:$0xff]
      %v466 = vld [vmem:[%s1 + $0x190] sm:$0xff]
      %v467 = vld [vmem:[%s1 + $0x198] sm:$0xff]
      %v468 = vld [vmem:[%s1 + $0x1a0] sm:$0xff]
      %v469 = vld [vmem:[%s1 + $0x1a8] sm:$0xff]
      %v470 = vld [vmem:[%s1 + $0x1b0] sm:$0xff]
      %v471 = vld [vmem:[%s1 + $0x1b8] sm:$0xff]
      %v472 = vld [vmem:[%s2] sm:$0x7f]
      %v473 = vld [vmem:[%s2 + $0x8] sm:$0x7f]
      %v474 = vld [vmem:[%s2 + $0x10] sm:$0x7f]
      %v475 = vld [vmem:[%s2 + $0x18] sm:$0x7f]
      %v477 = vunpack.c.l.b16 %v415
      %v478 = vunpack.c.h.b16 %v415
      %v479 = vpack.c.b16 %v477, %v477
      %v480 = vpack.c.b16 %v478, %v478
      %v538 = vunpack.c.l.b16 %v416
      %v539 = vunpack.c.h.b16 %v416
      %v540 = vunpack.c.l.b16 %v417
      %v541 = vunpack.c.h.b16 %v417
      %v542 = vunpack.c.l.b16 %v418
      %v543 = vunpack.c.h.b16 %v418
      %v544 = vunpack.c.l.b16 %v419
      %v545 = vunpack.c.h.b16 %v419
      %v546 = vunpack.c.l.b16 %v420
      %v547 = vunpack.c.h.b16 %v420
      %v548 = vunpack.c.l.b16 %v421
      %v549 = vunpack.c.h.b16 %v421
      %v550 = vunpack.c.l.b16 %v422
      %v551 = vunpack.c.h.b16 %v422
      %v552 = vunpack.c.l.b16 %v423
      %v553 = vunpack.c.h.b16 %v423
      %v554 = vunpack.c.l.b16 %v424
      %v555 = vunpack.c.h.b16 %v424
      %v556 = vunpack.c.l.b16 %v425
      %v557 = vunpack.c.h.b16 %v425
      %v558 = vunpack.c.l.b16 %v426
      %v559 = vunpack.c.h.b16 %v426
      %v560 = vunpack.c.l.b16 %v427
      %v561 = vunpack.c.h.b16 %v427
      %v562 = vunpack.c.l.b16 %v428
      %v563 = vunpack.c.h.b16 %v428
      %v564 = vunpack.c.l.b16 %v429
      %v565 = vunpack.c.h.b16 %v429
      %v566 = vunpack.c.l.b16 %v430
      %v567 = vunpack.c.h.b16 %v430
      %v568 = vunpack.c.l.b16 %v431
      %v569 = vunpack.c.h.b16 %v431
      %v570 = vunpack.c.l.b16 %v432
      %v571 = vunpack.c.h.b16 %v432
      %v572 = vunpack.c.l.b16 %v433
      %v573 = vunpack.c.h.b16 %v433
      %v574 = vunpack.c.l.b16 %v434
      %v575 = vunpack.c.h.b16 %v434
      %v576 = vunpack.c.l.b16 %v435
      %v577 = vunpack.c.h.b16 %v435
      %v578 = vunpack.c.l.b16 %v436
      %v579 = vunpack.c.h.b16 %v436
      %v580 = vunpack.c.l.b16 %v437
      %v581 = vunpack.c.h.b16 %v437
      %v582 = vunpack.c.l.b16 %v438
      %v583 = vunpack.c.h.b16 %v438
      %v584 = vunpack.c.l.b16 %v439
      %v585 = vunpack.c.h.b16 %v439
      %v586 = vunpack.c.l.b16 %v440
      %v587 = vunpack.c.h.b16 %v440
      %v588 = vunpack.c.l.b16 %v441
      %v589 = vunpack.c.h.b16 %v441
      %v590 = vunpack.c.l.b16 %v442
      %v591 = vunpack.c.h.b16 %v442
      %v592 = vunpack.c.l.b16 %v443
      %v593 = vunpack.c.h.b16 %v443
      %v594 = vunpack.c.l.b16 %v444
      %v595 = vunpack.c.h.b16 %v444
      %v596 = vunpack.c.l.b16 %v445
      %v597 = vunpack.c.h.b16 %v445
      %v598 = vunpack.c.l.b16 %v446
      %v599 = vunpack.c.h.b16 %v446
      %v600 = vunpack.c.l.b16 %v447
      %v601 = vunpack.c.h.b16 %v447
      %v602 = vunpack.c.l.b16 %v448
      %v603 = vunpack.c.h.b16 %v448
      %v604 = vunpack.c.l.b16 %v449
      %v605 = vunpack.c.h.b16 %v449
      %v606 = vunpack.c.l.b16 %v450
      %v607 = vunpack.c.h.b16 %v450
      %v608 = vunpack.c.l.b16 %v451
      %v609 = vunpack.c.h.b16 %v451
      %v610 = vunpack.c.l.b16 %v452
      %v611 = vunpack.c.h.b16 %v452
      %v612 = vunpack.c.l.b16 %v453
      %v613 = vunpack.c.h.b16 %v453
      %v614 = vunpack.c.l.b16 %v454
      %v615 = vunpack.c.h.b16 %v454
      %v616 = vunpack.c.l.b16 %v455
      %v617 = vunpack.c.h.b16 %v455
      %v618 = vunpack.c.l.b16 %v456
      %v619 = vunpack.c.h.b16 %v456
      %v620 = vunpack.c.l.b16 %v457
      %v621 = vunpack.c.h.b16 %v457
      %v622 = vunpack.c.l.b16 %v458
      %v623 = vunpack.c.h.b16 %v458
      %v624 = vunpack.c.l.b16 %v459
      %v625 = vunpack.c.h.b16 %v459
      %v626 = vunpack.c.l.b16 %v460
      %v627 = vunpack.c.h.b16 %v460
      %v628 = vunpack.c.l.b16 %v461
      %v629 = vunpack.c.h.b16 %v461
      %v630 = vunpack.c.l.b16 %v462
      %v631 = vunpack.c.h.b16 %v462
      %v632 = vunpack.c.l.b16 %v463
      %v633 = vunpack.c.h.b16 %v463
      %v634 = vunpack.c.l.b16 %v464
      %v635 = vunpack.c.h.b16 %v464
      %v636 = vunpack.c.l.b16 %v465
      %v637 = vunpack.c.h.b16 %v465
      %v638 = vunpack.c.l.b16 %v466
      %v639 = vunpack.c.h.b16 %v466
      %v640 = vunpack.c.l.b16 %v467
      %v641 = vunpack.c.h.b16 %v467
      %v642 = vunpack.c.l.b16 %v468
      %v643 = vunpack.c.h.b16 %v468
      %v644 = vunpack.c.l.b16 %v469
      %v645 = vunpack.c.h.b16 %v469
      %v646 = vunpack.c.l.b16 %v470
      %v647 = vunpack.c.h.b16 %v470
      %v648 = vunpack.c.l.b16 %v471
      %v649 = vunpack.c.h.b16 %v471
      %v650 = vpack.c.b16 %v542, %v538
      %v651 = vpack.c.b16 %v543, %v539
      %v652 = vpack.c.b16 %v544, %v540
      %v653 = vpack.c.b16 %v545, %v541
      %v654 = vpack.c.b16 %v550, %v546
      %v655 = vpack.c.b16 %v551, %v547
      %v656 = vpack.c.b16 %v552, %v548
      %v657 = vpack.c.b16 %v553, %v549
      %v658 = vpack.c.b16 %v558, %v554
      %v659 = vpack.c.b16 %v559, %v555
      %v660 = vpack.c.b16 %v560, %v556
      %v661 = vpack.c.b16 %v561, %v557
      %v662 = vpack.c.b16 %v566, %v562
      %v663 = vpack.c.b16 %v567, %v563
      %v664 = vpack.c.b16 %v568, %v564
      %v665 = vpack.c.b16 %v569, %v565
      %v666 = vpack.c.b16 %v574, %v570
      %v667 = vpack.c.b16 %v575, %v571
      %v668 = vpack.c.b16 %v576, %v572
      %v669 = vpack.c.b16 %v577, %v573
      %v670 = vpack.c.b16 %v582, %v578
      %v671 = vpack.c.b16 %v583, %v579
      %v672 = vpack.c.b16 %v584, %v580
      %v673 = vpack.c.b16 %v585, %v581
      %v674 = vpack.c.b16 %v590, %v586
      %v675 = vpack.c.b16 %v591, %v587
      %v676 = vpack.c.b16 %v592, %v588
      %v677 = vpack.c.b16 %v593, %v589
      %v678 = vpack.c.b16 %v598, %v594
      %v679 = vpack.c.b16 %v599, %v595
      %v680 = vpack.c.b16 %v600, %v596
      %v681 = vpack.c.b16 %v601, %v597
      %v682 = vpack.c.b16 %v606, %v602
      %v683 = vpack.c.b16 %v607, %v603
      %v684 = vpack.c.b16 %v608, %v604
      %v685 = vpack.c.b16 %v609, %v605
      %v686 = vpack.c.b16 %v614, %v610
      %v687 = vpack.c.b16 %v615, %v611
      %v688 = vpack.c.b16 %v616, %v612
      %v689 = vpack.c.b16 %v617, %v613
      %v690 = vpack.c.b16 %v622, %v618
      %v691 = vpack.c.b16 %v623, %v619
      %v692 = vpack.c.b16 %v624, %v620
      %v693 = vpack.c.b16 %v625, %v621
      %v694 = vpack.c.b16 %v630, %v626
      %v695 = vpack.c.b16 %v631, %v627
      %v696 = vpack.c.b16 %v632, %v628
      %v697 = vpack.c.b16 %v633, %v629
      %v698 = vpack.c.b16 %v638, %v634
      %v699 = vpack.c.b16 %v639, %v635
      %v700 = vpack.c.b16 %v640, %v636
      %v701 = vpack.c.b16 %v641, %v637
      %v702 = vpack.c.b16 %v646, %v642
      %v703 = vpack.c.b16 %v647, %v643
      %v704 = vpack.c.b16 %v648, %v644
      %v705 = vpack.c.b16 %v649, %v645
      %vm762 = vcmask 785408
      %v764 = vsel %vm762, %v480, 0
      %766 = vmatpush.bf16.msra.mxu0 %v678
      %767 = vmatpush.bf16.msra.mxu0 %v674
      %768 = vmatpush.bf16.msra.mxu0 %v670
      %769 = vmatpush.bf16.msra.mxu0 %v666
      %770 = vmatpush.bf16.msra.mxu0 %v662
      %771 = vmatpush.bf16.msra.mxu0 %v658
      %772 = vmatpush.bf16.msra.mxu0 %v654
      %773 = vmatpush.bf16.msra.mxu0 %v650
      %774 = vmatmul.bf16.gmra.mxu0 %v479
      %v775 = vpop.f32.mrf.mxu0
      %v776 = vadd.f32 %v472, %v775
      %v777 = vpop.f32.mrf.mxu0
      %778 = vdwg.mxu0
      %779 = vmatpush.bf16.msra.mxu0 0
      %780 = vmatpush.bf16.msra.mxu0 0
      %781 = vmatpush.bf16.msra.mxu0 %v702
      %782 = vmatpush.bf16.msra.mxu0 %v698
      %783 = vmatpush.bf16.msra.mxu0 %v694
      %784 = vmatpush.bf16.msra.mxu0 %v690
      %785 = vmatpush.bf16.msra.mxu0 %v686
      %786 = vmatpush.bf16.msra.mxu0 %v682
      %787 = vmatmul.bf16.gmra.mxu0 %v764
      %v788 = vpop.f32.mrf.mxu0
      %v789 = vadd.f32 %v776, %v788
      %v790 = vpop.f32.mrf.mxu0
      %791 = vdwg.mxu0
      %792 = vmatpush.bf16.msra.mxu0 %v679
      %793 = vmatpush.bf16.msra.mxu0 %v675
      %794 = vmatpush.bf16.msra.mxu0 %v671
      %795 = vmatpush.bf16.msra.mxu0 %v667
      %796 = vmatpush.bf16.msra.mxu0 %v663
      %797 = vmatpush.bf16.msra.mxu0 %v659
      %798 = vmatpush.bf16.msra.mxu0 %v655
      %799 = vmatpush.bf16.msra.mxu0 %v651
      %800 = vmatmul.bf16.gmra.mxu0 %v479
      %v801 = vpop.f32.mrf.mxu0
      %v802 = vadd.f32 %v473, %v801
      %v803 = vpop.f32.mrf.mxu0
      %804 = vdwg.mxu0
      %805 = vmatpush.bf16.msra.mxu0 0
      %806 = vmatpush.bf16.msra.mxu0 0
      %807 = vmatpush.bf16.msra.mxu0 %v703
      %808 = vmatpush.bf16.msra.mxu0 %v699
      %809 = vmatpush.bf16.msra.mxu0 %v695
      %810 = vmatpush.bf16.msra.mxu0 %v691
      %811 = vmatpush.bf16.msra.mxu0 %v687
      %812 = vmatpush.bf16.msra.mxu0 %v683
      %813 = vmatmul.bf16.gmra.mxu0 %v764
      %v814 = vpop.f32.mrf.mxu0
      %v815 = vadd.f32 %v802, %v814
      %v816 = vpop.f32.mrf.mxu0
      %817 = vdwg.mxu0
      %818 = vmatpush.bf16.msra.mxu0 %v680
      %819 = vmatpush.bf16.msra.mxu0 %v676
      %820 = vmatpush.bf16.msra.mxu0 %v672
      %821 = vmatpush.bf16.msra.mxu0 %v668
      %822 = vmatpush.bf16.msra.mxu0 %v664
      %823 = vmatpush.bf16.msra.mxu0 %v660
      %824 = vmatpush.bf16.msra.mxu0 %v656
      %825 = vmatpush.bf16.msra.mxu0 %v652
      %826 = vmatmul.bf16.gmra.mxu0 %v479
      %v827 = vpop.f32.mrf.mxu0
      %v828 = vadd.f32 %v474, %v827
      %v829 = vpop.f32.mrf.mxu0
      %830 = vdwg.mxu0
      %831 = vmatpush.bf16.msra.mxu0 0
      %832 = vmatpush.bf16.msra.mxu0 0
      %833 = vmatpush.bf16.msra.mxu0 %v704
      %834 = vmatpush.bf16.msra.mxu0 %v700
      %835 = vmatpush.bf16.msra.mxu0 %v696
      %836 = vmatpush.bf16.msra.mxu0 %v692
      %837 = vmatpush.bf16.msra.mxu0 %v688
      %838 = vmatpush.bf16.msra.mxu0 %v684
      %839 = vmatmul.bf16.gmra.mxu0 %v764
      %v840 = vpop.f32.mrf.mxu0
      %v841 = vadd.f32 %v828, %v840
      %v842 = vpop.f32.mrf.mxu0
      %843 = vdwg.mxu0
      %844 = vmatpush.bf16.msra.mxu0 %v681
      %845 = vmatpush.bf16.msra.mxu0 %v677
      %846 = vmatpush.bf16.msra.mxu0 %v673
      %847 = vmatpush.bf16.msra.mxu0 %v669
      %848 = vmatpush.bf16.msra.mxu0 %v665
      %849 = vmatpush.bf16.msra.mxu0 %v661
      %850 = vmatpush.bf16.msra.mxu0 %v657
      %851 = vmatpush.bf16.msra.mxu0 %v653
      %852 = vmatmul.bf16.gmra.mxu0 %v479
      %v853 = vpop.f32.mrf.mxu0
      %v854 = vadd.f32 %v475, %v853
      %v855 = vpop.f32.mrf.mxu0
      %856 = vdwg.mxu0
      %857 = vmatpush.bf16.msra.mxu0 0
      %858 = vmatpush.bf16.msra.mxu0 0
      %859 = vmatpush.bf16.msra.mxu0 %v705
      %860 = vmatpush.bf16.msra.mxu0 %v701
      %861 = vmatpush.bf16.msra.mxu0 %v697
      %862 = vmatpush.bf16.msra.mxu0 %v693
      %863 = vmatpush.bf16.msra.mxu0 %v689
      %864 = vmatpush.bf16.msra.mxu0 %v685
      %865 = vmatmul.bf16.gmra.mxu0 %v764
      %v866 = vpop.f32.mrf.mxu0
      %v867 = vadd.f32 %v854, %v866
      %v868 = vpop.f32.mrf.mxu0
      %869 = vdwg.mxu0
      %v870 = vmax.f32 %v789, 0.0
      %v871 = vmax.f32 %v815, 0.0
      %v872 = vmax.f32 %v841, 0.0
      %v873 = vmax.f32 %v867, 0.0
      %v874 = vpack.c.bf16 %v870, %v870
      %v875 = vpack.c.bf16 %v871, %v871
      %v876 = vpack.c.bf16 %v872, %v872
      %v877 = vpack.c.bf16 %v873, %v873
      %v878 = vld [vmem:[%s3] sm:$0xff]
      %v879 = vld [vmem:[%s3 + $0x8] sm:$0xff]
      %v880 = vld [vmem:[%s3 + $0x10] sm:$0xff]
      %v881 = vld [vmem:[%s3 + $0x18] sm:$0xff]
      %v882 = vld [vmem:[%s3 + $0x20] sm:$0xff]
      %v883 = vld [vmem:[%s3 + $0x28] sm:$0xff]
      %v884 = vld [vmem:[%s3 + $0x30] sm:$0xff]
      %v885 = vld [vmem:[%s3 + $0x38] sm:$0xff]
      %v886 = vld [vmem:[%s3 + $0x40] sm:$0xff]
      %v887 = vld [vmem:[%s3 + $0x48] sm:$0xff]
      %v888 = vld [vmem:[%s3 + $0x50] sm:$0xff]
      %v889 = vld [vmem:[%s3 + $0x58] sm:$0xff]
      %v890 = vld [vmem:[%s3 + $0x60] sm:$0xff]
      %v891 = vld [vmem:[%s3 + $0x68] sm:$0xff]
      %v892 = vld [vmem:[%s3 + $0x70] sm:$0xff]
      %v893 = vld [vmem:[%s3 + $0x78] sm:$0xff]
      %v894 = vld [vmem:[%s3 + $0x80] sm:$0xff]
      %v895 = vld [vmem:[%s3 + $0x88] sm:$0xff]
      %v896 = vld [vmem:[%s3 + $0x90] sm:$0xff]
      %v897 = vld [vmem:[%s3 + $0x98] sm:$0xff]
      %v898 = vld [vmem:[%s3 + $0xa0] sm:$0xff]
      %v899 = vld [vmem:[%s3 + $0xa8] sm:$0xff]
      %v900 = vld [vmem:[%s3 + $0xb0] sm:$0xff]
      %v901 = vld [vmem:[%s3 + $0xb8] sm:$0xff]
      %v902 = vld [vmem:[%s3 + $0xc0] sm:$0xff]
      %v903 = vld [vmem:[%s3 + $0xc8] sm:$0xff]
      %v904 = vld [vmem:[%s3 + $0xd0] sm:$0xff]
      %v905 = vld [vmem:[%s3 + $0xd8] sm:$0xff]
      %v906 = vld [vmem:[%s3 + $0xe0] sm:$0xff]
      %v907 = vld [vmem:[%s3 + $0xe8] sm:$0xff]
      %v908 = vld [vmem:[%s3 + $0xf0] sm:$0xff]
      %v909 = vld [vmem:[%s3 + $0xf8] sm:$0xff]
      %v910 = vld [vmem:[%s3 + $0x100] sm:$0xff]
      %v911 = vld [vmem:[%s3 + $0x108] sm:$0xff]
      %v912 = vld [vmem:[%s3 + $0x110] sm:$0xff]
      %v913 = vld [vmem:[%s3 + $0x118] sm:$0xff]
      %v914 = vld [vmem:[%s3 + $0x120] sm:$0xff]
      %v915 = vld [vmem:[%s3 + $0x128] sm:$0xff]
      %v916 = vld [vmem:[%s3 + $0x130] sm:$0xff]
      %v917 = vld [vmem:[%s3 + $0x138] sm:$0xff]
      %v918 = vld [vmem:[%s3 + $0x140] sm:$0xff]
      %v919 = vld [vmem:[%s3 + $0x148] sm:$0xff]
      %v920 = vld [vmem:[%s3 + $0x150] sm:$0xff]
      %v921 = vld [vmem:[%s3 + $0x158] sm:$0xff]
      %v922 = vld [vmem:[%s3 + $0x160] sm:$0xff]
      %v923 = vld [vmem:[%s3 + $0x168] sm:$0xff]
      %v924 = vld [vmem:[%s3 + $0x170] sm:$0xff]
      %v925 = vld [vmem:[%s3 + $0x178] sm:$0xff]
      %v926 = vld [vmem:[%s3 + $0x180] sm:$0xff]
      %v927 = vld [vmem:[%s3 + $0x188] sm:$0xff]
      %v928 = vld [vmem:[%s3 + $0x190] sm:$0xff]
      %v929 = vld [vmem:[%s3 + $0x198] sm:$0xff]
      %v930 = vld [vmem:[%s3 + $0x1a0] sm:$0xff]
      %v931 = vld [vmem:[%s3 + $0x1a8] sm:$0xff]
      %v932 = vld [vmem:[%s3 + $0x1b0] sm:$0xff]
      %v933 = vld [vmem:[%s3 + $0x1b8] sm:$0xff]
      %v934 = vld [vmem:[%s3 + $0x1c0] sm:$0xff]
      %v935 = vld [vmem:[%s3 + $0x1c8] sm:$0xff]
      %v936 = vld [vmem:[%s3 + $0x1d0] sm:$0xff]
      %v937 = vld [vmem:[%s3 + $0x1d8] sm:$0xff]
      %v938 = vld [vmem:[%s3 + $0x1e0] sm:$0xff]
      %v939 = vld [vmem:[%s3 + $0x1e8] sm:$0xff]
      %v940 = vld [vmem:[%s3 + $0x1f0] sm:$0xff]
      %v941 = vld [vmem:[%s3 + $0x1f8] sm:$0xff]
      %v942 = vld [vmem:[%s3 + $0x200] sm:$0xff]
      %v943 = vld [vmem:[%s3 + $0x208] sm:$0xff]
      %v944 = vld [vmem:[%s3 + $0x210] sm:$0xff]
      %v945 = vld [vmem:[%s3 + $0x218] sm:$0xff]
      %v946 = vld [vmem:[%s3 + $0x220] sm:$0xff]
      %v947 = vld [vmem:[%s3 + $0x228] sm:$0xff]
      %v948 = vld [vmem:[%s3 + $0x230] sm:$0xff]
      %v949 = vld [vmem:[%s3 + $0x238] sm:$0xff]
      %v950 = vld [vmem:[%s3 + $0x240] sm:$0xff]
      %v951 = vld [vmem:[%s3 + $0x248] sm:$0xff]
      %v952 = vld [vmem:[%s3 + $0x250] sm:$0xff]
      %v953 = vld [vmem:[%s3 + $0x258] sm:$0xff]
      %v954 = vld [vmem:[%s3 + $0x260] sm:$0xff]
      %v955 = vld [vmem:[%s3 + $0x268] sm:$0xff]
      %v956 = vld [vmem:[%s3 + $0x270] sm:$0xff]
      %v957 = vld [vmem:[%s3 + $0x278] sm:$0xff]
      %v958 = vld [vmem:[%s3 + $0x280] sm:$0xff]
      %v959 = vld [vmem:[%s3 + $0x288] sm:$0xff]
      %v960 = vld [vmem:[%s3 + $0x290] sm:$0xff]
      %v961 = vld [vmem:[%s3 + $0x298] sm:$0xff]
      %v962 = vld [vmem:[%s3 + $0x2a0] sm:$0xff]
      %v963 = vld [vmem:[%s3 + $0x2a8] sm:$0xff]
      %v964 = vld [vmem:[%s3 + $0x2b0] sm:$0xff]
      %v965 = vld [vmem:[%s3 + $0x2b8] sm:$0xff]
      %v966 = vld [vmem:[%s3 + $0x2c0] sm:$0xff]
      %v967 = vld [vmem:[%s3 + $0x2c8] sm:$0xff]
      %v968 = vld [vmem:[%s3 + $0x2d0] sm:$0xff]
      %v969 = vld [vmem:[%s3 + $0x2d8] sm:$0xff]
      %v970 = vld [vmem:[%s3 + $0x2e0] sm:$0xff]
      %v971 = vld [vmem:[%s3 + $0x2e8] sm:$0xff]
      %v972 = vld [vmem:[%s3 + $0x2f0] sm:$0xff]
      %v973 = vld [vmem:[%s3 + $0x2f8] sm:$0xff]
      %v974 = vld [vmem:[%s3 + $0x300] sm:$0xff]
      %v975 = vld [vmem:[%s3 + $0x308] sm:$0xff]
      %v976 = vld [vmem:[%s3 + $0x310] sm:$0xff]
      %v977 = vld [vmem:[%s3 + $0x318] sm:$0xff]
      %v978 = vld [vmem:[%s3 + $0x320] sm:$0xff]
      %v979 = vld [vmem:[%s3 + $0x328] sm:$0xff]
      %v980 = vld [vmem:[%s3 + $0x330] sm:$0xff]
      %v981 = vld [vmem:[%s3 + $0x338] sm:$0xff]
      %v982 = vld [vmem:[%s3 + $0x340] sm:$0xff]
      %v983 = vld [vmem:[%s3 + $0x348] sm:$0xff]
      %v984 = vld [vmem:[%s3 + $0x350] sm:$0xff]
      %v985 = vld [vmem:[%s3 + $0x358] sm:$0xff]
      %v986 = vld [vmem:[%s3 + $0x360] sm:$0xff]
      %v987 = vld [vmem:[%s3 + $0x368] sm:$0xff]
      %v988 = vld [vmem:[%s3 + $0x370] sm:$0xff]
      %v989 = vld [vmem:[%s3 + $0x378] sm:$0xff]
      %v1102 = vunpack.c.l.b16 %v878
      %v1103 = vunpack.c.h.b16 %v878
      %v1104 = vunpack.c.l.b16 %v879
      %v1105 = vunpack.c.h.b16 %v879
      %v1106 = vunpack.c.l.b16 %v880
      %v1107 = vunpack.c.h.b16 %v880
      %v1108 = vunpack.c.l.b16 %v881
      %v1109 = vunpack.c.h.b16 %v881
      %v1110 = vunpack.c.l.b16 %v882
      %v1111 = vunpack.c.h.b16 %v882
      %v1112 = vunpack.c.l.b16 %v883
      %v1113 = vunpack.c.h.b16 %v883
      %v1114 = vunpack.c.l.b16 %v884
      %v1115 = vunpack.c.h.b16 %v884
      %v1116 = vunpack.c.l.b16 %v885
      %v1117 = vunpack.c.h.b16 %v885
      %v1118 = vunpack.c.l.b16 %v886
      %v1119 = vunpack.c.h.b16 %v886
      %v1120 = vunpack.c.l.b16 %v887
      %v1121 = vunpack.c.h.b16 %v887
      %v1122 = vunpack.c.l.b16 %v888
      %v1123 = vunpack.c.h.b16 %v888
      %v1124 = vunpack.c.l.b16 %v889
      %v1125 = vunpack.c.h.b16 %v889
      %v1126 = vunpack.c.l.b16 %v890
      %v1127 = vunpack.c.h.b16 %v890
      %v1128 = vunpack.c.l.b16 %v891
      %v1129 = vunpack.c.h.b16 %v891
      %v1130 = vunpack.c.l.b16 %v892
      %v1131 = vunpack.c.h.b16 %v892
      %v1132 = vunpack.c.l.b16 %v893
      %v1133 = vunpack.c.h.b16 %v893
      %v1134 = vunpack.c.l.b16 %v894
      %v1135 = vunpack.c.h.b16 %v894
      %v1136 = vunpack.c.l.b16 %v895
      %v1137 = vunpack.c.h.b16 %v895
      %v1138 = vunpack.c.l.b16 %v896
      %v1139 = vunpack.c.h.b16 %v896
      %v1140 = vunpack.c.l.b16 %v897
      %v1141 = vunpack.c.h.b16 %v897
      %v1142 = vunpack.c.l.b16 %v898
      %v1143 = vunpack.c.h.b16 %v898
      %v1144 = vunpack.c.l.b16 %v899
      %v1145 = vunpack.c.h.b16 %v899
      %v1146 = vunpack.c.l.b16 %v900
      %v1147 = vunpack.c.h.b16 %v900
      %v1148 = vunpack.c.l.b16 %v901
      %v1149 = vunpack.c.h.b16 %v901
      %v1150 = vunpack.c.l.b16 %v902
      %v1151 = vunpack.c.h.b16 %v902
      %v1152 = vunpack.c.l.b16 %v903
      %v1153 = vunpack.c.h.b16 %v903
      %v1154 = vunpack.c.l.b16 %v904
      %v1155 = vunpack.c.h.b16 %v904
      %v1156 = vunpack.c.l.b16 %v905
      %v1157 = vunpack.c.h.b16 %v905
      %v1158 = vunpack.c.l.b16 %v906
      %v1159 = vunpack.c.h.b16 %v906
      %v1160 = vunpack.c.l.b16 %v907
      %v1161 = vunpack.c.h.b16 %v907
      %v1162 = vunpack.c.l.b16 %v908
      %v1163 = vunpack.c.h.b16 %v908
      %v1164 = vunpack.c.l.b16 %v909
      %v1165 = vunpack.c.h.b16 %v909
      %v1166 = vunpack.c.l.b16 %v910
      %v1167 = vunpack.c.h.b16 %v910
      %v1168 = vunpack.c.l.b16 %v911
      %v1169 = vunpack.c.h.b16 %v911
      %v1170 = vunpack.c.l.b16 %v912
      %v1171 = vunpack.c.h.b16 %v912
      %v1172 = vunpack.c.l.b16 %v913
      %v1173 = vunpack.c.h.b16 %v913
      %v1174 = vunpack.c.l.b16 %v914
      %v1175 = vunpack.c.h.b16 %v914
      %v1176 = vunpack.c.l.b16 %v915
      %v1177 = vunpack.c.h.b16 %v915
      %v1178 = vunpack.c.l.b16 %v916
      %v1179 = vunpack.c.h.b16 %v916
      %v1180 = vunpack.c.l.b16 %v917
      %v1181 = vunpack.c.h.b16 %v917
      %v1182 = vunpack.c.l.b16 %v918
      %v1183 = vunpack.c.h.b16 %v918
      %v1184 = vunpack.c.l.b16 %v919
      %v1185 = vunpack.c.h.b16 %v919
      %v1186 = vunpack.c.l.b16 %v920
      %v1187 = vunpack.c.h.b16 %v920
      %v1188 = vunpack.c.l.b16 %v921
      %v1189 = vunpack.c.h.b16 %v921
      %v1190 = vunpack.c.l.b16 %v922
      %v1191 = vunpack.c.h.b16 %v922
      %v1192 = vunpack.c.l.b16 %v923
      %v1193 = vunpack.c.h.b16 %v923
      %v1194 = vunpack.c.l.b16 %v924
      %v1195 = vunpack.c.h.b16 %v924
      %v1196 = vunpack.c.l.b16 %v925
      %v1197 = vunpack.c.h.b16 %v925
      %v1198 = vunpack.c.l.b16 %v926
      %v1199 = vunpack.c.h.b16 %v926
      %v1200 = vunpack.c.l.b16 %v927
      %v1201 = vunpack.c.h.b16 %v927
      %v1202 = vunpack.c.l.b16 %v928
      %v1203 = vunpack.c.h.b16 %v928
      %v1204 = vunpack.c.l.b16 %v929
      %v1205 = vunpack.c.h.b16 %v929
      %v1206 = vunpack.c.l.b16 %v930
      %v1207 = vunpack.c.h.b16 %v930
      %v1208 = vunpack.c.l.b16 %v931
      %v1209 = vunpack.c.h.b16 %v931
      %v1210 = vunpack.c.l.b16 %v932
      %v1211 = vunpack.c.h.b16 %v932
      %v1212 = vunpack.c.l.b16 %v933
      %v1213 = vunpack.c.h.b16 %v933
      %v1214 = vunpack.c.l.b16 %v934
      %v1215 = vunpack.c.h.b16 %v934
      %v1216 = vunpack.c.l.b16 %v935
      %v1217 = vunpack.c.h.b16 %v935
      %v1218 = vunpack.c.l.b16 %v936
      %v1219 = vunpack.c.h.b16 %v936
      %v1220 = vunpack.c.l.b16 %v937
      %v1221 = vunpack.c.h.b16 %v937
      %v1222 = vunpack.c.l.b16 %v938
      %v1223 = vunpack.c.h.b16 %v938
      %v1224 = vunpack.c.l.b16 %v939
      %v1225 = vunpack.c.h.b16 %v939
      %v1226 = vunpack.c.l.b16 %v940
      %v1227 = vunpack.c.h.b16 %v940
      %v1228 = vunpack.c.l.b16 %v941
      %v1229 = vunpack.c.h.b16 %v941
      %v1230 = vunpack.c.l.b16 %v942
      %v1231 = vunpack.c.h.b16 %v942
      %v1232 = vunpack.c.l.b16 %v943
      %v1233 = vunpack.c.h.b16 %v943
      %v1234 = vunpack.c.l.b16 %v944
      %v1235 = vunpack.c.h.b16 %v944
      %v1236 = vunpack.c.l.b16 %v945
      %v1237 = vunpack.c.h.b16 %v945
      %v1238 = vunpack.c.l.b16 %v946
      %v1239 = vunpack.c.h.b16 %v946
      %v1240 = vunpack.c.l.b16 %v947
      %v1241 = vunpack.c.h.b16 %v947
      %v1242 = vunpack.c.l.b16 %v948
      %v1243 = vunpack.c.h.b16 %v948
      %v1244 = vunpack.c.l.b16 %v949
      %v1245 = vunpack.c.h.b16 %v949
      %v1246 = vunpack.c.l.b16 %v950
      %v1247 = vunpack.c.h.b16 %v950
      %v1248 = vunpack.c.l.b16 %v951
      %v1249 = vunpack.c.h.b16 %v951
      %v1250 = vunpack.c.l.b16 %v952
      %v1251 = vunpack.c.h.b16 %v952
      %v1252 = vunpack.c.l.b16 %v953
      %v1253 = vunpack.c.h.b16 %v953
      %v1254 = vunpack.c.l.b16 %v954
      %v1255 = vunpack.c.h.b16 %v954
      %v1256 = vunpack.c.l.b16 %v955
      %v1257 = vunpack.c.h.b16 %v955
      %v1258 = vunpack.c.l.b16 %v956
      %v1259 = vunpack.c.h.b16 %v956
      %v1260 = vunpack.c.l.b16 %v957
      %v1261 = vunpack.c.h.b16 %v957
      %v1262 = vunpack.c.l.b16 %v958
      %v1263 = vunpack.c.h.b16 %v958
      %v1264 = vunpack.c.l.b16 %v959
      %v1265 = vunpack.c.h.b16 %v959
      %v1266 = vunpack.c.l.b16 %v960
      %v1267 = vunpack.c.h.b16 %v960
      %v1268 = vunpack.c.l.b16 %v961
      %v1269 = vunpack.c.h.b16 %v961
      %v1270 = vunpack.c.l.b16 %v962
      %v1271 = vunpack.c.h.b16 %v962
      %v1272 = vunpack.c.l.b16 %v963
      %v1273 = vunpack.c.h.b16 %v963
      %v1274 = vunpack.c.l.b16 %v964
      %v1275 = vunpack.c.h.b16 %v964
      %v1276 = vunpack.c.l.b16 %v965
      %v1277 = vunpack.c.h.b16 %v965
      %v1278 = vunpack.c.l.b16 %v966
      %v1279 = vunpack.c.h.b16 %v966
      %v1280 = vunpack.c.l.b16 %v967
      %v1281 = vunpack.c.h.b16 %v967
      %v1282 = vunpack.c.l.b16 %v968
      %v1283 = vunpack.c.h.b16 %v968
      %v1284 = vunpack.c.l.b16 %v969
      %v1285 = vunpack.c.h.b16 %v969
      %v1286 = vunpack.c.l.b16 %v970
      %v1287 = vunpack.c.h.b16 %v970
      %v1288 = vunpack.c.l.b16 %v971
      %v1289 = vunpack.c.h.b16 %v971
      %v1290 = vunpack.c.l.b16 %v972
      %v1291 = vunpack.c.h.b16 %v972
      %v1292 = vunpack.c.l.b16 %v973
      %v1293 = vunpack.c.h.b16 %v973
      %v1294 = vunpack.c.l.b16 %v974
      %v1295 = vunpack.c.h.b16 %v974
      %v1296 = vunpack.c.l.b16 %v975
      %v1297 = vunpack.c.h.b16 %v975
      %v1298 = vunpack.c.l.b16 %v976
      %v1299 = vunpack.c.h.b16 %v976
      %v1300 = vunpack.c.l.b16 %v977
      %v1301 = vunpack.c.h.b16 %v977
      %v1302 = vunpack.c.l.b16 %v978
      %v1303 = vunpack.c.h.b16 %v978
      %v1304 = vunpack.c.l.b16 %v979
      %v1305 = vunpack.c.h.b16 %v979
      %v1306 = vunpack.c.l.b16 %v980
      %v1307 = vunpack.c.h.b16 %v980
      %v1308 = vunpack.c.l.b16 %v981
      %v1309 = vunpack.c.h.b16 %v981
      %v1310 = vunpack.c.l.b16 %v982
      %v1311 = vunpack.c.h.b16 %v982
      %v1312 = vunpack.c.l.b16 %v983
      %v1313 = vunpack.c.h.b16 %v983
      %v1314 = vunpack.c.l.b16 %v984
      %v1315 = vunpack.c.h.b16 %v984
      %v1316 = vunpack.c.l.b16 %v985
      %v1317 = vunpack.c.h.b16 %v985
      %v1318 = vunpack.c.l.b16 %v986
      %v1319 = vunpack.c.h.b16 %v986
      %v1320 = vunpack.c.l.b16 %v987
      %v1321 = vunpack.c.h.b16 %v987
      %v1322 = vunpack.c.l.b16 %v988
      %v1323 = vunpack.c.h.b16 %v988
      %v1324 = vunpack.c.l.b16 %v989
      %v1325 = vunpack.c.h.b16 %v989
      %v1326 = vpack.c.b16 %v1106, %v1102
      %v1327 = vpack.c.b16 %v1107, %v1103
      %v1328 = vpack.c.b16 %v1108, %v1104
      %v1329 = vpack.c.b16 %v1109, %v1105
      %v1330 = vpack.c.b16 %v1114, %v1110
      %v1331 = vpack.c.b16 %v1115, %v1111
      %v1332 = vpack.c.b16 %v1116, %v1112
      %v1333 = vpack.c.b16 %v1117, %v1113
      %v1334 = vpack.c.b16 %v1122, %v1118
      %v1335 = vpack.c.b16 %v1123, %v1119
      %v1336 = vpack.c.b16 %v1124, %v1120
      %v1337 = vpack.c.b16 %v1125, %v1121
      %v1338 = vpack.c.b16 %v1130, %v1126
      %v1339 = vpack.c.b16 %v1131, %v1127
      %v1340 = vpack.c.b16 %v1132, %v1128
      %v1341 = vpack.c.b16 %v1133, %v1129
      %v1342 = vpack.c.b16 %v1138, %v1134
      %v1343 = vpack.c.b16 %v1139, %v1135
      %v1344 = vpack.c.b16 %v1140, %v1136
      %v1345 = vpack.c.b16 %v1141, %v1137
      %v1346 = vpack.c.b16 %v1146, %v1142
      %v1347 = vpack.c.b16 %v1147, %v1143
      %v1348 = vpack.c.b16 %v1148, %v1144
      %v1349 = vpack.c.b16 %v1149, %v1145
      %v1350 = vpack.c.b16 %v1154, %v1150
      %v1351 = vpack.c.b16 %v1155, %v1151
      %v1352 = vpack.c.b16 %v1156, %v1152
      %v1353 = vpack.c.b16 %v1157, %v1153
      %v1354 = vpack.c.b16 %v1162, %v1158
      %v1355 = vpack.c.b16 %v1163, %v1159
      %v1356 = vpack.c.b16 %v1164, %v1160
      %v1357 = vpack.c.b16 %v1165, %v1161
      %v1358 = vpack.c.b16 %v1170, %v1166
      %v1359 = vpack.c.b16 %v1171, %v1167
      %v1360 = vpack.c.b16 %v1172, %v1168
      %v1361 = vpack.c.b16 %v1173, %v1169
      %v1362 = vpack.c.b16 %v1178, %v1174
      %v1363 = vpack.c.b16 %v1179, %v1175
      %v1364 = vpack.c.b16 %v1180, %v1176
      %v1365 = vpack.c.b16 %v1181, %v1177
      %v1366 = vpack.c.b16 %v1186, %v1182
      %v1367 = vpack.c.b16 %v1187, %v1183
      %v1368 = vpack.c.b16 %v1188, %v1184
      %v1369 = vpack.c.b16 %v1189, %v1185
      %v1370 = vpack.c.b16 %v1194, %v1190
      %v1371 = vpack.c.b16 %v1195, %v1191
      %v1372 = vpack.c.b16 %v1196, %v1192
      %v1373 = vpack.c.b16 %v1197, %v1193
      %v1374 = vpack.c.b16 %v1202, %v1198
      %v1375 = vpack.c.b16 %v1203, %v1199
      %v1376 = vpack.c.b16 %v1204, %v1200
      %v1377 = vpack.c.b16 %v1205, %v1201
      %v1378 = vpack.c.b16 %v1210, %v1206
      %v1379 = vpack.c.b16 %v1211, %v1207
      %v1380 = vpack.c.b16 %v1212, %v1208
      %v1381 = vpack.c.b16 %v1213, %v1209
      %v1382 = vpack.c.b16 %v1218, %v1214
      %v1383 = vpack.c.b16 %v1219, %v1215
      %v1384 = vpack.c.b16 %v1220, %v1216
      %v1385 = vpack.c.b16 %v1221, %v1217
      %v1386 = vpack.c.b16 %v1226, %v1222
      %v1387 = vpack.c.b16 %v1227, %v1223
      %v1388 = vpack.c.b16 %v1228, %v1224
      %v1389 = vpack.c.b16 %v1229, %v1225
      %v1390 = vpack.c.b16 %v1234, %v1230
      %v1391 = vpack.c.b16 %v1235, %v1231
      %v1392 = vpack.c.b16 %v1236, %v1232
      %v1393 = vpack.c.b16 %v1237, %v1233
      %v1394 = vpack.c.b16 %v1242, %v1238
      %v1395 = vpack.c.b16 %v1243, %v1239
      %v1396 = vpack.c.b16 %v1244, %v1240
      %v1397 = vpack.c.b16 %v1245, %v1241
      %v1398 = vpack.c.b16 %v1250, %v1246
      %v1399 = vpack.c.b16 %v1251, %v1247
      %v1400 = vpack.c.b16 %v1252, %v1248
      %v1401 = vpack.c.b16 %v1253, %v1249
      %v1402 = vpack.c.b16 %v1258, %v1254
      %v1403 = vpack.c.b16 %v1259, %v1255
      %v1404 = vpack.c.b16 %v1260, %v1256
      %v1405 = vpack.c.b16 %v1261, %v1257
      %v1406 = vpack.c.b16 %v1266, %v1262
      %v1407 = vpack.c.b16 %v1267, %v1263
      %v1408 = vpack.c.b16 %v1268, %v1264
      %v1409 = vpack.c.b16 %v1269, %v1265
      %v1410 = vpack.c.b16 %v1274, %v1270
      %v1411 = vpack.c.b16 %v1275, %v1271
      %v1412 = vpack.c.b16 %v1276, %v1272
      %v1413 = vpack.c.b16 %v1277, %v1273
      %v1414 = vpack.c.b16 %v1282, %v1278
      %v1415 = vpack.c.b16 %v1283, %v1279
      %v1416 = vpack.c.b16 %v1284, %v1280
      %v1417 = vpack.c.b16 %v1285, %v1281
      %v1418 = vpack.c.b16 %v1290, %v1286
      %v1419 = vpack.c.b16 %v1291, %v1287
      %v1420 = vpack.c.b16 %v1292, %v1288
      %v1421 = vpack.c.b16 %v1293, %v1289
      %v1422 = vpack.c.b16 %v1298, %v1294
      %v1423 = vpack.c.b16 %v1299, %v1295
      %v1424 = vpack.c.b16 %v1300, %v1296
      %v1425 = vpack.c.b16 %v1301, %v1297
      %v1426 = vpack.c.b16 %v1306, %v1302
      %v1427 = vpack.c.b16 %v1307, %v1303
      %v1428 = vpack.c.b16 %v1308, %v1304
      %v1429 = vpack.c.b16 %v1309, %v1305
      %v1430 = vpack.c.b16 %v1314, %v1310
      %v1431 = vpack.c.b16 %v1315, %v1311
      %v1432 = vpack.c.b16 %v1316, %v1312
      %v1433 = vpack.c.b16 %v1317, %v1313
      %v1434 = vpack.c.b16 %v1322, %v1318
      %v1435 = vpack.c.b16 %v1323, %v1319
      %v1436 = vpack.c.b16 %v1324, %v1320
      %v1437 = vpack.c.b16 %v1325, %v1321
      %vm1550 = vcmask 523264
      %v1552 = vsel %vm1550, %v877, 0
      %1554 = vmatpush.bf16.msra.mxu0 %v1354
      %1555 = vmatpush.bf16.msra.mxu0 %v1350
      %1556 = vmatpush.bf16.msra.mxu0 %v1346
      %1557 = vmatpush.bf16.msra.mxu0 %v1342
      %1558 = vmatpush.bf16.msra.mxu0 %v1338
      %1559 = vmatpush.bf16.msra.mxu0 %v1334
      %1560 = vmatpush.bf16.msra.mxu0 %v1330
      %1561 = vmatpush.bf16.msra.mxu0 %v1326
      %1562 = vmatmul.bf16.gmra.mxu0 %v874
      %v1563 = vpop.f32.mrf.mxu0
      %v1564 = vadd.f32 0.0, %v1563
      %v1565 = vpop.f32.mrf.mxu0
      %1566 = vdwg.mxu0
      %1567 = vmatpush.bf16.msra.mxu0 %v1386
      %1568 = vmatpush.bf16.msra.mxu0 %v1382
      %1569 = vmatpush.bf16.msra.mxu0 %v1378
      %1570 = vmatpush.bf16.msra.mxu0 %v1374
      %1571 = vmatpush.bf16.msra.mxu0 %v1370
      %1572 = vmatpush.bf16.msra.mxu0 %v1366
      %1573 = vmatpush.bf16.msra.mxu0 %v1362
      %1574 = vmatpush.bf16.msra.mxu0 %v1358
      %1575 = vmatmul.bf16.gmra.mxu0 %v875
      %v1576 = vpop.f32.mrf.mxu0
      %v1577 = vadd.f32 %v1564, %v1576
      %v1578 = vpop.f32.mrf.mxu0
      %1579 = vdwg.mxu0
      %1580 = vmatpush.bf16.msra.mxu0 %v1418
      %1581 = vmatpush.bf16.msra.mxu0 %v1414
      %1582 = vmatpush.bf16.msra.mxu0 %v1410
      %1583 = vmatpush.bf16.msra.mxu0 %v1406
      %1584 = vmatpush.bf16.msra.mxu0 %v1402
      %1585 = vmatpush.bf16.msra.mxu0 %v1398
      %1586 = vmatpush.bf16.msra.mxu0 %v1394
      %1587 = vmatpush.bf16.msra.mxu0 %v1390
      %1588 = vmatmul.bf16.gmra.mxu0 %v876
      %v1589 = vpop.f32.mrf.mxu0
      %v1590 = vadd.f32 %v1577, %v1589
      %v1591 = vpop.f32.mrf.mxu0
      %1592 = vdwg.mxu0
      %1593 = vmatpush.bf16.msra.mxu0 0
      %1594 = vmatpush.bf16.msra.mxu0 0
      %1595 = vmatpush.bf16.msra.mxu0 0
      %1596 = vmatpush.bf16.msra.mxu0 0
      %1597 = vmatpush.bf16.msra.mxu0 %v1434
      %1598 = vmatpush.bf16.msra.mxu0 %v1430
      %1599 = vmatpush.bf16.msra.mxu0 %v1426
      %1600 = vmatpush.bf16.msra.mxu0 %v1422
      %1601 = vmatmul.bf16.gmra.mxu0 %v1552
      %v1602 = vpop.f32.mrf.mxu0
      %v1603 = vadd.f32 %v1590, %v1602
      %v1604 = vpop.f32.mrf.mxu0
      %1605 = vdwg.mxu0
      %1606 = vmatpush.bf16.msra.mxu0 %v1355
      %1607 = vmatpush.bf16.msra.mxu0 %v1351
      %1608 = vmatpush.bf16.msra.mxu0 %v1347
      %1609 = vmatpush.bf16.msra.mxu0 %v1343
      %1610 = vmatpush.bf16.msra.mxu0 %v1339
      %1611 = vmatpush.bf16.msra.mxu0 %v1335
      %1612 = vmatpush.bf16.msra.mxu0 %v1331
      %1613 = vmatpush.bf16.msra.mxu0 %v1327
      %1614 = vmatmul.bf16.gmra.mxu0 %v874
      %v1615 = vpop.f32.mrf.mxu0
      %v1616 = vadd.f32 0.0, %v1615
      %v1617 = vpop.f32.mrf.mxu0
      %1618 = vdwg.mxu0
      %1619 = vmatpush.bf16.msra.mxu0 %v1387
      %1620 = vmatpush.bf16.msra.mxu0 %v1383
      %1621 = vmatpush.bf16.msra.mxu0 %v1379
      %1622 = vmatpush.bf16.msra.mxu0 %v1375
      %1623 = vmatpush.bf16.msra.mxu0 %v1371
      %1624 = vmatpush.bf16.msra.mxu0 %v1367
      %1625 = vmatpush.bf16.msra.mxu0 %v1363
      %1626 = vmatpush.bf16.msra.mxu0 %v1359
      %1627 = vmatmul.bf16.gmra.mxu0 %v875
      %v1628 = vpop.f32.mrf.mxu0
      %v1629 = vadd.f32 %v1616, %v1628
      %v1630 = vpop.f32.mrf.mxu0
      %1631 = vdwg.mxu0
      %1632 = vmatpush.bf16.msra.mxu0 %v1419
      %1633 = vmatpush.bf16.msra.mxu0 %v1415
      %1634 = vmatpush.bf16.msra.mxu0 %v1411
      %1635 = vmatpush.bf16.msra.mxu0 %v1407
      %1636 = vmatpush.bf16.msra.mxu0 %v1403
      %1637 = vmatpush.bf16.msra.mxu0 %v1399
      %1638 = vmatpush.bf16.msra.mxu0 %v1395
      %1639 = vmatpush.bf16.msra.mxu0 %v1391
      %1640 = vmatmul.bf16.gmra.mxu0 %v876
      %v1641 = vpop.f32.mrf.mxu0
      %v1642 = vadd.f32 %v1629, %v1641
      %v1643 = vpop.f32.mrf.mxu0
      %1644 = vdwg.mxu0
      %1645 = vmatpush.bf16.msra.mxu0 0
      %1646 = vmatpush.bf16.msra.mxu0 0
      %1647 = vmatpush.bf16.msra.mxu0 0
      %1648 = vmatpush.bf16.msra.mxu0 0
      %1649 = vmatpush.bf16.msra.mxu0 %v1435
      %1650 = vmatpush.bf16.msra.mxu0 %v1431
      %1651 = vmatpush.bf16.msra.mxu0 %v1427
      %1652 = vmatpush.bf16.msra.mxu0 %v1423
      %1653 = vmatmul.bf16.gmra.mxu0 %v1552
      %v1654 = vpop.f32.mrf.mxu0
      %v1655 = vadd.f32 %v1642, %v1654
      %v1656 = vpop.f32.mrf.mxu0
      %1657 = vdwg.mxu0
      %1658 = vmatpush.bf16.msra.mxu0 %v1356
      %1659 = vmatpush.bf16.msra.mxu0 %v1352
      %1660 = vmatpush.bf16.msra.mxu0 %v1348
      %1661 = vmatpush.bf16.msra.mxu0 %v1344
      %1662 = vmatpush.bf16.msra.mxu0 %v1340
      %1663 = vmatpush.bf16.msra.mxu0 %v1336
      %1664 = vmatpush.bf16.msra.mxu0 %v1332
      %1665 = vmatpush.bf16.msra.mxu0 %v1328
      %1666 = vmatmul.bf16.gmra.mxu0 %v874
      %v1667 = vpop.f32.mrf.mxu0
      %v1668 = vadd.f32 0.0, %v1667
      %v1669 = vpop.f32.mrf.mxu0
      %1670 = vdwg.mxu0
      %1671 = vmatpush.bf16.msra.mxu0 %v1388
      %1672 = vmatpush.bf16.msra.mxu0 %v1384
      %1673 = vmatpush.bf16.msra.mxu0 %v1380
      %1674 = vmatpush.bf16.msra.mxu0 %v1376
      %1675 = vmatpush.bf16.msra.mxu0 %v1372
      %1676 = vmatpush.bf16.msra.mxu0 %v1368
      %1677 = vmatpush.bf16.msra.mxu0 %v1364
      %1678 = vmatpush.bf16.msra.mxu0 %v1360
      %1679 = vmatmul.bf16.gmra.mxu0 %v875
      %v1680 = vpop.f32.mrf.mxu0
      %v1681 = vadd.f32 %v1668, %v1680
      %v1682 = vpop.f32.mrf.mxu0
      %1683 = vdwg.mxu0
      %1684 = vmatpush.bf16.msra.mxu0 %v1420
      %1685 = vmatpush.bf16.msra.mxu0 %v1416
      %1686 = vmatpush.bf16.msra.mxu0 %v1412
      %1687 = vmatpush.bf16.msra.mxu0 %v1408
      %1688 = vmatpush.bf16.msra.mxu0 %v1404
      %1689 = vmatpush.bf16.msra.mxu0 %v1400
      %1690 = vmatpush.bf16.msra.mxu0 %v1396
      %1691 = vmatpush.bf16.msra.mxu0 %v1392
      %1692 = vmatmul.bf16.gmra.mxu0 %v876
      %v1693 = vpop.f32.mrf.mxu0
      %v1694 = vadd.f32 %v1681, %v1693
      %v1695 = vpop.f32.mrf.mxu0
      %1696 = vdwg.mxu0
      %1697 = vmatpush.bf16.msra.mxu0 0
      %1698 = vmatpush.bf16.msra.mxu0 0
      %1699 = vmatpush.bf16.msra.mxu0 0
      %1700 = vmatpush.bf16.msra.mxu0 0
      %1701 = vmatpush.bf16.msra.mxu0 %v1436
      %1702 = vmatpush.bf16.msra.mxu0 %v1432
      %1703 = vmatpush.bf16.msra.mxu0 %v1428
      %1704 = vmatpush.bf16.msra.mxu0 %v1424
      %1705 = vmatmul.bf16.gmra.mxu0 %v1552
      %v1706 = vpop.f32.mrf.mxu0
      %v1707 = vadd.f32 %v1694, %v1706
      %v1708 = vpop.f32.mrf.mxu0
      %1709 = vdwg.mxu0
      %1710 = vmatpush.bf16.msra.mxu0 %v1357
      %1711 = vmatpush.bf16.msra.mxu0 %v1353
      %1712 = vmatpush.bf16.msra.mxu0 %v1349
      %1713 = vmatpush.bf16.msra.mxu0 %v1345
      %1714 = vmatpush.bf16.msra.mxu0 %v1341
      %1715 = vmatpush.bf16.msra.mxu0 %v1337
      %1716 = vmatpush.bf16.msra.mxu0 %v1333
      %1717 = vmatpush.bf16.msra.mxu0 %v1329
      %1718 = vmatmul.bf16.gmra.mxu0 %v874
      %v1719 = vpop.f32.mrf.mxu0
      %v1720 = vadd.f32 0.0, %v1719
      %v1721 = vpop.f32.mrf.mxu0
      %1722 = vdwg.mxu0
      %1723 = vmatpush.bf16.msra.mxu0 %v1389
      %1724 = vmatpush.bf16.msra.mxu0 %v1385
      %1725 = vmatpush.bf16.msra.mxu0 %v1381
      %1726 = vmatpush.bf16.msra.mxu0 %v1377
      %1727 = vmatpush.bf16.msra.mxu0 %v1373
      %1728 = vmatpush.bf16.msra.mxu0 %v1369
      %1729 = vmatpush.bf16.msra.mxu0 %v1365
      %1730 = vmatpush.bf16.msra.mxu0 %v1361
      %1731 = vmatmul.bf16.gmra.mxu0 %v875
      %v1732 = vpop.f32.mrf.mxu0
      %v1733 = vadd.f32 %v1720, %v1732
      %v1734 = vpop.f32.mrf.mxu0
      %1735 = vdwg.mxu0
      %1736 = vmatpush.bf16.msra.mxu0 %v1421
      %1737 = vmatpush.bf16.msra.mxu0 %v1417
      %1738 = vmatpush.bf16.msra.mxu0 %v1413
      %1739 = vmatpush.bf16.msra.mxu0 %v1409
      %1740 = vmatpush.bf16.msra.mxu0 %v1405
      %1741 = vmatpush.bf16.msra.mxu0 %v1401
      %1742 = vmatpush.bf16.msra.mxu0 %v1397
      %1743 = vmatpush.bf16.msra.mxu0 %v1393
      %1744 = vmatmul.bf16.gmra.mxu0 %v876
      %v1745 = vpop.f32.mrf.mxu0
      %v1746 = vadd.f32 %v1733, %v1745
      %v1747 = vpop.f32.mrf.mxu0
      %1748 = vdwg.mxu0
      %1749 = vmatpush.bf16.msra.mxu0 0
      %1750 = vmatpush.bf16.msra.mxu0 0
      %1751 = vmatpush.bf16.msra.mxu0 0
      %1752 = vmatpush.bf16.msra.mxu0 0
      %1753 = vmatpush.bf16.msra.mxu0 %v1437
      %1754 = vmatpush.bf16.msra.mxu0 %v1433
      %1755 = vmatpush.bf16.msra.mxu0 %v1429
      %1756 = vmatpush.bf16.msra.mxu0 %v1425
      %1757 = vmatmul.bf16.gmra.mxu0 %v1552
      %v1758 = vpop.f32.mrf.mxu0
      %v1759 = vadd.f32 %v1746, %v1758
      %v1760 = vpop.f32.mrf.mxu0
      %1761 = vdwg.mxu0
      %v1762 = vld [vmem:[%s4] sm:$0xff]
      %v1763 = vld [vmem:[%s4 + $0x8] sm:$0xff]
      %s1764 = scalar_lea.vmem %s3, 896
      %v1765 = vld [vmem:[%s1764] sm:$0xff]
      %v1766 = vld [vmem:[%s1764 + $0x8] sm:$0xff]
      %v1767 = vld [vmem:[%s1764 + $0x10] sm:$0xff]
      %v1768 = vld [vmem:[%s1764 + $0x18] sm:$0xff]
      %v1769 = vld [vmem:[%s1764 + $0x20] sm:$0xff]
      %v1770 = vld [vmem:[%s1764 + $0x28] sm:$0xff]
      %v1771 = vld [vmem:[%s1764 + $0x30] sm:$0xff]
      %v1772 = vld [vmem:[%s1764 + $0x38] sm:$0xff]
      %v1773 = vld [vmem:[%s1764 + $0x40] sm:$0xff]
      %v1774 = vld [vmem:[%s1764 + $0x48] sm:$0xff]
      %v1775 = vld [vmem:[%s1764 + $0x50] sm:$0xff]
      %v1776 = vld [vmem:[%s1764 + $0x58] sm:$0xff]
      %v1777 = vld [vmem:[%s1764 + $0x60] sm:$0xff]
      %v1778 = vld [vmem:[%s1764 + $0x68] sm:$0xff]
      %v1779 = vld [vmem:[%s1764 + $0x70] sm:$0xff]
      %v1780 = vld [vmem:[%s1764 + $0x78] sm:$0xff]
      %v1781 = vld [vmem:[%s1764 + $0x80] sm:$0xff]
      %v1782 = vld [vmem:[%s1764 + $0x88] sm:$0xff]
      %v1783 = vld [vmem:[%s1764 + $0x90] sm:$0xff]
      %v1784 = vld [vmem:[%s1764 + $0x98] sm:$0xff]
      %v1785 = vld [vmem:[%s1764 + $0xa0] sm:$0xff]
      %v1786 = vld [vmem:[%s1764 + $0xa8] sm:$0xff]
      %v1787 = vld [vmem:[%s1764 + $0xb0] sm:$0xff]
      %v1788 = vld [vmem:[%s1764 + $0xb8] sm:$0xff]
      %v1789 = vld [vmem:[%s1764 + $0xc0] sm:$0xff]
      %v1790 = vld [vmem:[%s1764 + $0xc8] sm:$0xff]
      %v1791 = vld [vmem:[%s1764 + $0xd0] sm:$0xff]
      %v1792 = vld [vmem:[%s1764 + $0xd8] sm:$0xff]
      %v1793 = vld [vmem:[%s1764 + $0xe0] sm:$0xff]
      %v1794 = vld [vmem:[%s1764 + $0xe8] sm:$0xff]
      %v1795 = vld [vmem:[%s1764 + $0xf0] sm:$0xff]
      %v1796 = vld [vmem:[%s1764 + $0xf8] sm:$0xff]
      %v1797 = vld [vmem:[%s1764 + $0x100] sm:$0xff]
      %v1798 = vld [vmem:[%s1764 + $0x108] sm:$0xff]
      %v1799 = vld [vmem:[%s1764 + $0x110] sm:$0xff]
      %v1800 = vld [vmem:[%s1764 + $0x118] sm:$0xff]
      %v1801 = vld [vmem:[%s1764 + $0x120] sm:$0xff]
      %v1802 = vld [vmem:[%s1764 + $0x128] sm:$0xff]
      %v1803 = vld [vmem:[%s1764 + $0x130] sm:$0xff]
      %v1804 = vld [vmem:[%s1764 + $0x138] sm:$0xff]
      %v1805 = vld [vmem:[%s1764 + $0x140] sm:$0xff]
      %v1806 = vld [vmem:[%s1764 + $0x148] sm:$0xff]
      %v1807 = vld [vmem:[%s1764 + $0x150] sm:$0xff]
      %v1808 = vld [vmem:[%s1764 + $0x158] sm:$0xff]
      %v1809 = vld [vmem:[%s1764 + $0x160] sm:$0xff]
      %v1810 = vld [vmem:[%s1764 + $0x168] sm:$0xff]
      %v1811 = vld [vmem:[%s1764 + $0x170] sm:$0xff]
      %v1812 = vld [vmem:[%s1764 + $0x178] sm:$0xff]
      %v1813 = vld [vmem:[%s1764 + $0x180] sm:$0xff]
      %v1814 = vld [vmem:[%s1764 + $0x188] sm:$0xff]
      %v1815 = vld [vmem:[%s1764 + $0x190] sm:$0xff]
      %v1816 = vld [vmem:[%s1764 + $0x198] sm:$0xff]
      %v1817 = vld [vmem:[%s1764 + $0x1a0] sm:$0xff]
      %v1818 = vld [vmem:[%s1764 + $0x1a8] sm:$0xff]
      %v1819 = vld [vmem:[%s1764 + $0x1b0] sm:$0xff]
      %v1820 = vld [vmem:[%s1764 + $0x1b8] sm:$0xff]
      %v1821 = vld [vmem:[%s1764 + $0x1c0] sm:$0xff]
      %v1822 = vld [vmem:[%s1764 + $0x1c8] sm:$0xff]
      %v1823 = vld [vmem:[%s1764 + $0x1d0] sm:$0xff]
      %v1824 = vld [vmem:[%s1764 + $0x1d8] sm:$0xff]
      %v1825 = vld [vmem:[%s1764 + $0x1e0] sm:$0xff]
      %v1826 = vld [vmem:[%s1764 + $0x1e8] sm:$0xff]
      %v1827 = vld [vmem:[%s1764 + $0x1f0] sm:$0xff]
      %v1828 = vld [vmem:[%s1764 + $0x1f8] sm:$0xff]
      %v1829 = vld [vmem:[%s1764 + $0x200] sm:$0xff]
      %v1830 = vld [vmem:[%s1764 + $0x208] sm:$0xff]
      %v1831 = vld [vmem:[%s1764 + $0x210] sm:$0xff]
      %v1832 = vld [vmem:[%s1764 + $0x218] sm:$0xff]
      %v1833 = vld [vmem:[%s1764 + $0x220] sm:$0xff]
      %v1834 = vld [vmem:[%s1764 + $0x228] sm:$0xff]
      %v1835 = vld [vmem:[%s1764 + $0x230] sm:$0xff]
      %v1836 = vld [vmem:[%s1764 + $0x238] sm:$0xff]
      %v1837 = vld [vmem:[%s1764 + $0x240] sm:$0xff]
      %v1838 = vld [vmem:[%s1764 + $0x248] sm:$0xff]
      %v1839 = vld [vmem:[%s1764 + $0x250] sm:$0xff]
      %v1840 = vld [vmem:[%s1764 + $0x258] sm:$0xff]
      %v1841 = vld [vmem:[%s1764 + $0x260] sm:$0xff]
      %v1842 = vld [vmem:[%s1764 + $0x268] sm:$0xff]
      %v1843 = vld [vmem:[%s1764 + $0x270] sm:$0xff]
      %v1844 = vld [vmem:[%s1764 + $0x278] sm:$0xff]
      %v1845 = vld [vmem:[%s1764 + $0x280] sm:$0xff]
      %v1846 = vld [vmem:[%s1764 + $0x288] sm:$0xff]
      %v1847 = vld [vmem:[%s1764 + $0x290] sm:$0xff]
      %v1848 = vld [vmem:[%s1764 + $0x298] sm:$0xff]
      %v1849 = vld [vmem:[%s1764 + $0x2a0] sm:$0xff]
      %v1850 = vld [vmem:[%s1764 + $0x2a8] sm:$0xff]
      %v1851 = vld [vmem:[%s1764 + $0x2b0] sm:$0xff]
      %v1852 = vld [vmem:[%s1764 + $0x2b8] sm:$0xff]
      %v1853 = vld [vmem:[%s1764 + $0x2c0] sm:$0xff]
      %v1854 = vld [vmem:[%s1764 + $0x2c8] sm:$0xff]
      %v1855 = vld [vmem:[%s1764 + $0x2d0] sm:$0xff]
      %v1856 = vld [vmem:[%s1764 + $0x2d8] sm:$0xff]
      %v1857 = vld [vmem:[%s1764 + $0x2e0] sm:$0xff]
      %v1858 = vld [vmem:[%s1764 + $0x2e8] sm:$0xff]
      %v1859 = vld [vmem:[%s1764 + $0x2f0] sm:$0xff]
      %v1860 = vld [vmem:[%s1764 + $0x2f8] sm:$0xff]
      %v1861 = vld [vmem:[%s1764 + $0x300] sm:$0xff]
      %v1862 = vld [vmem:[%s1764 + $0x308] sm:$0xff]
      %v1863 = vld [vmem:[%s1764 + $0x310] sm:$0xff]
      %v1864 = vld [vmem:[%s1764 + $0x318] sm:$0xff]
      %v1865 = vld [vmem:[%s1764 + $0x320] sm:$0xff]
      %v1866 = vld [vmem:[%s1764 + $0x328] sm:$0xff]
      %v1867 = vld [vmem:[%s1764 + $0x330] sm:$0xff]
      %v1868 = vld [vmem:[%s1764 + $0x338] sm:$0xff]
      %v1869 = vld [vmem:[%s1764 + $0x340] sm:$0xff]
      %v1870 = vld [vmem:[%s1764 + $0x348] sm:$0xff]
      %v1871 = vld [vmem:[%s1764 + $0x350] sm:$0xff]
      %v1872 = vld [vmem:[%s1764 + $0x358] sm:$0xff]
      %v1873 = vld [vmem:[%s1764 + $0x360] sm:$0xff]
      %v1874 = vld [vmem:[%s1764 + $0x368] sm:$0xff]
      %v1875 = vld [vmem:[%s1764 + $0x370] sm:$0xff]
      %v1876 = vld [vmem:[%s1764 + $0x378] sm:$0xff]
      %v1989 = vunpack.c.l.b16 %v1765
      %v1990 = vunpack.c.h.b16 %v1765
      %v1991 = vunpack.c.l.b16 %v1766
      %v1992 = vunpack.c.h.b16 %v1766
      %v1993 = vunpack.c.l.b16 %v1767
      %v1994 = vunpack.c.h.b16 %v1767
      %v1995 = vunpack.c.l.b16 %v1768
      %v1996 = vunpack.c.h.b16 %v1768
      %v1997 = vunpack.c.l.b16 %v1769
      %v1998 = vunpack.c.h.b16 %v1769
      %v1999 = vunpack.c.l.b16 %v1770
      %v2000 = vunpack.c.h.b16 %v1770
      %v2001 = vunpack.c.l.b16 %v1771
      %v2002 = vunpack.c.h.b16 %v1771
      %v2003 = vunpack.c.l.b16 %v1772
      %v2004 = vunpack.c.h.b16 %v1772
      %v2005 = vunpack.c.l.b16 %v1773
      %v2006 = vunpack.c.h.b16 %v1773
      %v2007 = vunpack.c.l.b16 %v1774
      %v2008 = vunpack.c.h.b16 %v1774
      %v2009 = vunpack.c.l.b16 %v1775
      %v2010 = vunpack.c.h.b16 %v1775
      %v2011 = vunpack.c.l.b16 %v1776
      %v2012 = vunpack.c.h.b16 %v1776
      %v2013 = vunpack.c.l.b16 %v1777
      %v2014 = vunpack.c.h.b16 %v1777
      %v2015 = vunpack.c.l.b16 %v1778
      %v2016 = vunpack.c.h.b16 %v1778
      %v2017 = vunpack.c.l.b16 %v1779
      %v2018 = vunpack.c.h.b16 %v1779
      %v2019 = vunpack.c.l.b16 %v1780
      %v2020 = vunpack.c.h.b16 %v1780
      %v2021 = vunpack.c.l.b16 %v1781
      %v2022 = vunpack.c.h.b16 %v1781
      %v2023 = vunpack.c.l.b16 %v1782
      %v2024 = vunpack.c.h.b16 %v1782
      %v2025 = vunpack.c.l.b16 %v1783
      %v2026 = vunpack.c.h.b16 %v1783
      %v2027 = vunpack.c.l.b16 %v1784
      %v2028 = vunpack.c.h.b16 %v1784
      %v2029 = vunpack.c.l.b16 %v1785
      %v2030 = vunpack.c.h.b16 %v1785
      %v2031 = vunpack.c.l.b16 %v1786
      %v2032 = vunpack.c.h.b16 %v1786
      %v2033 = vunpack.c.l.b16 %v1787
      %v2034 = vunpack.c.h.b16 %v1787
      %v2035 = vunpack.c.l.b16 %v1788
      %v2036 = vunpack.c.h.b16 %v1788
      %v2037 = vunpack.c.l.b16 %v1789
      %v2038 = vunpack.c.h.b16 %v1789
      %v2039 = vunpack.c.l.b16 %v1790
      %v2040 = vunpack.c.h.b16 %v1790
      %v2041 = vunpack.c.l.b16 %v1791
      %v2042 = vunpack.c.h.b16 %v1791
      %v2043 = vunpack.c.l.b16 %v1792
      %v2044 = vunpack.c.h.b16 %v1792
      %v2045 = vunpack.c.l.b16 %v1793
      %v2046 = vunpack.c.h.b16 %v1793
      %v2047 = vunpack.c.l.b16 %v1794
      %v2048 = vunpack.c.h.b16 %v1794
      %v2049 = vunpack.c.l.b16 %v1795
      %v2050 = vunpack.c.h.b16 %v1795
      %v2051 = vunpack.c.l.b16 %v1796
      %v2052 = vunpack.c.h.b16 %v1796
      %v2053 = vunpack.c.l.b16 %v1797
      %v2054 = vunpack.c.h.b16 %v1797
      %v2055 = vunpack.c.l.b16 %v1798
      %v2056 = vunpack.c.h.b16 %v1798
      %v2057 = vunpack.c.l.b16 %v1799
      %v2058 = vunpack.c.h.b16 %v1799
      %v2059 = vunpack.c.l.b16 %v1800
      %v2060 = vunpack.c.h.b16 %v1800
      %v2061 = vunpack.c.l.b16 %v1801
      %v2062 = vunpack.c.h.b16 %v1801
      %v2063 = vunpack.c.l.b16 %v1802
      %v2064 = vunpack.c.h.b16 %v1802
      %v2065 = vunpack.c.l.b16 %v1803
      %v2066 = vunpack.c.h.b16 %v1803
      %v2067 = vunpack.c.l.b16 %v1804
      %v2068 = vunpack.c.h.b16 %v1804
      %v2069 = vunpack.c.l.b16 %v1805
      %v2070 = vunpack.c.h.b16 %v1805
      %v2071 = vunpack.c.l.b16 %v1806
      %v2072 = vunpack.c.h.b16 %v1806
      %v2073 = vunpack.c.l.b16 %v1807
      %v2074 = vunpack.c.h.b16 %v1807
      %v2075 = vunpack.c.l.b16 %v1808
      %v2076 = vunpack.c.h.b16 %v1808
      %v2077 = vunpack.c.l.b16 %v1809
      %v2078 = vunpack.c.h.b16 %v1809
      %v2079 = vunpack.c.l.b16 %v1810
      %v2080 = vunpack.c.h.b16 %v1810
      %v2081 = vunpack.c.l.b16 %v1811
      %v2082 = vunpack.c.h.b16 %v1811
      %v2083 = vunpack.c.l.b16 %v1812
      %v2084 = vunpack.c.h.b16 %v1812
      %v2085 = vunpack.c.l.b16 %v1813
      %v2086 = vunpack.c.h.b16 %v1813
      %v2087 = vunpack.c.l.b16 %v1814
      %v2088 = vunpack.c.h.b16 %v1814
      %v2089 = vunpack.c.l.b16 %v1815
      %v2090 = vunpack.c.h.b16 %v1815
      %v2091 = vunpack.c.l.b16 %v1816
      %v2092 = vunpack.c.h.b16 %v1816
      %v2093 = vunpack.c.l.b16 %v1817
      %v2094 = vunpack.c.h.b16 %v1817
      %v2095 = vunpack.c.l.b16 %v1818
      %v2096 = vunpack.c.h.b16 %v1818
      %v2097 = vunpack.c.l.b16 %v1819
      %v2098 = vunpack.c.h.b16 %v1819
      %v2099 = vunpack.c.l.b16 %v1820
      %v2100 = vunpack.c.h.b16 %v1820
      %v2101 = vunpack.c.l.b16 %v1821
      %v2102 = vunpack.c.h.b16 %v1821
      %v2103 = vunpack.c.l.b16 %v1822
      %v2104 = vunpack.c.h.b16 %v1822
      %v2105 = vunpack.c.l.b16 %v1823
      %v2106 = vunpack.c.h.b16 %v1823
      %v2107 = vunpack.c.l.b16 %v1824
      %v2108 = vunpack.c.h.b16 %v1824
      %v2109 = vunpack.c.l.b16 %v1825
      %v2110 = vunpack.c.h.b16 %v1825
      %v2111 = vunpack.c.l.b16 %v1826
      %v2112 = vunpack.c.h.b16 %v1826
      %v2113 = vunpack.c.l.b16 %v1827
      %v2114 = vunpack.c.h.b16 %v1827
      %v2115 = vunpack.c.l.b16 %v1828
      %v2116 = vunpack.c.h.b16 %v1828
      %v2117 = vunpack.c.l.b16 %v1829
      %v2118 = vunpack.c.h.b16 %v1829
      %v2119 = vunpack.c.l.b16 %v1830
      %v2120 = vunpack.c.h.b16 %v1830
      %v2121 = vunpack.c.l.b16 %v1831
      %v2122 = vunpack.c.h.b16 %v1831
      %v2123 = vunpack.c.l.b16 %v1832
      %v2124 = vunpack.c.h.b16 %v1832
      %v2125 = vunpack.c.l.b16 %v1833
      %v2126 = vunpack.c.h.b16 %v1833
      %v2127 = vunpack.c.l.b16 %v1834
      %v2128 = vunpack.c.h.b16 %v1834
      %v2129 = vunpack.c.l.b16 %v1835
      %v2130 = vunpack.c.h.b16 %v1835
      %v2131 = vunpack.c.l.b16 %v1836
      %v2132 = vunpack.c.h.b16 %v1836
      %v2133 = vunpack.c.l.b16 %v1837
      %v2134 = vunpack.c.h.b16 %v1837
      %v2135 = vunpack.c.l.b16 %v1838
      %v2136 = vunpack.c.h.b16 %v1838
      %v2137 = vunpack.c.l.b16 %v1839
      %v2138 = vunpack.c.h.b16 %v1839
      %v2139 = vunpack.c.l.b16 %v1840
      %v2140 = vunpack.c.h.b16 %v1840
      %v2141 = vunpack.c.l.b16 %v1841
      %v2142 = vunpack.c.h.b16 %v1841
      %v2143 = vunpack.c.l.b16 %v1842
      %v2144 = vunpack.c.h.b16 %v1842
      %v2145 = vunpack.c.l.b16 %v1843
      %v2146 = vunpack.c.h.b16 %v1843
      %v2147 = vunpack.c.l.b16 %v1844
      %v2148 = vunpack.c.h.b16 %v1844
      %v2149 = vunpack.c.l.b16 %v1845
      %v2150 = vunpack.c.h.b16 %v1845
      %v2151 = vunpack.c.l.b16 %v1846
      %v2152 = vunpack.c.h.b16 %v1846
      %v2153 = vunpack.c.l.b16 %v1847
      %v2154 = vunpack.c.h.b16 %v1847
      %v2155 = vunpack.c.l.b16 %v1848
      %v2156 = vunpack.c.h.b16 %v1848
      %v2157 = vunpack.c.l.b16 %v1849
      %v2158 = vunpack.c.h.b16 %v1849
      %v2159 = vunpack.c.l.b16 %v1850
      %v2160 = vunpack.c.h.b16 %v1850
      %v2161 = vunpack.c.l.b16 %v1851
      %v2162 = vunpack.c.h.b16 %v1851
      %v2163 = vunpack.c.l.b16 %v1852
      %v2164 = vunpack.c.h.b16 %v1852
      %v2165 = vunpack.c.l.b16 %v1853
      %v2166 = vunpack.c.h.b16 %v1853
      %v2167 = vunpack.c.l.b16 %v1854
      %v2168 = vunpack.c.h.b16 %v1854
      %v2169 = vunpack.c.l.b16 %v1855
      %v2170 = vunpack.c.h.b16 %v1855
      %v2171 = vunpack.c.l.b16 %v1856
      %v2172 = vunpack.c.h.b16 %v1856
      %v2173 = vunpack.c.l.b16 %v1857
      %v2174 = vunpack.c.h.b16 %v1857
      %v2175 = vunpack.c.l.b16 %v1858
      %v2176 = vunpack.c.h.b16 %v1858
      %v2177 = vunpack.c.l.b16 %v1859
      %v2178 = vunpack.c.h.b16 %v1859
      %v2179 = vunpack.c.l.b16 %v1860
      %v2180 = vunpack.c.h.b16 %v1860
      %v2181 = vunpack.c.l.b16 %v1861
      %v2182 = vunpack.c.h.b16 %v1861
      %v2183 = vunpack.c.l.b16 %v1862
      %v2184 = vunpack.c.h.b16 %v1862
      %v2185 = vunpack.c.l.b16 %v1863
      %v2186 = vunpack.c.h.b16 %v1863
      %v2187 = vunpack.c.l.b16 %v1864
      %v2188 = vunpack.c.h.b16 %v1864
      %v2189 = vunpack.c.l.b16 %v1865
      %v2190 = vunpack.c.h.b16 %v1865
      %v2191 = vunpack.c.l.b16 %v1866
      %v2192 = vunpack.c.h.b16 %v1866
      %v2193 = vunpack.c.l.b16 %v1867
      %v2194 = vunpack.c.h.b16 %v1867
      %v2195 = vunpack.c.l.b16 %v1868
      %v2196 = vunpack.c.h.b16 %v1868
      %v2197 = vunpack.c.l.b16 %v1869
      %v2198 = vunpack.c.h.b16 %v1869
      %v2199 = vunpack.c.l.b16 %v1870
      %v2200 = vunpack.c.h.b16 %v1870
      %v2201 = vunpack.c.l.b16 %v1871
      %v2202 = vunpack.c.h.b16 %v1871
      %v2203 = vunpack.c.l.b16 %v1872
      %v2204 = vunpack.c.h.b16 %v1872
      %v2205 = vunpack.c.l.b16 %v1873
      %v2206 = vunpack.c.h.b16 %v1873
      %v2207 = vunpack.c.l.b16 %v1874
      %v2208 = vunpack.c.h.b16 %v1874
      %v2209 = vunpack.c.l.b16 %v1875
      %v2210 = vunpack.c.h.b16 %v1875
      %v2211 = vunpack.c.l.b16 %v1876
      %v2212 = vunpack.c.h.b16 %v1876
      %v2213 = vpack.c.b16 %v1993, %v1989
      %v2214 = vpack.c.b16 %v1994, %v1990
      %v2215 = vpack.c.b16 %v1995, %v1991
      %v2216 = vpack.c.b16 %v1996, %v1992
      %v2217 = vpack.c.b16 %v2001, %v1997
      %v2218 = vpack.c.b16 %v2002, %v1998
      %v2219 = vpack.c.b16 %v2003, %v1999
      %v2220 = vpack.c.b16 %v2004, %v2000
      %v2221 = vpack.c.b16 %v2009, %v2005
      %v2222 = vpack.c.b16 %v2010, %v2006
      %v2223 = vpack.c.b16 %v2011, %v2007
      %v2224 = vpack.c.b16 %v2012, %v2008
      %v2225 = vpack.c.b16 %v2017, %v2013
      %v2226 = vpack.c.b16 %v2018, %v2014
      %v2227 = vpack.c.b16 %v2019, %v2015
      %v2228 = vpack.c.b16 %v2020, %v2016
      %v2229 = vpack.c.b16 %v2025, %v2021
      %v2230 = vpack.c.b16 %v2026, %v2022
      %v2231 = vpack.c.b16 %v2027, %v2023
      %v2232 = vpack.c.b16 %v2028, %v2024
      %v2233 = vpack.c.b16 %v2033, %v2029
      %v2234 = vpack.c.b16 %v2034, %v2030
      %v2235 = vpack.c.b16 %v2035, %v2031
      %v2236 = vpack.c.b16 %v2036, %v2032
      %v2237 = vpack.c.b16 %v2041, %v2037
      %v2238 = vpack.c.b16 %v2042, %v2038
      %v2239 = vpack.c.b16 %v2043, %v2039
      %v2240 = vpack.c.b16 %v2044, %v2040
      %v2241 = vpack.c.b16 %v2049, %v2045
      %v2242 = vpack.c.b16 %v2050, %v2046
      %v2243 = vpack.c.b16 %v2051, %v2047
      %v2244 = vpack.c.b16 %v2052, %v2048
      %v2245 = vpack.c.b16 %v2057, %v2053
      %v2246 = vpack.c.b16 %v2058, %v2054
      %v2247 = vpack.c.b16 %v2059, %v2055
      %v2248 = vpack.c.b16 %v2060, %v2056
      %v2249 = vpack.c.b16 %v2065, %v2061
      %v2250 = vpack.c.b16 %v2066, %v2062
      %v2251 = vpack.c.b16 %v2067, %v2063
      %v2252 = vpack.c.b16 %v2068, %v2064
      %v2253 = vpack.c.b16 %v2073, %v2069
      %v2254 = vpack.c.b16 %v2074, %v2070
      %v2255 = vpack.c.b16 %v2075, %v2071
      %v2256 = vpack.c.b16 %v2076, %v2072
      %v2257 = vpack.c.b16 %v2081, %v2077
      %v2258 = vpack.c.b16 %v2082, %v2078
      %v2259 = vpack.c.b16 %v2083, %v2079
      %v2260 = vpack.c.b16 %v2084, %v2080
      %v2261 = vpack.c.b16 %v2089, %v2085
      %v2262 = vpack.c.b16 %v2090, %v2086
      %v2263 = vpack.c.b16 %v2091, %v2087
      %v2264 = vpack.c.b16 %v2092, %v2088
      %v2265 = vpack.c.b16 %v2097, %v2093
      %v2266 = vpack.c.b16 %v2098, %v2094
      %v2267 = vpack.c.b16 %v2099, %v2095
      %v2268 = vpack.c.b16 %v2100, %v2096
      %v2269 = vpack.c.b16 %v2105, %v2101
      %v2270 = vpack.c.b16 %v2106, %v2102
      %v2271 = vpack.c.b16 %v2107, %v2103
      %v2272 = vpack.c.b16 %v2108, %v2104
      %v2273 = vpack.c.b16 %v2113, %v2109
      %v2274 = vpack.c.b16 %v2114, %v2110
      %v2275 = vpack.c.b16 %v2115, %v2111
      %v2276 = vpack.c.b16 %v2116, %v2112
      %v2277 = vpack.c.b16 %v2121, %v2117
      %v2278 = vpack.c.b16 %v2122, %v2118
      %v2279 = vpack.c.b16 %v2123, %v2119
      %v2280 = vpack.c.b16 %v2124, %v2120
      %v2281 = vpack.c.b16 %v2129, %v2125
      %v2282 = vpack.c.b16 %v2130, %v2126
      %v2283 = vpack.c.b16 %v2131, %v2127
      %v2284 = vpack.c.b16 %v2132, %v2128
      %v2285 = vpack.c.b16 %v2137, %v2133
      %v2286 = vpack.c.b16 %v2138, %v2134
      %v2287 = vpack.c.b16 %v2139, %v2135
      %v2288 = vpack.c.b16 %v2140, %v2136
      %v2289 = vpack.c.b16 %v2145, %v2141
      %v2290 = vpack.c.b16 %v2146, %v2142
      %v2291 = vpack.c.b16 %v2147, %v2143
      %v2292 = vpack.c.b16 %v2148, %v2144
      %v2293 = vpack.c.b16 %v2153, %v2149
      %v2294 = vpack.c.b16 %v2154, %v2150
      %v2295 = vpack.c.b16 %v2155, %v2151
      %v2296 = vpack.c.b16 %v2156, %v2152
      %v2297 = vpack.c.b16 %v2161, %v2157
      %v2298 = vpack.c.b16 %v2162, %v2158
      %v2299 = vpack.c.b16 %v2163, %v2159
      %v2300 = vpack.c.b16 %v2164, %v2160
      %v2301 = vpack.c.b16 %v2169, %v2165
      %v2302 = vpack.c.b16 %v2170, %v2166
      %v2303 = vpack.c.b16 %v2171, %v2167
      %v2304 = vpack.c.b16 %v2172, %v2168
      %v2305 = vpack.c.b16 %v2177, %v2173
      %v2306 = vpack.c.b16 %v2178, %v2174
      %v2307 = vpack.c.b16 %v2179, %v2175
      %v2308 = vpack.c.b16 %v2180, %v2176
      %v2309 = vpack.c.b16 %v2185, %v2181
      %v2310 = vpack.c.b16 %v2186, %v2182
      %v2311 = vpack.c.b16 %v2187, %v2183
      %v2312 = vpack.c.b16 %v2188, %v2184
      %v2313 = vpack.c.b16 %v2193, %v2189
      %v2314 = vpack.c.b16 %v2194, %v2190
      %v2315 = vpack.c.b16 %v2195, %v2191
      %v2316 = vpack.c.b16 %v2196, %v2192
      %v2317 = vpack.c.b16 %v2201, %v2197
      %v2318 = vpack.c.b16 %v2202, %v2198
      %v2319 = vpack.c.b16 %v2203, %v2199
      %v2320 = vpack.c.b16 %v2204, %v2200
      %v2321 = vpack.c.b16 %v2209, %v2205
      %v2322 = vpack.c.b16 %v2210, %v2206
      %v2323 = vpack.c.b16 %v2211, %v2207
      %v2324 = vpack.c.b16 %v2212, %v2208
      %2437 = vmatpush.bf16.msra.mxu0 %v2241
      %2438 = vmatpush.bf16.msra.mxu0 %v2237
      %2439 = vmatpush.bf16.msra.mxu0 %v2233
      %2440 = vmatpush.bf16.msra.mxu0 %v2229
      %2441 = vmatpush.bf16.msra.mxu0 %v2225
      %2442 = vmatpush.bf16.msra.mxu0 %v2221
      %2443 = vmatpush.bf16.msra.mxu0 %v2217
      %2444 = vmatpush.bf16.msra.mxu0 %v2213
      %2445 = vmatmul.bf16.gmra.mxu0 %v874
      %v2446 = vpop.f32.mrf.mxu0
      %v2447 = vadd.f32 0.0, %v2446
      %v2448 = vpop.f32.mrf.mxu0
      %2449 = vdwg.mxu0
      %2450 = vmatpush.bf16.msra.mxu0 %v2273
      %2451 = vmatpush.bf16.msra.mxu0 %v2269
      %2452 = vmatpush.bf16.msra.mxu0 %v2265
      %2453 = vmatpush.bf16.msra.mxu0 %v2261
      %2454 = vmatpush.bf16.msra.mxu0 %v2257
      %2455 = vmatpush.bf16.msra.mxu0 %v2253
      %2456 = vmatpush.bf16.msra.mxu0 %v2249
      %2457 = vmatpush.bf16.msra.mxu0 %v2245
      %2458 = vmatmul.bf16.gmra.mxu0 %v875
      %v2459 = vpop.f32.mrf.mxu0
      %v2460 = vadd.f32 %v2447, %v2459
      %v2461 = vpop.f32.mrf.mxu0
      %2462 = vdwg.mxu0
      %2463 = vmatpush.bf16.msra.mxu0 %v2305
      %2464 = vmatpush.bf16.msra.mxu0 %v2301
      %2465 = vmatpush.bf16.msra.mxu0 %v2297
      %2466 = vmatpush.bf16.msra.mxu0 %v2293
      %2467 = vmatpush.bf16.msra.mxu0 %v2289
      %2468 = vmatpush.bf16.msra.mxu0 %v2285
      %2469 = vmatpush.bf16.msra.mxu0 %v2281
      %2470 = vmatpush.bf16.msra.mxu0 %v2277
      %2471 = vmatmul.bf16.gmra.mxu0 %v876
      %v2472 = vpop.f32.mrf.mxu0
      %v2473 = vadd.f32 %v2460, %v2472
      %v2474 = vpop.f32.mrf.mxu0
      %2475 = vdwg.mxu0
      %2476 = vmatpush.bf16.msra.mxu0 0
      %2477 = vmatpush.bf16.msra.mxu0 0
      %2478 = vmatpush.bf16.msra.mxu0 0
      %2479 = vmatpush.bf16.msra.mxu0 0
      %2480 = vmatpush.bf16.msra.mxu0 %v2321
      %2481 = vmatpush.bf16.msra.mxu0 %v2317
      %2482 = vmatpush.bf16.msra.mxu0 %v2313
      %2483 = vmatpush.bf16.msra.mxu0 %v2309
      %2484 = vmatmul.bf16.gmra.mxu0 %v1552
      %v2485 = vpop.f32.mrf.mxu0
      %v2486 = vadd.f32 %v2473, %v2485
      %v2487 = vpop.f32.mrf.mxu0
      %2488 = vdwg.mxu0
      %2489 = vmatpush.bf16.msra.mxu0 %v2242
      %2490 = vmatpush.bf16.msra.mxu0 %v2238
      %2491 = vmatpush.bf16.msra.mxu0 %v2234
      %2492 = vmatpush.bf16.msra.mxu0 %v2230
      %2493 = vmatpush.bf16.msra.mxu0 %v2226
      %2494 = vmatpush.bf16.msra.mxu0 %v2222
      %2495 = vmatpush.bf16.msra.mxu0 %v2218
      %2496 = vmatpush.bf16.msra.mxu0 %v2214
      %2497 = vmatmul.bf16.gmra.mxu0 %v874
      %v2498 = vpop.f32.mrf.mxu0
      %v2499 = vadd.f32 0.0, %v2498
      %v2500 = vpop.f32.mrf.mxu0
      %2501 = vdwg.mxu0
      %2502 = vmatpush.bf16.msra.mxu0 %v2274
      %2503 = vmatpush.bf16.msra.mxu0 %v2270
      %2504 = vmatpush.bf16.msra.mxu0 %v2266
      %2505 = vmatpush.bf16.msra.mxu0 %v2262
      %2506 = vmatpush.bf16.msra.mxu0 %v2258
      %2507 = vmatpush.bf16.msra.mxu0 %v2254
      %2508 = vmatpush.bf16.msra.mxu0 %v2250
      %2509 = vmatpush.bf16.msra.mxu0 %v2246
      %2510 = vmatmul.bf16.gmra.mxu0 %v875
      %v2511 = vpop.f32.mrf.mxu0
      %v2512 = vadd.f32 %v2499, %v2511
      %v2513 = vpop.f32.mrf.mxu0
      %2514 = vdwg.mxu0
      %2515 = vmatpush.bf16.msra.mxu0 %v2306
      %2516 = vmatpush.bf16.msra.mxu0 %v2302
      %2517 = vmatpush.bf16.msra.mxu0 %v2298
      %2518 = vmatpush.bf16.msra.mxu0 %v2294
      %2519 = vmatpush.bf16.msra.mxu0 %v2290
      %2520 = vmatpush.bf16.msra.mxu0 %v2286
      %2521 = vmatpush.bf16.msra.mxu0 %v2282
      %2522 = vmatpush.bf16.msra.mxu0 %v2278
      %2523 = vmatmul.bf16.gmra.mxu0 %v876
      %v2524 = vpop.f32.mrf.mxu0
      %v2525 = vadd.f32 %v2512, %v2524
      %v2526 = vpop.f32.mrf.mxu0
      %2527 = vdwg.mxu0
      %2528 = vmatpush.bf16.msra.mxu0 0
      %2529 = vmatpush.bf16.msra.mxu0 0
      %2530 = vmatpush.bf16.msra.mxu0 0
      %2531 = vmatpush.bf16.msra.mxu0 0
      %2532 = vmatpush.bf16.msra.mxu0 %v2322
      %2533 = vmatpush.bf16.msra.mxu0 %v2318
      %2534 = vmatpush.bf16.msra.mxu0 %v2314
      %2535 = vmatpush.bf16.msra.mxu0 %v2310
      %2536 = vmatmul.bf16.gmra.mxu0 %v1552
      %v2537 = vpop.f32.mrf.mxu0
      %v2538 = vadd.f32 %v2525, %v2537
      %v2539 = vpop.f32.mrf.mxu0
      %2540 = vdwg.mxu0
      %2541 = vmatpush.bf16.msra.mxu0 %v2243
      %2542 = vmatpush.bf16.msra.mxu0 %v2239
      %2543 = vmatpush.bf16.msra.mxu0 %v2235
      %2544 = vmatpush.bf16.msra.mxu0 %v2231
      %2545 = vmatpush.bf16.msra.mxu0 %v2227
      %2546 = vmatpush.bf16.msra.mxu0 %v2223
      %2547 = vmatpush.bf16.msra.mxu0 %v2219
      %2548 = vmatpush.bf16.msra.mxu0 %v2215
      %2549 = vmatmul.bf16.gmra.mxu0 %v874
      %v2550 = vpop.f32.mrf.mxu0
      %v2551 = vadd.f32 0.0, %v2550
      %v2552 = vpop.f32.mrf.mxu0
      %2553 = vdwg.mxu0
      %2554 = vmatpush.bf16.msra.mxu0 %v2275
      %2555 = vmatpush.bf16.msra.mxu0 %v2271
      %2556 = vmatpush.bf16.msra.mxu0 %v2267
      %2557 = vmatpush.bf16.msra.mxu0 %v2263
      %2558 = vmatpush.bf16.msra.mxu0 %v2259
      %2559 = vmatpush.bf16.msra.mxu0 %v2255
      %2560 = vmatpush.bf16.msra.mxu0 %v2251
      %2561 = vmatpush.bf16.msra.mxu0 %v2247
      %2562 = vmatmul.bf16.gmra.mxu0 %v875
      %v2563 = vpop.f32.mrf.mxu0
      %v2564 = vadd.f32 %v2551, %v2563
      %v2565 = vpop.f32.mrf.mxu0
      %2566 = vdwg.mxu0
      %2567 = vmatpush.bf16.msra.mxu0 %v2307
      %2568 = vmatpush.bf16.msra.mxu0 %v2303
      %2569 = vmatpush.bf16.msra.mxu0 %v2299
      %2570 = vmatpush.bf16.msra.mxu0 %v2295
      %2571 = vmatpush.bf16.msra.mxu0 %v2291
      %2572 = vmatpush.bf16.msra.mxu0 %v2287
      %2573 = vmatpush.bf16.msra.mxu0 %v2283
      %2574 = vmatpush.bf16.msra.mxu0 %v2279
      %2575 = vmatmul.bf16.gmra.mxu0 %v876
      %v2576 = vpop.f32.mrf.mxu0
      %v2577 = vadd.f32 %v2564, %v2576
      %v2578 = vpop.f32.mrf.mxu0
      %2579 = vdwg.mxu0
      %2580 = vmatpush.bf16.msra.mxu0 0
      %2581 = vmatpush.bf16.msra.mxu0 0
      %2582 = vmatpush.bf16.msra.mxu0 0
      %2583 = vmatpush.bf16.msra.mxu0 0
      %2584 = vmatpush.bf16.msra.mxu0 %v2323
      %2585 = vmatpush.bf16.msra.mxu0 %v2319
      %2586 = vmatpush.bf16.msra.mxu0 %v2315
      %2587 = vmatpush.bf16.msra.mxu0 %v2311
      %2588 = vmatmul.bf16.gmra.mxu0 %v1552
      %v2589 = vpop.f32.mrf.mxu0
      %v2590 = vadd.f32 %v2577, %v2589
      %v2591 = vpop.f32.mrf.mxu0
      %2592 = vdwg.mxu0
      %2593 = vmatpush.bf16.msra.mxu0 %v2244
      %2594 = vmatpush.bf16.msra.mxu0 %v2240
      %2595 = vmatpush.bf16.msra.mxu0 %v2236
      %2596 = vmatpush.bf16.msra.mxu0 %v2232
      %2597 = vmatpush.bf16.msra.mxu0 %v2228
      %2598 = vmatpush.bf16.msra.mxu0 %v2224
      %2599 = vmatpush.bf16.msra.mxu0 %v2220
      %2600 = vmatpush.bf16.msra.mxu0 %v2216
      %2601 = vmatmul.bf16.gmra.mxu0 %v874
      %v2602 = vpop.f32.mrf.mxu0
      %v2603 = vadd.f32 0.0, %v2602
      %v2604 = vpop.f32.mrf.mxu0
      %2605 = vdwg.mxu0
      %2606 = vmatpush.bf16.msra.mxu0 %v2276
      %2607 = vmatpush.bf16.msra.mxu0 %v2272
      %2608 = vmatpush.bf16.msra.mxu0 %v2268
      %2609 = vmatpush.bf16.msra.mxu0 %v2264
      %2610 = vmatpush.bf16.msra.mxu0 %v2260
      %2611 = vmatpush.bf16.msra.mxu0 %v2256
      %2612 = vmatpush.bf16.msra.mxu0 %v2252
      %2613 = vmatpush.bf16.msra.mxu0 %v2248
      %2614 = vmatmul.bf16.gmra.mxu0 %v875
      %v2615 = vpop.f32.mrf.mxu0
      %v2616 = vadd.f32 %v2603, %v2615
      %v2617 = vpop.f32.mrf.mxu0
      %2618 = vdwg.mxu0
      %2619 = vmatpush.bf16.msra.mxu0 %v2308
      %2620 = vmatpush.bf16.msra.mxu0 %v2304
      %2621 = vmatpush.bf16.msra.mxu0 %v2300
      %2622 = vmatpush.bf16.msra.mxu0 %v2296
      %2623 = vmatpush.bf16.msra.mxu0 %v2292
      %2624 = vmatpush.bf16.msra.mxu0 %v2288
      %2625 = vmatpush.bf16.msra.mxu0 %v2284
      %2626 = vmatpush.bf16.msra.mxu0 %v2280
      %2627 = vmatmul.bf16.gmra.mxu0 %v876
      %v2628 = vpop.f32.mrf.mxu0
      %v2629 = vadd.f32 %v2616, %v2628
      %v2630 = vpop.f32.mrf.mxu0
      %2631 = vdwg.mxu0
      %2632 = vmatpush.bf16.msra.mxu0 0
      %2633 = vmatpush.bf16.msra.mxu0 0
      %2634 = vmatpush.bf16.msra.mxu0 0
      %2635 = vmatpush.bf16.msra.mxu0 0
      %2636 = vmatpush.bf16.msra.mxu0 %v2324
      %2637 = vmatpush.bf16.msra.mxu0 %v2320
      %2638 = vmatpush.bf16.msra.mxu0 %v2316
      %2639 = vmatpush.bf16.msra.mxu0 %v2312
      %2640 = vmatmul.bf16.gmra.mxu0 %v1552
      %v2641 = vpop.f32.mrf.mxu0
      %v2642 = vadd.f32 %v2629, %v2641
      %v2643 = vpop.f32.mrf.mxu0
      %2644 = vdwg.mxu0
      %s2645 = scalar_lea.vmem %s4, 16
      %v2646 = vld [vmem:[%s2645] sm:$0xff]
      %v2647 = vld [vmem:[%s2645 + $0x8] sm:$0xff]
      %vm2648 = vcmask 56320
      %v2650 = vsel %vm2648, %v2646, 0
      %v2653 = vsel %vm2648, %v2647, 0
      %vm2655 = vcmask 1046528
      %v2657 = vsel %vm2655, %v2486, 0
      %v2660 = vsel %vm2655, %v2538, 0
      %v2663 = vsel %vm2655, %v2590, 0
      %v2666 = vsel %vm2655, %v2642, 0
      %2668 = vmatpush.msra.mxu0 0.0
      %2669 = vmatpush.msra.mxu0 0.0
      %2670 = vmatpush.msra.mxu0 0.0
      %2671 = vmatpush.msra.mxu0 0.0
      %2672 = vmatpush.msra.mxu0 0.0
      %2673 = vmatpush.msra.mxu0 0.0
      %2674 = vmatpush.msra.mxu0 0.0
      %2675 = vmatpush.msra.mxu0 0.0
      %2676 = vmatpush.msra.mxu0 0.0
      %2677 = vmatpush.msra.mxu0 0.0
      %2678 = vmatpush.msra.mxu0 0.0
      %2679 = vmatpush.msra.mxu0 0.0
      %2680 = vmatpush.msra.mxu0 0.0
      %2681 = vmatpush.msra.mxu0 0.0
      %2682 = vmatpush.msra.mxu0 0.0
      %2683 = vmatpush.msra.mxu0 %v2657
      %2684 = vmatmul.f32.gmra.mxu0 %v2650
      %v2685 = vpop.f32.mrf.mxu0
      %v2686 = vadd.f32 0.0, %v2685
      %2687 = vmatmul.f32.gmra.mxu0 %v2653
      %v2688 = vpop.f32.mrf.mxu0
      %v2689 = vadd.f32 0.0, %v2688
      %2690 = vdwg.mxu0
      %2691 = vmatpush.msra.mxu0 0.0
      %2692 = vmatpush.msra.mxu0 0.0
      %2693 = vmatpush.msra.mxu0 0.0
      %2694 = vmatpush.msra.mxu0 0.0
      %2695 = vmatpush.msra.mxu0 0.0
      %2696 = vmatpush.msra.mxu0 0.0
      %2697 = vmatpush.msra.mxu0 0.0
      %2698 = vmatpush.msra.mxu0 0.0
      %2699 = vmatpush.msra.mxu0 0.0
      %2700 = vmatpush.msra.mxu0 0.0
      %2701 = vmatpush.msra.mxu0 0.0
      %2702 = vmatpush.msra.mxu0 0.0
      %2703 = vmatpush.msra.mxu0 0.0
      %2704 = vmatpush.msra.mxu0 0.0
      %2705 = vmatpush.msra.mxu0 0.0
      %2706 = vmatpush.msra.mxu0 %v2660
      %2707 = vmatmul.f32.gmra.mxu0 %v2650
      %v2708 = vpop.f32.mrf.mxu0
      %v2709 = vadd.f32 0.0, %v2708
      %2710 = vmatmul.f32.gmra.mxu0 %v2653
      %v2711 = vpop.f32.mrf.mxu0
      %v2712 = vadd.f32 0.0, %v2711
      %2713 = vdwg.mxu0
      %2714 = vmatpush.msra.mxu0 0.0
      %2715 = vmatpush.msra.mxu0 0.0
      %2716 = vmatpush.msra.mxu0 0.0
      %2717 = vmatpush.msra.mxu0 0.0
      %2718 = vmatpush.msra.mxu0 0.0
      %2719 = vmatpush.msra.mxu0 0.0
      %2720 = vmatpush.msra.mxu0 0.0
      %2721 = vmatpush.msra.mxu0 0.0
      %2722 = vmatpush.msra.mxu0 0.0
      %2723 = vmatpush.msra.mxu0 0.0
      %2724 = vmatpush.msra.mxu0 0.0
      %2725 = vmatpush.msra.mxu0 0.0
      %2726 = vmatpush.msra.mxu0 0.0
      %2727 = vmatpush.msra.mxu0 0.0
      %2728 = vmatpush.msra.mxu0 0.0
      %2729 = vmatpush.msra.mxu0 %v2663
      %2730 = vmatmul.f32.gmra.mxu0 %v2650
      %v2731 = vpop.f32.mrf.mxu0
      %v2732 = vadd.f32 0.0, %v2731
      %2733 = vmatmul.f32.gmra.mxu0 %v2653
      %v2734 = vpop.f32.mrf.mxu0
      %v2735 = vadd.f32 0.0, %v2734
      %2736 = vdwg.mxu0
      %2737 = vmatpush.msra.mxu0 0.0
      %2738 = vmatpush.msra.mxu0 0.0
      %2739 = vmatpush.msra.mxu0 0.0
      %2740 = vmatpush.msra.mxu0 0.0
      %2741 = vmatpush.msra.mxu0 0.0
      %2742 = vmatpush.msra.mxu0 0.0
      %2743 = vmatpush.msra.mxu0 0.0
      %2744 = vmatpush.msra.mxu0 0.0
      %2745 = vmatpush.msra.mxu0 0.0
      %2746 = vmatpush.msra.mxu0 0.0
      %2747 = vmatpush.msra.mxu0 0.0
      %2748 = vmatpush.msra.mxu0 0.0
      %2749 = vmatpush.msra.mxu0 0.0
      %2750 = vmatpush.msra.mxu0 0.0
      %2751 = vmatpush.msra.mxu0 0.0
      %2752 = vmatpush.msra.mxu0 %v2666
      %2753 = vmatmul.f32.gmra.mxu0 %v2650
      %v2754 = vpop.f32.mrf.mxu0
      %v2755 = vadd.f32 0.0, %v2754
      %2756 = vmatmul.f32.gmra.mxu0 %v2653
      %v2757 = vpop.f32.mrf.mxu0
      %v2758 = vadd.f32 0.0, %v2757
      %2759 = vdwg.mxu0
      %v2761 = vsel %vm2648, %v1762, 0
      %v2764 = vsel %vm2648, %v1763, 0
      %v2767 = vsel %vm2655, %v1603, 0
      %v2770 = vsel %vm2655, %v1655, 0
      %v2773 = vsel %vm2655, %v1707, 0
      %v2776 = vsel %vm2655, %v1759, 0
      %2778 = vmatpush.msra.mxu0 0.0
      %2779 = vmatpush.msra.mxu0 0.0
      %2780 = vmatpush.msra.mxu0 0.0
      %2781 = vmatpush.msra.mxu0 0.0
      %2782 = vmatpush.msra.mxu0 0.0
      %2783 = vmatpush.msra.mxu0 0.0
      %2784 = vmatpush.msra.mxu0 0.0
      %2785 = vmatpush.msra.mxu0 0.0
      %2786 = vmatpush.msra.mxu0 0.0
      %2787 = vmatpush.msra.mxu0 0.0
      %2788 = vmatpush.msra.mxu0 0.0
      %2789 = vmatpush.msra.mxu0 0.0
      %2790 = vmatpush.msra.mxu0 0.0
      %2791 = vmatpush.msra.mxu0 0.0
      %2792 = vmatpush.msra.mxu0 0.0
      %2793 = vmatpush.msra.mxu0 %v2767
      %2794 = vmatmul.f32.gmra.mxu0 %v2761
      %v2795 = vpop.f32.mrf.mxu0
      %v2796 = vadd.f32 %v2686, %v2795
      %2797 = vmatmul.f32.gmra.mxu0 %v2764
      %v2798 = vpop.f32.mrf.mxu0
      %v2799 = vadd.f32 %v2689, %v2798
      %2800 = vdwg.mxu0
      %2801 = vmatpush.msra.mxu0 0.0
      %2802 = vmatpush.msra.mxu0 0.0
      %2803 = vmatpush.msra.mxu0 0.0
      %2804 = vmatpush.msra.mxu0 0.0
      %2805 = vmatpush.msra.mxu0 0.0
      %2806 = vmatpush.msra.mxu0 0.0
      %2807 = vmatpush.msra.mxu0 0.0
      %2808 = vmatpush.msra.mxu0 0.0
      %2809 = vmatpush.msra.mxu0 0.0
      %2810 = vmatpush.msra.mxu0 0.0
      %2811 = vmatpush.msra.mxu0 0.0
      %2812 = vmatpush.msra.mxu0 0.0
      %2813 = vmatpush.msra.mxu0 0.0
      %2814 = vmatpush.msra.mxu0 0.0
      %2815 = vmatpush.msra.mxu0 0.0
      %2816 = vmatpush.msra.mxu0 %v2770
      %2817 = vmatmul.f32.gmra.mxu0 %v2761
      %v2818 = vpop.f32.mrf.mxu0
      %v2819 = vadd.f32 %v2709, %v2818
      %2820 = vmatmul.f32.gmra.mxu0 %v2764
      %v2821 = vpop.f32.mrf.mxu0
      %v2822 = vadd.f32 %v2712, %v2821
      %2823 = vdwg.mxu0
      %2824 = vmatpush.msra.mxu0 0.0
      %2825 = vmatpush.msra.mxu0 0.0
      %2826 = vmatpush.msra.mxu0 0.0
      %2827 = vmatpush.msra.mxu0 0.0
      %2828 = vmatpush.msra.mxu0 0.0
      %2829 = vmatpush.msra.mxu0 0.0
      %2830 = vmatpush.msra.mxu0 0.0
      %2831 = vmatpush.msra.mxu0 0.0
      %2832 = vmatpush.msra.mxu0 0.0
      %2833 = vmatpush.msra.mxu0 0.0
      %2834 = vmatpush.msra.mxu0 0.0
      %2835 = vmatpush.msra.mxu0 0.0
      %2836 = vmatpush.msra.mxu0 0.0
      %2837 = vmatpush.msra.mxu0 0.0
      %2838 = vmatpush.msra.mxu0 0.0
      %2839 = vmatpush.msra.mxu0 %v2773
      %2840 = vmatmul.f32.gmra.mxu0 %v2761
      %v2841 = vpop.f32.mrf.mxu0
      %v2842 = vadd.f32 %v2732, %v2841
      %2843 = vmatmul.f32.gmra.mxu0 %v2764
      %v2844 = vpop.f32.mrf.mxu0
      %v2845 = vadd.f32 %v2735, %v2844
      %2846 = vdwg.mxu0
      %2847 = vmatpush.msra.mxu0 0.0
      %2848 = vmatpush.msra.mxu0 0.0
      %2849 = vmatpush.msra.mxu0 0.0
      %2850 = vmatpush.msra.mxu0 0.0
      %2851 = vmatpush.msra.mxu0 0.0
      %2852 = vmatpush.msra.mxu0 0.0
      %2853 = vmatpush.msra.mxu0 0.0
      %2854 = vmatpush.msra.mxu0 0.0
      %2855 = vmatpush.msra.mxu0 0.0
      %2856 = vmatpush.msra.mxu0 0.0
      %2857 = vmatpush.msra.mxu0 0.0
      %2858 = vmatpush.msra.mxu0 0.0
      %2859 = vmatpush.msra.mxu0 0.0
      %2860 = vmatpush.msra.mxu0 0.0
      %2861 = vmatpush.msra.mxu0 0.0
      %2862 = vmatpush.msra.mxu0 %v2776
      %2863 = vmatmul.f32.gmra.mxu0 %v2761
      %v2864 = vpop.f32.mrf.mxu0
      %v2865 = vadd.f32 %v2755, %v2864
      %2866 = vmatmul.f32.gmra.mxu0 %v2764
      %v2867 = vpop.f32.mrf.mxu0
      %v2868 = vadd.f32 %v2758, %v2867
      %2869 = vdwg.mxu0
      %s2870 = scalar_lea.vmem %s3, 1792
      %v2871 = vld [vmem:[%s2870] sm:$0xff]
      %v2872 = vld [vmem:[%s2870 + $0x8] sm:$0xff]
      %v2873 = vld [vmem:[%s2870 + $0x10] sm:$0xff]
      %v2874 = vld [vmem:[%s2870 + $0x18] sm:$0xff]
      %v2875 = vld [vmem:[%s2870 + $0x20] sm:$0xff]
      %v2876 = vld [vmem:[%s2870 + $0x28] sm:$0xff]
      %v2877 = vld [vmem:[%s2870 + $0x30] sm:$0xff]
      %v2878 = vld [vmem:[%s2870 + $0x38] sm:$0xff]
      %v2879 = vld [vmem:[%s2870 + $0x40] sm:$0xff]
      %v2880 = vld [vmem:[%s2870 + $0x48] sm:$0xff]
      %v2881 = vld [vmem:[%s2870 + $0x50] sm:$0xff]
      %v2882 = vld [vmem:[%s2870 + $0x58] sm:$0xff]
      %v2883 = vld [vmem:[%s2870 + $0x60] sm:$0xff]
      %v2884 = vld [vmem:[%s2870 + $0x68] sm:$0xff]
      %v2885 = vld [vmem:[%s2870 + $0x70] sm:$0xff]
      %v2886 = vld [vmem:[%s2870 + $0x78] sm:$0xff]
      %v2887 = vld [vmem:[%s2870 + $0x80] sm:$0xff]
      %v2888 = vld [vmem:[%s2870 + $0x88] sm:$0xff]
      %v2889 = vld [vmem:[%s2870 + $0x90] sm:$0xff]
      %v2890 = vld [vmem:[%s2870 + $0x98] sm:$0xff]
      %v2891 = vld [vmem:[%s2870 + $0xa0] sm:$0xff]
      %v2892 = vld [vmem:[%s2870 + $0xa8] sm:$0xff]
      %v2893 = vld [vmem:[%s2870 + $0xb0] sm:$0xff]
      %v2894 = vld [vmem:[%s2870 + $0xb8] sm:$0xff]
      %v2895 = vld [vmem:[%s2870 + $0xc0] sm:$0xff]
      %v2896 = vld [vmem:[%s2870 + $0xc8] sm:$0xff]
      %v2897 = vld [vmem:[%s2870 + $0xd0] sm:$0xff]
      %v2898 = vld [vmem:[%s2870 + $0xd8] sm:$0xff]
      %v2899 = vld [vmem:[%s2870 + $0xe0] sm:$0xff]
      %v2900 = vld [vmem:[%s2870 + $0xe8] sm:$0xff]
      %v2901 = vld [vmem:[%s2870 + $0xf0] sm:$0xff]
      %v2902 = vld [vmem:[%s2870 + $0xf8] sm:$0xff]
      %v2903 = vld [vmem:[%s2870 + $0x100] sm:$0xff]
      %v2904 = vld [vmem:[%s2870 + $0x108] sm:$0xff]
      %v2905 = vld [vmem:[%s2870 + $0x110] sm:$0xff]
      %v2906 = vld [vmem:[%s2870 + $0x118] sm:$0xff]
      %v2907 = vld [vmem:[%s2870 + $0x120] sm:$0xff]
      %v2908 = vld [vmem:[%s2870 + $0x128] sm:$0xff]
      %v2909 = vld [vmem:[%s2870 + $0x130] sm:$0xff]
      %v2910 = vld [vmem:[%s2870 + $0x138] sm:$0xff]
      %v2911 = vld [vmem:[%s2870 + $0x140] sm:$0xff]
      %v2912 = vld [vmem:[%s2870 + $0x148] sm:$0xff]
      %v2913 = vld [vmem:[%s2870 + $0x150] sm:$0xff]
      %v2914 = vld [vmem:[%s2870 + $0x158] sm:$0xff]
      %v2915 = vld [vmem:[%s2870 + $0x160] sm:$0xff]
      %v2916 = vld [vmem:[%s2870 + $0x168] sm:$0xff]
      %v2917 = vld [vmem:[%s2870 + $0x170] sm:$0xff]
      %v2918 = vld [vmem:[%s2870 + $0x178] sm:$0xff]
      %v2919 = vld [vmem:[%s2870 + $0x180] sm:$0xff]
      %v2920 = vld [vmem:[%s2870 + $0x188] sm:$0xff]
      %v2921 = vld [vmem:[%s2870 + $0x190] sm:$0xff]
      %v2922 = vld [vmem:[%s2870 + $0x198] sm:$0xff]
      %v2923 = vld [vmem:[%s2870 + $0x1a0] sm:$0xff]
      %v2924 = vld [vmem:[%s2870 + $0x1a8] sm:$0xff]
      %v2925 = vld [vmem:[%s2870 + $0x1b0] sm:$0xff]
      %v2926 = vld [vmem:[%s2870 + $0x1b8] sm:$0xff]
      %v2927 = vld [vmem:[%s2870 + $0x1c0] sm:$0xff]
      %v2928 = vld [vmem:[%s2870 + $0x1c8] sm:$0xff]
      %v2929 = vld [vmem:[%s2870 + $0x1d0] sm:$0xff]
      %v2930 = vld [vmem:[%s2870 + $0x1d8] sm:$0xff]
      %v2931 = vld [vmem:[%s2870 + $0x1e0] sm:$0xff]
      %v2932 = vld [vmem:[%s2870 + $0x1e8] sm:$0xff]
      %v2933 = vld [vmem:[%s2870 + $0x1f0] sm:$0xff]
      %v2934 = vld [vmem:[%s2870 + $0x1f8] sm:$0xff]
      %v2935 = vld [vmem:[%s2870 + $0x200] sm:$0xff]
      %v2936 = vld [vmem:[%s2870 + $0x208] sm:$0xff]
      %v2937 = vld [vmem:[%s2870 + $0x210] sm:$0xff]
      %v2938 = vld [vmem:[%s2870 + $0x218] sm:$0xff]
      %v2939 = vld [vmem:[%s2870 + $0x220] sm:$0xff]
      %v2940 = vld [vmem:[%s2870 + $0x228] sm:$0xff]
      %v2941 = vld [vmem:[%s2870 + $0x230] sm:$0xff]
      %v2942 = vld [vmem:[%s2870 + $0x238] sm:$0xff]
      %v2943 = vld [vmem:[%s2870 + $0x240] sm:$0xff]
      %v2944 = vld [vmem:[%s2870 + $0x248] sm:$0xff]
      %v2945 = vld [vmem:[%s2870 + $0x250] sm:$0xff]
      %v2946 = vld [vmem:[%s2870 + $0x258] sm:$0xff]
      %v2947 = vld [vmem:[%s2870 + $0x260] sm:$0xff]
      %v2948 = vld [vmem:[%s2870 + $0x268] sm:$0xff]
      %v2949 = vld [vmem:[%s2870 + $0x270] sm:$0xff]
      %v2950 = vld [vmem:[%s2870 + $0x278] sm:$0xff]
      %v2951 = vld [vmem:[%s2870 + $0x280] sm:$0xff]
      %v2952 = vld [vmem:[%s2870 + $0x288] sm:$0xff]
      %v2953 = vld [vmem:[%s2870 + $0x290] sm:$0xff]
      %v2954 = vld [vmem:[%s2870 + $0x298] sm:$0xff]
      %v2955 = vld [vmem:[%s2870 + $0x2a0] sm:$0xff]
      %v2956 = vld [vmem:[%s2870 + $0x2a8] sm:$0xff]
      %v2957 = vld [vmem:[%s2870 + $0x2b0] sm:$0xff]
      %v2958 = vld [vmem:[%s2870 + $0x2b8] sm:$0xff]
      %v2959 = vld [vmem:[%s2870 + $0x2c0] sm:$0xff]
      %v2960 = vld [vmem:[%s2870 + $0x2c8] sm:$0xff]
      %v2961 = vld [vmem:[%s2870 + $0x2d0] sm:$0xff]
      %v2962 = vld [vmem:[%s2870 + $0x2d8] sm:$0xff]
      %v2963 = vld [vmem:[%s2870 + $0x2e0] sm:$0xff]
      %v2964 = vld [vmem:[%s2870 + $0x2e8] sm:$0xff]
      %v2965 = vld [vmem:[%s2870 + $0x2f0] sm:$0xff]
      %v2966 = vld [vmem:[%s2870 + $0x2f8] sm:$0xff]
      %v2967 = vld [vmem:[%s2870 + $0x300] sm:$0xff]
      %v2968 = vld [vmem:[%s2870 + $0x308] sm:$0xff]
      %v2969 = vld [vmem:[%s2870 + $0x310] sm:$0xff]
      %v2970 = vld [vmem:[%s2870 + $0x318] sm:$0xff]
      %v2971 = vld [vmem:[%s2870 + $0x320] sm:$0xff]
      %v2972 = vld [vmem:[%s2870 + $0x328] sm:$0xff]
      %v2973 = vld [vmem:[%s2870 + $0x330] sm:$0xff]
      %v2974 = vld [vmem:[%s2870 + $0x338] sm:$0xff]
      %v2975 = vld [vmem:[%s2870 + $0x340] sm:$0xff]
      %v2976 = vld [vmem:[%s2870 + $0x348] sm:$0xff]
      %v2977 = vld [vmem:[%s2870 + $0x350] sm:$0xff]
      %v2978 = vld [vmem:[%s2870 + $0x358] sm:$0xff]
      %v2979 = vld [vmem:[%s2870 + $0x360] sm:$0xff]
      %v2980 = vld [vmem:[%s2870 + $0x368] sm:$0xff]
      %v2981 = vld [vmem:[%s2870 + $0x370] sm:$0xff]
      %v2982 = vld [vmem:[%s2870 + $0x378] sm:$0xff]
      %v3095 = vunpack.c.l.b16 %v2871
      %v3096 = vunpack.c.h.b16 %v2871
      %v3097 = vunpack.c.l.b16 %v2872
      %v3098 = vunpack.c.h.b16 %v2872
      %v3099 = vunpack.c.l.b16 %v2873
      %v3100 = vunpack.c.h.b16 %v2873
      %v3101 = vunpack.c.l.b16 %v2874
      %v3102 = vunpack.c.h.b16 %v2874
      %v3103 = vunpack.c.l.b16 %v2875
      %v3104 = vunpack.c.h.b16 %v2875
      %v3105 = vunpack.c.l.b16 %v2876
      %v3106 = vunpack.c.h.b16 %v2876
      %v3107 = vunpack.c.l.b16 %v2877
      %v3108 = vunpack.c.h.b16 %v2877
      %v3109 = vunpack.c.l.b16 %v2878
      %v3110 = vunpack.c.h.b16 %v2878
      %v3111 = vunpack.c.l.b16 %v2879
      %v3112 = vunpack.c.h.b16 %v2879
      %v3113 = vunpack.c.l.b16 %v2880
      %v3114 = vunpack.c.h.b16 %v2880
      %v3115 = vunpack.c.l.b16 %v2881
      %v3116 = vunpack.c.h.b16 %v2881
      %v3117 = vunpack.c.l.b16 %v2882
      %v3118 = vunpack.c.h.b16 %v2882
      %v3119 = vunpack.c.l.b16 %v2883
      %v3120 = vunpack.c.h.b16 %v2883
      %v3121 = vunpack.c.l.b16 %v2884
      %v3122 = vunpack.c.h.b16 %v2884
      %v3123 = vunpack.c.l.b16 %v2885
      %v3124 = vunpack.c.h.b16 %v2885
      %v3125 = vunpack.c.l.b16 %v2886
      %v3126 = vunpack.c.h.b16 %v2886
      %v3127 = vunpack.c.l.b16 %v2887
      %v3128 = vunpack.c.h.b16 %v2887
      %v3129 = vunpack.c.l.b16 %v2888
      %v3130 = vunpack.c.h.b16 %v2888
      %v3131 = vunpack.c.l.b16 %v2889
      %v3132 = vunpack.c.h.b16 %v2889
      %v3133 = vunpack.c.l.b16 %v2890
      %v3134 = vunpack.c.h.b16 %v2890
      %v3135 = vunpack.c.l.b16 %v2891
      %v3136 = vunpack.c.h.b16 %v2891
      %v3137 = vunpack.c.l.b16 %v2892
      %v3138 = vunpack.c.h.b16 %v2892
      %v3139 = vunpack.c.l.b16 %v2893
      %v3140 = vunpack.c.h.b16 %v2893
      %v3141 = vunpack.c.l.b16 %v2894
      %v3142 = vunpack.c.h.b16 %v2894
      %v3143 = vunpack.c.l.b16 %v2895
      %v3144 = vunpack.c.h.b16 %v2895
      %v3145 = vunpack.c.l.b16 %v2896
      %v3146 = vunpack.c.h.b16 %v2896
      %v3147 = vunpack.c.l.b16 %v2897
      %v3148 = vunpack.c.h.b16 %v2897
      %v3149 = vunpack.c.l.b16 %v2898
      %v3150 = vunpack.c.h.b16 %v2898
      %v3151 = vunpack.c.l.b16 %v2899
      %v3152 = vunpack.c.h.b16 %v2899
      %v3153 = vunpack.c.l.b16 %v2900
      %v3154 = vunpack.c.h.b16 %v2900
      %v3155 = vunpack.c.l.b16 %v2901
      %v3156 = vunpack.c.h.b16 %v2901
      %v3157 = vunpack.c.l.b16 %v2902
      %v3158 = vunpack.c.h.b16 %v2902
      %v3159 = vunpack.c.l.b16 %v2903
      %v3160 = vunpack.c.h.b16 %v2903
      %v3161 = vunpack.c.l.b16 %v2904
      %v3162 = vunpack.c.h.b16 %v2904
      %v3163 = vunpack.c.l.b16 %v2905
      %v3164 = vunpack.c.h.b16 %v2905
      %v3165 = vunpack.c.l.b16 %v2906
      %v3166 = vunpack.c.h.b16 %v2906
      %v3167 = vunpack.c.l.b16 %v2907
      %v3168 = vunpack.c.h.b16 %v2907
      %v3169 = vunpack.c.l.b16 %v2908
      %v3170 = vunpack.c.h.b16 %v2908
      %v3171 = vunpack.c.l.b16 %v2909
      %v3172 = vunpack.c.h.b16 %v2909
      %v3173 = vunpack.c.l.b16 %v2910
      %v3174 = vunpack.c.h.b16 %v2910
      %v3175 = vunpack.c.l.b16 %v2911
      %v3176 = vunpack.c.h.b16 %v2911
      %v3177 = vunpack.c.l.b16 %v2912
      %v3178 = vunpack.c.h.b16 %v2912
      %v3179 = vunpack.c.l.b16 %v2913
      %v3180 = vunpack.c.h.b16 %v2913
      %v3181 = vunpack.c.l.b16 %v2914
      %v3182 = vunpack.c.h.b16 %v2914
      %v3183 = vunpack.c.l.b16 %v2915
      %v3184 = vunpack.c.h.b16 %v2915
      %v3185 = vunpack.c.l.b16 %v2916
      %v3186 = vunpack.c.h.b16 %v2916
      %v3187 = vunpack.c.l.b16 %v2917
      %v3188 = vunpack.c.h.b16 %v2917
      %v3189 = vunpack.c.l.b16 %v2918
      %v3190 = vunpack.c.h.b16 %v2918
      %v3191 = vunpack.c.l.b16 %v2919
      %v3192 = vunpack.c.h.b16 %v2919
      %v3193 = vunpack.c.l.b16 %v2920
      %v3194 = vunpack.c.h.b16 %v2920
      %v3195 = vunpack.c.l.b16 %v2921
      %v3196 = vunpack.c.h.b16 %v2921
      %v3197 = vunpack.c.l.b16 %v2922
      %v3198 = vunpack.c.h.b16 %v2922
      %v3199 = vunpack.c.l.b16 %v2923
      %v3200 = vunpack.c.h.b16 %v2923
      %v3201 = vunpack.c.l.b16 %v2924
      %v3202 = vunpack.c.h.b16 %v2924
      %v3203 = vunpack.c.l.b16 %v2925
      %v3204 = vunpack.c.h.b16 %v2925
      %v3205 = vunpack.c.l.b16 %v2926
      %v3206 = vunpack.c.h.b16 %v2926
      %v3207 = vunpack.c.l.b16 %v2927
      %v3208 = vunpack.c.h.b16 %v2927
      %v3209 = vunpack.c.l.b16 %v2928
      %v3210 = vunpack.c.h.b16 %v2928
      %v3211 = vunpack.c.l.b16 %v2929
      %v3212 = vunpack.c.h.b16 %v2929
      %v3213 = vunpack.c.l.b16 %v2930
      %v3214 = vunpack.c.h.b16 %v2930
      %v3215 = vunpack.c.l.b16 %v2931
      %v3216 = vunpack.c.h.b16 %v2931
      %v3217 = vunpack.c.l.b16 %v2932
      %v3218 = vunpack.c.h.b16 %v2932
      %v3219 = vunpack.c.l.b16 %v2933
      %v3220 = vunpack.c.h.b16 %v2933
      %v3221 = vunpack.c.l.b16 %v2934
      %v3222 = vunpack.c.h.b16 %v2934
      %v3223 = vunpack.c.l.b16 %v2935
      %v3224 = vunpack.c.h.b16 %v2935
      %v3225 = vunpack.c.l.b16 %v2936
      %v3226 = vunpack.c.h.b16 %v2936
      %v3227 = vunpack.c.l.b16 %v2937
      %v3228 = vunpack.c.h.b16 %v2937
      %v3229 = vunpack.c.l.b16 %v2938
      %v3230 = vunpack.c.h.b16 %v2938
      %v3231 = vunpack.c.l.b16 %v2939
      %v3232 = vunpack.c.h.b16 %v2939
      %v3233 = vunpack.c.l.b16 %v2940
      %v3234 = vunpack.c.h.b16 %v2940
      %v3235 = vunpack.c.l.b16 %v2941
      %v3236 = vunpack.c.h.b16 %v2941
      %v3237 = vunpack.c.l.b16 %v2942
      %v3238 = vunpack.c.h.b16 %v2942
      %v3239 = vunpack.c.l.b16 %v2943
      %v3240 = vunpack.c.h.b16 %v2943
      %v3241 = vunpack.c.l.b16 %v2944
      %v3242 = vunpack.c.h.b16 %v2944
      %v3243 = vunpack.c.l.b16 %v2945
      %v3244 = vunpack.c.h.b16 %v2945
      %v3245 = vunpack.c.l.b16 %v2946
      %v3246 = vunpack.c.h.b16 %v2946
      %v3247 = vunpack.c.l.b16 %v2947
      %v3248 = vunpack.c.h.b16 %v2947
      %v3249 = vunpack.c.l.b16 %v2948
      %v3250 = vunpack.c.h.b16 %v2948
      %v3251 = vunpack.c.l.b16 %v2949
      %v3252 = vunpack.c.h.b16 %v2949
      %v3253 = vunpack.c.l.b16 %v2950
      %v3254 = vunpack.c.h.b16 %v2950
      %v3255 = vunpack.c.l.b16 %v2951
      %v3256 = vunpack.c.h.b16 %v2951
      %v3257 = vunpack.c.l.b16 %v2952
      %v3258 = vunpack.c.h.b16 %v2952
      %v3259 = vunpack.c.l.b16 %v2953
      %v3260 = vunpack.c.h.b16 %v2953
      %v3261 = vunpack.c.l.b16 %v2954
      %v3262 = vunpack.c.h.b16 %v2954
      %v3263 = vunpack.c.l.b16 %v2955
      %v3264 = vunpack.c.h.b16 %v2955
      %v3265 = vunpack.c.l.b16 %v2956
      %v3266 = vunpack.c.h.b16 %v2956
      %v3267 = vunpack.c.l.b16 %v2957
      %v3268 = vunpack.c.h.b16 %v2957
      %v3269 = vunpack.c.l.b16 %v2958
      %v3270 = vunpack.c.h.b16 %v2958
      %v3271 = vunpack.c.l.b16 %v2959
      %v3272 = vunpack.c.h.b16 %v2959
      %v3273 = vunpack.c.l.b16 %v2960
      %v3274 = vunpack.c.h.b16 %v2960
      %v3275 = vunpack.c.l.b16 %v2961
      %v3276 = vunpack.c.h.b16 %v2961
      %v3277 = vunpack.c.l.b16 %v2962
      %v3278 = vunpack.c.h.b16 %v2962
      %v3279 = vunpack.c.l.b16 %v2963
      %v3280 = vunpack.c.h.b16 %v2963
      %v3281 = vunpack.c.l.b16 %v2964
      %v3282 = vunpack.c.h.b16 %v2964
      %v3283 = vunpack.c.l.b16 %v2965
      %v3284 = vunpack.c.h.b16 %v2965
      %v3285 = vunpack.c.l.b16 %v2966
      %v3286 = vunpack.c.h.b16 %v2966
      %v3287 = vunpack.c.l.b16 %v2967
      %v3288 = vunpack.c.h.b16 %v2967
      %v3289 = vunpack.c.l.b16 %v2968
      %v3290 = vunpack.c.h.b16 %v2968
      %v3291 = vunpack.c.l.b16 %v2969
      %v3292 = vunpack.c.h.b16 %v2969
      %v3293 = vunpack.c.l.b16 %v2970
      %v3294 = vunpack.c.h.b16 %v2970
      %v3295 = vunpack.c.l.b16 %v2971
      %v3296 = vunpack.c.h.b16 %v2971
      %v3297 = vunpack.c.l.b16 %v2972
      %v3298 = vunpack.c.h.b16 %v2972
      %v3299 = vunpack.c.l.b16 %v2973
      %v3300 = vunpack.c.h.b16 %v2973
      %v3301 = vunpack.c.l.b16 %v2974
      %v3302 = vunpack.c.h.b16 %v2974
      %v3303 = vunpack.c.l.b16 %v2975
      %v3304 = vunpack.c.h.b16 %v2975
      %v3305 = vunpack.c.l.b16 %v2976
      %v3306 = vunpack.c.h.b16 %v2976
      %v3307 = vunpack.c.l.b16 %v2977
      %v3308 = vunpack.c.h.b16 %v2977
      %v3309 = vunpack.c.l.b16 %v2978
      %v3310 = vunpack.c.h.b16 %v2978
      %v3311 = vunpack.c.l.b16 %v2979
      %v3312 = vunpack.c.h.b16 %v2979
      %v3313 = vunpack.c.l.b16 %v2980
      %v3314 = vunpack.c.h.b16 %v2980
      %v3315 = vunpack.c.l.b16 %v2981
      %v3316 = vunpack.c.h.b16 %v2981
      %v3317 = vunpack.c.l.b16 %v2982
      %v3318 = vunpack.c.h.b16 %v2982
      %v3319 = vpack.c.b16 %v3099, %v3095
      %v3320 = vpack.c.b16 %v3100, %v3096
      %v3321 = vpack.c.b16 %v3101, %v3097
      %v3322 = vpack.c.b16 %v3102, %v3098
      %v3323 = vpack.c.b16 %v3107, %v3103
      %v3324 = vpack.c.b16 %v3108, %v3104
      %v3325 = vpack.c.b16 %v3109, %v3105
      %v3326 = vpack.c.b16 %v3110, %v3106
      %v3327 = vpack.c.b16 %v3115, %v3111
      %v3328 = vpack.c.b16 %v3116, %v3112
      %v3329 = vpack.c.b16 %v3117, %v3113
      %v3330 = vpack.c.b16 %v3118, %v3114
      %v3331 = vpack.c.b16 %v3123, %v3119
      %v3332 = vpack.c.b16 %v3124, %v3120
      %v3333 = vpack.c.b16 %v3125, %v3121
      %v3334 = vpack.c.b16 %v3126, %v3122
      %v3335 = vpack.c.b16 %v3131, %v3127
      %v3336 = vpack.c.b16 %v3132, %v3128
      %v3337 = vpack.c.b16 %v3133, %v3129
      %v3338 = vpack.c.b16 %v3134, %v3130
      %v3339 = vpack.c.b16 %v3139, %v3135
      %v3340 = vpack.c.b16 %v3140, %v3136
      %v3341 = vpack.c.b16 %v3141, %v3137
      %v3342 = vpack.c.b16 %v3142, %v3138
      %v3343 = vpack.c.b16 %v3147, %v3143
      %v3344 = vpack.c.b16 %v3148, %v3144
      %v3345 = vpack.c.b16 %v3149, %v3145
      %v3346 = vpack.c.b16 %v3150, %v3146
      %v3347 = vpack.c.b16 %v3155, %v3151
      %v3348 = vpack.c.b16 %v3156, %v3152
      %v3349 = vpack.c.b16 %v3157, %v3153
      %v3350 = vpack.c.b16 %v3158, %v3154
      %v3351 = vpack.c.b16 %v3163, %v3159
      %v3352 = vpack.c.b16 %v3164, %v3160
      %v3353 = vpack.c.b16 %v3165, %v3161
      %v3354 = vpack.c.b16 %v3166, %v3162
      %v3355 = vpack.c.b16 %v3171, %v3167
      %v3356 = vpack.c.b16 %v3172, %v3168
      %v3357 = vpack.c.b16 %v3173, %v3169
      %v3358 = vpack.c.b16 %v3174, %v3170
      %v3359 = vpack.c.b16 %v3179, %v3175
      %v3360 = vpack.c.b16 %v3180, %v3176
      %v3361 = vpack.c.b16 %v3181, %v3177
      %v3362 = vpack.c.b16 %v3182, %v3178
      %v3363 = vpack.c.b16 %v3187, %v3183
      %v3364 = vpack.c.b16 %v3188, %v3184
      %v3365 = vpack.c.b16 %v3189, %v3185
      %v3366 = vpack.c.b16 %v3190, %v3186
      %v3367 = vpack.c.b16 %v3195, %v3191
      %v3368 = vpack.c.b16 %v3196, %v3192
      %v3369 = vpack.c.b16 %v3197, %v3193
      %v3370 = vpack.c.b16 %v3198, %v3194
      %v3371 = vpack.c.b16 %v3203, %v3199
      %v3372 = vpack.c.b16 %v3204, %v3200
      %v3373 = vpack.c.b16 %v3205, %v3201
      %v3374 = vpack.c.b16 %v3206, %v3202
      %v3375 = vpack.c.b16 %v3211, %v3207
      %v3376 = vpack.c.b16 %v3212, %v3208
      %v3377 = vpack.c.b16 %v3213, %v3209
      %v3378 = vpack.c.b16 %v3214, %v3210
      %v3379 = vpack.c.b16 %v3219, %v3215
      %v3380 = vpack.c.b16 %v3220, %v3216
      %v3381 = vpack.c.b16 %v3221, %v3217
      %v3382 = vpack.c.b16 %v3222, %v3218
      %v3383 = vpack.c.b16 %v3227, %v3223
      %v3384 = vpack.c.b16 %v3228, %v3224
      %v3385 = vpack.c.b16 %v3229, %v3225
      %v3386 = vpack.c.b16 %v3230, %v3226
      %v3387 = vpack.c.b16 %v3235, %v3231
      %v3388 = vpack.c.b16 %v3236, %v3232
      %v3389 = vpack.c.b16 %v3237, %v3233
      %v3390 = vpack.c.b16 %v3238, %v3234
      %v3391 = vpack.c.b16 %v3243, %v3239
      %v3392 = vpack.c.b16 %v3244, %v3240
      %v3393 = vpack.c.b16 %v3245, %v3241
      %v3394 = vpack.c.b16 %v3246, %v3242
      %v3395 = vpack.c.b16 %v3251, %v3247
      %v3396 = vpack.c.b16 %v3252, %v3248
      %v3397 = vpack.c.b16 %v3253, %v3249
      %v3398 = vpack.c.b16 %v3254, %v3250
      %v3399 = vpack.c.b16 %v3259, %v3255
      %v3400 = vpack.c.b16 %v3260, %v3256
      %v3401 = vpack.c.b16 %v3261, %v3257
      %v3402 = vpack.c.b16 %v3262, %v3258
      %v3403 = vpack.c.b16 %v3267, %v3263
      %v3404 = vpack.c.b16 %v3268, %v3264
      %v3405 = vpack.c.b16 %v3269, %v3265
      %v3406 = vpack.c.b16 %v3270, %v3266
      %v3407 = vpack.c.b16 %v3275, %v3271
      %v3408 = vpack.c.b16 %v3276, %v3272
      %v3409 = vpack.c.b16 %v3277, %v3273
      %v3410 = vpack.c.b16 %v3278, %v3274
      %v3411 = vpack.c.b16 %v3283, %v3279
      %v3412 = vpack.c.b16 %v3284, %v3280
      %v3413 = vpack.c.b16 %v3285, %v3281
      %v3414 = vpack.c.b16 %v3286, %v3282
      %v3415 = vpack.c.b16 %v3291, %v3287
      %v3416 = vpack.c.b16 %v3292, %v3288
      %v3417 = vpack.c.b16 %v3293, %v3289
      %v3418 = vpack.c.b16 %v3294, %v3290
      %v3419 = vpack.c.b16 %v3299, %v3295
      %v3420 = vpack.c.b16 %v3300, %v3296
      %v3421 = vpack.c.b16 %v3301, %v3297
      %v3422 = vpack.c.b16 %v3302, %v3298
      %v3423 = vpack.c.b16 %v3307, %v3303
      %v3424 = vpack.c.b16 %v3308, %v3304
      %v3425 = vpack.c.b16 %v3309, %v3305
      %v3426 = vpack.c.b16 %v3310, %v3306
      %v3427 = vpack.c.b16 %v3315, %v3311
      %v3428 = vpack.c.b16 %v3316, %v3312
      %v3429 = vpack.c.b16 %v3317, %v3313
      %v3430 = vpack.c.b16 %v3318, %v3314
      %3543 = vmatpush.bf16.msra.mxu0 %v3347
      %3544 = vmatpush.bf16.msra.mxu0 %v3343
      %3545 = vmatpush.bf16.msra.mxu0 %v3339
      %3546 = vmatpush.bf16.msra.mxu0 %v3335
      %3547 = vmatpush.bf16.msra.mxu0 %v3331
      %3548 = vmatpush.bf16.msra.mxu0 %v3327
      %3549 = vmatpush.bf16.msra.mxu0 %v3323
      %3550 = vmatpush.bf16.msra.mxu0 %v3319
      %3551 = vmatmul.bf16.gmra.mxu0 %v874
      %v3552 = vpop.f32.mrf.mxu0
      %v3553 = vadd.f32 0.0, %v3552
      %v3554 = vpop.f32.mrf.mxu0
      %3555 = vdwg.mxu0
      %3556 = vmatpush.bf16.msra.mxu0 %v3379
      %3557 = vmatpush.bf16.msra.mxu0 %v3375
      %3558 = vmatpush.bf16.msra.mxu0 %v3371
      %3559 = vmatpush.bf16.msra.mxu0 %v3367
      %3560 = vmatpush.bf16.msra.mxu0 %v3363
      %3561 = vmatpush.bf16.msra.mxu0 %v3359
      %3562 = vmatpush.bf16.msra.mxu0 %v3355
      %3563 = vmatpush.bf16.msra.mxu0 %v3351
      %3564 = vmatmul.bf16.gmra.mxu0 %v875
      %v3565 = vpop.f32.mrf.mxu0
      %v3566 = vadd.f32 %v3553, %v3565
      %v3567 = vpop.f32.mrf.mxu0
      %3568 = vdwg.mxu0
      %3569 = vmatpush.bf16.msra.mxu0 %v3411
      %3570 = vmatpush.bf16.msra.mxu0 %v3407
      %3571 = vmatpush.bf16.msra.mxu0 %v3403
      %3572 = vmatpush.bf16.msra.mxu0 %v3399
      %3573 = vmatpush.bf16.msra.mxu0 %v3395
      %3574 = vmatpush.bf16.msra.mxu0 %v3391
      %3575 = vmatpush.bf16.msra.mxu0 %v3387
      %3576 = vmatpush.bf16.msra.mxu0 %v3383
      %3577 = vmatmul.bf16.gmra.mxu0 %v876
      %v3578 = vpop.f32.mrf.mxu0
      %v3579 = vadd.f32 %v3566, %v3578
      %v3580 = vpop.f32.mrf.mxu0
      %3581 = vdwg.mxu0
      %3582 = vmatpush.bf16.msra.mxu0 0
      %3583 = vmatpush.bf16.msra.mxu0 0
      %3584 = vmatpush.bf16.msra.mxu0 0
      %3585 = vmatpush.bf16.msra.mxu0 0
      %3586 = vmatpush.bf16.msra.mxu0 %v3427
      %3587 = vmatpush.bf16.msra.mxu0 %v3423
      %3588 = vmatpush.bf16.msra.mxu0 %v3419
      %3589 = vmatpush.bf16.msra.mxu0 %v3415
      %3590 = vmatmul.bf16.gmra.mxu0 %v1552
      %v3591 = vpop.f32.mrf.mxu0
      %v3592 = vadd.f32 %v3579, %v3591
      %v3593 = vpop.f32.mrf.mxu0
      %3594 = vdwg.mxu0
      %3595 = vmatpush.bf16.msra.mxu0 %v3348
      %3596 = vmatpush.bf16.msra.mxu0 %v3344
      %3597 = vmatpush.bf16.msra.mxu0 %v3340
      %3598 = vmatpush.bf16.msra.mxu0 %v3336
      %3599 = vmatpush.bf16.msra.mxu0 %v3332
      %3600 = vmatpush.bf16.msra.mxu0 %v3328
      %3601 = vmatpush.bf16.msra.mxu0 %v3324
      %3602 = vmatpush.bf16.msra.mxu0 %v3320
      %3603 = vmatmul.bf16.gmra.mxu0 %v874
      %v3604 = vpop.f32.mrf.mxu0
      %v3605 = vadd.f32 0.0, %v3604
      %v3606 = vpop.f32.mrf.mxu0
      %3607 = vdwg.mxu0
      %3608 = vmatpush.bf16.msra.mxu0 %v3380
      %3609 = vmatpush.bf16.msra.mxu0 %v3376
      %3610 = vmatpush.bf16.msra.mxu0 %v3372
      %3611 = vmatpush.bf16.msra.mxu0 %v3368
      %3612 = vmatpush.bf16.msra.mxu0 %v3364
      %3613 = vmatpush.bf16.msra.mxu0 %v3360
      %3614 = vmatpush.bf16.msra.mxu0 %v3356
      %3615 = vmatpush.bf16.msra.mxu0 %v3352
      %3616 = vmatmul.bf16.gmra.mxu0 %v875
      %v3617 = vpop.f32.mrf.mxu0
      %v3618 = vadd.f32 %v3605, %v3617
      %v3619 = vpop.f32.mrf.mxu0
      %3620 = vdwg.mxu0
      %3621 = vmatpush.bf16.msra.mxu0 %v3412
      %3622 = vmatpush.bf16.msra.mxu0 %v3408
      %3623 = vmatpush.bf16.msra.mxu0 %v3404
      %3624 = vmatpush.bf16.msra.mxu0 %v3400
      %3625 = vmatpush.bf16.msra.mxu0 %v3396
      %3626 = vmatpush.bf16.msra.mxu0 %v3392
      %3627 = vmatpush.bf16.msra.mxu0 %v3388
      %3628 = vmatpush.bf16.msra.mxu0 %v3384
      %3629 = vmatmul.bf16.gmra.mxu0 %v876
      %v3630 = vpop.f32.mrf.mxu0
      %v3631 = vadd.f32 %v3618, %v3630
      %v3632 = vpop.f32.mrf.mxu0
      %3633 = vdwg.mxu0
      %3634 = vmatpush.bf16.msra.mxu0 0
      %3635 = vmatpush.bf16.msra.mxu0 0
      %3636 = vmatpush.bf16.msra.mxu0 0
      %3637 = vmatpush.bf16.msra.mxu0 0
      %3638 = vmatpush.bf16.msra.mxu0 %v3428
      %3639 = vmatpush.bf16.msra.mxu0 %v3424
      %3640 = vmatpush.bf16.msra.mxu0 %v3420
      %3641 = vmatpush.bf16.msra.mxu0 %v3416
      %3642 = vmatmul.bf16.gmra.mxu0 %v1552
      %v3643 = vpop.f32.mrf.mxu0
      %v3644 = vadd.f32 %v3631, %v3643
      %v3645 = vpop.f32.mrf.mxu0
      %3646 = vdwg.mxu0
      %3647 = vmatpush.bf16.msra.mxu0 %v3349
      %3648 = vmatpush.bf16.msra.mxu0 %v3345
      %3649 = vmatpush.bf16.msra.mxu0 %v3341
      %3650 = vmatpush.bf16.msra.mxu0 %v3337
      %3651 = vmatpush.bf16.msra.mxu0 %v3333
      %3652 = vmatpush.bf16.msra.mxu0 %v3329
      %3653 = vmatpush.bf16.msra.mxu0 %v3325
      %3654 = vmatpush.bf16.msra.mxu0 %v3321
      %3655 = vmatmul.bf16.gmra.mxu0 %v874
      %v3656 = vpop.f32.mrf.mxu0
      %v3657 = vadd.f32 0.0, %v3656
      %v3658 = vpop.f32.mrf.mxu0
      %3659 = vdwg.mxu0
      %3660 = vmatpush.bf16.msra.mxu0 %v3381
      %3661 = vmatpush.bf16.msra.mxu0 %v3377
      %3662 = vmatpush.bf16.msra.mxu0 %v3373
      %3663 = vmatpush.bf16.msra.mxu0 %v3369
      %3664 = vmatpush.bf16.msra.mxu0 %v3365
      %3665 = vmatpush.bf16.msra.mxu0 %v3361
      %3666 = vmatpush.bf16.msra.mxu0 %v3357
      %3667 = vmatpush.bf16.msra.mxu0 %v3353
      %3668 = vmatmul.bf16.gmra.mxu0 %v875
      %v3669 = vpop.f32.mrf.mxu0
      %v3670 = vadd.f32 %v3657, %v3669
      %v3671 = vpop.f32.mrf.mxu0
      %3672 = vdwg.mxu0
      %3673 = vmatpush.bf16.msra.mxu0 %v3413
      %3674 = vmatpush.bf16.msra.mxu0 %v3409
      %3675 = vmatpush.bf16.msra.mxu0 %v3405
      %3676 = vmatpush.bf16.msra.mxu0 %v3401
      %3677 = vmatpush.bf16.msra.mxu0 %v3397
      %3678 = vmatpush.bf16.msra.mxu0 %v3393
      %3679 = vmatpush.bf16.msra.mxu0 %v3389
      %3680 = vmatpush.bf16.msra.mxu0 %v3385
      %3681 = vmatmul.bf16.gmra.mxu0 %v876
      %v3682 = vpop.f32.mrf.mxu0
      %v3683 = vadd.f32 %v3670, %v3682
      %v3684 = vpop.f32.mrf.mxu0
      %3685 = vdwg.mxu0
      %3686 = vmatpush.bf16.msra.mxu0 0
      %3687 = vmatpush.bf16.msra.mxu0 0
      %3688 = vmatpush.bf16.msra.mxu0 0
      %3689 = vmatpush.bf16.msra.mxu0 0
      %3690 = vmatpush.bf16.msra.mxu0 %v3429
      %3691 = vmatpush.bf16.msra.mxu0 %v3425
      %3692 = vmatpush.bf16.msra.mxu0 %v3421
      %3693 = vmatpush.bf16.msra.mxu0 %v3417
      %3694 = vmatmul.bf16.gmra.mxu0 %v1552
      %v3695 = vpop.f32.mrf.mxu0
      %v3696 = vadd.f32 %v3683, %v3695
      %v3697 = vpop.f32.mrf.mxu0
      %3698 = vdwg.mxu0
      %3699 = vmatpush.bf16.msra.mxu0 %v3350
      %3700 = vmatpush.bf16.msra.mxu0 %v3346
      %3701 = vmatpush.bf16.msra.mxu0 %v3342
      %3702 = vmatpush.bf16.msra.mxu0 %v3338
      %3703 = vmatpush.bf16.msra.mxu0 %v3334
      %3704 = vmatpush.bf16.msra.mxu0 %v3330
      %3705 = vmatpush.bf16.msra.mxu0 %v3326
      %3706 = vmatpush.bf16.msra.mxu0 %v3322
      %3707 = vmatmul.bf16.gmra.mxu0 %v874
      %v3708 = vpop.f32.mrf.mxu0
      %v3709 = vadd.f32 0.0, %v3708
      %v3710 = vpop.f32.mrf.mxu0
      %3711 = vdwg.mxu0
      %3712 = vmatpush.bf16.msra.mxu0 %v3382
      %3713 = vmatpush.bf16.msra.mxu0 %v3378
      %3714 = vmatpush.bf16.msra.mxu0 %v3374
      %3715 = vmatpush.bf16.msra.mxu0 %v3370
      %3716 = vmatpush.bf16.msra.mxu0 %v3366
      %3717 = vmatpush.bf16.msra.mxu0 %v3362
      %3718 = vmatpush.bf16.msra.mxu0 %v3358
      %3719 = vmatpush.bf16.msra.mxu0 %v3354
      %3720 = vmatmul.bf16.gmra.mxu0 %v875
      %v3721 = vpop.f32.mrf.mxu0
      %v3722 = vadd.f32 %v3709, %v3721
      %v3723 = vpop.f32.mrf.mxu0
      %3724 = vdwg.mxu0
      %3725 = vmatpush.bf16.msra.mxu0 %v3414
      %3726 = vmatpush.bf16.msra.mxu0 %v3410
      %3727 = vmatpush.bf16.msra.mxu0 %v3406
      %3728 = vmatpush.bf16.msra.mxu0 %v3402
      %3729 = vmatpush.bf16.msra.mxu0 %v3398
      %3730 = vmatpush.bf16.msra.mxu0 %v3394
      %3731 = vmatpush.bf16.msra.mxu0 %v3390
      %3732 = vmatpush.bf16.msra.mxu0 %v3386
      %3733 = vmatmul.bf16.gmra.mxu0 %v876
      %v3734 = vpop.f32.mrf.mxu0
      %v3735 = vadd.f32 %v3722, %v3734
      %v3736 = vpop.f32.mrf.mxu0
      %3737 = vdwg.mxu0
      %3738 = vmatpush.bf16.msra.mxu0 0
      %3739 = vmatpush.bf16.msra.mxu0 0
      %3740 = vmatpush.bf16.msra.mxu0 0
      %3741 = vmatpush.bf16.msra.mxu0 0
      %3742 = vmatpush.bf16.msra.mxu0 %v3430
      %3743 = vmatpush.bf16.msra.mxu0 %v3426
      %3744 = vmatpush.bf16.msra.mxu0 %v3422
      %3745 = vmatpush.bf16.msra.mxu0 %v3418
      %3746 = vmatmul.bf16.gmra.mxu0 %v1552
      %v3747 = vpop.f32.mrf.mxu0
      %v3748 = vadd.f32 %v3735, %v3747
      %v3749 = vpop.f32.mrf.mxu0
      %3750 = vdwg.mxu0
      %s3751 = scalar_lea.vmem %s4, 32
      %v3752 = vld [vmem:[%s3751] sm:$0xff]
      %v3753 = vld [vmem:[%s3751 + $0x8] sm:$0xff]
      %v3755 = vsel %vm2648, %v3752, 0
      %v3758 = vsel %vm2648, %v3753, 0
      %v3761 = vsel %vm2655, %v3592, 0
      %v3764 = vsel %vm2655, %v3644, 0
      %v3767 = vsel %vm2655, %v3696, 0
      %v3770 = vsel %vm2655, %v3748, 0
      %3772 = vmatpush.msra.mxu0 0.0
      %3773 = vmatpush.msra.mxu0 0.0
      %3774 = vmatpush.msra.mxu0 0.0
      %3775 = vmatpush.msra.mxu0 0.0
      %3776 = vmatpush.msra.mxu0 0.0
      %3777 = vmatpush.msra.mxu0 0.0
      %3778 = vmatpush.msra.mxu0 0.0
      %3779 = vmatpush.msra.mxu0 0.0
      %3780 = vmatpush.msra.mxu0 0.0
      %3781 = vmatpush.msra.mxu0 0.0
      %3782 = vmatpush.msra.mxu0 0.0
      %3783 = vmatpush.msra.mxu0 0.0
      %3784 = vmatpush.msra.mxu0 0.0
      %3785 = vmatpush.msra.mxu0 0.0
      %3786 = vmatpush.msra.mxu0 0.0
      %3787 = vmatpush.msra.mxu0 %v3761
      %3788 = vmatmul.f32.gmra.mxu0 %v3755
      %v3789 = vpop.f32.mrf.mxu0
      %v3790 = vadd.f32 0.0, %v3789
      %3791 = vmatmul.f32.gmra.mxu0 %v3758
      %v3792 = vpop.f32.mrf.mxu0
      %v3793 = vadd.f32 0.0, %v3792
      %3794 = vdwg.mxu0
      %3795 = vmatpush.msra.mxu0 0.0
      %3796 = vmatpush.msra.mxu0 0.0
      %3797 = vmatpush.msra.mxu0 0.0
      %3798 = vmatpush.msra.mxu0 0.0
      %3799 = vmatpush.msra.mxu0 0.0
      %3800 = vmatpush.msra.mxu0 0.0
      %3801 = vmatpush.msra.mxu0 0.0
      %3802 = vmatpush.msra.mxu0 0.0
      %3803 = vmatpush.msra.mxu0 0.0
      %3804 = vmatpush.msra.mxu0 0.0
      %3805 = vmatpush.msra.mxu0 0.0
      %3806 = vmatpush.msra.mxu0 0.0
      %3807 = vmatpush.msra.mxu0 0.0
      %3808 = vmatpush.msra.mxu0 0.0
      %3809 = vmatpush.msra.mxu0 0.0
      %3810 = vmatpush.msra.mxu0 %v3764
      %3811 = vmatmul.f32.gmra.mxu0 %v3755
      %v3812 = vpop.f32.mrf.mxu0
      %v3813 = vadd.f32 0.0, %v3812
      %3814 = vmatmul.f32.gmra.mxu0 %v3758
      %v3815 = vpop.f32.mrf.mxu0
      %v3816 = vadd.f32 0.0, %v3815
      %3817 = vdwg.mxu0
      %3818 = vmatpush.msra.mxu0 0.0
      %3819 = vmatpush.msra.mxu0 0.0
      %3820 = vmatpush.msra.mxu0 0.0
      %3821 = vmatpush.msra.mxu0 0.0
      %3822 = vmatpush.msra.mxu0 0.0
      %3823 = vmatpush.msra.mxu0 0.0
      %3824 = vmatpush.msra.mxu0 0.0
      %3825 = vmatpush.msra.mxu0 0.0
      %3826 = vmatpush.msra.mxu0 0.0
      %3827 = vmatpush.msra.mxu0 0.0
      %3828 = vmatpush.msra.mxu0 0.0
      %3829 = vmatpush.msra.mxu0 0.0
      %3830 = vmatpush.msra.mxu0 0.0
      %3831 = vmatpush.msra.mxu0 0.0
      %3832 = vmatpush.msra.mxu0 0.0
      %3833 = vmatpush.msra.mxu0 %v3767
      %3834 = vmatmul.f32.gmra.mxu0 %v3755
      %v3835 = vpop.f32.mrf.mxu0
      %v3836 = vadd.f32 0.0, %v3835
      %3837 = vmatmul.f32.gmra.mxu0 %v3758
      %v3838 = vpop.f32.mrf.mxu0
      %v3839 = vadd.f32 0.0, %v3838
      %3840 = vdwg.mxu0
      %3841 = vmatpush.msra.mxu0 0.0
      %3842 = vmatpush.msra.mxu0 0.0
      %3843 = vmatpush.msra.mxu0 0.0
      %3844 = vmatpush.msra.mxu0 0.0
      %3845 = vmatpush.msra.mxu0 0.0
      %3846 = vmatpush.msra.mxu0 0.0
      %3847 = vmatpush.msra.mxu0 0.0
      %3848 = vmatpush.msra.mxu0 0.0
      %3849 = vmatpush.msra.mxu0 0.0
      %3850 = vmatpush.msra.mxu0 0.0
      %3851 = vmatpush.msra.mxu0 0.0
      %3852 = vmatpush.msra.mxu0 0.0
      %3853 = vmatpush.msra.mxu0 0.0
      %3854 = vmatpush.msra.mxu0 0.0
      %3855 = vmatpush.msra.mxu0 0.0
      %3856 = vmatpush.msra.mxu0 %v3770
      %3857 = vmatmul.f32.gmra.mxu0 %v3755
      %v3858 = vpop.f32.mrf.mxu0
      %v3859 = vadd.f32 0.0, %v3858
      %3860 = vmatmul.f32.gmra.mxu0 %v3758
      %v3861 = vpop.f32.mrf.mxu0
      %v3862 = vadd.f32 0.0, %v3861
      %3863 = vdwg.mxu0
      %v3864 = vadd.f32 %v2796, %v3790
      %v3865 = vadd.f32 %v2819, %v3813
      %v3866 = vadd.f32 %v2842, %v3836
      %v3867 = vadd.f32 %v2865, %v3859
      %v3868 = vadd.f32 %v2799, %v3793
      %v3869 = vadd.f32 %v2822, %v3816
      %v3870 = vadd.f32 %v2845, %v3839
      %v3871 = vadd.f32 %v2868, %v3862
      %s3872 = scalar_lea.vmem %s3, 2688
      %v3873 = vld [vmem:[%s3872] sm:$0xff]
      %v3874 = vld [vmem:[%s3872 + $0x8] sm:$0xff]
      %v3875 = vld [vmem:[%s3872 + $0x10] sm:$0xff]
      %v3876 = vld [vmem:[%s3872 + $0x18] sm:$0xff]
      %v3877 = vld [vmem:[%s3872 + $0x20] sm:$0xff]
      %v3878 = vld [vmem:[%s3872 + $0x28] sm:$0xff]
      %v3879 = vld [vmem:[%s3872 + $0x30] sm:$0xff]
      %v3880 = vld [vmem:[%s3872 + $0x38] sm:$0xff]
      %v3881 = vld [vmem:[%s3872 + $0x40] sm:$0xff]
      %v3882 = vld [vmem:[%s3872 + $0x48] sm:$0xff]
      %v3883 = vld [vmem:[%s3872 + $0x50] sm:$0xff]
      %v3884 = vld [vmem:[%s3872 + $0x58] sm:$0xff]
      %v3885 = vld [vmem:[%s3872 + $0x60] sm:$0xff]
      %v3886 = vld [vmem:[%s3872 + $0x68] sm:$0xff]
      %v3887 = vld [vmem:[%s3872 + $0x70] sm:$0xff]
      %v3888 = vld [vmem:[%s3872 + $0x78] sm:$0xff]
      %v3889 = vld [vmem:[%s3872 + $0x80] sm:$0xff]
      %v3890 = vld [vmem:[%s3872 + $0x88] sm:$0xff]
      %v3891 = vld [vmem:[%s3872 + $0x90] sm:$0xff]
      %v3892 = vld [vmem:[%s3872 + $0x98] sm:$0xff]
      %v3893 = vld [vmem:[%s3872 + $0xa0] sm:$0xff]
      %v3894 = vld [vmem:[%s3872 + $0xa8] sm:$0xff]
      %v3895 = vld [vmem:[%s3872 + $0xb0] sm:$0xff]
      %v3896 = vld [vmem:[%s3872 + $0xb8] sm:$0xff]
      %v3897 = vld [vmem:[%s3872 + $0xc0] sm:$0xff]
      %v3898 = vld [vmem:[%s3872 + $0xc8] sm:$0xff]
      %v3899 = vld [vmem:[%s3872 + $0xd0] sm:$0xff]
      %v3900 = vld [vmem:[%s3872 + $0xd8] sm:$0xff]
      %v3901 = vld [vmem:[%s3872 + $0xe0] sm:$0xff]
      %v3902 = vld [vmem:[%s3872 + $0xe8] sm:$0xff]
      %v3903 = vld [vmem:[%s3872 + $0xf0] sm:$0xff]
      %v3904 = vld [vmem:[%s3872 + $0xf8] sm:$0xff]
      %v3905 = vld [vmem:[%s3872 + $0x100] sm:$0xff]
      %v3906 = vld [vmem:[%s3872 + $0x108] sm:$0xff]
      %v3907 = vld [vmem:[%s3872 + $0x110] sm:$0xff]
      %v3908 = vld [vmem:[%s3872 + $0x118] sm:$0xff]
      %v3909 = vld [vmem:[%s3872 + $0x120] sm:$0xff]
      %v3910 = vld [vmem:[%s3872 + $0x128] sm:$0xff]
      %v3911 = vld [vmem:[%s3872 + $0x130] sm:$0xff]
      %v3912 = vld [vmem:[%s3872 + $0x138] sm:$0xff]
      %v3913 = vld [vmem:[%s3872 + $0x140] sm:$0xff]
      %v3914 = vld [vmem:[%s3872 + $0x148] sm:$0xff]
      %v3915 = vld [vmem:[%s3872 + $0x150] sm:$0xff]
      %v3916 = vld [vmem:[%s3872 + $0x158] sm:$0xff]
      %v3917 = vld [vmem:[%s3872 + $0x160] sm:$0xff]
      %v3918 = vld [vmem:[%s3872 + $0x168] sm:$0xff]
      %v3919 = vld [vmem:[%s3872 + $0x170] sm:$0xff]
      %v3920 = vld [vmem:[%s3872 + $0x178] sm:$0xff]
      %v3921 = vld [vmem:[%s3872 + $0x180] sm:$0xff]
      %v3922 = vld [vmem:[%s3872 + $0x188] sm:$0xff]
      %v3923 = vld [vmem:[%s3872 + $0x190] sm:$0xff]
      %v3924 = vld [vmem:[%s3872 + $0x198] sm:$0xff]
      %v3925 = vld [vmem:[%s3872 + $0x1a0] sm:$0xff]
      %v3926 = vld [vmem:[%s3872 + $0x1a8] sm:$0xff]
      %v3927 = vld [vmem:[%s3872 + $0x1b0] sm:$0xff]
      %v3928 = vld [vmem:[%s3872 + $0x1b8] sm:$0xff]
      %v3929 = vld [vmem:[%s3872 + $0x1c0] sm:$0xff]
      %v3930 = vld [vmem:[%s3872 + $0x1c8] sm:$0xff]
      %v3931 = vld [vmem:[%s3872 + $0x1d0] sm:$0xff]
      %v3932 = vld [vmem:[%s3872 + $0x1d8] sm:$0xff]
      %v3933 = vld [vmem:[%s3872 + $0x1e0] sm:$0xff]
      %v3934 = vld [vmem:[%s3872 + $0x1e8] sm:$0xff]
      %v3935 = vld [vmem:[%s3872 + $0x1f0] sm:$0xff]
      %v3936 = vld [vmem:[%s3872 + $0x1f8] sm:$0xff]
      %v3937 = vld [vmem:[%s3872 + $0x200] sm:$0xff]
      %v3938 = vld [vmem:[%s3872 + $0x208] sm:$0xff]
      %v3939 = vld [vmem:[%s3872 + $0x210] sm:$0xff]
      %v3940 = vld [vmem:[%s3872 + $0x218] sm:$0xff]
      %v3941 = vld [vmem:[%s3872 + $0x220] sm:$0xff]
      %v3942 = vld [vmem:[%s3872 + $0x228] sm:$0xff]
      %v3943 = vld [vmem:[%s3872 + $0x230] sm:$0xff]
      %v3944 = vld [vmem:[%s3872 + $0x238] sm:$0xff]
      %v3945 = vld [vmem:[%s3872 + $0x240] sm:$0xff]
      %v3946 = vld [vmem:[%s3872 + $0x248] sm:$0xff]
      %v3947 = vld [vmem:[%s3872 + $0x250] sm:$0xff]
      %v3948 = vld [vmem:[%s3872 + $0x258] sm:$0xff]
      %v3949 = vld [vmem:[%s3872 + $0x260] sm:$0xff]
      %v3950 = vld [vmem:[%s3872 + $0x268] sm:$0xff]
      %v3951 = vld [vmem:[%s3872 + $0x270] sm:$0xff]
      %v3952 = vld [vmem:[%s3872 + $0x278] sm:$0xff]
      %v3953 = vld [vmem:[%s3872 + $0x280] sm:$0xff]
      %v3954 = vld [vmem:[%s3872 + $0x288] sm:$0xff]
      %v3955 = vld [vmem:[%s3872 + $0x290] sm:$0xff]
      %v3956 = vld [vmem:[%s3872 + $0x298] sm:$0xff]
      %v3957 = vld [vmem:[%s3872 + $0x2a0] sm:$0xff]
      %v3958 = vld [vmem:[%s3872 + $0x2a8] sm:$0xff]
      %v3959 = vld [vmem:[%s3872 + $0x2b0] sm:$0xff]
      %v3960 = vld [vmem:[%s3872 + $0x2b8] sm:$0xff]
      %v3961 = vld [vmem:[%s3872 + $0x2c0] sm:$0xff]
      %v3962 = vld [vmem:[%s3872 + $0x2c8] sm:$0xff]
      %v3963 = vld [vmem:[%s3872 + $0x2d0] sm:$0xff]
      %v3964 = vld [vmem:[%s3872 + $0x2d8] sm:$0xff]
      %v3965 = vld [vmem:[%s3872 + $0x2e0] sm:$0xff]
      %v3966 = vld [vmem:[%s3872 + $0x2e8] sm:$0xff]
      %v3967 = vld [vmem:[%s3872 + $0x2f0] sm:$0xff]
      %v3968 = vld [vmem:[%s3872 + $0x2f8] sm:$0xff]
      %v3969 = vld [vmem:[%s3872 + $0x300] sm:$0xff]
      %v3970 = vld [vmem:[%s3872 + $0x308] sm:$0xff]
      %v3971 = vld [vmem:[%s3872 + $0x310] sm:$0xff]
      %v3972 = vld [vmem:[%s3872 + $0x318] sm:$0xff]
      %v3973 = vld [vmem:[%s3872 + $0x320] sm:$0xff]
      %v3974 = vld [vmem:[%s3872 + $0x328] sm:$0xff]
      %v3975 = vld [vmem:[%s3872 + $0x330] sm:$0xff]
      %v3976 = vld [vmem:[%s3872 + $0x338] sm:$0xff]
      %v3977 = vld [vmem:[%s3872 + $0x340] sm:$0xff]
      %v3978 = vld [vmem:[%s3872 + $0x348] sm:$0xff]
      %v3979 = vld [vmem:[%s3872 + $0x350] sm:$0xff]
      %v3980 = vld [vmem:[%s3872 + $0x358] sm:$0xff]
      %v3981 = vld [vmem:[%s3872 + $0x360] sm:$0xff]
      %v3982 = vld [vmem:[%s3872 + $0x368] sm:$0xff]
      %v3983 = vld [vmem:[%s3872 + $0x370] sm:$0xff]
      %v3984 = vld [vmem:[%s3872 + $0x378] sm:$0xff]
      %v4097 = vunpack.c.l.b16 %v3873
      %v4098 = vunpack.c.h.b16 %v3873
      %v4099 = vunpack.c.l.b16 %v3874
      %v4100 = vunpack.c.h.b16 %v3874
      %v4101 = vunpack.c.l.b16 %v3875
      %v4102 = vunpack.c.h.b16 %v3875
      %v4103 = vunpack.c.l.b16 %v3876
      %v4104 = vunpack.c.h.b16 %v3876
      %v4105 = vunpack.c.l.b16 %v3877
      %v4106 = vunpack.c.h.b16 %v3877
      %v4107 = vunpack.c.l.b16 %v3878
      %v4108 = vunpack.c.h.b16 %v3878
      %v4109 = vunpack.c.l.b16 %v3879
      %v4110 = vunpack.c.h.b16 %v3879
      %v4111 = vunpack.c.l.b16 %v3880
      %v4112 = vunpack.c.h.b16 %v3880
      %v4113 = vunpack.c.l.b16 %v3881
      %v4114 = vunpack.c.h.b16 %v3881
      %v4115 = vunpack.c.l.b16 %v3882
      %v4116 = vunpack.c.h.b16 %v3882
      %v4117 = vunpack.c.l.b16 %v3883
      %v4118 = vunpack.c.h.b16 %v3883
      %v4119 = vunpack.c.l.b16 %v3884
      %v4120 = vunpack.c.h.b16 %v3884
      %v4121 = vunpack.c.l.b16 %v3885
      %v4122 = vunpack.c.h.b16 %v3885
      %v4123 = vunpack.c.l.b16 %v3886
      %v4124 = vunpack.c.h.b16 %v3886
      %v4125 = vunpack.c.l.b16 %v3887
      %v4126 = vunpack.c.h.b16 %v3887
      %v4127 = vunpack.c.l.b16 %v3888
      %v4128 = vunpack.c.h.b16 %v3888
      %v4129 = vunpack.c.l.b16 %v3889
      %v4130 = vunpack.c.h.b16 %v3889
      %v4131 = vunpack.c.l.b16 %v3890
      %v4132 = vunpack.c.h.b16 %v3890
      %v4133 = vunpack.c.l.b16 %v3891
      %v4134 = vunpack.c.h.b16 %v3891
      %v4135 = vunpack.c.l.b16 %v3892
      %v4136 = vunpack.c.h.b16 %v3892
      %v4137 = vunpack.c.l.b16 %v3893
      %v4138 = vunpack.c.h.b16 %v3893
      %v4139 = vunpack.c.l.b16 %v3894
      %v4140 = vunpack.c.h.b16 %v3894
      %v4141 = vunpack.c.l.b16 %v3895
      %v4142 = vunpack.c.h.b16 %v3895
      %v4143 = vunpack.c.l.b16 %v3896
      %v4144 = vunpack.c.h.b16 %v3896
      %v4145 = vunpack.c.l.b16 %v3897
      %v4146 = vunpack.c.h.b16 %v3897
      %v4147 = vunpack.c.l.b16 %v3898
      %v4148 = vunpack.c.h.b16 %v3898
      %v4149 = vunpack.c.l.b16 %v3899
      %v4150 = vunpack.c.h.b16 %v3899
      %v4151 = vunpack.c.l.b16 %v3900
      %v4152 = vunpack.c.h.b16 %v3900
      %v4153 = vunpack.c.l.b16 %v3901
      %v4154 = vunpack.c.h.b16 %v3901
      %v4155 = vunpack.c.l.b16 %v3902
      %v4156 = vunpack.c.h.b16 %v3902
      %v4157 = vunpack.c.l.b16 %v3903
      %v4158 = vunpack.c.h.b16 %v3903
      %v4159 = vunpack.c.l.b16 %v3904
      %v4160 = vunpack.c.h.b16 %v3904
      %v4161 = vunpack.c.l.b16 %v3905
      %v4162 = vunpack.c.h.b16 %v3905
      %v4163 = vunpack.c.l.b16 %v3906
      %v4164 = vunpack.c.h.b16 %v3906
      %v4165 = vunpack.c.l.b16 %v3907
      %v4166 = vunpack.c.h.b16 %v3907
      %v4167 = vunpack.c.l.b16 %v3908
      %v4168 = vunpack.c.h.b16 %v3908
      %v4169 = vunpack.c.l.b16 %v3909
      %v4170 = vunpack.c.h.b16 %v3909
      %v4171 = vunpack.c.l.b16 %v3910
      %v4172 = vunpack.c.h.b16 %v3910
      %v4173 = vunpack.c.l.b16 %v3911
      %v4174 = vunpack.c.h.b16 %v3911
      %v4175 = vunpack.c.l.b16 %v3912
      %v4176 = vunpack.c.h.b16 %v3912
      %v4177 = vunpack.c.l.b16 %v3913
      %v4178 = vunpack.c.h.b16 %v3913
      %v4179 = vunpack.c.l.b16 %v3914
      %v4180 = vunpack.c.h.b16 %v3914
      %v4181 = vunpack.c.l.b16 %v3915
      %v4182 = vunpack.c.h.b16 %v3915
      %v4183 = vunpack.c.l.b16 %v3916
      %v4184 = vunpack.c.h.b16 %v3916
      %v4185 = vunpack.c.l.b16 %v3917
      %v4186 = vunpack.c.h.b16 %v3917
      %v4187 = vunpack.c.l.b16 %v3918
      %v4188 = vunpack.c.h.b16 %v3918
      %v4189 = vunpack.c.l.b16 %v3919
      %v4190 = vunpack.c.h.b16 %v3919
      %v4191 = vunpack.c.l.b16 %v3920
      %v4192 = vunpack.c.h.b16 %v3920
      %v4193 = vunpack.c.l.b16 %v3921
      %v4194 = vunpack.c.h.b16 %v3921
      %v4195 = vunpack.c.l.b16 %v3922
      %v4196 = vunpack.c.h.b16 %v3922
      %v4197 = vunpack.c.l.b16 %v3923
      %v4198 = vunpack.c.h.b16 %v3923
      %v4199 = vunpack.c.l.b16 %v3924
      %v4200 = vunpack.c.h.b16 %v3924
      %v4201 = vunpack.c.l.b16 %v3925
      %v4202 = vunpack.c.h.b16 %v3925
      %v4203 = vunpack.c.l.b16 %v3926
      %v4204 = vunpack.c.h.b16 %v3926
      %v4205 = vunpack.c.l.b16 %v3927
      %v4206 = vunpack.c.h.b16 %v3927
      %v4207 = vunpack.c.l.b16 %v3928
      %v4208 = vunpack.c.h.b16 %v3928
      %v4209 = vunpack.c.l.b16 %v3929
      %v4210 = vunpack.c.h.b16 %v3929
      %v4211 = vunpack.c.l.b16 %v3930
      %v4212 = vunpack.c.h.b16 %v3930
      %v4213 = vunpack.c.l.b16 %v3931
      %v4214 = vunpack.c.h.b16 %v3931
      %v4215 = vunpack.c.l.b16 %v3932
      %v4216 = vunpack.c.h.b16 %v3932
      %v4217 = vunpack.c.l.b16 %v3933
      %v4218 = vunpack.c.h.b16 %v3933
      %v4219 = vunpack.c.l.b16 %v3934
      %v4220 = vunpack.c.h.b16 %v3934
      %v4221 = vunpack.c.l.b16 %v3935
      %v4222 = vunpack.c.h.b16 %v3935
      %v4223 = vunpack.c.l.b16 %v3936
      %v4224 = vunpack.c.h.b16 %v3936
      %v4225 = vunpack.c.l.b16 %v3937
      %v4226 = vunpack.c.h.b16 %v3937
      %v4227 = vunpack.c.l.b16 %v3938
      %v4228 = vunpack.c.h.b16 %v3938
      %v4229 = vunpack.c.l.b16 %v3939
      %v4230 = vunpack.c.h.b16 %v3939
      %v4231 = vunpack.c.l.b16 %v3940
      %v4232 = vunpack.c.h.b16 %v3940
      %v4233 = vunpack.c.l.b16 %v3941
      %v4234 = vunpack.c.h.b16 %v3941
      %v4235 = vunpack.c.l.b16 %v3942
      %v4236 = vunpack.c.h.b16 %v3942
      %v4237 = vunpack.c.l.b16 %v3943
      %v4238 = vunpack.c.h.b16 %v3943
      %v4239 = vunpack.c.l.b16 %v3944
      %v4240 = vunpack.c.h.b16 %v3944
      %v4241 = vunpack.c.l.b16 %v3945
      %v4242 = vunpack.c.h.b16 %v3945
      %v4243 = vunpack.c.l.b16 %v3946
      %v4244 = vunpack.c.h.b16 %v3946
      %v4245 = vunpack.c.l.b16 %v3947
      %v4246 = vunpack.c.h.b16 %v3947
      %v4247 = vunpack.c.l.b16 %v3948
      %v4248 = vunpack.c.h.b16 %v3948
      %v4249 = vunpack.c.l.b16 %v3949
      %v4250 = vunpack.c.h.b16 %v3949
      %v4251 = vunpack.c.l.b16 %v3950
      %v4252 = vunpack.c.h.b16 %v3950
      %v4253 = vunpack.c.l.b16 %v3951
      %v4254 = vunpack.c.h.b16 %v3951
      %v4255 = vunpack.c.l.b16 %v3952
      %v4256 = vunpack.c.h.b16 %v3952
      %v4257 = vunpack.c.l.b16 %v3953
      %v4258 = vunpack.c.h.b16 %v3953
      %v4259 = vunpack.c.l.b16 %v3954
      %v4260 = vunpack.c.h.b16 %v3954
      %v4261 = vunpack.c.l.b16 %v3955
      %v4262 = vunpack.c.h.b16 %v3955
      %v4263 = vunpack.c.l.b16 %v3956
      %v4264 = vunpack.c.h.b16 %v3956
      %v4265 = vunpack.c.l.b16 %v3957
      %v4266 = vunpack.c.h.b16 %v3957
      %v4267 = vunpack.c.l.b16 %v3958
      %v4268 = vunpack.c.h.b16 %v3958
      %v4269 = vunpack.c.l.b16 %v3959
      %v4270 = vunpack.c.h.b16 %v3959
      %v4271 = vunpack.c.l.b16 %v3960
      %v4272 = vunpack.c.h.b16 %v3960
      %v4273 = vunpack.c.l.b16 %v3961
      %v4274 = vunpack.c.h.b16 %v3961
      %v4275 = vunpack.c.l.b16 %v3962
      %v4276 = vunpack.c.h.b16 %v3962
      %v4277 = vunpack.c.l.b16 %v3963
      %v4278 = vunpack.c.h.b16 %v3963
      %v4279 = vunpack.c.l.b16 %v3964
      %v4280 = vunpack.c.h.b16 %v3964
      %v4281 = vunpack.c.l.b16 %v3965
      %v4282 = vunpack.c.h.b16 %v3965
      %v4283 = vunpack.c.l.b16 %v3966
      %v4284 = vunpack.c.h.b16 %v3966
      %v4285 = vunpack.c.l.b16 %v3967
      %v4286 = vunpack.c.h.b16 %v3967
      %v4287 = vunpack.c.l.b16 %v3968
      %v4288 = vunpack.c.h.b16 %v3968
      %v4289 = vunpack.c.l.b16 %v3969
      %v4290 = vunpack.c.h.b16 %v3969
      %v4291 = vunpack.c.l.b16 %v3970
      %v4292 = vunpack.c.h.b16 %v3970
      %v4293 = vunpack.c.l.b16 %v3971
      %v4294 = vunpack.c.h.b16 %v3971
      %v4295 = vunpack.c.l.b16 %v3972
      %v4296 = vunpack.c.h.b16 %v3972
      %v4297 = vunpack.c.l.b16 %v3973
      %v4298 = vunpack.c.h.b16 %v3973
      %v4299 = vunpack.c.l.b16 %v3974
      %v4300 = vunpack.c.h.b16 %v3974
      %v4301 = vunpack.c.l.b16 %v3975
      %v4302 = vunpack.c.h.b16 %v3975
      %v4303 = vunpack.c.l.b16 %v3976
      %v4304 = vunpack.c.h.b16 %v3976
      %v4305 = vunpack.c.l.b16 %v3977
      %v4306 = vunpack.c.h.b16 %v3977
      %v4307 = vunpack.c.l.b16 %v3978
      %v4308 = vunpack.c.h.b16 %v3978
      %v4309 = vunpack.c.l.b16 %v3979
      %v4310 = vunpack.c.h.b16 %v3979
      %v4311 = vunpack.c.l.b16 %v3980
      %v4312 = vunpack.c.h.b16 %v3980
      %v4313 = vunpack.c.l.b16 %v3981
      %v4314 = vunpack.c.h.b16 %v3981
      %v4315 = vunpack.c.l.b16 %v3982
      %v4316 = vunpack.c.h.b16 %v3982
      %v4317 = vunpack.c.l.b16 %v3983
      %v4318 = vunpack.c.h.b16 %v3983
      %v4319 = vunpack.c.l.b16 %v3984
      %v4320 = vunpack.c.h.b16 %v3984
      %v4321 = vpack.c.b16 %v4101, %v4097
      %v4322 = vpack.c.b16 %v4102, %v4098
      %v4323 = vpack.c.b16 %v4103, %v4099
      %v4324 = vpack.c.b16 %v4104, %v4100
      %v4325 = vpack.c.b16 %v4109, %v4105
      %v4326 = vpack.c.b16 %v4110, %v4106
      %v4327 = vpack.c.b16 %v4111, %v4107
      %v4328 = vpack.c.b16 %v4112, %v4108
      %v4329 = vpack.c.b16 %v4117, %v4113
      %v4330 = vpack.c.b16 %v4118, %v4114
      %v4331 = vpack.c.b16 %v4119, %v4115
      %v4332 = vpack.c.b16 %v4120, %v4116
      %v4333 = vpack.c.b16 %v4125, %v4121
      %v4334 = vpack.c.b16 %v4126, %v4122
      %v4335 = vpack.c.b16 %v4127, %v4123
      %v4336 = vpack.c.b16 %v4128, %v4124
      %v4337 = vpack.c.b16 %v4133, %v4129
      %v4338 = vpack.c.b16 %v4134, %v4130
      %v4339 = vpack.c.b16 %v4135, %v4131
      %v4340 = vpack.c.b16 %v4136, %v4132
      %v4341 = vpack.c.b16 %v4141, %v4137
      %v4342 = vpack.c.b16 %v4142, %v4138
      %v4343 = vpack.c.b16 %v4143, %v4139
      %v4344 = vpack.c.b16 %v4144, %v4140
      %v4345 = vpack.c.b16 %v4149, %v4145
      %v4346 = vpack.c.b16 %v4150, %v4146
      %v4347 = vpack.c.b16 %v4151, %v4147
      %v4348 = vpack.c.b16 %v4152, %v4148
      %v4349 = vpack.c.b16 %v4157, %v4153
      %v4350 = vpack.c.b16 %v4158, %v4154
      %v4351 = vpack.c.b16 %v4159, %v4155
      %v4352 = vpack.c.b16 %v4160, %v4156
      %v4353 = vpack.c.b16 %v4165, %v4161
      %v4354 = vpack.c.b16 %v4166, %v4162
      %v4355 = vpack.c.b16 %v4167, %v4163
      %v4356 = vpack.c.b16 %v4168, %v4164
      %v4357 = vpack.c.b16 %v4173, %v4169
      %v4358 = vpack.c.b16 %v4174, %v4170
      %v4359 = vpack.c.b16 %v4175, %v4171
      %v4360 = vpack.c.b16 %v4176, %v4172
      %v4361 = vpack.c.b16 %v4181, %v4177
      %v4362 = vpack.c.b16 %v4182, %v4178
      %v4363 = vpack.c.b16 %v4183, %v4179
      %v4364 = vpack.c.b16 %v4184, %v4180
      %v4365 = vpack.c.b16 %v4189, %v4185
      %v4366 = vpack.c.b16 %v4190, %v4186
      %v4367 = vpack.c.b16 %v4191, %v4187
      %v4368 = vpack.c.b16 %v4192, %v4188
      %v4369 = vpack.c.b16 %v4197, %v4193
      %v4370 = vpack.c.b16 %v4198, %v4194
      %v4371 = vpack.c.b16 %v4199, %v4195
      %v4372 = vpack.c.b16 %v4200, %v4196
      %v4373 = vpack.c.b16 %v4205, %v4201
      %v4374 = vpack.c.b16 %v4206, %v4202
      %v4375 = vpack.c.b16 %v4207, %v4203
      %v4376 = vpack.c.b16 %v4208, %v4204
      %v4377 = vpack.c.b16 %v4213, %v4209
      %v4378 = vpack.c.b16 %v4214, %v4210
      %v4379 = vpack.c.b16 %v4215, %v4211
      %v4380 = vpack.c.b16 %v4216, %v4212
      %v4381 = vpack.c.b16 %v4221, %v4217
      %v4382 = vpack.c.b16 %v4222, %v4218
      %v4383 = vpack.c.b16 %v4223, %v4219
      %v4384 = vpack.c.b16 %v4224, %v4220
      %v4385 = vpack.c.b16 %v4229, %v4225
      %v4386 = vpack.c.b16 %v4230, %v4226
      %v4387 = vpack.c.b16 %v4231, %v4227
      %v4388 = vpack.c.b16 %v4232, %v4228
      %v4389 = vpack.c.b16 %v4237, %v4233
      %v4390 = vpack.c.b16 %v4238, %v4234
      %v4391 = vpack.c.b16 %v4239, %v4235
      %v4392 = vpack.c.b16 %v4240, %v4236
      %v4393 = vpack.c.b16 %v4245, %v4241
      %v4394 = vpack.c.b16 %v4246, %v4242
      %v4395 = vpack.c.b16 %v4247, %v4243
      %v4396 = vpack.c.b16 %v4248, %v4244
      %v4397 = vpack.c.b16 %v4253, %v4249
      %v4398 = vpack.c.b16 %v4254, %v4250
      %v4399 = vpack.c.b16 %v4255, %v4251
      %v4400 = vpack.c.b16 %v4256, %v4252
      %v4401 = vpack.c.b16 %v4261, %v4257
      %v4402 = vpack.c.b16 %v4262, %v4258
      %v4403 = vpack.c.b16 %v4263, %v4259
      %v4404 = vpack.c.b16 %v4264, %v4260
      %v4405 = vpack.c.b16 %v4269, %v4265
      %v4406 = vpack.c.b16 %v4270, %v4266
      %v4407 = vpack.c.b16 %v4271, %v4267
      %v4408 = vpack.c.b16 %v4272, %v4268
      %v4409 = vpack.c.b16 %v4277, %v4273
      %v4410 = vpack.c.b16 %v4278, %v4274
      %v4411 = vpack.c.b16 %v4279, %v4275
      %v4412 = vpack.c.b16 %v4280, %v4276
      %v4413 = vpack.c.b16 %v4285, %v4281
      %v4414 = vpack.c.b16 %v4286, %v4282
      %v4415 = vpack.c.b16 %v4287, %v4283
      %v4416 = vpack.c.b16 %v4288, %v4284
      %v4417 = vpack.c.b16 %v4293, %v4289
      %v4418 = vpack.c.b16 %v4294, %v4290
      %v4419 = vpack.c.b16 %v4295, %v4291
      %v4420 = vpack.c.b16 %v4296, %v4292
      %v4421 = vpack.c.b16 %v4301, %v4297
      %v4422 = vpack.c.b16 %v4302, %v4298
      %v4423 = vpack.c.b16 %v4303, %v4299
      %v4424 = vpack.c.b16 %v4304, %v4300
      %v4425 = vpack.c.b16 %v4309, %v4305
      %v4426 = vpack.c.b16 %v4310, %v4306
      %v4427 = vpack.c.b16 %v4311, %v4307
      %v4428 = vpack.c.b16 %v4312, %v4308
      %v4429 = vpack.c.b16 %v4317, %v4313
      %v4430 = vpack.c.b16 %v4318, %v4314
      %v4431 = vpack.c.b16 %v4319, %v4315
      %v4432 = vpack.c.b16 %v4320, %v4316
      %4545 = vmatpush.bf16.msra.mxu0 %v4349
      %4546 = vmatpush.bf16.msra.mxu0 %v4345
      %4547 = vmatpush.bf16.msra.mxu0 %v4341
      %4548 = vmatpush.bf16.msra.mxu0 %v4337
      %4549 = vmatpush.bf16.msra.mxu0 %v4333
      %4550 = vmatpush.bf16.msra.mxu0 %v4329
      %4551 = vmatpush.bf16.msra.mxu0 %v4325
      %4552 = vmatpush.bf16.msra.mxu0 %v4321
      %4553 = vmatmul.bf16.gmra.mxu0 %v874
      %v4554 = vpop.f32.mrf.mxu0
      %v4555 = vadd.f32 0.0, %v4554
      %v4556 = vpop.f32.mrf.mxu0
      %4557 = vdwg.mxu0
      %4558 = vmatpush.bf16.msra.mxu0 %v4381
      %4559 = vmatpush.bf16.msra.mxu0 %v4377
      %4560 = vmatpush.bf16.msra.mxu0 %v4373
      %4561 = vmatpush.bf16.msra.mxu0 %v4369
      %4562 = vmatpush.bf16.msra.mxu0 %v4365
      %4563 = vmatpush.bf16.msra.mxu0 %v4361
      %4564 = vmatpush.bf16.msra.mxu0 %v4357
      %4565 = vmatpush.bf16.msra.mxu0 %v4353
      %4566 = vmatmul.bf16.gmra.mxu0 %v875
      %v4567 = vpop.f32.mrf.mxu0
      %v4568 = vadd.f32 %v4555, %v4567
      %v4569 = vpop.f32.mrf.mxu0
      %4570 = vdwg.mxu0
      %4571 = vmatpush.bf16.msra.mxu0 %v4413
      %4572 = vmatpush.bf16.msra.mxu0 %v4409
      %4573 = vmatpush.bf16.msra.mxu0 %v4405
      %4574 = vmatpush.bf16.msra.mxu0 %v4401
      %4575 = vmatpush.bf16.msra.mxu0 %v4397
      %4576 = vmatpush.bf16.msra.mxu0 %v4393
      %4577 = vmatpush.bf16.msra.mxu0 %v4389
      %4578 = vmatpush.bf16.msra.mxu0 %v4385
      %4579 = vmatmul.bf16.gmra.mxu0 %v876
      %v4580 = vpop.f32.mrf.mxu0
      %v4581 = vadd.f32 %v4568, %v4580
      %v4582 = vpop.f32.mrf.mxu0
      %4583 = vdwg.mxu0
      %4584 = vmatpush.bf16.msra.mxu0 0
      %4585 = vmatpush.bf16.msra.mxu0 0
      %4586 = vmatpush.bf16.msra.mxu0 0
      %4587 = vmatpush.bf16.msra.mxu0 0
      %4588 = vmatpush.bf16.msra.mxu0 %v4429
      %4589 = vmatpush.bf16.msra.mxu0 %v4425
      %4590 = vmatpush.bf16.msra.mxu0 %v4421
      %4591 = vmatpush.bf16.msra.mxu0 %v4417
      %4592 = vmatmul.bf16.gmra.mxu0 %v1552
      %v4593 = vpop.f32.mrf.mxu0
      %v4594 = vadd.f32 %v4581, %v4593
      %v4595 = vpop.f32.mrf.mxu0
      %4596 = vdwg.mxu0
      %4597 = vmatpush.bf16.msra.mxu0 %v4350
      %4598 = vmatpush.bf16.msra.mxu0 %v4346
      %4599 = vmatpush.bf16.msra.mxu0 %v4342
      %4600 = vmatpush.bf16.msra.mxu0 %v4338
      %4601 = vmatpush.bf16.msra.mxu0 %v4334
      %4602 = vmatpush.bf16.msra.mxu0 %v4330
      %4603 = vmatpush.bf16.msra.mxu0 %v4326
      %4604 = vmatpush.bf16.msra.mxu0 %v4322
      %4605 = vmatmul.bf16.gmra.mxu0 %v874
      %v4606 = vpop.f32.mrf.mxu0
      %v4607 = vadd.f32 0.0, %v4606
      %v4608 = vpop.f32.mrf.mxu0
      %4609 = vdwg.mxu0
      %4610 = vmatpush.bf16.msra.mxu0 %v4382
      %4611 = vmatpush.bf16.msra.mxu0 %v4378
      %4612 = vmatpush.bf16.msra.mxu0 %v4374
      %4613 = vmatpush.bf16.msra.mxu0 %v4370
      %4614 = vmatpush.bf16.msra.mxu0 %v4366
      %4615 = vmatpush.bf16.msra.mxu0 %v4362
      %4616 = vmatpush.bf16.msra.mxu0 %v4358
      %4617 = vmatpush.bf16.msra.mxu0 %v4354
      %4618 = vmatmul.bf16.gmra.mxu0 %v875
      %v4619 = vpop.f32.mrf.mxu0
      %v4620 = vadd.f32 %v4607, %v4619
      %v4621 = vpop.f32.mrf.mxu0
      %4622 = vdwg.mxu0
      %4623 = vmatpush.bf16.msra.mxu0 %v4414
      %4624 = vmatpush.bf16.msra.mxu0 %v4410
      %4625 = vmatpush.bf16.msra.mxu0 %v4406
      %4626 = vmatpush.bf16.msra.mxu0 %v4402
      %4627 = vmatpush.bf16.msra.mxu0 %v4398
      %4628 = vmatpush.bf16.msra.mxu0 %v4394
      %4629 = vmatpush.bf16.msra.mxu0 %v4390
      %4630 = vmatpush.bf16.msra.mxu0 %v4386
      %4631 = vmatmul.bf16.gmra.mxu0 %v876
      %v4632 = vpop.f32.mrf.mxu0
      %v4633 = vadd.f32 %v4620, %v4632
      %v4634 = vpop.f32.mrf.mxu0
      %4635 = vdwg.mxu0
      %4636 = vmatpush.bf16.msra.mxu0 0
      %4637 = vmatpush.bf16.msra.mxu0 0
      %4638 = vmatpush.bf16.msra.mxu0 0
      %4639 = vmatpush.bf16.msra.mxu0 0
      %4640 = vmatpush.bf16.msra.mxu0 %v4430
      %4641 = vmatpush.bf16.msra.mxu0 %v4426
      %4642 = vmatpush.bf16.msra.mxu0 %v4422
      %4643 = vmatpush.bf16.msra.mxu0 %v4418
      %4644 = vmatmul.bf16.gmra.mxu0 %v1552
      %v4645 = vpop.f32.mrf.mxu0
      %v4646 = vadd.f32 %v4633, %v4645
      %v4647 = vpop.f32.mrf.mxu0
      %4648 = vdwg.mxu0
      %4649 = vmatpush.bf16.msra.mxu0 %v4351
      %4650 = vmatpush.bf16.msra.mxu0 %v4347
      %4651 = vmatpush.bf16.msra.mxu0 %v4343
      %4652 = vmatpush.bf16.msra.mxu0 %v4339
      %4653 = vmatpush.bf16.msra.mxu0 %v4335
      %4654 = vmatpush.bf16.msra.mxu0 %v4331
      %4655 = vmatpush.bf16.msra.mxu0 %v4327
      %4656 = vmatpush.bf16.msra.mxu0 %v4323
      %4657 = vmatmul.bf16.gmra.mxu0 %v874
      %v4658 = vpop.f32.mrf.mxu0
      %v4659 = vadd.f32 0.0, %v4658
      %v4660 = vpop.f32.mrf.mxu0
      %4661 = vdwg.mxu0
      %4662 = vmatpush.bf16.msra.mxu0 %v4383
      %4663 = vmatpush.bf16.msra.mxu0 %v4379
      %4664 = vmatpush.bf16.msra.mxu0 %v4375
      %4665 = vmatpush.bf16.msra.mxu0 %v4371
      %4666 = vmatpush.bf16.msra.mxu0 %v4367
      %4667 = vmatpush.bf16.msra.mxu0 %v4363
      %4668 = vmatpush.bf16.msra.mxu0 %v4359
      %4669 = vmatpush.bf16.msra.mxu0 %v4355
      %4670 = vmatmul.bf16.gmra.mxu0 %v875
      %v4671 = vpop.f32.mrf.mxu0
      %v4672 = vadd.f32 %v4659, %v4671
      %v4673 = vpop.f32.mrf.mxu0
      %4674 = vdwg.mxu0
      %4675 = vmatpush.bf16.msra.mxu0 %v4415
      %4676 = vmatpush.bf16.msra.mxu0 %v4411
      %4677 = vmatpush.bf16.msra.mxu0 %v4407
      %4678 = vmatpush.bf16.msra.mxu0 %v4403
      %4679 = vmatpush.bf16.msra.mxu0 %v4399
      %4680 = vmatpush.bf16.msra.mxu0 %v4395
      %4681 = vmatpush.bf16.msra.mxu0 %v4391
      %4682 = vmatpush.bf16.msra.mxu0 %v4387
      %4683 = vmatmul.bf16.gmra.mxu0 %v876
      %v4684 = vpop.f32.mrf.mxu0
      %v4685 = vadd.f32 %v4672, %v4684
      %v4686 = vpop.f32.mrf.mxu0
      %4687 = vdwg.mxu0
      %4688 = vmatpush.bf16.msra.mxu0 0
      %4689 = vmatpush.bf16.msra.mxu0 0
      %4690 = vmatpush.bf16.msra.mxu0 0
      %4691 = vmatpush.bf16.msra.mxu0 0
      %4692 = vmatpush.bf16.msra.mxu0 %v4431
      %4693 = vmatpush.bf16.msra.mxu0 %v4427
      %4694 = vmatpush.bf16.msra.mxu0 %v4423
      %4695 = vmatpush.bf16.msra.mxu0 %v4419
      %4696 = vmatmul.bf16.gmra.mxu0 %v1552
      %v4697 = vpop.f32.mrf.mxu0
      %v4698 = vadd.f32 %v4685, %v4697
      %v4699 = vpop.f32.mrf.mxu0
      %4700 = vdwg.mxu0
      %4701 = vmatpush.bf16.msra.mxu0 %v4352
      %4702 = vmatpush.bf16.msra.mxu0 %v4348
      %4703 = vmatpush.bf16.msra.mxu0 %v4344
      %4704 = vmatpush.bf16.msra.mxu0 %v4340
      %4705 = vmatpush.bf16.msra.mxu0 %v4336
      %4706 = vmatpush.bf16.msra.mxu0 %v4332
      %4707 = vmatpush.bf16.msra.mxu0 %v4328
      %4708 = vmatpush.bf16.msra.mxu0 %v4324
      %4709 = vmatmul.bf16.gmra.mxu0 %v874
      %v4710 = vpop.f32.mrf.mxu0
      %v4711 = vadd.f32 0.0, %v4710
      %v4712 = vpop.f32.mrf.mxu0
      %4713 = vdwg.mxu0
      %4714 = vmatpush.bf16.msra.mxu0 %v4384
      %4715 = vmatpush.bf16.msra.mxu0 %v4380
      %4716 = vmatpush.bf16.msra.mxu0 %v4376
      %4717 = vmatpush.bf16.msra.mxu0 %v4372
      %4718 = vmatpush.bf16.msra.mxu0 %v4368
      %4719 = vmatpush.bf16.msra.mxu0 %v4364
      %4720 = vmatpush.bf16.msra.mxu0 %v4360
      %4721 = vmatpush.bf16.msra.mxu0 %v4356
      %4722 = vmatmul.bf16.gmra.mxu0 %v875
      %v4723 = vpop.f32.mrf.mxu0
      %v4724 = vadd.f32 %v4711, %v4723
      %v4725 = vpop.f32.mrf.mxu0
      %4726 = vdwg.mxu0
      %4727 = vmatpush.bf16.msra.mxu0 %v4416
      %4728 = vmatpush.bf16.msra.mxu0 %v4412
      %4729 = vmatpush.bf16.msra.mxu0 %v4408
      %4730 = vmatpush.bf16.msra.mxu0 %v4404
      %4731 = vmatpush.bf16.msra.mxu0 %v4400
      %4732 = vmatpush.bf16.msra.mxu0 %v4396
      %4733 = vmatpush.bf16.msra.mxu0 %v4392
      %4734 = vmatpush.bf16.msra.mxu0 %v4388
      %4735 = vmatmul.bf16.gmra.mxu0 %v876
      %v4736 = vpop.f32.mrf.mxu0
      %v4737 = vadd.f32 %v4724, %v4736
      %v4738 = vpop.f32.mrf.mxu0
      %4739 = vdwg.mxu0
      %4740 = vmatpush.bf16.msra.mxu0 0
      %4741 = vmatpush.bf16.msra.mxu0 0
      %4742 = vmatpush.bf16.msra.mxu0 0
      %4743 = vmatpush.bf16.msra.mxu0 0
      %4744 = vmatpush.bf16.msra.mxu0 %v4432
      %4745 = vmatpush.bf16.msra.mxu0 %v4428
      %4746 = vmatpush.bf16.msra.mxu0 %v4424
      %4747 = vmatpush.bf16.msra.mxu0 %v4420
      %4748 = vmatmul.bf16.gmra.mxu0 %v1552
      %v4749 = vpop.f32.mrf.mxu0
      %v4750 = vadd.f32 %v4737, %v4749
      %v4751 = vpop.f32.mrf.mxu0
      %4752 = vdwg.mxu0
      %s4753 = scalar_lea.vmem %s4, 48
      %v4754 = vld [vmem:[%s4753] sm:$0xff]
      %v4755 = vld [vmem:[%s4753 + $0x8] sm:$0xff]
      %v4757 = vsel %vm2648, %v4754, 0
      %v4760 = vsel %vm2648, %v4755, 0
      %v4763 = vsel %vm2655, %v4594, 0
      %v4766 = vsel %vm2655, %v4646, 0
      %v4769 = vsel %vm2655, %v4698, 0
      %v4772 = vsel %vm2655, %v4750, 0
      %4774 = vmatpush.msra.mxu0 0.0
      %4775 = vmatpush.msra.mxu0 0.0
      %4776 = vmatpush.msra.mxu0 0.0
      %4777 = vmatpush.msra.mxu0 0.0
      %4778 = vmatpush.msra.mxu0 0.0
      %4779 = vmatpush.msra.mxu0 0.0
      %4780 = vmatpush.msra.mxu0 0.0
      %4781 = vmatpush.msra.mxu0 0.0
      %4782 = vmatpush.msra.mxu0 0.0
      %4783 = vmatpush.msra.mxu0 0.0
      %4784 = vmatpush.msra.mxu0 0.0
      %4785 = vmatpush.msra.mxu0 0.0
      %4786 = vmatpush.msra.mxu0 0.0
      %4787 = vmatpush.msra.mxu0 0.0
      %4788 = vmatpush.msra.mxu0 0.0
      %4789 = vmatpush.msra.mxu0 %v4763
      %4790 = vmatmul.f32.gmra.mxu0 %v4757
      %v4791 = vpop.f32.mrf.mxu0
      %v4792 = vadd.f32 0.0, %v4791
      %4793 = vmatmul.f32.gmra.mxu0 %v4760
      %v4794 = vpop.f32.mrf.mxu0
      %v4795 = vadd.f32 0.0, %v4794
      %4796 = vdwg.mxu0
      %4797 = vmatpush.msra.mxu0 0.0
      %4798 = vmatpush.msra.mxu0 0.0
      %4799 = vmatpush.msra.mxu0 0.0
      %4800 = vmatpush.msra.mxu0 0.0
      %4801 = vmatpush.msra.mxu0 0.0
      %4802 = vmatpush.msra.mxu0 0.0
      %4803 = vmatpush.msra.mxu0 0.0
      %4804 = vmatpush.msra.mxu0 0.0
      %4805 = vmatpush.msra.mxu0 0.0
      %4806 = vmatpush.msra.mxu0 0.0
      %4807 = vmatpush.msra.mxu0 0.0
      %4808 = vmatpush.msra.mxu0 0.0
      %4809 = vmatpush.msra.mxu0 0.0
      %4810 = vmatpush.msra.mxu0 0.0
      %4811 = vmatpush.msra.mxu0 0.0
      %4812 = vmatpush.msra.mxu0 %v4766
      %4813 = vmatmul.f32.gmra.mxu0 %v4757
      %v4814 = vpop.f32.mrf.mxu0
      %v4815 = vadd.f32 0.0, %v4814
      %4816 = vmatmul.f32.gmra.mxu0 %v4760
      %v4817 = vpop.f32.mrf.mxu0
      %v4818 = vadd.f32 0.0, %v4817
      %4819 = vdwg.mxu0
      %4820 = vmatpush.msra.mxu0 0.0
      %4821 = vmatpush.msra.mxu0 0.0
      %4822 = vmatpush.msra.mxu0 0.0
      %4823 = vmatpush.msra.mxu0 0.0
      %4824 = vmatpush.msra.mxu0 0.0
      %4825 = vmatpush.msra.mxu0 0.0
      %4826 = vmatpush.msra.mxu0 0.0
      %4827 = vmatpush.msra.mxu0 0.0
      %4828 = vmatpush.msra.mxu0 0.0
      %4829 = vmatpush.msra.mxu0 0.0
      %4830 = vmatpush.msra.mxu0 0.0
      %4831 = vmatpush.msra.mxu0 0.0
      %4832 = vmatpush.msra.mxu0 0.0
      %4833 = vmatpush.msra.mxu0 0.0
      %4834 = vmatpush.msra.mxu0 0.0
      %4835 = vmatpush.msra.mxu0 %v4769
      %4836 = vmatmul.f32.gmra.mxu0 %v4757
      %v4837 = vpop.f32.mrf.mxu0
      %v4838 = vadd.f32 0.0, %v4837
      %4839 = vmatmul.f32.gmra.mxu0 %v4760
      %v4840 = vpop.f32.mrf.mxu0
      %v4841 = vadd.f32 0.0, %v4840
      %4842 = vdwg.mxu0
      %4843 = vmatpush.msra.mxu0 0.0
      %4844 = vmatpush.msra.mxu0 0.0
      %4845 = vmatpush.msra.mxu0 0.0
      %4846 = vmatpush.msra.mxu0 0.0
      %4847 = vmatpush.msra.mxu0 0.0
      %4848 = vmatpush.msra.mxu0 0.0
      %4849 = vmatpush.msra.mxu0 0.0
      %4850 = vmatpush.msra.mxu0 0.0
      %4851 = vmatpush.msra.mxu0 0.0
      %4852 = vmatpush.msra.mxu0 0.0
      %4853 = vmatpush.msra.mxu0 0.0
      %4854 = vmatpush.msra.mxu0 0.0
      %4855 = vmatpush.msra.mxu0 0.0
      %4856 = vmatpush.msra.mxu0 0.0
      %4857 = vmatpush.msra.mxu0 0.0
      %4858 = vmatpush.msra.mxu0 %v4772
      %4859 = vmatmul.f32.gmra.mxu0 %v4757
      %v4860 = vpop.f32.mrf.mxu0
      %v4861 = vadd.f32 0.0, %v4860
      %4862 = vmatmul.f32.gmra.mxu0 %v4760
      %v4863 = vpop.f32.mrf.mxu0
      %v4864 = vadd.f32 0.0, %v4863
      %4865 = vdwg.mxu0
      %v4866 = vadd.f32 %v3864, %v4792
      %v4867 = vadd.f32 %v3865, %v4815
      %v4868 = vadd.f32 %v3866, %v4838
      %v4869 = vadd.f32 %v3867, %v4861
      %v4870 = vadd.f32 %v3868, %v4795
      %v4871 = vadd.f32 %v3869, %v4818
      %v4872 = vadd.f32 %v3870, %v4841
      %v4873 = vadd.f32 %v3871, %v4864
      %v4874 = vld [vmem:[%s5] sm:$0xf]
      %v4876 = vperm.slane %v4874, 0
      %v4877 = vperm.slane %v4874, 1
      %v4878 = vperm.slane %v4874, 2
      %v4879 = vperm.slane %v4874, 3
      %v4884 = vadd.f32 %v4866, %v4876
      %v4885 = vadd.f32 %v4867, %v4877
      %v4886 = vadd.f32 %v4868, %v4878
      %v4887 = vadd.f32 %v4869, %v4879
      %v4888 = vadd.f32 %v4870, %v4876
      %v4889 = vadd.f32 %v4871, %v4877
      %v4890 = vadd.f32 %v4872, %v4878
      %v4891 = vadd.f32 %v4873, %v4879
      %v4892 = vmax.f32 %v4884, 0.0
      %v4893 = vmax.f32 %v4885, 0.0
      %v4894 = vmax.f32 %v4886, 0.0
      %v4895 = vmax.f32 %v4887, 0.0
      %v4896 = vmax.f32 %v4888, 0.0
      %v4897 = vmax.f32 %v4889, 0.0
      %v4898 = vmax.f32 %v4890, 0.0
      %v4899 = vmax.f32 %v4891, 0.0
      %v4900 = vpack.c.bf16 %v4896, %v4892
      %v4901 = vpack.c.bf16 %v4897, %v4893
      %v4902 = vpack.c.bf16 %v4898, %v4894
      %v4903 = vpack.c.bf16 %v4899, %v4895
      %v4904 = vld [vmem:[%s6] sm:$0xff]
      %v4905 = vld [vmem:[%s6 + $0x8] sm:$0xff]
      %v4906 = vld [vmem:[%s6 + $0x10] sm:$0xf]
      %v4907 = vld [vmem:[%s6 + $0x14] sm:$0xff]
      %v4908 = vld [vmem:[%s6 + $0x1c] sm:$0xff]
      %v4909 = vld [vmem:[%s6 + $0x24] sm:$0xf]
      %v4910 = vld [vmem:[%s6 + $0x28] sm:$0xff]
      %v4911 = vld [vmem:[%s6 + $0x30] sm:$0xff]
      %v4912 = vld [vmem:[%s6 + $0x38] sm:$0xf]
      %v4913 = vld [vmem:[%s6 + $0x3c] sm:$0xff]
      %v4914 = vld [vmem:[%s6 + $0x44] sm:$0xff]
      %v4915 = vld [vmem:[%s6 + $0x4c] sm:$0xf]
      %v4916 = vld [vmem:[%s6 + $0x50] sm:$0xff]
      %v4917 = vld [vmem:[%s6 + $0x58] sm:$0xff]
      %v4918 = vld [vmem:[%s6 + $0x60] sm:$0xf]
      %v4919 = vld [vmem:[%s6 + $0x64] sm:$0xff]
      %v4920 = vld [vmem:[%s6 + $0x6c] sm:$0xff]
      %v4921 = vld [vmem:[%s6 + $0x74] sm:$0xf]
      %v4922 = vld [vmem:[%s6 + $0x78] sm:$0xff]
      %v4923 = vld [vmem:[%s6 + $0x80] sm:$0xff]
      %v4924 = vld [vmem:[%s6 + $0x88] sm:$0xf]
      %v4925 = vld [vmem:[%s6 + $0x8c] sm:$0xff]
      %v4926 = vld [vmem:[%s6 + $0x94] sm:$0xff]
      %v4927 = vld [vmem:[%s6 + $0x9c] sm:$0xf]
      %v4928 = vld [vmem:[%s6 + $0xa0] sm:$0xff]
      %v4929 = vld [vmem:[%s6 + $0xa8] sm:$0xff]
      %v4930 = vld [vmem:[%s6 + $0xb0] sm:$0xf]
      %v4931 = vld [vmem:[%s6 + $0xb4] sm:$0xff]
      %v4932 = vld [vmem:[%s6 + $0xbc] sm:$0xff]
      %v4933 = vld [vmem:[%s6 + $0xc4] sm:$0xf]
      %v4934 = vld [vmem:[%s6 + $0xc8] sm:$0xff]
      %v4935 = vld [vmem:[%s6 + $0xd0] sm:$0xff]
      %v4936 = vld [vmem:[%s6 + $0xd8] sm:$0xf]
      %v4937 = vld [vmem:[%s6 + $0xdc] sm:$0xff]
      %v4938 = vld [vmem:[%s6 + $0xe4] sm:$0xff]
      %v4939 = vld [vmem:[%s6 + $0xec] sm:$0xf]
      %v4940 = vld [vmem:[%s6 + $0xf0] sm:$0xff]
      %v4941 = vld [vmem:[%s6 + $0xf8] sm:$0xff]
      %v4942 = vld [vmem:[%s6 + $0x100] sm:$0xf]
      %v4943 = vld [vmem:[%s6 + $0x104] sm:$0xff]
      %v4944 = vld [vmem:[%s6 + $0x10c] sm:$0xff]
      %v4945 = vld [vmem:[%s6 + $0x114] sm:$0xf]
      %v4946 = vld [vmem:[%s6 + $0x118] sm:$0xff]
      %v4947 = vld [vmem:[%s6 + $0x120] sm:$0xff]
      %v4948 = vld [vmem:[%s6 + $0x128] sm:$0xf]
      %v4949 = vld [vmem:[%s6 + $0x12c] sm:$0xff]
      %v4950 = vld [vmem:[%s6 + $0x134] sm:$0xff]
      %v4951 = vld [vmem:[%s6 + $0x13c] sm:$0xf]
      %v4952 = vld [vmem:[%s6 + $0x140] sm:$0xff]
      %v4953 = vld [vmem:[%s6 + $0x148] sm:$0xff]
      %v4954 = vld [vmem:[%s6 + $0x150] sm:$0xf]
      %v4955 = vld [vmem:[%s6 + $0x154] sm:$0xff]
      %v4956 = vld [vmem:[%s6 + $0x15c] sm:$0xff]
      %v4957 = vld [vmem:[%s6 + $0x164] sm:$0xf]
      %v4958 = vld [vmem:[%s6 + $0x168] sm:$0xff]
      %v4959 = vld [vmem:[%s6 + $0x170] sm:$0xff]
      %v4960 = vld [vmem:[%s6 + $0x178] sm:$0xf]
      %v4961 = vld [vmem:[%s6 + $0x17c] sm:$0xff]
      %v4962 = vld [vmem:[%s6 + $0x184] sm:$0xff]
      %v4963 = vld [vmem:[%s6 + $0x18c] sm:$0xf]
      %v4964 = vld [vmem:[%s6 + $0x190] sm:$0xff]
      %v4965 = vld [vmem:[%s6 + $0x198] sm:$0xff]
      %v4966 = vld [vmem:[%s6 + $0x1a0] sm:$0xf]
      %v4967 = vld [vmem:[%s6 + $0x1a4] sm:$0xff]
      %v4968 = vld [vmem:[%s6 + $0x1ac] sm:$0xff]
      %v4969 = vld [vmem:[%s6 + $0x1b4] sm:$0xf]
      %v4970 = vld [vmem:[%s6 + $0x1b8] sm:$0xff]
      %v4971 = vld [vmem:[%s6 + $0x1c0] sm:$0xff]
      %v4972 = vld [vmem:[%s6 + $0x1c8] sm:$0xf]
      %v4973 = vld [vmem:[%s6 + $0x1cc] sm:$0xff]
      %v4974 = vld [vmem:[%s6 + $0x1d4] sm:$0xff]
      %v4975 = vld [vmem:[%s6 + $0x1dc] sm:$0xf]
      %v4976 = vld [vmem:[%s6 + $0x1e0] sm:$0xff]
      %v4977 = vld [vmem:[%s6 + $0x1e8] sm:$0xff]
      %v4978 = vld [vmem:[%s6 + $0x1f0] sm:$0xf]
      %v4979 = vld [vmem:[%s6 + $0x1f4] sm:$0xff]
      %v4980 = vld [vmem:[%s6 + $0x1fc] sm:$0xff]
      %v4981 = vld [vmem:[%s6 + $0x204] sm:$0xf]
      %v4982 = vld [vmem:[%s6 + $0x208] sm:$0xff]
      %v4983 = vld [vmem:[%s6 + $0x210] sm:$0xff]
      %v4984 = vld [vmem:[%s6 + $0x218] sm:$0xf]
      %v4985 = vld [vmem:[%s6 + $0x21c] sm:$0xff]
      %v4986 = vld [vmem:[%s6 + $0x224] sm:$0xff]
      %v4987 = vld [vmem:[%s6 + $0x22c] sm:$0xf]
      %v4988 = vld [vmem:[%s6 + $0x230] sm:$0xff]
      %v4989 = vld [vmem:[%s6 + $0x238] sm:$0xff]
      %v4990 = vld [vmem:[%s6 + $0x240] sm:$0xf]
      %v4991 = vld [vmem:[%s6 + $0x244] sm:$0xff]
      %v4992 = vld [vmem:[%s6 + $0x24c] sm:$0xff]
      %v4993 = vld [vmem:[%s6 + $0x254] sm:$0xf]
      %v4994 = vld [vmem:[%s6 + $0x258] sm:$0xff]
      %v4995 = vld [vmem:[%s6 + $0x260] sm:$0xff]
      %v4996 = vld [vmem:[%s6 + $0x268] sm:$0xf]
      %v4997 = vld [vmem:[%s6 + $0x26c] sm:$0xff]
      %v4998 = vld [vmem:[%s6 + $0x274] sm:$0xff]
      %v4999 = vld [vmem:[%s6 + $0x27c] sm:$0xf]
      %v5000 = vld [vmem:[%s6 + $0x280] sm:$0xff]
      %v5001 = vld [vmem:[%s6 + $0x288] sm:$0xff]
      %v5002 = vld [vmem:[%s6 + $0x290] sm:$0xf]
      %v5003 = vld [vmem:[%s6 + $0x294] sm:$0xff]
      %v5004 = vld [vmem:[%s6 + $0x29c] sm:$0xff]
      %v5005 = vld [vmem:[%s6 + $0x2a4] sm:$0xf]
      %v5006 = vld [vmem:[%s6 + $0x2a8] sm:$0xff]
      %v5007 = vld [vmem:[%s6 + $0x2b0] sm:$0xff]
      %v5008 = vld [vmem:[%s6 + $0x2b8] sm:$0xf]
      %v5009 = vld [vmem:[%s6 + $0x2bc] sm:$0xff]
      %v5010 = vld [vmem:[%s6 + $0x2c4] sm:$0xff]
      %v5011 = vld [vmem:[%s6 + $0x2cc] sm:$0xf]
      %v5012 = vld [vmem:[%s6 + $0x2d0] sm:$0xff]
      %v5013 = vld [vmem:[%s6 + $0x2d8] sm:$0xff]
      %v5014 = vld [vmem:[%s6 + $0x2e0] sm:$0xf]
      %v5015 = vld [vmem:[%s6 + $0x2e4] sm:$0xff]
      %v5016 = vld [vmem:[%s6 + $0x2ec] sm:$0xff]
      %v5017 = vld [vmem:[%s6 + $0x2f4] sm:$0xf]
      %v5018 = vld [vmem:[%s6 + $0x2f8] sm:$0xff]
      %v5019 = vld [vmem:[%s6 + $0x300] sm:$0xff]
      %v5020 = vld [vmem:[%s6 + $0x308] sm:$0xf]
      %v5021 = vld [vmem:[%s6 + $0x30c] sm:$0xff]
      %v5022 = vld [vmem:[%s6 + $0x314] sm:$0xff]
      %v5023 = vld [vmem:[%s6 + $0x31c] sm:$0xf]
      %v5024 = vld [vmem:[%s6 + $0x320] sm:$0xff]
      %v5025 = vld [vmem:[%s6 + $0x328] sm:$0xff]
      %v5026 = vld [vmem:[%s6 + $0x330] sm:$0xf]
      %v5027 = vld [vmem:[%s6 + $0x334] sm:$0xff]
      %v5028 = vld [vmem:[%s6 + $0x33c] sm:$0xff]
      %v5029 = vld [vmem:[%s6 + $0x344] sm:$0xf]
      %v5030 = vld [vmem:[%s6 + $0x348] sm:$0xff]
      %v5031 = vld [vmem:[%s6 + $0x350] sm:$0xff]
      %v5032 = vld [vmem:[%s6 + $0x358] sm:$0xf]
      %v5033 = vld [vmem:[%s6 + $0x35c] sm:$0xff]
      %v5034 = vld [vmem:[%s6 + $0x364] sm:$0xff]
      %v5035 = vld [vmem:[%s6 + $0x36c] sm:$0xf]
      %v5036 = vld [vmem:[%s6 + $0x370] sm:$0xff]
      %v5037 = vld [vmem:[%s6 + $0x378] sm:$0xff]
      %v5038 = vld [vmem:[%s6 + $0x380] sm:$0xf]
      %v5039 = vld [vmem:[%s6 + $0x384] sm:$0xff]
      %v5040 = vld [vmem:[%s6 + $0x38c] sm:$0xff]
      %v5041 = vld [vmem:[%s6 + $0x394] sm:$0xf]
      %v5042 = vld [vmem:[%s6 + $0x398] sm:$0xff]
      %v5043 = vld [vmem:[%s6 + $0x3a0] sm:$0xff]
      %v5044 = vld [vmem:[%s6 + $0x3a8] sm:$0xf]
      %v5045 = vld [vmem:[%s6 + $0x3ac] sm:$0xff]
      %v5046 = vld [vmem:[%s6 + $0x3b4] sm:$0xff]
      %v5047 = vld [vmem:[%s6 + $0x3bc] sm:$0xf]
      %v5048 = vld [vmem:[%s6 + $0x3c0] sm:$0xff]
      %v5049 = vld [vmem:[%s6 + $0x3c8] sm:$0xff]
      %v5050 = vld [vmem:[%s6 + $0x3d0] sm:$0xf]
      %v5051 = vld [vmem:[%s6 + $0x3d4] sm:$0xff]
      %v5052 = vld [vmem:[%s6 + $0x3dc] sm:$0xff]
      %v5053 = vld [vmem:[%s6 + $0x3e4] sm:$0xf]
      %v5054 = vld [vmem:[%s6 + $0x3e8] sm:$0xff]
      %v5055 = vld [vmem:[%s6 + $0x3f0] sm:$0xff]
      %v5056 = vld [vmem:[%s6 + $0x3f8] sm:$0xf]
      %v5057 = vld [vmem:[%s6 + $0x3fc] sm:$0xff]
      %v5058 = vld [vmem:[%s6 + $0x404] sm:$0xff]
      %v5059 = vld [vmem:[%s6 + $0x40c] sm:$0xf]
      %v5060 = vld [vmem:[%s6 + $0x410] sm:$0xff]
      %v5061 = vld [vmem:[%s6 + $0x418] sm:$0xff]
      %v5062 = vld [vmem:[%s6 + $0x420] sm:$0xf]
      %v5063 = vld [vmem:[%s6 + $0x424] sm:$0xff]
      %v5064 = vld [vmem:[%s6 + $0x42c] sm:$0xff]
      %v5065 = vld [vmem:[%s6 + $0x434] sm:$0xf]
      %v5066 = vld [vmem:[%s6 + $0x438] sm:$0xff]
      %v5067 = vld [vmem:[%s6 + $0x440] sm:$0xff]
      %v5068 = vld [vmem:[%s6 + $0x448] sm:$0xf]
      %v5069 = vld [vmem:[%s6 + $0x44c] sm:$0xff]
      %v5070 = vld [vmem:[%s6 + $0x454] sm:$0xff]
      %v5071 = vld [vmem:[%s6 + $0x45c] sm:$0xf]
      %v5072 = vld [vmem:[%s6 + $0x460] sm:$0xff]
      %v5073 = vld [vmem:[%s6 + $0x468] sm:$0xff]
      %v5074 = vld [vmem:[%s6 + $0x470] sm:$0xf]
      %v5075 = vld [vmem:[%s6 + $0x474] sm:$0xff]
      %v5076 = vld [vmem:[%s6 + $0x47c] sm:$0xff]
      %v5077 = vld [vmem:[%s6 + $0x484] sm:$0xf]
      %v5078 = vld [vmem:[%s6 + $0x488] sm:$0xff]
      %v5079 = vld [vmem:[%s6 + $0x490] sm:$0xff]
      %v5080 = vld [vmem:[%s6 + $0x498] sm:$0xf]
      %v5081 = vld [vmem:[%s6 + $0x49c] sm:$0xff]
      %v5082 = vld [vmem:[%s6 + $0x4a4] sm:$0xff]
      %v5083 = vld [vmem:[%s6 + $0x4ac] sm:$0xf]
      %v5084 = vld [vmem:[%s6 + $0x4b0] sm:$0xff]
      %v5085 = vld [vmem:[%s6 + $0x4b8] sm:$0xff]
      %v5086 = vld [vmem:[%s6 + $0x4c0] sm:$0xf]
      %v5087 = vld [vmem:[%s6 + $0x4c4] sm:$0xff]
      %v5088 = vld [vmem:[%s6 + $0x4cc] sm:$0xff]
      %v5089 = vld [vmem:[%s6 + $0x4d4] sm:$0xf]
      %v5090 = vld [vmem:[%s6 + $0x4d8] sm:$0xff]
      %v5091 = vld [vmem:[%s6 + $0x4e0] sm:$0xff]
      %v5092 = vld [vmem:[%s6 + $0x4e8] sm:$0xf]
      %v5093 = vld [vmem:[%s6 + $0x4ec] sm:$0xff]
      %v5094 = vld [vmem:[%s6 + $0x4f4] sm:$0xff]
      %v5095 = vld [vmem:[%s6 + $0x4fc] sm:$0xf]
      %v5288 = vunpack.c.l.b16 %v4904
      %v5289 = vunpack.c.h.b16 %v4904
      %v5290 = vunpack.c.l.b16 %v4905
      %v5291 = vunpack.c.h.b16 %v4905
      %v5292 = vunpack.c.l.b16 %v4906
      %v5293 = vunpack.c.l.b16 %v4907
      %v5294 = vunpack.c.h.b16 %v4907
      %v5295 = vunpack.c.l.b16 %v4908
      %v5296 = vunpack.c.h.b16 %v4908
      %v5297 = vunpack.c.l.b16 %v4909
      %v5298 = vunpack.c.l.b16 %v4910
      %v5299 = vunpack.c.h.b16 %v4910
      %v5300 = vunpack.c.l.b16 %v4911
      %v5301 = vunpack.c.h.b16 %v4911
      %v5302 = vunpack.c.l.b16 %v4912
      %v5303 = vunpack.c.l.b16 %v4913
      %v5304 = vunpack.c.h.b16 %v4913
      %v5305 = vunpack.c.l.b16 %v4914
      %v5306 = vunpack.c.h.b16 %v4914
      %v5307 = vunpack.c.l.b16 %v4915
      %v5308 = vunpack.c.l.b16 %v4916
      %v5309 = vunpack.c.h.b16 %v4916
      %v5310 = vunpack.c.l.b16 %v4917
      %v5311 = vunpack.c.h.b16 %v4917
      %v5312 = vunpack.c.l.b16 %v4918
      %v5313 = vunpack.c.l.b16 %v4919
      %v5314 = vunpack.c.h.b16 %v4919
      %v5315 = vunpack.c.l.b16 %v4920
      %v5316 = vunpack.c.h.b16 %v4920
      %v5317 = vunpack.c.l.b16 %v4921
      %v5318 = vunpack.c.l.b16 %v4922
      %v5319 = vunpack.c.h.b16 %v4922
      %v5320 = vunpack.c.l.b16 %v4923
      %v5321 = vunpack.c.h.b16 %v4923
      %v5322 = vunpack.c.l.b16 %v4924
      %v5323 = vunpack.c.l.b16 %v4925
      %v5324 = vunpack.c.h.b16 %v4925
      %v5325 = vunpack.c.l.b16 %v4926
      %v5326 = vunpack.c.h.b16 %v4926
      %v5327 = vunpack.c.l.b16 %v4927
      %v5328 = vunpack.c.l.b16 %v4928
      %v5329 = vunpack.c.h.b16 %v4928
      %v5330 = vunpack.c.l.b16 %v4929
      %v5331 = vunpack.c.h.b16 %v4929
      %v5332 = vunpack.c.l.b16 %v4930
      %v5333 = vunpack.c.l.b16 %v4931
      %v5334 = vunpack.c.h.b16 %v4931
      %v5335 = vunpack.c.l.b16 %v4932
      %v5336 = vunpack.c.h.b16 %v4932
      %v5337 = vunpack.c.l.b16 %v4933
      %v5338 = vunpack.c.l.b16 %v4934
      %v5339 = vunpack.c.h.b16 %v4934
      %v5340 = vunpack.c.l.b16 %v4935
      %v5341 = vunpack.c.h.b16 %v4935
      %v5342 = vunpack.c.l.b16 %v4936
      %v5343 = vunpack.c.l.b16 %v4937
      %v5344 = vunpack.c.h.b16 %v4937
      %v5345 = vunpack.c.l.b16 %v4938
      %v5346 = vunpack.c.h.b16 %v4938
      %v5347 = vunpack.c.l.b16 %v4939
      %v5348 = vunpack.c.l.b16 %v4940
      %v5349 = vunpack.c.h.b16 %v4940
      %v5350 = vunpack.c.l.b16 %v4941
      %v5351 = vunpack.c.h.b16 %v4941
      %v5352 = vunpack.c.l.b16 %v4942
      %v5353 = vunpack.c.l.b16 %v4943
      %v5354 = vunpack.c.h.b16 %v4943
      %v5355 = vunpack.c.l.b16 %v4944
      %v5356 = vunpack.c.h.b16 %v4944
      %v5357 = vunpack.c.l.b16 %v4945
      %v5358 = vunpack.c.l.b16 %v4946
      %v5359 = vunpack.c.h.b16 %v4946
      %v5360 = vunpack.c.l.b16 %v4947
      %v5361 = vunpack.c.h.b16 %v4947
      %v5362 = vunpack.c.l.b16 %v4948
      %v5363 = vunpack.c.l.b16 %v4949
      %v5364 = vunpack.c.h.b16 %v4949
      %v5365 = vunpack.c.l.b16 %v4950
      %v5366 = vunpack.c.h.b16 %v4950
      %v5367 = vunpack.c.l.b16 %v4951
      %v5368 = vunpack.c.l.b16 %v4952
      %v5369 = vunpack.c.h.b16 %v4952
      %v5370 = vunpack.c.l.b16 %v4953
      %v5371 = vunpack.c.h.b16 %v4953
      %v5372 = vunpack.c.l.b16 %v4954
      %v5373 = vunpack.c.l.b16 %v4955
      %v5374 = vunpack.c.h.b16 %v4955
      %v5375 = vunpack.c.l.b16 %v4956
      %v5376 = vunpack.c.h.b16 %v4956
      %v5377 = vunpack.c.l.b16 %v4957
      %v5378 = vunpack.c.l.b16 %v4958
      %v5379 = vunpack.c.h.b16 %v4958
      %v5380 = vunpack.c.l.b16 %v4959
      %v5381 = vunpack.c.h.b16 %v4959
      %v5382 = vunpack.c.l.b16 %v4960
      %v5383 = vunpack.c.l.b16 %v4961
      %v5384 = vunpack.c.h.b16 %v4961
      %v5385 = vunpack.c.l.b16 %v4962
      %v5386 = vunpack.c.h.b16 %v4962
      %v5387 = vunpack.c.l.b16 %v4963
      %v5388 = vunpack.c.l.b16 %v4964
      %v5389 = vunpack.c.h.b16 %v4964
      %v5390 = vunpack.c.l.b16 %v4965
      %v5391 = vunpack.c.h.b16 %v4965
      %v5392 = vunpack.c.l.b16 %v4966
      %v5393 = vunpack.c.l.b16 %v4967
      %v5394 = vunpack.c.h.b16 %v4967
      %v5395 = vunpack.c.l.b16 %v4968
      %v5396 = vunpack.c.h.b16 %v4968
      %v5397 = vunpack.c.l.b16 %v4969
      %v5398 = vunpack.c.l.b16 %v4970
      %v5399 = vunpack.c.h.b16 %v4970
      %v5400 = vunpack.c.l.b16 %v4971
      %v5401 = vunpack.c.h.b16 %v4971
      %v5402 = vunpack.c.l.b16 %v4972
      %v5403 = vunpack.c.l.b16 %v4973
      %v5404 = vunpack.c.h.b16 %v4973
      %v5405 = vunpack.c.l.b16 %v4974
      %v5406 = vunpack.c.h.b16 %v4974
      %v5407 = vunpack.c.l.b16 %v4975
      %v5408 = vunpack.c.l.b16 %v4976
      %v5409 = vunpack.c.h.b16 %v4976
      %v5410 = vunpack.c.l.b16 %v4977
      %v5411 = vunpack.c.h.b16 %v4977
      %v5412 = vunpack.c.l.b16 %v4978
      %v5413 = vunpack.c.l.b16 %v4979
      %v5414 = vunpack.c.h.b16 %v4979
      %v5415 = vunpack.c.l.b16 %v4980
      %v5416 = vunpack.c.h.b16 %v4980
      %v5417 = vunpack.c.l.b16 %v4981
      %v5418 = vunpack.c.l.b16 %v4982
      %v5419 = vunpack.c.h.b16 %v4982
      %v5420 = vunpack.c.l.b16 %v4983
      %v5421 = vunpack.c.h.b16 %v4983
      %v5422 = vunpack.c.l.b16 %v4984
      %v5423 = vunpack.c.l.b16 %v4985
      %v5424 = vunpack.c.h.b16 %v4985
      %v5425 = vunpack.c.l.b16 %v4986
      %v5426 = vunpack.c.h.b16 %v4986
      %v5427 = vunpack.c.l.b16 %v4987
      %v5428 = vunpack.c.l.b16 %v4988
      %v5429 = vunpack.c.h.b16 %v4988
      %v5430 = vunpack.c.l.b16 %v4989
      %v5431 = vunpack.c.h.b16 %v4989
      %v5432 = vunpack.c.l.b16 %v4990
      %v5433 = vunpack.c.l.b16 %v4991
      %v5434 = vunpack.c.h.b16 %v4991
      %v5435 = vunpack.c.l.b16 %v4992
      %v5436 = vunpack.c.h.b16 %v4992
      %v5437 = vunpack.c.l.b16 %v4993
      %v5438 = vunpack.c.l.b16 %v4994
      %v5439 = vunpack.c.h.b16 %v4994
      %v5440 = vunpack.c.l.b16 %v4995
      %v5441 = vunpack.c.h.b16 %v4995
      %v5442 = vunpack.c.l.b16 %v4996
      %v5443 = vunpack.c.l.b16 %v4997
      %v5444 = vunpack.c.h.b16 %v4997
      %v5445 = vunpack.c.l.b16 %v4998
      %v5446 = vunpack.c.h.b16 %v4998
      %v5447 = vunpack.c.l.b16 %v4999
      %v5448 = vunpack.c.l.b16 %v5000
      %v5449 = vunpack.c.h.b16 %v5000
      %v5450 = vunpack.c.l.b16 %v5001
      %v5451 = vunpack.c.h.b16 %v5001
      %v5452 = vunpack.c.l.b16 %v5002
      %v5453 = vunpack.c.l.b16 %v5003
      %v5454 = vunpack.c.h.b16 %v5003
      %v5455 = vunpack.c.l.b16 %v5004
      %v5456 = vunpack.c.h.b16 %v5004
      %v5457 = vunpack.c.l.b16 %v5005
      %v5458 = vunpack.c.l.b16 %v5006
      %v5459 = vunpack.c.h.b16 %v5006
      %v5460 = vunpack.c.l.b16 %v5007
      %v5461 = vunpack.c.h.b16 %v5007
      %v5462 = vunpack.c.l.b16 %v5008
      %v5463 = vunpack.c.l.b16 %v5009
      %v5464 = vunpack.c.h.b16 %v5009
      %v5465 = vunpack.c.l.b16 %v5010
      %v5466 = vunpack.c.h.b16 %v5010
      %v5467 = vunpack.c.l.b16 %v5011
      %v5468 = vunpack.c.l.b16 %v5012
      %v5469 = vunpack.c.h.b16 %v5012
      %v5470 = vunpack.c.l.b16 %v5013
      %v5471 = vunpack.c.h.b16 %v5013
      %v5472 = vunpack.c.l.b16 %v5014
      %v5473 = vunpack.c.l.b16 %v5015
      %v5474 = vunpack.c.h.b16 %v5015
      %v5475 = vunpack.c.l.b16 %v5016
      %v5476 = vunpack.c.h.b16 %v5016
      %v5477 = vunpack.c.l.b16 %v5017
      %v5478 = vunpack.c.l.b16 %v5018
      %v5479 = vunpack.c.h.b16 %v5018
      %v5480 = vunpack.c.l.b16 %v5019
      %v5481 = vunpack.c.h.b16 %v5019
      %v5482 = vunpack.c.l.b16 %v5020
      %v5483 = vunpack.c.l.b16 %v5021
      %v5484 = vunpack.c.h.b16 %v5021
      %v5485 = vunpack.c.l.b16 %v5022
      %v5486 = vunpack.c.h.b16 %v5022
      %v5487 = vunpack.c.l.b16 %v5023
      %v5488 = vunpack.c.l.b16 %v5024
      %v5489 = vunpack.c.h.b16 %v5024
      %v5490 = vunpack.c.l.b16 %v5025
      %v5491 = vunpack.c.h.b16 %v5025
      %v5492 = vunpack.c.l.b16 %v5026
      %v5493 = vunpack.c.l.b16 %v5027
      %v5494 = vunpack.c.h.b16 %v5027
      %v5495 = vunpack.c.l.b16 %v5028
      %v5496 = vunpack.c.h.b16 %v5028
      %v5497 = vunpack.c.l.b16 %v5029
      %v5498 = vunpack.c.l.b16 %v5030
      %v5499 = vunpack.c.h.b16 %v5030
      %v5500 = vunpack.c.l.b16 %v5031
      %v5501 = vunpack.c.h.b16 %v5031
      %v5502 = vunpack.c.l.b16 %v5032
      %v5503 = vunpack.c.l.b16 %v5033
      %v5504 = vunpack.c.h.b16 %v5033
      %v5505 = vunpack.c.l.b16 %v5034
      %v5506 = vunpack.c.h.b16 %v5034
      %v5507 = vunpack.c.l.b16 %v5035
      %v5508 = vunpack.c.l.b16 %v5036
      %v5509 = vunpack.c.h.b16 %v5036
      %v5510 = vunpack.c.l.b16 %v5037
      %v5511 = vunpack.c.h.b16 %v5037
      %v5512 = vunpack.c.l.b16 %v5038
      %v5513 = vunpack.c.l.b16 %v5039
      %v5514 = vunpack.c.h.b16 %v5039
      %v5515 = vunpack.c.l.b16 %v5040
      %v5516 = vunpack.c.h.b16 %v5040
      %v5517 = vunpack.c.l.b16 %v5041
      %v5518 = vunpack.c.l.b16 %v5042
      %v5519 = vunpack.c.h.b16 %v5042
      %v5520 = vunpack.c.l.b16 %v5043
      %v5521 = vunpack.c.h.b16 %v5043
      %v5522 = vunpack.c.l.b16 %v5044
      %v5523 = vunpack.c.l.b16 %v5045
      %v5524 = vunpack.c.h.b16 %v5045
      %v5525 = vunpack.c.l.b16 %v5046
      %v5526 = vunpack.c.h.b16 %v5046
      %v5527 = vunpack.c.l.b16 %v5047
      %v5528 = vunpack.c.l.b16 %v5048
      %v5529 = vunpack.c.h.b16 %v5048
      %v5530 = vunpack.c.l.b16 %v5049
      %v5531 = vunpack.c.h.b16 %v5049
      %v5532 = vunpack.c.l.b16 %v5050
      %v5533 = vunpack.c.l.b16 %v5051
      %v5534 = vunpack.c.h.b16 %v5051
      %v5535 = vunpack.c.l.b16 %v5052
      %v5536 = vunpack.c.h.b16 %v5052
      %v5537 = vunpack.c.l.b16 %v5053
      %v5538 = vunpack.c.l.b16 %v5054
      %v5539 = vunpack.c.h.b16 %v5054
      %v5540 = vunpack.c.l.b16 %v5055
      %v5541 = vunpack.c.h.b16 %v5055
      %v5542 = vunpack.c.l.b16 %v5056
      %v5543 = vunpack.c.l.b16 %v5057
      %v5544 = vunpack.c.h.b16 %v5057
      %v5545 = vunpack.c.l.b16 %v5058
      %v5546 = vunpack.c.h.b16 %v5058
      %v5547 = vunpack.c.l.b16 %v5059
      %v5548 = vunpack.c.l.b16 %v5060
      %v5549 = vunpack.c.h.b16 %v5060
      %v5550 = vunpack.c.l.b16 %v5061
      %v5551 = vunpack.c.h.b16 %v5061
      %v5552 = vunpack.c.l.b16 %v5062
      %v5553 = vunpack.c.l.b16 %v5063
      %v5554 = vunpack.c.h.b16 %v5063
      %v5555 = vunpack.c.l.b16 %v5064
      %v5556 = vunpack.c.h.b16 %v5064
      %v5557 = vunpack.c.l.b16 %v5065
      %v5558 = vunpack.c.l.b16 %v5066
      %v5559 = vunpack.c.h.b16 %v5066
      %v5560 = vunpack.c.l.b16 %v5067
      %v5561 = vunpack.c.h.b16 %v5067
      %v5562 = vunpack.c.l.b16 %v5068
      %v5563 = vunpack.c.l.b16 %v5069
      %v5564 = vunpack.c.h.b16 %v5069
      %v5565 = vunpack.c.l.b16 %v5070
      %v5566 = vunpack.c.h.b16 %v5070
      %v5567 = vunpack.c.l.b16 %v5071
      %v5568 = vunpack.c.l.b16 %v5072
      %v5569 = vunpack.c.h.b16 %v5072
      %v5570 = vunpack.c.l.b16 %v5073
      %v5571 = vunpack.c.h.b16 %v5073
      %v5572 = vunpack.c.l.b16 %v5074
      %v5573 = vunpack.c.l.b16 %v5075
      %v5574 = vunpack.c.h.b16 %v5075
      %v5575 = vunpack.c.l.b16 %v5076
      %v5576 = vunpack.c.h.b16 %v5076
      %v5577 = vunpack.c.l.b16 %v5077
      %v5578 = vunpack.c.l.b16 %v5078
      %v5579 = vunpack.c.h.b16 %v5078
      %v5580 = vunpack.c.l.b16 %v5079
      %v5581 = vunpack.c.h.b16 %v5079
      %v5582 = vunpack.c.l.b16 %v5080
      %v5583 = vunpack.c.l.b16 %v5081
      %v5584 = vunpack.c.h.b16 %v5081
      %v5585 = vunpack.c.l.b16 %v5082
      %v5586 = vunpack.c.h.b16 %v5082
      %v5587 = vunpack.c.l.b16 %v5083
      %v5588 = vunpack.c.l.b16 %v5084
      %v5589 = vunpack.c.h.b16 %v5084
      %v5590 = vunpack.c.l.b16 %v5085
      %v5591 = vunpack.c.h.b16 %v5085
      %v5592 = vunpack.c.l.b16 %v5086
      %v5593 = vunpack.c.l.b16 %v5087
      %v5594 = vunpack.c.h.b16 %v5087
      %v5595 = vunpack.c.l.b16 %v5088
      %v5596 = vunpack.c.h.b16 %v5088
      %v5597 = vunpack.c.l.b16 %v5089
      %v5598 = vunpack.c.l.b16 %v5090
      %v5599 = vunpack.c.h.b16 %v5090
      %v5600 = vunpack.c.l.b16 %v5091
      %v5601 = vunpack.c.h.b16 %v5091
      %v5602 = vunpack.c.l.b16 %v5092
      %v5603 = vunpack.c.l.b16 %v5093
      %v5604 = vunpack.c.h.b16 %v5093
      %v5605 = vunpack.c.l.b16 %v5094
      %v5606 = vunpack.c.h.b16 %v5094
      %v5607 = vunpack.c.l.b16 %v5095
      %v5608 = vpack.c.b16 %v5293, %v5288
      %v5609 = vpack.c.b16 %v5294, %v5289
      %v5610 = vpack.c.b16 %v5295, %v5290
      %v5611 = vpack.c.b16 %v5296, %v5291
      %v5612 = vpack.c.b16 %v5297, %v5292
      %v5613 = vpack.c.b16 %v5303, %v5298
      %v5614 = vpack.c.b16 %v5304, %v5299
      %v5615 = vpack.c.b16 %v5305, %v5300
      %v5616 = vpack.c.b16 %v5306, %v5301
      %v5617 = vpack.c.b16 %v5307, %v5302
      %v5618 = vpack.c.b16 %v5313, %v5308
      %v5619 = vpack.c.b16 %v5314, %v5309
      %v5620 = vpack.c.b16 %v5315, %v5310
      %v5621 = vpack.c.b16 %v5316, %v5311
      %v5622 = vpack.c.b16 %v5317, %v5312
      %v5623 = vpack.c.b16 %v5323, %v5318
      %v5624 = vpack.c.b16 %v5324, %v5319
      %v5625 = vpack.c.b16 %v5325, %v5320
      %v5626 = vpack.c.b16 %v5326, %v5321
      %v5627 = vpack.c.b16 %v5327, %v5322
      %v5628 = vpack.c.b16 %v5333, %v5328
      %v5629 = vpack.c.b16 %v5334, %v5329
      %v5630 = vpack.c.b16 %v5335, %v5330
      %v5631 = vpack.c.b16 %v5336, %v5331
      %v5632 = vpack.c.b16 %v5337, %v5332
      %v5633 = vpack.c.b16 %v5343, %v5338
      %v5634 = vpack.c.b16 %v5344, %v5339
      %v5635 = vpack.c.b16 %v5345, %v5340
      %v5636 = vpack.c.b16 %v5346, %v5341
      %v5637 = vpack.c.b16 %v5347, %v5342
      %v5638 = vpack.c.b16 %v5353, %v5348
      %v5639 = vpack.c.b16 %v5354, %v5349
      %v5640 = vpack.c.b16 %v5355, %v5350
      %v5641 = vpack.c.b16 %v5356, %v5351
      %v5642 = vpack.c.b16 %v5357, %v5352
      %v5643 = vpack.c.b16 %v5363, %v5358
      %v5644 = vpack.c.b16 %v5364, %v5359
      %v5645 = vpack.c.b16 %v5365, %v5360
      %v5646 = vpack.c.b16 %v5366, %v5361
      %v5647 = vpack.c.b16 %v5367, %v5362
      %v5648 = vpack.c.b16 %v5373, %v5368
      %v5649 = vpack.c.b16 %v5374, %v5369
      %v5650 = vpack.c.b16 %v5375, %v5370
      %v5651 = vpack.c.b16 %v5376, %v5371
      %v5652 = vpack.c.b16 %v5377, %v5372
      %v5653 = vpack.c.b16 %v5383, %v5378
      %v5654 = vpack.c.b16 %v5384, %v5379
      %v5655 = vpack.c.b16 %v5385, %v5380
      %v5656 = vpack.c.b16 %v5386, %v5381
      %v5657 = vpack.c.b16 %v5387, %v5382
      %v5658 = vpack.c.b16 %v5393, %v5388
      %v5659 = vpack.c.b16 %v5394, %v5389
      %v5660 = vpack.c.b16 %v5395, %v5390
      %v5661 = vpack.c.b16 %v5396, %v5391
      %v5662 = vpack.c.b16 %v5397, %v5392
      %v5663 = vpack.c.b16 %v5403, %v5398
      %v5664 = vpack.c.b16 %v5404, %v5399
      %v5665 = vpack.c.b16 %v5405, %v5400
      %v5666 = vpack.c.b16 %v5406, %v5401
      %v5667 = vpack.c.b16 %v5407, %v5402
      %v5668 = vpack.c.b16 %v5413, %v5408
      %v5669 = vpack.c.b16 %v5414, %v5409
      %v5670 = vpack.c.b16 %v5415, %v5410
      %v5671 = vpack.c.b16 %v5416, %v5411
      %v5672 = vpack.c.b16 %v5417, %v5412
      %v5673 = vpack.c.b16 %v5423, %v5418
      %v5674 = vpack.c.b16 %v5424, %v5419
      %v5675 = vpack.c.b16 %v5425, %v5420
      %v5676 = vpack.c.b16 %v5426, %v5421
      %v5677 = vpack.c.b16 %v5427, %v5422
      %v5678 = vpack.c.b16 %v5433, %v5428
      %v5679 = vpack.c.b16 %v5434, %v5429
      %v5680 = vpack.c.b16 %v5435, %v5430
      %v5681 = vpack.c.b16 %v5436, %v5431
      %v5682 = vpack.c.b16 %v5437, %v5432
      %v5683 = vpack.c.b16 %v5443, %v5438
      %v5684 = vpack.c.b16 %v5444, %v5439
      %v5685 = vpack.c.b16 %v5445, %v5440
      %v5686 = vpack.c.b16 %v5446, %v5441
      %v5687 = vpack.c.b16 %v5447, %v5442
      %v5688 = vpack.c.b16 %v5453, %v5448
      %v5689 = vpack.c.b16 %v5454, %v5449
      %v5690 = vpack.c.b16 %v5455, %v5450
      %v5691 = vpack.c.b16 %v5456, %v5451
      %v5692 = vpack.c.b16 %v5457, %v5452
      %v5693 = vpack.c.b16 %v5463, %v5458
      %v5694 = vpack.c.b16 %v5464, %v5459
      %v5695 = vpack.c.b16 %v5465, %v5460
      %v5696 = vpack.c.b16 %v5466, %v5461
      %v5697 = vpack.c.b16 %v5467, %v5462
      %v5698 = vpack.c.b16 %v5473, %v5468
      %v5699 = vpack.c.b16 %v5474, %v5469
      %v5700 = vpack.c.b16 %v5475, %v5470
      %v5701 = vpack.c.b16 %v5476, %v5471
      %v5702 = vpack.c.b16 %v5477, %v5472
      %v5703 = vpack.c.b16 %v5483, %v5478
      %v5704 = vpack.c.b16 %v5484, %v5479
      %v5705 = vpack.c.b16 %v5485, %v5480
      %v5706 = vpack.c.b16 %v5486, %v5481
      %v5707 = vpack.c.b16 %v5487, %v5482
      %v5708 = vpack.c.b16 %v5493, %v5488
      %v5709 = vpack.c.b16 %v5494, %v5489
      %v5710 = vpack.c.b16 %v5495, %v5490
      %v5711 = vpack.c.b16 %v5496, %v5491
      %v5712 = vpack.c.b16 %v5497, %v5492
      %v5713 = vpack.c.b16 %v5503, %v5498
      %v5714 = vpack.c.b16 %v5504, %v5499
      %v5715 = vpack.c.b16 %v5505, %v5500
      %v5716 = vpack.c.b16 %v5506, %v5501
      %v5717 = vpack.c.b16 %v5507, %v5502
      %v5718 = vpack.c.b16 %v5513, %v5508
      %v5719 = vpack.c.b16 %v5514, %v5509
      %v5720 = vpack.c.b16 %v5515, %v5510
      %v5721 = vpack.c.b16 %v5516, %v5511
      %v5722 = vpack.c.b16 %v5517, %v5512
      %v5723 = vpack.c.b16 %v5523, %v5518
      %v5724 = vpack.c.b16 %v5524, %v5519
      %v5725 = vpack.c.b16 %v5525, %v5520
      %v5726 = vpack.c.b16 %v5526, %v5521
      %v5727 = vpack.c.b16 %v5527, %v5522
      %v5728 = vpack.c.b16 %v5533, %v5528
      %v5729 = vpack.c.b16 %v5534, %v5529
      %v5730 = vpack.c.b16 %v5535, %v5530
      %v5731 = vpack.c.b16 %v5536, %v5531
      %v5732 = vpack.c.b16 %v5537, %v5532
      %v5733 = vpack.c.b16 %v5543, %v5538
      %v5734 = vpack.c.b16 %v5544, %v5539
      %v5735 = vpack.c.b16 %v5545, %v5540
      %v5736 = vpack.c.b16 %v5546, %v5541
      %v5737 = vpack.c.b16 %v5547, %v5542
      %v5738 = vpack.c.b16 %v5553, %v5548
      %v5739 = vpack.c.b16 %v5554, %v5549
      %v5740 = vpack.c.b16 %v5555, %v5550
      %v5741 = vpack.c.b16 %v5556, %v5551
      %v5742 = vpack.c.b16 %v5557, %v5552
      %v5743 = vpack.c.b16 %v5563, %v5558
      %v5744 = vpack.c.b16 %v5564, %v5559
      %v5745 = vpack.c.b16 %v5565, %v5560
      %v5746 = vpack.c.b16 %v5566, %v5561
      %v5747 = vpack.c.b16 %v5567, %v5562
      %v5748 = vpack.c.b16 %v5573, %v5568
      %v5749 = vpack.c.b16 %v5574, %v5569
      %v5750 = vpack.c.b16 %v5575, %v5570
      %v5751 = vpack.c.b16 %v5576, %v5571
      %v5752 = vpack.c.b16 %v5577, %v5572
      %v5753 = vpack.c.b16 %v5583, %v5578
      %v5754 = vpack.c.b16 %v5584, %v5579
      %v5755 = vpack.c.b16 %v5585, %v5580
      %v5756 = vpack.c.b16 %v5586, %v5581
      %v5757 = vpack.c.b16 %v5587, %v5582
      %v5758 = vpack.c.b16 %v5593, %v5588
      %v5759 = vpack.c.b16 %v5594, %v5589
      %v5760 = vpack.c.b16 %v5595, %v5590
      %v5761 = vpack.c.b16 %v5596, %v5591
      %v5762 = vpack.c.b16 %v5597, %v5592
      %v5763 = vpack.c.b16 %v5603, %v5598
      %v5764 = vpack.c.b16 %v5604, %v5599
      %v5765 = vpack.c.b16 %v5605, %v5600
      %v5766 = vpack.c.b16 %v5606, %v5601
      %v5767 = vpack.c.b16 %v5607, %v5602
      %5928 = vmatpush.bf16.msra.mxu0 %v5643
      %5929 = vmatpush.bf16.msra.mxu0 %v5638
      %5930 = vmatpush.bf16.msra.mxu0 %v5633
      %5931 = vmatpush.bf16.msra.mxu0 %v5628
      %5932 = vmatpush.bf16.msra.mxu0 %v5623
      %5933 = vmatpush.bf16.msra.mxu0 %v5618
      %5934 = vmatpush.bf16.msra.mxu0 %v5613
      %5935 = vmatpush.bf16.msra.mxu0 %v5608
      %5936 = vmatmul.bf16.gmra.mxu0 %v4900
      %v5937 = vpop.f32.mrf.mxu0
      %v5938 = vadd.f32 0.0, %v5937
      %v5939 = vpop.f32.mrf.mxu0
      %v5940 = vadd.f32 0.0, %v5939
      %5941 = vdwg.mxu0
      %5942 = vmatpush.bf16.msra.mxu0 %v5683
      %5943 = vmatpush.bf16.msra.mxu0 %v5678
      %5944 = vmatpush.bf16.msra.mxu0 %v5673
      %5945 = vmatpush.bf16.msra.mxu0 %v5668
      %5946 = vmatpush.bf16.msra.mxu0 %v5663
      %5947 = vmatpush.bf16.msra.mxu0 %v5658
      %5948 = vmatpush.bf16.msra.mxu0 %v5653
      %5949 = vmatpush.bf16.msra.mxu0 %v5648
      %5950 = vmatmul.bf16.gmra.mxu0 %v4901
      %v5951 = vpop.f32.mrf.mxu0
      %v5952 = vadd.f32 %v5938, %v5951
      %v5953 = vpop.f32.mrf.mxu0
      %v5954 = vadd.f32 %v5940, %v5953
      %5955 = vdwg.mxu0
      %5956 = vmatpush.bf16.msra.mxu0 %v5723
      %5957 = vmatpush.bf16.msra.mxu0 %v5718
      %5958 = vmatpush.bf16.msra.mxu0 %v5713
      %5959 = vmatpush.bf16.msra.mxu0 %v5708
      %5960 = vmatpush.bf16.msra.mxu0 %v5703
      %5961 = vmatpush.bf16.msra.mxu0 %v5698
      %5962 = vmatpush.bf16.msra.mxu0 %v5693
      %5963 = vmatpush.bf16.msra.mxu0 %v5688
      %5964 = vmatmul.bf16.gmra.mxu0 %v4902
      %v5965 = vpop.f32.mrf.mxu0
      %v5966 = vadd.f32 %v5952, %v5965
      %v5967 = vpop.f32.mrf.mxu0
      %v5968 = vadd.f32 %v5954, %v5967
      %5969 = vdwg.mxu0
      %5970 = vmatpush.bf16.msra.mxu0 %v5763
      %5971 = vmatpush.bf16.msra.mxu0 %v5758
      %5972 = vmatpush.bf16.msra.mxu0 %v5753
      %5973 = vmatpush.bf16.msra.mxu0 %v5748
      %5974 = vmatpush.bf16.msra.mxu0 %v5743
      %5975 = vmatpush.bf16.msra.mxu0 %v5738
      %5976 = vmatpush.bf16.msra.mxu0 %v5733
      %5977 = vmatpush.bf16.msra.mxu0 %v5728
      %5978 = vmatmul.bf16.gmra.mxu0 %v4903
      %v5979 = vpop.f32.mrf.mxu0
      %v5980 = vadd.f32 %v5966, %v5979
      %v5981 = vpop.f32.mrf.mxu0
      %v5982 = vadd.f32 %v5968, %v5981
      %5983 = vdwg.mxu0
      %5984 = vmatpush.bf16.msra.mxu0 %v5644
      %5985 = vmatpush.bf16.msra.mxu0 %v5639
      %5986 = vmatpush.bf16.msra.mxu0 %v5634
      %5987 = vmatpush.bf16.msra.mxu0 %v5629
      %5988 = vmatpush.bf16.msra.mxu0 %v5624
      %5989 = vmatpush.bf16.msra.mxu0 %v5619
      %5990 = vmatpush.bf16.msra.mxu0 %v5614
      %5991 = vmatpush.bf16.msra.mxu0 %v5609
      %5992 = vmatmul.bf16.gmra.mxu0 %v4900
      %v5993 = vpop.f32.mrf.mxu0
      %v5994 = vadd.f32 0.0, %v5993
      %v5995 = vpop.f32.mrf.mxu0
      %v5996 = vadd.f32 0.0, %v5995
      %5997 = vdwg.mxu0
      %5998 = vmatpush.bf16.msra.mxu0 %v5684
      %5999 = vmatpush.bf16.msra.mxu0 %v5679
      %6000 = vmatpush.bf16.msra.mxu0 %v5674
      %6001 = vmatpush.bf16.msra.mxu0 %v5669
      %6002 = vmatpush.bf16.msra.mxu0 %v5664
      %6003 = vmatpush.bf16.msra.mxu0 %v5659
      %6004 = vmatpush.bf16.msra.mxu0 %v5654
      %6005 = vmatpush.bf16.msra.mxu0 %v5649
      %6006 = vmatmul.bf16.gmra.mxu0 %v4901
      %v6007 = vpop.f32.mrf.mxu0
      %v6008 = vadd.f32 %v5994, %v6007
      %v6009 = vpop.f32.mrf.mxu0
      %v6010 = vadd.f32 %v5996, %v6009
      %6011 = vdwg.mxu0
      %6012 = vmatpush.bf16.msra.mxu0 %v5724
      %6013 = vmatpush.bf16.msra.mxu0 %v5719
      %6014 = vmatpush.bf16.msra.mxu0 %v5714
      %6015 = vmatpush.bf16.msra.mxu0 %v5709
      %6016 = vmatpush.bf16.msra.mxu0 %v5704
      %6017 = vmatpush.bf16.msra.mxu0 %v5699
      %6018 = vmatpush.bf16.msra.mxu0 %v5694
      %6019 = vmatpush.bf16.msra.mxu0 %v5689
      %6020 = vmatmul.bf16.gmra.mxu0 %v4902
      %v6021 = vpop.f32.mrf.mxu0
      %v6022 = vadd.f32 %v6008, %v6021
      %v6023 = vpop.f32.mrf.mxu0
      %v6024 = vadd.f32 %v6010, %v6023
      %6025 = vdwg.mxu0
      %6026 = vmatpush.bf16.msra.mxu0 %v5764
      %6027 = vmatpush.bf16.msra.mxu0 %v5759
      %6028 = vmatpush.bf16.msra.mxu0 %v5754
      %6029 = vmatpush.bf16.msra.mxu0 %v5749
      %6030 = vmatpush.bf16.msra.mxu0 %v5744
      %6031 = vmatpush.bf16.msra.mxu0 %v5739
      %6032 = vmatpush.bf16.msra.mxu0 %v5734
      %6033 = vmatpush.bf16.msra.mxu0 %v5729
      %6034 = vmatmul.bf16.gmra.mxu0 %v4903
      %v6035 = vpop.f32.mrf.mxu0
      %v6036 = vadd.f32 %v6022, %v6035
      %v6037 = vpop.f32.mrf.mxu0
      %v6038 = vadd.f32 %v6024, %v6037
      %6039 = vdwg.mxu0
      %6040 = vmatpush.bf16.msra.mxu0 %v5645
      %6041 = vmatpush.bf16.msra.mxu0 %v5640
      %6042 = vmatpush.bf16.msra.mxu0 %v5635
      %6043 = vmatpush.bf16.msra.mxu0 %v5630
      %6044 = vmatpush.bf16.msra.mxu0 %v5625
      %6045 = vmatpush.bf16.msra.mxu0 %v5620
      %6046 = vmatpush.bf16.msra.mxu0 %v5615
      %6047 = vmatpush.bf16.msra.mxu0 %v5610
      %6048 = vmatmul.bf16.gmra.mxu0 %v4900
      %v6049 = vpop.f32.mrf.mxu0
      %v6050 = vadd.f32 0.0, %v6049
      %v6051 = vpop.f32.mrf.mxu0
      %v6052 = vadd.f32 0.0, %v6051
      %6053 = vdwg.mxu0
      %6054 = vmatpush.bf16.msra.mxu0 %v5685
      %6055 = vmatpush.bf16.msra.mxu0 %v5680
      %6056 = vmatpush.bf16.msra.mxu0 %v5675
      %6057 = vmatpush.bf16.msra.mxu0 %v5670
      %6058 = vmatpush.bf16.msra.mxu0 %v5665
      %6059 = vmatpush.bf16.msra.mxu0 %v5660
      %6060 = vmatpush.bf16.msra.mxu0 %v5655
      %6061 = vmatpush.bf16.msra.mxu0 %v5650
      %6062 = vmatmul.bf16.gmra.mxu0 %v4901
      %v6063 = vpop.f32.mrf.mxu0
      %v6064 = vadd.f32 %v6050, %v6063
      %v6065 = vpop.f32.mrf.mxu0
      %v6066 = vadd.f32 %v6052, %v6065
      %6067 = vdwg.mxu0
      %6068 = vmatpush.bf16.msra.mxu0 %v5725
      %6069 = vmatpush.bf16.msra.mxu0 %v5720
      %6070 = vmatpush.bf16.msra.mxu0 %v5715
      %6071 = vmatpush.bf16.msra.mxu0 %v5710
      %6072 = vmatpush.bf16.msra.mxu0 %v5705
      %6073 = vmatpush.bf16.msra.mxu0 %v5700
      %6074 = vmatpush.bf16.msra.mxu0 %v5695
      %6075 = vmatpush.bf16.msra.mxu0 %v5690
      %6076 = vmatmul.bf16.gmra.mxu0 %v4902
      %v6077 = vpop.f32.mrf.mxu0
      %v6078 = vadd.f32 %v6064, %v6077
      %v6079 = vpop.f32.mrf.mxu0
      %v6080 = vadd.f32 %v6066, %v6079
      %6081 = vdwg.mxu0
      %6082 = vmatpush.bf16.msra.mxu0 %v5765
      %6083 = vmatpush.bf16.msra.mxu0 %v5760
      %6084 = vmatpush.bf16.msra.mxu0 %v5755
      %6085 = vmatpush.bf16.msra.mxu0 %v5750
      %6086 = vmatpush.bf16.msra.mxu0 %v5745
      %6087 = vmatpush.bf16.msra.mxu0 %v5740
      %6088 = vmatpush.bf16.msra.mxu0 %v5735
      %6089 = vmatpush.bf16.msra.mxu0 %v5730
      %6090 = vmatmul.bf16.gmra.mxu0 %v4903
      %v6091 = vpop.f32.mrf.mxu0
      %v6092 = vadd.f32 %v6078, %v6091
      %v6093 = vpop.f32.mrf.mxu0
      %v6094 = vadd.f32 %v6080, %v6093
      %6095 = vdwg.mxu0
      %6096 = vmatpush.bf16.msra.mxu0 %v5646
      %6097 = vmatpush.bf16.msra.mxu0 %v5641
      %6098 = vmatpush.bf16.msra.mxu0 %v5636
      %6099 = vmatpush.bf16.msra.mxu0 %v5631
      %6100 = vmatpush.bf16.msra.mxu0 %v5626
      %6101 = vmatpush.bf16.msra.mxu0 %v5621
      %6102 = vmatpush.bf16.msra.mxu0 %v5616
      %6103 = vmatpush.bf16.msra.mxu0 %v5611
      %6104 = vmatmul.bf16.gmra.mxu0 %v4900
      %v6105 = vpop.f32.mrf.mxu0
      %v6106 = vadd.f32 0.0, %v6105
      %v6107 = vpop.f32.mrf.mxu0
      %v6108 = vadd.f32 0.0, %v6107
      %6109 = vdwg.mxu0
      %6110 = vmatpush.bf16.msra.mxu0 %v5686
      %6111 = vmatpush.bf16.msra.mxu0 %v5681
      %6112 = vmatpush.bf16.msra.mxu0 %v5676
      %6113 = vmatpush.bf16.msra.mxu0 %v5671
      %6114 = vmatpush.bf16.msra.mxu0 %v5666
      %6115 = vmatpush.bf16.msra.mxu0 %v5661
      %6116 = vmatpush.bf16.msra.mxu0 %v5656
      %6117 = vmatpush.bf16.msra.mxu0 %v5651
      %6118 = vmatmul.bf16.gmra.mxu0 %v4901
      %v6119 = vpop.f32.mrf.mxu0
      %v6120 = vadd.f32 %v6106, %v6119
      %v6121 = vpop.f32.mrf.mxu0
      %v6122 = vadd.f32 %v6108, %v6121
      %6123 = vdwg.mxu0
      %6124 = vmatpush.bf16.msra.mxu0 %v5726
      %6125 = vmatpush.bf16.msra.mxu0 %v5721
      %6126 = vmatpush.bf16.msra.mxu0 %v5716
      %6127 = vmatpush.bf16.msra.mxu0 %v5711
      %6128 = vmatpush.bf16.msra.mxu0 %v5706
      %6129 = vmatpush.bf16.msra.mxu0 %v5701
      %6130 = vmatpush.bf16.msra.mxu0 %v5696
      %6131 = vmatpush.bf16.msra.mxu0 %v5691
      %6132 = vmatmul.bf16.gmra.mxu0 %v4902
      %v6133 = vpop.f32.mrf.mxu0
      %v6134 = vadd.f32 %v6120, %v6133
      %v6135 = vpop.f32.mrf.mxu0
      %v6136 = vadd.f32 %v6122, %v6135
      %6137 = vdwg.mxu0
      %6138 = vmatpush.bf16.msra.mxu0 %v5766
      %6139 = vmatpush.bf16.msra.mxu0 %v5761
      %6140 = vmatpush.bf16.msra.mxu0 %v5756
      %6141 = vmatpush.bf16.msra.mxu0 %v5751
      %6142 = vmatpush.bf16.msra.mxu0 %v5746
      %6143 = vmatpush.bf16.msra.mxu0 %v5741
      %6144 = vmatpush.bf16.msra.mxu0 %v5736
      %6145 = vmatpush.bf16.msra.mxu0 %v5731
      %6146 = vmatmul.bf16.gmra.mxu0 %v4903
      %v6147 = vpop.f32.mrf.mxu0
      %v6148 = vadd.f32 %v6134, %v6147
      %v6149 = vpop.f32.mrf.mxu0
      %v6150 = vadd.f32 %v6136, %v6149
      %6151 = vdwg.mxu0
      %6152 = vmatpush.bf16.msra.mxu0 %v5647
      %6153 = vmatpush.bf16.msra.mxu0 %v5642
      %6154 = vmatpush.bf16.msra.mxu0 %v5637
      %6155 = vmatpush.bf16.msra.mxu0 %v5632
      %6156 = vmatpush.bf16.msra.mxu0 %v5627
      %6157 = vmatpush.bf16.msra.mxu0 %v5622
      %6158 = vmatpush.bf16.msra.mxu0 %v5617
      %6159 = vmatpush.bf16.msra.mxu0 %v5612
      %6160 = vmatmul.bf16.gmra.mxu0 %v4900
      %v6161 = vpop.f32.mrf.mxu0
      %v6162 = vadd.f32 0.0, %v6161
      %v6163 = vpop.f32.mrf.mxu0
      %v6164 = vadd.f32 0.0, %v6163
      %6165 = vdwg.mxu0
      %6166 = vmatpush.bf16.msra.mxu0 %v5687
      %6167 = vmatpush.bf16.msra.mxu0 %v5682
      %6168 = vmatpush.bf16.msra.mxu0 %v5677
      %6169 = vmatpush.bf16.msra.mxu0 %v5672
      %6170 = vmatpush.bf16.msra.mxu0 %v5667
      %6171 = vmatpush.bf16.msra.mxu0 %v5662
      %6172 = vmatpush.bf16.msra.mxu0 %v5657
      %6173 = vmatpush.bf16.msra.mxu0 %v5652
      %6174 = vmatmul.bf16.gmra.mxu0 %v4901
      %v6175 = vpop.f32.mrf.mxu0
      %v6176 = vadd.f32 %v6162, %v6175
      %v6177 = vpop.f32.mrf.mxu0
      %v6178 = vadd.f32 %v6164, %v6177
      %6179 = vdwg.mxu0
      %6180 = vmatpush.bf16.msra.mxu0 %v5727
      %6181 = vmatpush.bf16.msra.mxu0 %v5722
      %6182 = vmatpush.bf16.msra.mxu0 %v5717
      %6183 = vmatpush.bf16.msra.mxu0 %v5712
      %6184 = vmatpush.bf16.msra.mxu0 %v5707
      %6185 = vmatpush.bf16.msra.mxu0 %v5702
      %6186 = vmatpush.bf16.msra.mxu0 %v5697
      %6187 = vmatpush.bf16.msra.mxu0 %v5692
      %6188 = vmatmul.bf16.gmra.mxu0 %v4902
      %v6189 = vpop.f32.mrf.mxu0
      %v6190 = vadd.f32 %v6176, %v6189
      %v6191 = vpop.f32.mrf.mxu0
      %v6192 = vadd.f32 %v6178, %v6191
      %6193 = vdwg.mxu0
      %6194 = vmatpush.bf16.msra.mxu0 %v5767
      %6195 = vmatpush.bf16.msra.mxu0 %v5762
      %6196 = vmatpush.bf16.msra.mxu0 %v5757
      %6197 = vmatpush.bf16.msra.mxu0 %v5752
      %6198 = vmatpush.bf16.msra.mxu0 %v5747
      %6199 = vmatpush.bf16.msra.mxu0 %v5742
      %6200 = vmatpush.bf16.msra.mxu0 %v5737
      %6201 = vmatpush.bf16.msra.mxu0 %v5732
      %6202 = vmatmul.bf16.gmra.mxu0 %v4903
      %v6203 = vpop.f32.mrf.mxu0
      %v6204 = vadd.f32 %v6190, %v6203
      %v6205 = vpop.f32.mrf.mxu0
      %v6206 = vadd.f32 %v6192, %v6205
      %6207 = vdwg.mxu0
      %v6208 = vld [vmem:[%s7] sm:$0xff]
      %v6209 = vld [vmem:[%s7 + $0x8] sm:$0xff]
      %v6210 = vld [vmem:[%s7 + $0x10] sm:$0xff]
      %v6211 = vld [vmem:[%s7 + $0x18] sm:$0xff]
      %v6212 = vld [vmem:[%s7 + $0x20] sm:$0x3]
      %s6213 = scalar_lea.vmem %s6, 1280
      %v6214 = vld [vmem:[%s6213] sm:$0xff]
      %v6215 = vld [vmem:[%s6213 + $0x8] sm:$0xff]
      %v6216 = vld [vmem:[%s6213 + $0x10] sm:$0xf]
      %v6217 = vld [vmem:[%s6213 + $0x14] sm:$0xff]
      %v6218 = vld [vmem:[%s6213 + $0x1c] sm:$0xff]
      %v6219 = vld [vmem:[%s6213 + $0x24] sm:$0xf]
      %v6220 = vld [vmem:[%s6213 + $0x28] sm:$0xff]
      %v6221 = vld [vmem:[%s6213 + $0x30] sm:$0xff]
      %v6222 = vld [vmem:[%s6213 + $0x38] sm:$0xf]
      %v6223 = vld [vmem:[%s6213 + $0x3c] sm:$0xff]
      %v6224 = vld [vmem:[%s6213 + $0x44] sm:$0xff]
      %v6225 = vld [vmem:[%s6213 + $0x4c] sm:$0xf]
      %v6226 = vld [vmem:[%s6213 + $0x50] sm:$0xff]
      %v6227 = vld [vmem:[%s6213 + $0x58] sm:$0xff]
      %v6228 = vld [vmem:[%s6213 + $0x60] sm:$0xf]
      %v6229 = vld [vmem:[%s6213 + $0x64] sm:$0xff]
      %v6230 = vld [vmem:[%s6213 + $0x6c] sm:$0xff]
      %v6231 = vld [vmem:[%s6213 + $0x74] sm:$0xf]
      %v6232 = vld [vmem:[%s6213 + $0x78] sm:$0xff]
      %v6233 = vld [vmem:[%s6213 + $0x80] sm:$0xff]
      %v6234 = vld [vmem:[%s6213 + $0x88] sm:$0xf]
      %v6235 = vld [vmem:[%s6213 + $0x8c] sm:$0xff]
      %v6236 = vld [vmem:[%s6213 + $0x94] sm:$0xff]
      %v6237 = vld [vmem:[%s6213 + $0x9c] sm:$0xf]
      %v6238 = vld [vmem:[%s6213 + $0xa0] sm:$0xff]
      %v6239 = vld [vmem:[%s6213 + $0xa8] sm:$0xff]
      %v6240 = vld [vmem:[%s6213 + $0xb0] sm:$0xf]
      %v6241 = vld [vmem:[%s6213 + $0xb4] sm:$0xff]
      %v6242 = vld [vmem:[%s6213 + $0xbc] sm:$0xff]
      %v6243 = vld [vmem:[%s6213 + $0xc4] sm:$0xf]
      %v6244 = vld [vmem:[%s6213 + $0xc8] sm:$0xff]
      %v6245 = vld [vmem:[%s6213 + $0xd0] sm:$0xff]
      %v6246 = vld [vmem:[%s6213 + $0xd8] sm:$0xf]
      %v6247 = vld [vmem:[%s6213 + $0xdc] sm:$0xff]
      %v6248 = vld [vmem:[%s6213 + $0xe4] sm:$0xff]
      %v6249 = vld [vmem:[%s6213 + $0xec] sm:$0xf]
      %v6250 = vld [vmem:[%s6213 + $0xf0] sm:$0xff]
      %v6251 = vld [vmem:[%s6213 + $0xf8] sm:$0xff]
      %v6252 = vld [vmem:[%s6213 + $0x100] sm:$0xf]
      %v6253 = vld [vmem:[%s6213 + $0x104] sm:$0xff]
      %v6254 = vld [vmem:[%s6213 + $0x10c] sm:$0xff]
      %v6255 = vld [vmem:[%s6213 + $0x114] sm:$0xf]
      %v6256 = vld [vmem:[%s6213 + $0x118] sm:$0xff]
      %v6257 = vld [vmem:[%s6213 + $0x120] sm:$0xff]
      %v6258 = vld [vmem:[%s6213 + $0x128] sm:$0xf]
      %v6259 = vld [vmem:[%s6213 + $0x12c] sm:$0xff]
      %v6260 = vld [vmem:[%s6213 + $0x134] sm:$0xff]
      %v6261 = vld [vmem:[%s6213 + $0x13c] sm:$0xf]
      %v6262 = vld [vmem:[%s6213 + $0x140] sm:$0xff]
      %v6263 = vld [vmem:[%s6213 + $0x148] sm:$0xff]
      %v6264 = vld [vmem:[%s6213 + $0x150] sm:$0xf]
      %v6265 = vld [vmem:[%s6213 + $0x154] sm:$0xff]
      %v6266 = vld [vmem:[%s6213 + $0x15c] sm:$0xff]
      %v6267 = vld [vmem:[%s6213 + $0x164] sm:$0xf]
      %v6268 = vld [vmem:[%s6213 + $0x168] sm:$0xff]
      %v6269 = vld [vmem:[%s6213 + $0x170] sm:$0xff]
      %v6270 = vld [vmem:[%s6213 + $0x178] sm:$0xf]
      %v6271 = vld [vmem:[%s6213 + $0x17c] sm:$0xff]
      %v6272 = vld [vmem:[%s6213 + $0x184] sm:$0xff]
      %v6273 = vld [vmem:[%s6213 + $0x18c] sm:$0xf]
      %v6274 = vld [vmem:[%s6213 + $0x190] sm:$0xff]
      %v6275 = vld [vmem:[%s6213 + $0x198] sm:$0xff]
      %v6276 = vld [vmem:[%s6213 + $0x1a0] sm:$0xf]
      %v6277 = vld [vmem:[%s6213 + $0x1a4] sm:$0xff]
      %v6278 = vld [vmem:[%s6213 + $0x1ac] sm:$0xff]
      %v6279 = vld [vmem:[%s6213 + $0x1b4] sm:$0xf]
      %v6280 = vld [vmem:[%s6213 + $0x1b8] sm:$0xff]
      %v6281 = vld [vmem:[%s6213 + $0x1c0] sm:$0xff]
      %v6282 = vld [vmem:[%s6213 + $0x1c8] sm:$0xf]
      %v6283 = vld [vmem:[%s6213 + $0x1cc] sm:$0xff]
      %v6284 = vld [vmem:[%s6213 + $0x1d4] sm:$0xff]
      %v6285 = vld [vmem:[%s6213 + $0x1dc] sm:$0xf]
      %v6286 = vld [vmem:[%s6213 + $0x1e0] sm:$0xff]
      %v6287 = vld [vmem:[%s6213 + $0x1e8] sm:$0xff]
      %v6288 = vld [vmem:[%s6213 + $0x1f0] sm:$0xf]
      %v6289 = vld [vmem:[%s6213 + $0x1f4] sm:$0xff]
      %v6290 = vld [vmem:[%s6213 + $0x1fc] sm:$0xff]
      %v6291 = vld [vmem:[%s6213 + $0x204] sm:$0xf]
      %v6292 = vld [vmem:[%s6213 + $0x208] sm:$0xff]
      %v6293 = vld [vmem:[%s6213 + $0x210] sm:$0xff]
      %v6294 = vld [vmem:[%s6213 + $0x218] sm:$0xf]
      %v6295 = vld [vmem:[%s6213 + $0x21c] sm:$0xff]
      %v6296 = vld [vmem:[%s6213 + $0x224] sm:$0xff]
      %v6297 = vld [vmem:[%s6213 + $0x22c] sm:$0xf]
      %v6298 = vld [vmem:[%s6213 + $0x230] sm:$0xff]
      %v6299 = vld [vmem:[%s6213 + $0x238] sm:$0xff]
      %v6300 = vld [vmem:[%s6213 + $0x240] sm:$0xf]
      %v6301 = vld [vmem:[%s6213 + $0x244] sm:$0xff]
      %v6302 = vld [vmem:[%s6213 + $0x24c] sm:$0xff]
      %v6303 = vld [vmem:[%s6213 + $0x254] sm:$0xf]
      %v6304 = vld [vmem:[%s6213 + $0x258] sm:$0xff]
      %v6305 = vld [vmem:[%s6213 + $0x260] sm:$0xff]
      %v6306 = vld [vmem:[%s6213 + $0x268] sm:$0xf]
      %v6307 = vld [vmem:[%s6213 + $0x26c] sm:$0xff]
      %v6308 = vld [vmem:[%s6213 + $0x274] sm:$0xff]
      %v6309 = vld [vmem:[%s6213 + $0x27c] sm:$0xf]
      %v6310 = vld [vmem:[%s6213 + $0x280] sm:$0xff]
      %v6311 = vld [vmem:[%s6213 + $0x288] sm:$0xff]
      %v6312 = vld [vmem:[%s6213 + $0x290] sm:$0xf]
      %v6313 = vld [vmem:[%s6213 + $0x294] sm:$0xff]
      %v6314 = vld [vmem:[%s6213 + $0x29c] sm:$0xff]
      %v6315 = vld [vmem:[%s6213 + $0x2a4] sm:$0xf]
      %v6316 = vld [vmem:[%s6213 + $0x2a8] sm:$0xff]
      %v6317 = vld [vmem:[%s6213 + $0x2b0] sm:$0xff]
      %v6318 = vld [vmem:[%s6213 + $0x2b8] sm:$0xf]
      %v6319 = vld [vmem:[%s6213 + $0x2bc] sm:$0xff]
      %v6320 = vld [vmem:[%s6213 + $0x2c4] sm:$0xff]
      %v6321 = vld [vmem:[%s6213 + $0x2cc] sm:$0xf]
      %v6322 = vld [vmem:[%s6213 + $0x2d0] sm:$0xff]
      %v6323 = vld [vmem:[%s6213 + $0x2d8] sm:$0xff]
      %v6324 = vld [vmem:[%s6213 + $0x2e0] sm:$0xf]
      %v6325 = vld [vmem:[%s6213 + $0x2e4] sm:$0xff]
      %v6326 = vld [vmem:[%s6213 + $0x2ec] sm:$0xff]
      %v6327 = vld [vmem:[%s6213 + $0x2f4] sm:$0xf]
      %v6328 = vld [vmem:[%s6213 + $0x2f8] sm:$0xff]
      %v6329 = vld [vmem:[%s6213 + $0x300] sm:$0xff]
      %v6330 = vld [vmem:[%s6213 + $0x308] sm:$0xf]
      %v6331 = vld [vmem:[%s6213 + $0x30c] sm:$0xff]
      %v6332 = vld [vmem:[%s6213 + $0x314] sm:$0xff]
      %v6333 = vld [vmem:[%s6213 + $0x31c] sm:$0xf]
      %v6334 = vld [vmem:[%s6213 + $0x320] sm:$0xff]
      %v6335 = vld [vmem:[%s6213 + $0x328] sm:$0xff]
      %v6336 = vld [vmem:[%s6213 + $0x330] sm:$0xf]
      %v6337 = vld [vmem:[%s6213 + $0x334] sm:$0xff]
      %v6338 = vld [vmem:[%s6213 + $0x33c] sm:$0xff]
      %v6339 = vld [vmem:[%s6213 + $0x344] sm:$0xf]
      %v6340 = vld [vmem:[%s6213 + $0x348] sm:$0xff]
      %v6341 = vld [vmem:[%s6213 + $0x350] sm:$0xff]
      %v6342 = vld [vmem:[%s6213 + $0x358] sm:$0xf]
      %v6343 = vld [vmem:[%s6213 + $0x35c] sm:$0xff]
      %v6344 = vld [vmem:[%s6213 + $0x364] sm:$0xff]
      %v6345 = vld [vmem:[%s6213 + $0x36c] sm:$0xf]
      %v6346 = vld [vmem:[%s6213 + $0x370] sm:$0xff]
      %v6347 = vld [vmem:[%s6213 + $0x378] sm:$0xff]
      %v6348 = vld [vmem:[%s6213 + $0x380] sm:$0xf]
      %v6349 = vld [vmem:[%s6213 + $0x384] sm:$0xff]
      %v6350 = vld [vmem:[%s6213 + $0x38c] sm:$0xff]
      %v6351 = vld [vmem:[%s6213 + $0x394] sm:$0xf]
      %v6352 = vld [vmem:[%s6213 + $0x398] sm:$0xff]
      %v6353 = vld [vmem:[%s6213 + $0x3a0] sm:$0xff]
      %v6354 = vld [vmem:[%s6213 + $0x3a8] sm:$0xf]
      %v6355 = vld [vmem:[%s6213 + $0x3ac] sm:$0xff]
      %v6356 = vld [vmem:[%s6213 + $0x3b4] sm:$0xff]
      %v6357 = vld [vmem:[%s6213 + $0x3bc] sm:$0xf]
      %v6358 = vld [vmem:[%s6213 + $0x3c0] sm:$0xff]
      %v6359 = vld [vmem:[%s6213 + $0x3c8] sm:$0xff]
      %v6360 = vld [vmem:[%s6213 + $0x3d0] sm:$0xf]
      %v6361 = vld [vmem:[%s6213 + $0x3d4] sm:$0xff]
      %v6362 = vld [vmem:[%s6213 + $0x3dc] sm:$0xff]
      %v6363 = vld [vmem:[%s6213 + $0x3e4] sm:$0xf]
      %v6364 = vld [vmem:[%s6213 + $0x3e8] sm:$0xff]
      %v6365 = vld [vmem:[%s6213 + $0x3f0] sm:$0xff]
      %v6366 = vld [vmem:[%s6213 + $0x3f8] sm:$0xf]
      %v6367 = vld [vmem:[%s6213 + $0x3fc] sm:$0xff]
      %v6368 = vld [vmem:[%s6213 + $0x404] sm:$0xff]
      %v6369 = vld [vmem:[%s6213 + $0x40c] sm:$0xf]
      %v6370 = vld [vmem:[%s6213 + $0x410] sm:$0xff]
      %v6371 = vld [vmem:[%s6213 + $0x418] sm:$0xff]
      %v6372 = vld [vmem:[%s6213 + $0x420] sm:$0xf]
      %v6373 = vld [vmem:[%s6213 + $0x424] sm:$0xff]
      %v6374 = vld [vmem:[%s6213 + $0x42c] sm:$0xff]
      %v6375 = vld [vmem:[%s6213 + $0x434] sm:$0xf]
      %v6376 = vld [vmem:[%s6213 + $0x438] sm:$0xff]
      %v6377 = vld [vmem:[%s6213 + $0x440] sm:$0xff]
      %v6378 = vld [vmem:[%s6213 + $0x448] sm:$0xf]
      %v6379 = vld [vmem:[%s6213 + $0x44c] sm:$0xff]
      %v6380 = vld [vmem:[%s6213 + $0x454] sm:$0xff]
      %v6381 = vld [vmem:[%s6213 + $0x45c] sm:$0xf]
      %v6382 = vld [vmem:[%s6213 + $0x460] sm:$0xff]
      %v6383 = vld [vmem:[%s6213 + $0x468] sm:$0xff]
      %v6384 = vld [vmem:[%s6213 + $0x470] sm:$0xf]
      %v6385 = vld [vmem:[%s6213 + $0x474] sm:$0xff]
      %v6386 = vld [vmem:[%s6213 + $0x47c] sm:$0xff]
      %v6387 = vld [vmem:[%s6213 + $0x484] sm:$0xf]
      %v6388 = vld [vmem:[%s6213 + $0x488] sm:$0xff]
      %v6389 = vld [vmem:[%s6213 + $0x490] sm:$0xff]
      %v6390 = vld [vmem:[%s6213 + $0x498] sm:$0xf]
      %v6391 = vld [vmem:[%s6213 + $0x49c] sm:$0xff]
      %v6392 = vld [vmem:[%s6213 + $0x4a4] sm:$0xff]
      %v6393 = vld [vmem:[%s6213 + $0x4ac] sm:$0xf]
      %v6394 = vld [vmem:[%s6213 + $0x4b0] sm:$0xff]
      %v6395 = vld [vmem:[%s6213 + $0x4b8] sm:$0xff]
      %v6396 = vld [vmem:[%s6213 + $0x4c0] sm:$0xf]
      %v6397 = vld [vmem:[%s6213 + $0x4c4] sm:$0xff]
      %v6398 = vld [vmem:[%s6213 + $0x4cc] sm:$0xff]
      %v6399 = vld [vmem:[%s6213 + $0x4d4] sm:$0xf]
      %v6400 = vld [vmem:[%s6213 + $0x4d8] sm:$0xff]
      %v6401 = vld [vmem:[%s6213 + $0x4e0] sm:$0xff]
      %v6402 = vld [vmem:[%s6213 + $0x4e8] sm:$0xf]
      %v6403 = vld [vmem:[%s6213 + $0x4ec] sm:$0xff]
      %v6404 = vld [vmem:[%s6213 + $0x4f4] sm:$0xff]
      %v6405 = vld [vmem:[%s6213 + $0x4fc] sm:$0xf]
      %v6598 = vunpack.c.l.b16 %v6214
      %v6599 = vunpack.c.h.b16 %v6214
      %v6600 = vunpack.c.l.b16 %v6215
      %v6601 = vunpack.c.h.b16 %v6215
      %v6602 = vunpack.c.l.b16 %v6216
      %v6603 = vunpack.c.l.b16 %v6217
      %v6604 = vunpack.c.h.b16 %v6217
      %v6605 = vunpack.c.l.b16 %v6218
      %v6606 = vunpack.c.h.b16 %v6218
      %v6607 = vunpack.c.l.b16 %v6219
      %v6608 = vunpack.c.l.b16 %v6220
      %v6609 = vunpack.c.h.b16 %v6220
      %v6610 = vunpack.c.l.b16 %v6221
      %v6611 = vunpack.c.h.b16 %v6221
      %v6612 = vunpack.c.l.b16 %v6222
      %v6613 = vunpack.c.l.b16 %v6223
      %v6614 = vunpack.c.h.b16 %v6223
      %v6615 = vunpack.c.l.b16 %v6224
      %v6616 = vunpack.c.h.b16 %v6224
      %v6617 = vunpack.c.l.b16 %v6225
      %v6618 = vunpack.c.l.b16 %v6226
      %v6619 = vunpack.c.h.b16 %v6226
      %v6620 = vunpack.c.l.b16 %v6227
      %v6621 = vunpack.c.h.b16 %v6227
      %v6622 = vunpack.c.l.b16 %v6228
      %v6623 = vunpack.c.l.b16 %v6229
      %v6624 = vunpack.c.h.b16 %v6229
      %v6625 = vunpack.c.l.b16 %v6230
      %v6626 = vunpack.c.h.b16 %v6230
      %v6627 = vunpack.c.l.b16 %v6231
      %v6628 = vunpack.c.l.b16 %v6232
      %v6629 = vunpack.c.h.b16 %v6232
      %v6630 = vunpack.c.l.b16 %v6233
      %v6631 = vunpack.c.h.b16 %v6233
      %v6632 = vunpack.c.l.b16 %v6234
      %v6633 = vunpack.c.l.b16 %v6235
      %v6634 = vunpack.c.h.b16 %v6235
      %v6635 = vunpack.c.l.b16 %v6236
      %v6636 = vunpack.c.h.b16 %v6236
      %v6637 = vunpack.c.l.b16 %v6237
      %v6638 = vunpack.c.l.b16 %v6238
      %v6639 = vunpack.c.h.b16 %v6238
      %v6640 = vunpack.c.l.b16 %v6239
      %v6641 = vunpack.c.h.b16 %v6239
      %v6642 = vunpack.c.l.b16 %v6240
      %v6643 = vunpack.c.l.b16 %v6241
      %v6644 = vunpack.c.h.b16 %v6241
      %v6645 = vunpack.c.l.b16 %v6242
      %v6646 = vunpack.c.h.b16 %v6242
      %v6647 = vunpack.c.l.b16 %v6243
      %v6648 = vunpack.c.l.b16 %v6244
      %v6649 = vunpack.c.h.b16 %v6244
      %v6650 = vunpack.c.l.b16 %v6245
      %v6651 = vunpack.c.h.b16 %v6245
      %v6652 = vunpack.c.l.b16 %v6246
      %v6653 = vunpack.c.l.b16 %v6247
      %v6654 = vunpack.c.h.b16 %v6247
      %v6655 = vunpack.c.l.b16 %v6248
      %v6656 = vunpack.c.h.b16 %v6248
      %v6657 = vunpack.c.l.b16 %v6249
      %v6658 = vunpack.c.l.b16 %v6250
      %v6659 = vunpack.c.h.b16 %v6250
      %v6660 = vunpack.c.l.b16 %v6251
      %v6661 = vunpack.c.h.b16 %v6251
      %v6662 = vunpack.c.l.b16 %v6252
      %v6663 = vunpack.c.l.b16 %v6253
      %v6664 = vunpack.c.h.b16 %v6253
      %v6665 = vunpack.c.l.b16 %v6254
      %v6666 = vunpack.c.h.b16 %v6254
      %v6667 = vunpack.c.l.b16 %v6255
      %v6668 = vunpack.c.l.b16 %v6256
      %v6669 = vunpack.c.h.b16 %v6256
      %v6670 = vunpack.c.l.b16 %v6257
      %v6671 = vunpack.c.h.b16 %v6257
      %v6672 = vunpack.c.l.b16 %v6258
      %v6673 = vunpack.c.l.b16 %v6259
      %v6674 = vunpack.c.h.b16 %v6259
      %v6675 = vunpack.c.l.b16 %v6260
      %v6676 = vunpack.c.h.b16 %v6260
      %v6677 = vunpack.c.l.b16 %v6261
      %v6678 = vunpack.c.l.b16 %v6262
      %v6679 = vunpack.c.h.b16 %v6262
      %v6680 = vunpack.c.l.b16 %v6263
      %v6681 = vunpack.c.h.b16 %v6263
      %v6682 = vunpack.c.l.b16 %v6264
      %v6683 = vunpack.c.l.b16 %v6265
      %v6684 = vunpack.c.h.b16 %v6265
      %v6685 = vunpack.c.l.b16 %v6266
      %v6686 = vunpack.c.h.b16 %v6266
      %v6687 = vunpack.c.l.b16 %v6267
      %v6688 = vunpack.c.l.b16 %v6268
      %v6689 = vunpack.c.h.b16 %v6268
      %v6690 = vunpack.c.l.b16 %v6269
      %v6691 = vunpack.c.h.b16 %v6269
      %v6692 = vunpack.c.l.b16 %v6270
      %v6693 = vunpack.c.l.b16 %v6271
      %v6694 = vunpack.c.h.b16 %v6271
      %v6695 = vunpack.c.l.b16 %v6272
      %v6696 = vunpack.c.h.b16 %v6272
      %v6697 = vunpack.c.l.b16 %v6273
      %v6698 = vunpack.c.l.b16 %v6274
      %v6699 = vunpack.c.h.b16 %v6274
      %v6700 = vunpack.c.l.b16 %v6275
      %v6701 = vunpack.c.h.b16 %v6275
      %v6702 = vunpack.c.l.b16 %v6276
      %v6703 = vunpack.c.l.b16 %v6277
      %v6704 = vunpack.c.h.b16 %v6277
      %v6705 = vunpack.c.l.b16 %v6278
      %v6706 = vunpack.c.h.b16 %v6278
      %v6707 = vunpack.c.l.b16 %v6279
      %v6708 = vunpack.c.l.b16 %v6280
      %v6709 = vunpack.c.h.b16 %v6280
      %v6710 = vunpack.c.l.b16 %v6281
      %v6711 = vunpack.c.h.b16 %v6281
      %v6712 = vunpack.c.l.b16 %v6282
      %v6713 = vunpack.c.l.b16 %v6283
      %v6714 = vunpack.c.h.b16 %v6283
      %v6715 = vunpack.c.l.b16 %v6284
      %v6716 = vunpack.c.h.b16 %v6284
      %v6717 = vunpack.c.l.b16 %v6285
      %v6718 = vunpack.c.l.b16 %v6286
      %v6719 = vunpack.c.h.b16 %v6286
      %v6720 = vunpack.c.l.b16 %v6287
      %v6721 = vunpack.c.h.b16 %v6287
      %v6722 = vunpack.c.l.b16 %v6288
      %v6723 = vunpack.c.l.b16 %v6289
      %v6724 = vunpack.c.h.b16 %v6289
      %v6725 = vunpack.c.l.b16 %v6290
      %v6726 = vunpack.c.h.b16 %v6290
      %v6727 = vunpack.c.l.b16 %v6291
      %v6728 = vunpack.c.l.b16 %v6292
      %v6729 = vunpack.c.h.b16 %v6292
      %v6730 = vunpack.c.l.b16 %v6293
      %v6731 = vunpack.c.h.b16 %v6293
      %v6732 = vunpack.c.l.b16 %v6294
      %v6733 = vunpack.c.l.b16 %v6295
      %v6734 = vunpack.c.h.b16 %v6295
      %v6735 = vunpack.c.l.b16 %v6296
      %v6736 = vunpack.c.h.b16 %v6296
      %v6737 = vunpack.c.l.b16 %v6297
      %v6738 = vunpack.c.l.b16 %v6298
      %v6739 = vunpack.c.h.b16 %v6298
      %v6740 = vunpack.c.l.b16 %v6299
      %v6741 = vunpack.c.h.b16 %v6299
      %v6742 = vunpack.c.l.b16 %v6300
      %v6743 = vunpack.c.l.b16 %v6301
      %v6744 = vunpack.c.h.b16 %v6301
      %v6745 = vunpack.c.l.b16 %v6302
      %v6746 = vunpack.c.h.b16 %v6302
      %v6747 = vunpack.c.l.b16 %v6303
      %v6748 = vunpack.c.l.b16 %v6304
      %v6749 = vunpack.c.h.b16 %v6304
      %v6750 = vunpack.c.l.b16 %v6305
      %v6751 = vunpack.c.h.b16 %v6305
      %v6752 = vunpack.c.l.b16 %v6306
      %v6753 = vunpack.c.l.b16 %v6307
      %v6754 = vunpack.c.h.b16 %v6307
      %v6755 = vunpack.c.l.b16 %v6308
      %v6756 = vunpack.c.h.b16 %v6308
      %v6757 = vunpack.c.l.b16 %v6309
      %v6758 = vunpack.c.l.b16 %v6310
      %v6759 = vunpack.c.h.b16 %v6310
      %v6760 = vunpack.c.l.b16 %v6311
      %v6761 = vunpack.c.h.b16 %v6311
      %v6762 = vunpack.c.l.b16 %v6312
      %v6763 = vunpack.c.l.b16 %v6313
      %v6764 = vunpack.c.h.b16 %v6313
      %v6765 = vunpack.c.l.b16 %v6314
      %v6766 = vunpack.c.h.b16 %v6314
      %v6767 = vunpack.c.l.b16 %v6315
      %v6768 = vunpack.c.l.b16 %v6316
      %v6769 = vunpack.c.h.b16 %v6316
      %v6770 = vunpack.c.l.b16 %v6317
      %v6771 = vunpack.c.h.b16 %v6317
      %v6772 = vunpack.c.l.b16 %v6318
      %v6773 = vunpack.c.l.b16 %v6319
      %v6774 = vunpack.c.h.b16 %v6319
      %v6775 = vunpack.c.l.b16 %v6320
      %v6776 = vunpack.c.h.b16 %v6320
      %v6777 = vunpack.c.l.b16 %v6321
      %v6778 = vunpack.c.l.b16 %v6322
      %v6779 = vunpack.c.h.b16 %v6322
      %v6780 = vunpack.c.l.b16 %v6323
      %v6781 = vunpack.c.h.b16 %v6323
      %v6782 = vunpack.c.l.b16 %v6324
      %v6783 = vunpack.c.l.b16 %v6325
      %v6784 = vunpack.c.h.b16 %v6325
      %v6785 = vunpack.c.l.b16 %v6326
      %v6786 = vunpack.c.h.b16 %v6326
      %v6787 = vunpack.c.l.b16 %v6327
      %v6788 = vunpack.c.l.b16 %v6328
      %v6789 = vunpack.c.h.b16 %v6328
      %v6790 = vunpack.c.l.b16 %v6329
      %v6791 = vunpack.c.h.b16 %v6329
      %v6792 = vunpack.c.l.b16 %v6330
      %v6793 = vunpack.c.l.b16 %v6331
      %v6794 = vunpack.c.h.b16 %v6331
      %v6795 = vunpack.c.l.b16 %v6332
      %v6796 = vunpack.c.h.b16 %v6332
      %v6797 = vunpack.c.l.b16 %v6333
      %v6798 = vunpack.c.l.b16 %v6334
      %v6799 = vunpack.c.h.b16 %v6334
      %v6800 = vunpack.c.l.b16 %v6335
      %v6801 = vunpack.c.h.b16 %v6335
      %v6802 = vunpack.c.l.b16 %v6336
      %v6803 = vunpack.c.l.b16 %v6337
      %v6804 = vunpack.c.h.b16 %v6337
      %v6805 = vunpack.c.l.b16 %v6338
      %v6806 = vunpack.c.h.b16 %v6338
      %v6807 = vunpack.c.l.b16 %v6339
      %v6808 = vunpack.c.l.b16 %v6340
      %v6809 = vunpack.c.h.b16 %v6340
      %v6810 = vunpack.c.l.b16 %v6341
      %v6811 = vunpack.c.h.b16 %v6341
      %v6812 = vunpack.c.l.b16 %v6342
      %v6813 = vunpack.c.l.b16 %v6343
      %v6814 = vunpack.c.h.b16 %v6343
      %v6815 = vunpack.c.l.b16 %v6344
      %v6816 = vunpack.c.h.b16 %v6344
      %v6817 = vunpack.c.l.b16 %v6345
      %v6818 = vunpack.c.l.b16 %v6346
      %v6819 = vunpack.c.h.b16 %v6346
      %v6820 = vunpack.c.l.b16 %v6347
      %v6821 = vunpack.c.h.b16 %v6347
      %v6822 = vunpack.c.l.b16 %v6348
      %v6823 = vunpack.c.l.b16 %v6349
      %v6824 = vunpack.c.h.b16 %v6349
      %v6825 = vunpack.c.l.b16 %v6350
      %v6826 = vunpack.c.h.b16 %v6350
      %v6827 = vunpack.c.l.b16 %v6351
      %v6828 = vunpack.c.l.b16 %v6352
      %v6829 = vunpack.c.h.b16 %v6352
      %v6830 = vunpack.c.l.b16 %v6353
      %v6831 = vunpack.c.h.b16 %v6353
      %v6832 = vunpack.c.l.b16 %v6354
      %v6833 = vunpack.c.l.b16 %v6355
      %v6834 = vunpack.c.h.b16 %v6355
      %v6835 = vunpack.c.l.b16 %v6356
      %v6836 = vunpack.c.h.b16 %v6356
      %v6837 = vunpack.c.l.b16 %v6357
      %v6838 = vunpack.c.l.b16 %v6358
      %v6839 = vunpack.c.h.b16 %v6358
      %v6840 = vunpack.c.l.b16 %v6359
      %v6841 = vunpack.c.h.b16 %v6359
      %v6842 = vunpack.c.l.b16 %v6360
      %v6843 = vunpack.c.l.b16 %v6361
      %v6844 = vunpack.c.h.b16 %v6361
      %v6845 = vunpack.c.l.b16 %v6362
      %v6846 = vunpack.c.h.b16 %v6362
      %v6847 = vunpack.c.l.b16 %v6363
      %v6848 = vunpack.c.l.b16 %v6364
      %v6849 = vunpack.c.h.b16 %v6364
      %v6850 = vunpack.c.l.b16 %v6365
      %v6851 = vunpack.c.h.b16 %v6365
      %v6852 = vunpack.c.l.b16 %v6366
      %v6853 = vunpack.c.l.b16 %v6367
      %v6854 = vunpack.c.h.b16 %v6367
      %v6855 = vunpack.c.l.b16 %v6368
      %v6856 = vunpack.c.h.b16 %v6368
      %v6857 = vunpack.c.l.b16 %v6369
      %v6858 = vunpack.c.l.b16 %v6370
      %v6859 = vunpack.c.h.b16 %v6370
      %v6860 = vunpack.c.l.b16 %v6371
      %v6861 = vunpack.c.h.b16 %v6371
      %v6862 = vunpack.c.l.b16 %v6372
      %v6863 = vunpack.c.l.b16 %v6373
      %v6864 = vunpack.c.h.b16 %v6373
      %v6865 = vunpack.c.l.b16 %v6374
      %v6866 = vunpack.c.h.b16 %v6374
      %v6867 = vunpack.c.l.b16 %v6375
      %v6868 = vunpack.c.l.b16 %v6376
      %v6869 = vunpack.c.h.b16 %v6376
      %v6870 = vunpack.c.l.b16 %v6377
      %v6871 = vunpack.c.h.b16 %v6377
      %v6872 = vunpack.c.l.b16 %v6378
      %v6873 = vunpack.c.l.b16 %v6379
      %v6874 = vunpack.c.h.b16 %v6379
      %v6875 = vunpack.c.l.b16 %v6380
      %v6876 = vunpack.c.h.b16 %v6380
      %v6877 = vunpack.c.l.b16 %v6381
      %v6878 = vunpack.c.l.b16 %v6382
      %v6879 = vunpack.c.h.b16 %v6382
      %v6880 = vunpack.c.l.b16 %v6383
      %v6881 = vunpack.c.h.b16 %v6383
      %v6882 = vunpack.c.l.b16 %v6384
      %v6883 = vunpack.c.l.b16 %v6385
      %v6884 = vunpack.c.h.b16 %v6385
      %v6885 = vunpack.c.l.b16 %v6386
      %v6886 = vunpack.c.h.b16 %v6386
      %v6887 = vunpack.c.l.b16 %v6387
      %v6888 = vunpack.c.l.b16 %v6388
      %v6889 = vunpack.c.h.b16 %v6388
      %v6890 = vunpack.c.l.b16 %v6389
      %v6891 = vunpack.c.h.b16 %v6389
      %v6892 = vunpack.c.l.b16 %v6390
      %v6893 = vunpack.c.l.b16 %v6391
      %v6894 = vunpack.c.h.b16 %v6391
      %v6895 = vunpack.c.l.b16 %v6392
      %v6896 = vunpack.c.h.b16 %v6392
      %v6897 = vunpack.c.l.b16 %v6393
      %v6898 = vunpack.c.l.b16 %v6394
      %v6899 = vunpack.c.h.b16 %v6394
      %v6900 = vunpack.c.l.b16 %v6395
      %v6901 = vunpack.c.h.b16 %v6395
      %v6902 = vunpack.c.l.b16 %v6396
      %v6903 = vunpack.c.l.b16 %v6397
      %v6904 = vunpack.c.h.b16 %v6397
      %v6905 = vunpack.c.l.b16 %v6398
      %v6906 = vunpack.c.h.b16 %v6398
      %v6907 = vunpack.c.l.b16 %v6399
      %v6908 = vunpack.c.l.b16 %v6400
      %v6909 = vunpack.c.h.b16 %v6400
      %v6910 = vunpack.c.l.b16 %v6401
      %v6911 = vunpack.c.h.b16 %v6401
      %v6912 = vunpack.c.l.b16 %v6402
      %v6913 = vunpack.c.l.b16 %v6403
      %v6914 = vunpack.c.h.b16 %v6403
      %v6915 = vunpack.c.l.b16 %v6404
      %v6916 = vunpack.c.h.b16 %v6404
      %v6917 = vunpack.c.l.b16 %v6405
      %v6918 = vpack.c.b16 %v6603, %v6598
      %v6919 = vpack.c.b16 %v6604, %v6599
      %v6920 = vpack.c.b16 %v6605, %v6600
      %v6921 = vpack.c.b16 %v6606, %v6601
      %v6922 = vpack.c.b16 %v6607, %v6602
      %v6923 = vpack.c.b16 %v6613, %v6608
      %v6924 = vpack.c.b16 %v6614, %v6609
      %v6925 = vpack.c.b16 %v6615, %v6610
      %v6926 = vpack.c.b16 %v6616, %v6611
      %v6927 = vpack.c.b16 %v6617, %v6612
      %v6928 = vpack.c.b16 %v6623, %v6618
      %v6929 = vpack.c.b16 %v6624, %v6619
      %v6930 = vpack.c.b16 %v6625, %v6620
      %v6931 = vpack.c.b16 %v6626, %v6621
      %v6932 = vpack.c.b16 %v6627, %v6622
      %v6933 = vpack.c.b16 %v6633, %v6628
      %v6934 = vpack.c.b16 %v6634, %v6629
      %v6935 = vpack.c.b16 %v6635, %v6630
      %v6936 = vpack.c.b16 %v6636, %v6631
      %v6937 = vpack.c.b16 %v6637, %v6632
      %v6938 = vpack.c.b16 %v6643, %v6638
      %v6939 = vpack.c.b16 %v6644, %v6639
      %v6940 = vpack.c.b16 %v6645, %v6640
      %v6941 = vpack.c.b16 %v6646, %v6641
      %v6942 = vpack.c.b16 %v6647, %v6642
      %v6943 = vpack.c.b16 %v6653, %v6648
      %v6944 = vpack.c.b16 %v6654, %v6649
      %v6945 = vpack.c.b16 %v6655, %v6650
      %v6946 = vpack.c.b16 %v6656, %v6651
      %v6947 = vpack.c.b16 %v6657, %v6652
      %v6948 = vpack.c.b16 %v6663, %v6658
      %v6949 = vpack.c.b16 %v6664, %v6659
      %v6950 = vpack.c.b16 %v6665, %v6660
      %v6951 = vpack.c.b16 %v6666, %v6661
      %v6952 = vpack.c.b16 %v6667, %v6662
      %v6953 = vpack.c.b16 %v6673, %v6668
      %v6954 = vpack.c.b16 %v6674, %v6669
      %v6955 = vpack.c.b16 %v6675, %v6670
      %v6956 = vpack.c.b16 %v6676, %v6671
      %v6957 = vpack.c.b16 %v6677, %v6672
      %v6958 = vpack.c.b16 %v6683, %v6678
      %v6959 = vpack.c.b16 %v6684, %v6679
      %v6960 = vpack.c.b16 %v6685, %v6680
      %v6961 = vpack.c.b16 %v6686, %v6681
      %v6962 = vpack.c.b16 %v6687, %v6682
      %v6963 = vpack.c.b16 %v6693, %v6688
      %v6964 = vpack.c.b16 %v6694, %v6689
      %v6965 = vpack.c.b16 %v6695, %v6690
      %v6966 = vpack.c.b16 %v6696, %v6691
      %v6967 = vpack.c.b16 %v6697, %v6692
      %v6968 = vpack.c.b16 %v6703, %v6698
      %v6969 = vpack.c.b16 %v6704, %v6699
      %v6970 = vpack.c.b16 %v6705, %v6700
      %v6971 = vpack.c.b16 %v6706, %v6701
      %v6972 = vpack.c.b16 %v6707, %v6702
      %v6973 = vpack.c.b16 %v6713, %v6708
      %v6974 = vpack.c.b16 %v6714, %v6709
      %v6975 = vpack.c.b16 %v6715, %v6710
      %v6976 = vpack.c.b16 %v6716, %v6711
      %v6977 = vpack.c.b16 %v6717, %v6712
      %v6978 = vpack.c.b16 %v6723, %v6718
      %v6979 = vpack.c.b16 %v6724, %v6719
      %v6980 = vpack.c.b16 %v6725, %v6720
      %v6981 = vpack.c.b16 %v6726, %v6721
      %v6982 = vpack.c.b16 %v6727, %v6722
      %v6983 = vpack.c.b16 %v6733, %v6728
      %v6984 = vpack.c.b16 %v6734, %v6729
      %v6985 = vpack.c.b16 %v6735, %v6730
      %v6986 = vpack.c.b16 %v6736, %v6731
      %v6987 = vpack.c.b16 %v6737, %v6732
      %v6988 = vpack.c.b16 %v6743, %v6738
      %v6989 = vpack.c.b16 %v6744, %v6739
      %v6990 = vpack.c.b16 %v6745, %v6740
      %v6991 = vpack.c.b16 %v6746, %v6741
      %v6992 = vpack.c.b16 %v6747, %v6742
      %v6993 = vpack.c.b16 %v6753, %v6748
      %v6994 = vpack.c.b16 %v6754, %v6749
      %v6995 = vpack.c.b16 %v6755, %v6750
      %v6996 = vpack.c.b16 %v6756, %v6751
      %v6997 = vpack.c.b16 %v6757, %v6752
      %v6998 = vpack.c.b16 %v6763, %v6758
      %v6999 = vpack.c.b16 %v6764, %v6759
      %v7000 = vpack.c.b16 %v6765, %v6760
      %v7001 = vpack.c.b16 %v6766, %v6761
      %v7002 = vpack.c.b16 %v6767, %v6762
      %v7003 = vpack.c.b16 %v6773, %v6768
      %v7004 = vpack.c.b16 %v6774, %v6769
      %v7005 = vpack.c.b16 %v6775, %v6770
      %v7006 = vpack.c.b16 %v6776, %v6771
      %v7007 = vpack.c.b16 %v6777, %v6772
      %v7008 = vpack.c.b16 %v6783, %v6778
      %v7009 = vpack.c.b16 %v6784, %v6779
      %v7010 = vpack.c.b16 %v6785, %v6780
      %v7011 = vpack.c.b16 %v6786, %v6781
      %v7012 = vpack.c.b16 %v6787, %v6782
      %v7013 = vpack.c.b16 %v6793, %v6788
      %v7014 = vpack.c.b16 %v6794, %v6789
      %v7015 = vpack.c.b16 %v6795, %v6790
      %v7016 = vpack.c.b16 %v6796, %v6791
      %v7017 = vpack.c.b16 %v6797, %v6792
      %v7018 = vpack.c.b16 %v6803, %v6798
      %v7019 = vpack.c.b16 %v6804, %v6799
      %v7020 = vpack.c.b16 %v6805, %v6800
      %v7021 = vpack.c.b16 %v6806, %v6801
      %v7022 = vpack.c.b16 %v6807, %v6802
      %v7023 = vpack.c.b16 %v6813, %v6808
      %v7024 = vpack.c.b16 %v6814, %v6809
      %v7025 = vpack.c.b16 %v6815, %v6810
      %v7026 = vpack.c.b16 %v6816, %v6811
      %v7027 = vpack.c.b16 %v6817, %v6812
      %v7028 = vpack.c.b16 %v6823, %v6818
      %v7029 = vpack.c.b16 %v6824, %v6819
      %v7030 = vpack.c.b16 %v6825, %v6820
      %v7031 = vpack.c.b16 %v6826, %v6821
      %v7032 = vpack.c.b16 %v6827, %v6822
      %v7033 = vpack.c.b16 %v6833, %v6828
      %v7034 = vpack.c.b16 %v6834, %v6829
      %v7035 = vpack.c.b16 %v6835, %v6830
      %v7036 = vpack.c.b16 %v6836, %v6831
      %v7037 = vpack.c.b16 %v6837, %v6832
      %v7038 = vpack.c.b16 %v6843, %v6838
      %v7039 = vpack.c.b16 %v6844, %v6839
      %v7040 = vpack.c.b16 %v6845, %v6840
      %v7041 = vpack.c.b16 %v6846, %v6841
      %v7042 = vpack.c.b16 %v6847, %v6842
      %v7043 = vpack.c.b16 %v6853, %v6848
      %v7044 = vpack.c.b16 %v6854, %v6849
      %v7045 = vpack.c.b16 %v6855, %v6850
      %v7046 = vpack.c.b16 %v6856, %v6851
      %v7047 = vpack.c.b16 %v6857, %v6852
      %v7048 = vpack.c.b16 %v6863, %v6858
      %v7049 = vpack.c.b16 %v6864, %v6859
      %v7050 = vpack.c.b16 %v6865, %v6860
      %v7051 = vpack.c.b16 %v6866, %v6861
      %v7052 = vpack.c.b16 %v6867, %v6862
      %v7053 = vpack.c.b16 %v6873, %v6868
      %v7054 = vpack.c.b16 %v6874, %v6869
      %v7055 = vpack.c.b16 %v6875, %v6870
      %v7056 = vpack.c.b16 %v6876, %v6871
      %v7057 = vpack.c.b16 %v6877, %v6872
      %v7058 = vpack.c.b16 %v6883, %v6878
      %v7059 = vpack.c.b16 %v6884, %v6879
      %v7060 = vpack.c.b16 %v6885, %v6880
      %v7061 = vpack.c.b16 %v6886, %v6881
      %v7062 = vpack.c.b16 %v6887, %v6882
      %v7063 = vpack.c.b16 %v6893, %v6888
      %v7064 = vpack.c.b16 %v6894, %v6889
      %v7065 = vpack.c.b16 %v6895, %v6890
      %v7066 = vpack.c.b16 %v6896, %v6891
      %v7067 = vpack.c.b16 %v6897, %v6892
      %v7068 = vpack.c.b16 %v6903, %v6898
      %v7069 = vpack.c.b16 %v6904, %v6899
      %v7070 = vpack.c.b16 %v6905, %v6900
      %v7071 = vpack.c.b16 %v6906, %v6901
      %v7072 = vpack.c.b16 %v6907, %v6902
      %v7073 = vpack.c.b16 %v6913, %v6908
      %v7074 = vpack.c.b16 %v6914, %v6909
      %v7075 = vpack.c.b16 %v6915, %v6910
      %v7076 = vpack.c.b16 %v6916, %v6911
      %v7077 = vpack.c.b16 %v6917, %v6912
      %7238 = vmatpush.bf16.msra.mxu0 %v6953
      %7239 = vmatpush.bf16.msra.mxu0 %v6948
      %7240 = vmatpush.bf16.msra.mxu0 %v6943
      %7241 = vmatpush.bf16.msra.mxu0 %v6938
      %7242 = vmatpush.bf16.msra.mxu0 %v6933
      %7243 = vmatpush.bf16.msra.mxu0 %v6928
      %7244 = vmatpush.bf16.msra.mxu0 %v6923
      %7245 = vmatpush.bf16.msra.mxu0 %v6918
      %7246 = vmatmul.bf16.gmra.mxu0 %v4900
      %v7247 = vpop.f32.mrf.mxu0
      %v7248 = vadd.f32 0.0, %v7247
      %v7249 = vpop.f32.mrf.mxu0
      %v7250 = vadd.f32 0.0, %v7249
      %7251 = vdwg.mxu0
      %7252 = vmatpush.bf16.msra.mxu0 %v6993
      %7253 = vmatpush.bf16.msra.mxu0 %v6988
      %7254 = vmatpush.bf16.msra.mxu0 %v6983
      %7255 = vmatpush.bf16.msra.mxu0 %v6978
      %7256 = vmatpush.bf16.msra.mxu0 %v6973
      %7257 = vmatpush.bf16.msra.mxu0 %v6968
      %7258 = vmatpush.bf16.msra.mxu0 %v6963
      %7259 = vmatpush.bf16.msra.mxu0 %v6958
      %7260 = vmatmul.bf16.gmra.mxu0 %v4901
      %v7261 = vpop.f32.mrf.mxu0
      %v7262 = vadd.f32 %v7248, %v7261
      %v7263 = vpop.f32.mrf.mxu0
      %v7264 = vadd.f32 %v7250, %v7263
      %7265 = vdwg.mxu0
      %7266 = vmatpush.bf16.msra.mxu0 %v7033
      %7267 = vmatpush.bf16.msra.mxu0 %v7028
      %7268 = vmatpush.bf16.msra.mxu0 %v7023
      %7269 = vmatpush.bf16.msra.mxu0 %v7018
      %7270 = vmatpush.bf16.msra.mxu0 %v7013
      %7271 = vmatpush.bf16.msra.mxu0 %v7008
      %7272 = vmatpush.bf16.msra.mxu0 %v7003
      %7273 = vmatpush.bf16.msra.mxu0 %v6998
      %7274 = vmatmul.bf16.gmra.mxu0 %v4902
      %v7275 = vpop.f32.mrf.mxu0
      %v7276 = vadd.f32 %v7262, %v7275
      %v7277 = vpop.f32.mrf.mxu0
      %v7278 = vadd.f32 %v7264, %v7277
      %7279 = vdwg.mxu0
      %7280 = vmatpush.bf16.msra.mxu0 %v7073
      %7281 = vmatpush.bf16.msra.mxu0 %v7068
      %7282 = vmatpush.bf16.msra.mxu0 %v7063
      %7283 = vmatpush.bf16.msra.mxu0 %v7058
      %7284 = vmatpush.bf16.msra.mxu0 %v7053
      %7285 = vmatpush.bf16.msra.mxu0 %v7048
      %7286 = vmatpush.bf16.msra.mxu0 %v7043
      %7287 = vmatpush.bf16.msra.mxu0 %v7038
      %7288 = vmatmul.bf16.gmra.mxu0 %v4903
      %v7289 = vpop.f32.mrf.mxu0
      %v7290 = vadd.f32 %v7276, %v7289
      %v7291 = vpop.f32.mrf.mxu0
      %v7292 = vadd.f32 %v7278, %v7291
      %7293 = vdwg.mxu0
      %7294 = vmatpush.bf16.msra.mxu0 %v6954
      %7295 = vmatpush.bf16.msra.mxu0 %v6949
      %7296 = vmatpush.bf16.msra.mxu0 %v6944
      %7297 = vmatpush.bf16.msra.mxu0 %v6939
      %7298 = vmatpush.bf16.msra.mxu0 %v6934
      %7299 = vmatpush.bf16.msra.mxu0 %v6929
      %7300 = vmatpush.bf16.msra.mxu0 %v6924
      %7301 = vmatpush.bf16.msra.mxu0 %v6919
      %7302 = vmatmul.bf16.gmra.mxu0 %v4900
      %v7303 = vpop.f32.mrf.mxu0
      %v7304 = vadd.f32 0.0, %v7303
      %v7305 = vpop.f32.mrf.mxu0
      %v7306 = vadd.f32 0.0, %v7305
      %7307 = vdwg.mxu0
      %7308 = vmatpush.bf16.msra.mxu0 %v6994
      %7309 = vmatpush.bf16.msra.mxu0 %v6989
      %7310 = vmatpush.bf16.msra.mxu0 %v6984
      %7311 = vmatpush.bf16.msra.mxu0 %v6979
      %7312 = vmatpush.bf16.msra.mxu0 %v6974
      %7313 = vmatpush.bf16.msra.mxu0 %v6969
      %7314 = vmatpush.bf16.msra.mxu0 %v6964
      %7315 = vmatpush.bf16.msra.mxu0 %v6959
      %7316 = vmatmul.bf16.gmra.mxu0 %v4901
      %v7317 = vpop.f32.mrf.mxu0
      %v7318 = vadd.f32 %v7304, %v7317
      %v7319 = vpop.f32.mrf.mxu0
      %v7320 = vadd.f32 %v7306, %v7319
      %7321 = vdwg.mxu0
      %7322 = vmatpush.bf16.msra.mxu0 %v7034
      %7323 = vmatpush.bf16.msra.mxu0 %v7029
      %7324 = vmatpush.bf16.msra.mxu0 %v7024
      %7325 = vmatpush.bf16.msra.mxu0 %v7019
      %7326 = vmatpush.bf16.msra.mxu0 %v7014
      %7327 = vmatpush.bf16.msra.mxu0 %v7009
      %7328 = vmatpush.bf16.msra.mxu0 %v7004
      %7329 = vmatpush.bf16.msra.mxu0 %v6999
      %7330 = vmatmul.bf16.gmra.mxu0 %v4902
      %v7331 = vpop.f32.mrf.mxu0
      %v7332 = vadd.f32 %v7318, %v7331
      %v7333 = vpop.f32.mrf.mxu0
      %v7334 = vadd.f32 %v7320, %v7333
      %7335 = vdwg.mxu0
      %7336 = vmatpush.bf16.msra.mxu0 %v7074
      %7337 = vmatpush.bf16.msra.mxu0 %v7069
      %7338 = vmatpush.bf16.msra.mxu0 %v7064
      %7339 = vmatpush.bf16.msra.mxu0 %v7059
      %7340 = vmatpush.bf16.msra.mxu0 %v7054
      %7341 = vmatpush.bf16.msra.mxu0 %v7049
      %7342 = vmatpush.bf16.msra.mxu0 %v7044
      %7343 = vmatpush.bf16.msra.mxu0 %v7039
      %7344 = vmatmul.bf16.gmra.mxu0 %v4903
      %v7345 = vpop.f32.mrf.mxu0
      %v7346 = vadd.f32 %v7332, %v7345
      %v7347 = vpop.f32.mrf.mxu0
      %v7348 = vadd.f32 %v7334, %v7347
      %7349 = vdwg.mxu0
      %7350 = vmatpush.bf16.msra.mxu0 %v6955
      %7351 = vmatpush.bf16.msra.mxu0 %v6950
      %7352 = vmatpush.bf16.msra.mxu0 %v6945
      %7353 = vmatpush.bf16.msra.mxu0 %v6940
      %7354 = vmatpush.bf16.msra.mxu0 %v6935
      %7355 = vmatpush.bf16.msra.mxu0 %v6930
      %7356 = vmatpush.bf16.msra.mxu0 %v6925
      %7357 = vmatpush.bf16.msra.mxu0 %v6920
      %7358 = vmatmul.bf16.gmra.mxu0 %v4900
      %v7359 = vpop.f32.mrf.mxu0
      %v7360 = vadd.f32 0.0, %v7359
      %v7361 = vpop.f32.mrf.mxu0
      %v7362 = vadd.f32 0.0, %v7361
      %7363 = vdwg.mxu0
      %7364 = vmatpush.bf16.msra.mxu0 %v6995
      %7365 = vmatpush.bf16.msra.mxu0 %v6990
      %7366 = vmatpush.bf16.msra.mxu0 %v6985
      %7367 = vmatpush.bf16.msra.mxu0 %v6980
      %7368 = vmatpush.bf16.msra.mxu0 %v6975
      %7369 = vmatpush.bf16.msra.mxu0 %v6970
      %7370 = vmatpush.bf16.msra.mxu0 %v6965
      %7371 = vmatpush.bf16.msra.mxu0 %v6960
      %7372 = vmatmul.bf16.gmra.mxu0 %v4901
      %v7373 = vpop.f32.mrf.mxu0
      %v7374 = vadd.f32 %v7360, %v7373
      %v7375 = vpop.f32.mrf.mxu0
      %v7376 = vadd.f32 %v7362, %v7375
      %7377 = vdwg.mxu0
      %7378 = vmatpush.bf16.msra.mxu0 %v7035
      %7379 = vmatpush.bf16.msra.mxu0 %v7030
      %7380 = vmatpush.bf16.msra.mxu0 %v7025
      %7381 = vmatpush.bf16.msra.mxu0 %v7020
      %7382 = vmatpush.bf16.msra.mxu0 %v7015
      %7383 = vmatpush.bf16.msra.mxu0 %v7010
      %7384 = vmatpush.bf16.msra.mxu0 %v7005
      %7385 = vmatpush.bf16.msra.mxu0 %v7000
      %7386 = vmatmul.bf16.gmra.mxu0 %v4902
      %v7387 = vpop.f32.mrf.mxu0
      %v7388 = vadd.f32 %v7374, %v7387
      %v7389 = vpop.f32.mrf.mxu0
      %v7390 = vadd.f32 %v7376, %v7389
      %7391 = vdwg.mxu0
      %7392 = vmatpush.bf16.msra.mxu0 %v7075
      %7393 = vmatpush.bf16.msra.mxu0 %v7070
      %7394 = vmatpush.bf16.msra.mxu0 %v7065
      %7395 = vmatpush.bf16.msra.mxu0 %v7060
      %7396 = vmatpush.bf16.msra.mxu0 %v7055
      %7397 = vmatpush.bf16.msra.mxu0 %v7050
      %7398 = vmatpush.bf16.msra.mxu0 %v7045
      %7399 = vmatpush.bf16.msra.mxu0 %v7040
      %7400 = vmatmul.bf16.gmra.mxu0 %v4903
      %v7401 = vpop.f32.mrf.mxu0
      %v7402 = vadd.f32 %v7388, %v7401
      %v7403 = vpop.f32.mrf.mxu0
      %v7404 = vadd.f32 %v7390, %v7403
      %7405 = vdwg.mxu0
      %7406 = vmatpush.bf16.msra.mxu0 %v6956
      %7407 = vmatpush.bf16.msra.mxu0 %v6951
      %7408 = vmatpush.bf16.msra.mxu0 %v6946
      %7409 = vmatpush.bf16.msra.mxu0 %v6941
      %7410 = vmatpush.bf16.msra.mxu0 %v6936
      %7411 = vmatpush.bf16.msra.mxu0 %v6931
      %7412 = vmatpush.bf16.msra.mxu0 %v6926
      %7413 = vmatpush.bf16.msra.mxu0 %v6921
      %7414 = vmatmul.bf16.gmra.mxu0 %v4900
      %v7415 = vpop.f32.mrf.mxu0
      %v7416 = vadd.f32 0.0, %v7415
      %v7417 = vpop.f32.mrf.mxu0
      %v7418 = vadd.f32 0.0, %v7417
      %7419 = vdwg.mxu0
      %7420 = vmatpush.bf16.msra.mxu0 %v6996
      %7421 = vmatpush.bf16.msra.mxu0 %v6991
      %7422 = vmatpush.bf16.msra.mxu0 %v6986
      %7423 = vmatpush.bf16.msra.mxu0 %v6981
      %7424 = vmatpush.bf16.msra.mxu0 %v6976
      %7425 = vmatpush.bf16.msra.mxu0 %v6971
      %7426 = vmatpush.bf16.msra.mxu0 %v6966
      %7427 = vmatpush.bf16.msra.mxu0 %v6961
      %7428 = vmatmul.bf16.gmra.mxu0 %v4901
      %v7429 = vpop.f32.mrf.mxu0
      %v7430 = vadd.f32 %v7416, %v7429
      %v7431 = vpop.f32.mrf.mxu0
      %v7432 = vadd.f32 %v7418, %v7431
      %7433 = vdwg.mxu0
      %7434 = vmatpush.bf16.msra.mxu0 %v7036
      %7435 = vmatpush.bf16.msra.mxu0 %v7031
      %7436 = vmatpush.bf16.msra.mxu0 %v7026
      %7437 = vmatpush.bf16.msra.mxu0 %v7021
      %7438 = vmatpush.bf16.msra.mxu0 %v7016
      %7439 = vmatpush.bf16.msra.mxu0 %v7011
      %7440 = vmatpush.bf16.msra.mxu0 %v7006
      %7441 = vmatpush.bf16.msra.mxu0 %v7001
      %7442 = vmatmul.bf16.gmra.mxu0 %v4902
      %v7443 = vpop.f32.mrf.mxu0
      %v7444 = vadd.f32 %v7430, %v7443
      %v7445 = vpop.f32.mrf.mxu0
      %v7446 = vadd.f32 %v7432, %v7445
      %7447 = vdwg.mxu0
      %7448 = vmatpush.bf16.msra.mxu0 %v7076
      %7449 = vmatpush.bf16.msra.mxu0 %v7071
      %7450 = vmatpush.bf16.msra.mxu0 %v7066
      %7451 = vmatpush.bf16.msra.mxu0 %v7061
      %7452 = vmatpush.bf16.msra.mxu0 %v7056
      %7453 = vmatpush.bf16.msra.mxu0 %v7051
      %7454 = vmatpush.bf16.msra.mxu0 %v7046
      %7455 = vmatpush.bf16.msra.mxu0 %v7041
      %7456 = vmatmul.bf16.gmra.mxu0 %v4903
      %v7457 = vpop.f32.mrf.mxu0
      %v7458 = vadd.f32 %v7444, %v7457
      %v7459 = vpop.f32.mrf.mxu0
      %v7460 = vadd.f32 %v7446, %v7459
      %7461 = vdwg.mxu0
      %7462 = vmatpush.bf16.msra.mxu0 %v6957
      %7463 = vmatpush.bf16.msra.mxu0 %v6952
      %7464 = vmatpush.bf16.msra.mxu0 %v6947
      %7465 = vmatpush.bf16.msra.mxu0 %v6942
      %7466 = vmatpush.bf16.msra.mxu0 %v6937
      %7467 = vmatpush.bf16.msra.mxu0 %v6932
      %7468 = vmatpush.bf16.msra.mxu0 %v6927
      %7469 = vmatpush.bf16.msra.mxu0 %v6922
      %7470 = vmatmul.bf16.gmra.mxu0 %v4900
      %v7471 = vpop.f32.mrf.mxu0
      %v7472 = vadd.f32 0.0, %v7471
      %v7473 = vpop.f32.mrf.mxu0
      %v7474 = vadd.f32 0.0, %v7473
      %7475 = vdwg.mxu0
      %7476 = vmatpush.bf16.msra.mxu0 %v6997
      %7477 = vmatpush.bf16.msra.mxu0 %v6992
      %7478 = vmatpush.bf16.msra.mxu0 %v6987
      %7479 = vmatpush.bf16.msra.mxu0 %v6982
      %7480 = vmatpush.bf16.msra.mxu0 %v6977
      %7481 = vmatpush.bf16.msra.mxu0 %v6972
      %7482 = vmatpush.bf16.msra.mxu0 %v6967
      %7483 = vmatpush.bf16.msra.mxu0 %v6962
      %7484 = vmatmul.bf16.gmra.mxu0 %v4901
      %v7485 = vpop.f32.mrf.mxu0
      %v7486 = vadd.f32 %v7472, %v7485
      %v7487 = vpop.f32.mrf.mxu0
      %v7488 = vadd.f32 %v7474, %v7487
      %7489 = vdwg.mxu0
      %7490 = vmatpush.bf16.msra.mxu0 %v7037
      %7491 = vmatpush.bf16.msra.mxu0 %v7032
      %7492 = vmatpush.bf16.msra.mxu0 %v7027
      %7493 = vmatpush.bf16.msra.mxu0 %v7022
      %7494 = vmatpush.bf16.msra.mxu0 %v7017
      %7495 = vmatpush.bf16.msra.mxu0 %v7012
      %7496 = vmatpush.bf16.msra.mxu0 %v7007
      %7497 = vmatpush.bf16.msra.mxu0 %v7002
      %7498 = vmatmul.bf16.gmra.mxu0 %v4902
      %v7499 = vpop.f32.mrf.mxu0
      %v7500 = vadd.f32 %v7486, %v7499
      %v7501 = vpop.f32.mrf.mxu0
      %v7502 = vadd.f32 %v7488, %v7501
      %7503 = vdwg.mxu0
      %7504 = vmatpush.bf16.msra.mxu0 %v7077
      %7505 = vmatpush.bf16.msra.mxu0 %v7072
      %7506 = vmatpush.bf16.msra.mxu0 %v7067
      %7507 = vmatpush.bf16.msra.mxu0 %v7062
      %7508 = vmatpush.bf16.msra.mxu0 %v7057
      %7509 = vmatpush.bf16.msra.mxu0 %v7052
      %7510 = vmatpush.bf16.msra.mxu0 %v7047
      %7511 = vmatpush.bf16.msra.mxu0 %v7042
      %7512 = vmatmul.bf16.gmra.mxu0 %v4903
      %v7513 = vpop.f32.mrf.mxu0
      %v7514 = vadd.f32 %v7500, %v7513
      %v7515 = vpop.f32.mrf.mxu0
      %v7516 = vadd.f32 %v7502, %v7515
      %7517 = vdwg.mxu0
      %s7518 = scalar_lea.vmem %s7, 40
      %v7519 = vld [vmem:[%s7518] sm:$0xff]
      %v7520 = vld [vmem:[%s7518 + $0x8] sm:$0xff]
      %v7521 = vld [vmem:[%s7518 + $0x10] sm:$0xff]
      %v7522 = vld [vmem:[%s7518 + $0x18] sm:$0xff]
      %v7523 = vld [vmem:[%s7518 + $0x20] sm:$0x3]
      %vm7524 = vcmask 130048
      %v7526 = vsel %vm7524, %v7519, 0
      %v7529 = vsel %vm7524, %v7520, 0
      %v7532 = vsel %vm7524, %v7521, 0
      %v7535 = vsel %vm7524, %v7522, 0
      %v7538 = vsel %vm7524, %v7523, 0
      %7540 = vmatpush.msra.mxu0 0.0
      %7541 = vmatpush.msra.mxu0 0.0
      %7542 = vmatpush.msra.mxu0 0.0
      %7543 = vmatpush.msra.mxu0 0.0
      %7544 = vmatpush.msra.mxu0 0.0
      %7545 = vmatpush.msra.mxu0 0.0
      %7546 = vmatpush.msra.mxu0 0.0
      %7547 = vmatpush.msra.mxu0 0.0
      %7548 = vmatpush.msra.mxu0 0.0
      %7549 = vmatpush.msra.mxu0 0.0
      %7550 = vmatpush.msra.mxu0 0.0
      %7551 = vmatpush.msra.mxu0 0.0
      %7552 = vmatpush.msra.mxu0 0.0
      %7553 = vmatpush.msra.mxu0 0.0
      %7554 = vmatpush.msra.mxu0 %v7292
      %7555 = vmatpush.msra.mxu0 %v7290
      %7556 = vmatmul.f32.gmra.mxu0 %v7526
      %v7557 = vpop.f32.mrf.mxu0
      %v7558 = vadd.f32 0.0, %v7557
      %7559 = vmatmul.f32.gmra.mxu0 %v7529
      %v7560 = vpop.f32.mrf.mxu0
      %v7561 = vadd.f32 0.0, %v7560
      %7562 = vmatmul.f32.gmra.mxu0 %v7532
      %v7563 = vpop.f32.mrf.mxu0
      %v7564 = vadd.f32 0.0, %v7563
      %7565 = vmatmul.f32.gmra.mxu0 %v7535
      %v7566 = vpop.f32.mrf.mxu0
      %v7567 = vadd.f32 0.0, %v7566
      %7568 = vmatmul.f32.gmra.mxu0 %v7538
      %v7569 = vpop.f32.mrf.mxu0
      %v7570 = vadd.f32 0.0, %v7569
      %7571 = vdwg.mxu0
      %7572 = vmatpush.msra.mxu0 0.0
      %7573 = vmatpush.msra.mxu0 0.0
      %7574 = vmatpush.msra.mxu0 0.0
      %7575 = vmatpush.msra.mxu0 0.0
      %7576 = vmatpush.msra.mxu0 0.0
      %7577 = vmatpush.msra.mxu0 0.0
      %7578 = vmatpush.msra.mxu0 0.0
      %7579 = vmatpush.msra.mxu0 0.0
      %7580 = vmatpush.msra.mxu0 0.0
      %7581 = vmatpush.msra.mxu0 0.0
      %7582 = vmatpush.msra.mxu0 0.0
      %7583 = vmatpush.msra.mxu0 0.0
      %7584 = vmatpush.msra.mxu0 0.0
      %7585 = vmatpush.msra.mxu0 0.0
      %7586 = vmatpush.msra.mxu0 %v7348
      %7587 = vmatpush.msra.mxu0 %v7346
      %7588 = vmatmul.f32.gmra.mxu0 %v7526
      %v7589 = vpop.f32.mrf.mxu0
      %v7590 = vadd.f32 0.0, %v7589
      %7591 = vmatmul.f32.gmra.mxu0 %v7529
      %v7592 = vpop.f32.mrf.mxu0
      %v7593 = vadd.f32 0.0, %v7592
      %7594 = vmatmul.f32.gmra.mxu0 %v7532
      %v7595 = vpop.f32.mrf.mxu0
      %v7596 = vadd.f32 0.0, %v7595
      %7597 = vmatmul.f32.gmra.mxu0 %v7535
      %v7598 = vpop.f32.mrf.mxu0
      %v7599 = vadd.f32 0.0, %v7598
      %7600 = vmatmul.f32.gmra.mxu0 %v7538
      %v7601 = vpop.f32.mrf.mxu0
      %v7602 = vadd.f32 0.0, %v7601
      %7603 = vdwg.mxu0
      %7604 = vmatpush.msra.mxu0 0.0
      %7605 = vmatpush.msra.mxu0 0.0
      %7606 = vmatpush.msra.mxu0 0.0
      %7607 = vmatpush.msra.mxu0 0.0
      %7608 = vmatpush.msra.mxu0 0.0
      %7609 = vmatpush.msra.mxu0 0.0
      %7610 = vmatpush.msra.mxu0 0.0
      %7611 = vmatpush.msra.mxu0 0.0
      %7612 = vmatpush.msra.mxu0 0.0
      %7613 = vmatpush.msra.mxu0 0.0
      %7614 = vmatpush.msra.mxu0 0.0
      %7615 = vmatpush.msra.mxu0 0.0
      %7616 = vmatpush.msra.mxu0 0.0
      %7617 = vmatpush.msra.mxu0 0.0
      %7618 = vmatpush.msra.mxu0 %v7404
      %7619 = vmatpush.msra.mxu0 %v7402
      %7620 = vmatmul.f32.gmra.mxu0 %v7526
      %v7621 = vpop.f32.mrf.mxu0
      %v7622 = vadd.f32 0.0, %v7621
      %7623 = vmatmul.f32.gmra.mxu0 %v7529
      %v7624 = vpop.f32.mrf.mxu0
      %v7625 = vadd.f32 0.0, %v7624
      %7626 = vmatmul.f32.gmra.mxu0 %v7532
      %v7627 = vpop.f32.mrf.mxu0
      %v7628 = vadd.f32 0.0, %v7627
      %7629 = vmatmul.f32.gmra.mxu0 %v7535
      %v7630 = vpop.f32.mrf.mxu0
      %v7631 = vadd.f32 0.0, %v7630
      %7632 = vmatmul.f32.gmra.mxu0 %v7538
      %v7633 = vpop.f32.mrf.mxu0
      %v7634 = vadd.f32 0.0, %v7633
      %7635 = vdwg.mxu0
      %7636 = vmatpush.msra.mxu0 0.0
      %7637 = vmatpush.msra.mxu0 0.0
      %7638 = vmatpush.msra.mxu0 0.0
      %7639 = vmatpush.msra.mxu0 0.0
      %7640 = vmatpush.msra.mxu0 0.0
      %7641 = vmatpush.msra.mxu0 0.0
      %7642 = vmatpush.msra.mxu0 0.0
      %7643 = vmatpush.msra.mxu0 0.0
      %7644 = vmatpush.msra.mxu0 0.0
      %7645 = vmatpush.msra.mxu0 0.0
      %7646 = vmatpush.msra.mxu0 0.0
      %7647 = vmatpush.msra.mxu0 0.0
      %7648 = vmatpush.msra.mxu0 0.0
      %7649 = vmatpush.msra.mxu0 0.0
      %7650 = vmatpush.msra.mxu0 %v7460
      %7651 = vmatpush.msra.mxu0 %v7458
      %7652 = vmatmul.f32.gmra.mxu0 %v7526
      %v7653 = vpop.f32.mrf.mxu0
      %v7654 = vadd.f32 0.0, %v7653
      %7655 = vmatmul.f32.gmra.mxu0 %v7529
      %v7656 = vpop.f32.mrf.mxu0
      %v7657 = vadd.f32 0.0, %v7656
      %7658 = vmatmul.f32.gmra.mxu0 %v7532
      %v7659 = vpop.f32.mrf.mxu0
      %v7660 = vadd.f32 0.0, %v7659
      %7661 = vmatmul.f32.gmra.mxu0 %v7535
      %v7662 = vpop.f32.mrf.mxu0
      %v7663 = vadd.f32 0.0, %v7662
      %7664 = vmatmul.f32.gmra.mxu0 %v7538
      %v7665 = vpop.f32.mrf.mxu0
      %v7666 = vadd.f32 0.0, %v7665
      %7667 = vdwg.mxu0
      %7668 = vmatpush.msra.mxu0 0.0
      %7669 = vmatpush.msra.mxu0 0.0
      %7670 = vmatpush.msra.mxu0 0.0
      %7671 = vmatpush.msra.mxu0 0.0
      %7672 = vmatpush.msra.mxu0 0.0
      %7673 = vmatpush.msra.mxu0 0.0
      %7674 = vmatpush.msra.mxu0 0.0
      %7675 = vmatpush.msra.mxu0 0.0
      %7676 = vmatpush.msra.mxu0 0.0
      %7677 = vmatpush.msra.mxu0 0.0
      %7678 = vmatpush.msra.mxu0 0.0
      %7679 = vmatpush.msra.mxu0 0.0
      %7680 = vmatpush.msra.mxu0 0.0
      %7681 = vmatpush.msra.mxu0 0.0
      %7682 = vmatpush.msra.mxu0 %v7516
      %7683 = vmatpush.msra.mxu0 %v7514
      %7684 = vmatmul.f32.gmra.mxu0 %v7526
      %v7685 = vpop.f32.mrf.mxu0
      %v7686 = vadd.f32 0.0, %v7685
      %7687 = vmatmul.f32.gmra.mxu0 %v7529
      %v7688 = vpop.f32.mrf.mxu0
      %v7689 = vadd.f32 0.0, %v7688
      %7690 = vmatmul.f32.gmra.mxu0 %v7532
      %v7691 = vpop.f32.mrf.mxu0
      %v7692 = vadd.f32 0.0, %v7691
      %7693 = vmatmul.f32.gmra.mxu0 %v7535
      %v7694 = vpop.f32.mrf.mxu0
      %v7695 = vadd.f32 0.0, %v7694
      %7696 = vmatmul.f32.gmra.mxu0 %v7538
      %v7697 = vpop.f32.mrf.mxu0
      %v7698 = vadd.f32 0.0, %v7697
      %7699 = vdwg.mxu0
      %v7701 = vsel %vm7524, %v6208, 0
      %v7704 = vsel %vm7524, %v6209, 0
      %v7707 = vsel %vm7524, %v6210, 0
      %v7710 = vsel %vm7524, %v6211, 0
      %v7713 = vsel %vm7524, %v6212, 0
      %7715 = vmatpush.msra.mxu0 0.0
      %7716 = vmatpush.msra.mxu0 0.0
      %7717 = vmatpush.msra.mxu0 0.0
      %7718 = vmatpush.msra.mxu0 0.0
      %7719 = vmatpush.msra.mxu0 0.0
      %7720 = vmatpush.msra.mxu0 0.0
      %7721 = vmatpush.msra.mxu0 0.0
      %7722 = vmatpush.msra.mxu0 0.0
      %7723 = vmatpush.msra.mxu0 0.0
      %7724 = vmatpush.msra.mxu0 0.0
      %7725 = vmatpush.msra.mxu0 0.0
      %7726 = vmatpush.msra.mxu0 0.0
      %7727 = vmatpush.msra.mxu0 0.0
      %7728 = vmatpush.msra.mxu0 0.0
      %7729 = vmatpush.msra.mxu0 %v5982
      %7730 = vmatpush.msra.mxu0 %v5980
      %7731 = vmatmul.f32.gmra.mxu0 %v7701
      %v7732 = vpop.f32.mrf.mxu0
      %v7733 = vadd.f32 %v7558, %v7732
      %7734 = vmatmul.f32.gmra.mxu0 %v7704
      %v7735 = vpop.f32.mrf.mxu0
      %v7736 = vadd.f32 %v7561, %v7735
      %7737 = vmatmul.f32.gmra.mxu0 %v7707
      %v7738 = vpop.f32.mrf.mxu0
      %v7739 = vadd.f32 %v7564, %v7738
      %7740 = vmatmul.f32.gmra.mxu0 %v7710
      %v7741 = vpop.f32.mrf.mxu0
      %v7742 = vadd.f32 %v7567, %v7741
      %7743 = vmatmul.f32.gmra.mxu0 %v7713
      %v7744 = vpop.f32.mrf.mxu0
      %v7745 = vadd.f32 %v7570, %v7744
      %7746 = vdwg.mxu0
      %7747 = vmatpush.msra.mxu0 0.0
      %7748 = vmatpush.msra.mxu0 0.0
      %7749 = vmatpush.msra.mxu0 0.0
      %7750 = vmatpush.msra.mxu0 0.0
      %7751 = vmatpush.msra.mxu0 0.0
      %7752 = vmatpush.msra.mxu0 0.0
      %7753 = vmatpush.msra.mxu0 0.0
      %7754 = vmatpush.msra.mxu0 0.0
      %7755 = vmatpush.msra.mxu0 0.0
      %7756 = vmatpush.msra.mxu0 0.0
      %7757 = vmatpush.msra.mxu0 0.0
      %7758 = vmatpush.msra.mxu0 0.0
      %7759 = vmatpush.msra.mxu0 0.0
      %7760 = vmatpush.msra.mxu0 0.0
      %7761 = vmatpush.msra.mxu0 %v6038
      %7762 = vmatpush.msra.mxu0 %v6036
      %7763 = vmatmul.f32.gmra.mxu0 %v7701
      %v7764 = vpop.f32.mrf.mxu0
      %v7765 = vadd.f32 %v7590, %v7764
      %7766 = vmatmul.f32.gmra.mxu0 %v7704
      %v7767 = vpop.f32.mrf.mxu0
      %v7768 = vadd.f32 %v7593, %v7767
      %7769 = vmatmul.f32.gmra.mxu0 %v7707
      %v7770 = vpop.f32.mrf.mxu0
      %v7771 = vadd.f32 %v7596, %v7770
      %7772 = vmatmul.f32.gmra.mxu0 %v7710
      %v7773 = vpop.f32.mrf.mxu0
      %v7774 = vadd.f32 %v7599, %v7773
      %7775 = vmatmul.f32.gmra.mxu0 %v7713
      %v7776 = vpop.f32.mrf.mxu0
      %v7777 = vadd.f32 %v7602, %v7776
      %7778 = vdwg.mxu0
      %7779 = vmatpush.msra.mxu0 0.0
      %7780 = vmatpush.msra.mxu0 0.0
      %7781 = vmatpush.msra.mxu0 0.0
      %7782 = vmatpush.msra.mxu0 0.0
      %7783 = vmatpush.msra.mxu0 0.0
      %7784 = vmatpush.msra.mxu0 0.0
      %7785 = vmatpush.msra.mxu0 0.0
      %7786 = vmatpush.msra.mxu0 0.0
      %7787 = vmatpush.msra.mxu0 0.0
      %7788 = vmatpush.msra.mxu0 0.0
      %7789 = vmatpush.msra.mxu0 0.0
      %7790 = vmatpush.msra.mxu0 0.0
      %7791 = vmatpush.msra.mxu0 0.0
      %7792 = vmatpush.msra.mxu0 0.0
      %7793 = vmatpush.msra.mxu0 %v6094
      %7794 = vmatpush.msra.mxu0 %v6092
      %7795 = vmatmul.f32.gmra.mxu0 %v7701
      %v7796 = vpop.f32.mrf.mxu0
      %v7797 = vadd.f32 %v7622, %v7796
      %7798 = vmatmul.f32.gmra.mxu0 %v7704
      %v7799 = vpop.f32.mrf.mxu0
      %v7800 = vadd.f32 %v7625, %v7799
      %7801 = vmatmul.f32.gmra.mxu0 %v7707
      %v7802 = vpop.f32.mrf.mxu0
      %v7803 = vadd.f32 %v7628, %v7802
      %7804 = vmatmul.f32.gmra.mxu0 %v7710
      %v7805 = vpop.f32.mrf.mxu0
      %v7806 = vadd.f32 %v7631, %v7805
      %7807 = vmatmul.f32.gmra.mxu0 %v7713
      %v7808 = vpop.f32.mrf.mxu0
      %v7809 = vadd.f32 %v7634, %v7808
      %7810 = vdwg.mxu0
      %7811 = vmatpush.msra.mxu0 0.0
      %7812 = vmatpush.msra.mxu0 0.0
      %7813 = vmatpush.msra.mxu0 0.0
      %7814 = vmatpush.msra.mxu0 0.0
      %7815 = vmatpush.msra.mxu0 0.0
      %7816 = vmatpush.msra.mxu0 0.0
      %7817 = vmatpush.msra.mxu0 0.0
      %7818 = vmatpush.msra.mxu0 0.0
      %7819 = vmatpush.msra.mxu0 0.0
      %7820 = vmatpush.msra.mxu0 0.0
      %7821 = vmatpush.msra.mxu0 0.0
      %7822 = vmatpush.msra.mxu0 0.0
      %7823 = vmatpush.msra.mxu0 0.0
      %7824 = vmatpush.msra.mxu0 0.0
      %7825 = vmatpush.msra.mxu0 %v6150
      %7826 = vmatpush.msra.mxu0 %v6148
      %7827 = vmatmul.f32.gmra.mxu0 %v7701
      %v7828 = vpop.f32.mrf.mxu0
      %v7829 = vadd.f32 %v7654, %v7828
      %7830 = vmatmul.f32.gmra.mxu0 %v7704
      %v7831 = vpop.f32.mrf.mxu0
      %v7832 = vadd.f32 %v7657, %v7831
      %7833 = vmatmul.f32.gmra.mxu0 %v7707
      %v7834 = vpop.f32.mrf.mxu0
      %v7835 = vadd.f32 %v7660, %v7834
      %7836 = vmatmul.f32.gmra.mxu0 %v7710
      %v7837 = vpop.f32.mrf.mxu0
      %v7838 = vadd.f32 %v7663, %v7837
      %7839 = vmatmul.f32.gmra.mxu0 %v7713
      %v7840 = vpop.f32.mrf.mxu0
      %v7841 = vadd.f32 %v7666, %v7840
      %7842 = vdwg.mxu0
      %7843 = vmatpush.msra.mxu0 0.0
      %7844 = vmatpush.msra.mxu0 0.0
      %7845 = vmatpush.msra.mxu0 0.0
      %7846 = vmatpush.msra.mxu0 0.0
      %7847 = vmatpush.msra.mxu0 0.0
      %7848 = vmatpush.msra.mxu0 0.0
      %7849 = vmatpush.msra.mxu0 0.0
      %7850 = vmatpush.msra.mxu0 0.0
      %7851 = vmatpush.msra.mxu0 0.0
      %7852 = vmatpush.msra.mxu0 0.0
      %7853 = vmatpush.msra.mxu0 0.0
      %7854 = vmatpush.msra.mxu0 0.0
      %7855 = vmatpush.msra.mxu0 0.0
      %7856 = vmatpush.msra.mxu0 0.0
      %7857 = vmatpush.msra.mxu0 %v6206
      %7858 = vmatpush.msra.mxu0 %v6204
      %7859 = vmatmul.f32.gmra.mxu0 %v7701
      %v7860 = vpop.f32.mrf.mxu0
      %v7861 = vadd.f32 %v7686, %v7860
      %7862 = vmatmul.f32.gmra.mxu0 %v7704
      %v7863 = vpop.f32.mrf.mxu0
      %v7864 = vadd.f32 %v7689, %v7863
      %7865 = vmatmul.f32.gmra.mxu0 %v7707
      %v7866 = vpop.f32.mrf.mxu0
      %v7867 = vadd.f32 %v7692, %v7866
      %7868 = vmatmul.f32.gmra.mxu0 %v7710
      %v7869 = vpop.f32.mrf.mxu0
      %v7870 = vadd.f32 %v7695, %v7869
      %7871 = vmatmul.f32.gmra.mxu0 %v7713
      %v7872 = vpop.f32.mrf.mxu0
      %v7873 = vadd.f32 %v7698, %v7872
      %7874 = vdwg.mxu0
      %s7875 = scalar_lea.vmem %s6, 2560
      %v7876 = vld [vmem:[%s7875] sm:$0xff]
      %v7877 = vld [vmem:[%s7875 + $0x8] sm:$0xff]
      %v7878 = vld [vmem:[%s7875 + $0x10] sm:$0xf]
      %v7879 = vld [vmem:[%s7875 + $0x14] sm:$0xff]
      %v7880 = vld [vmem:[%s7875 + $0x1c] sm:$0xff]
      %v7881 = vld [vmem:[%s7875 + $0x24] sm:$0xf]
      %v7882 = vld [vmem:[%s7875 + $0x28] sm:$0xff]
      %v7883 = vld [vmem:[%s7875 + $0x30] sm:$0xff]
      %v7884 = vld [vmem:[%s7875 + $0x38] sm:$0xf]
      %v7885 = vld [vmem:[%s7875 + $0x3c] sm:$0xff]
      %v7886 = vld [vmem:[%s7875 + $0x44] sm:$0xff]
      %v7887 = vld [vmem:[%s7875 + $0x4c] sm:$0xf]
      %v7888 = vld [vmem:[%s7875 + $0x50] sm:$0xff]
      %v7889 = vld [vmem:[%s7875 + $0x58] sm:$0xff]
      %v7890 = vld [vmem:[%s7875 + $0x60] sm:$0xf]
      %v7891 = vld [vmem:[%s7875 + $0x64] sm:$0xff]
      %v7892 = vld [vmem:[%s7875 + $0x6c] sm:$0xff]
      %v7893 = vld [vmem:[%s7875 + $0x74] sm:$0xf]
      %v7894 = vld [vmem:[%s7875 + $0x78] sm:$0xff]
      %v7895 = vld [vmem:[%s7875 + $0x80] sm:$0xff]
      %v7896 = vld [vmem:[%s7875 + $0x88] sm:$0xf]
      %v7897 = vld [vmem:[%s7875 + $0x8c] sm:$0xff]
      %v7898 = vld [vmem:[%s7875 + $0x94] sm:$0xff]
      %v7899 = vld [vmem:[%s7875 + $0x9c] sm:$0xf]
      %v7900 = vld [vmem:[%s7875 + $0xa0] sm:$0xff]
      %v7901 = vld [vmem:[%s7875 + $0xa8] sm:$0xff]
      %v7902 = vld [vmem:[%s7875 + $0xb0] sm:$0xf]
      %v7903 = vld [vmem:[%s7875 + $0xb4] sm:$0xff]
      %v7904 = vld [vmem:[%s7875 + $0xbc] sm:$0xff]
      %v7905 = vld [vmem:[%s7875 + $0xc4] sm:$0xf]
      %v7906 = vld [vmem:[%s7875 + $0xc8] sm:$0xff]
      %v7907 = vld [vmem:[%s7875 + $0xd0] sm:$0xff]
      %v7908 = vld [vmem:[%s7875 + $0xd8] sm:$0xf]
      %v7909 = vld [vmem:[%s7875 + $0xdc] sm:$0xff]
      %v7910 = vld [vmem:[%s7875 + $0xe4] sm:$0xff]
      %v7911 = vld [vmem:[%s7875 + $0xec] sm:$0xf]
      %v7912 = vld [vmem:[%s7875 + $0xf0] sm:$0xff]
      %v7913 = vld [vmem:[%s7875 + $0xf8] sm:$0xff]
      %v7914 = vld [vmem:[%s7875 + $0x100] sm:$0xf]
      %v7915 = vld [vmem:[%s7875 + $0x104] sm:$0xff]
      %v7916 = vld [vmem:[%s7875 + $0x10c] sm:$0xff]
      %v7917 = vld [vmem:[%s7875 + $0x114] sm:$0xf]
      %v7918 = vld [vmem:[%s7875 + $0x118] sm:$0xff]
      %v7919 = vld [vmem:[%s7875 + $0x120] sm:$0xff]
      %v7920 = vld [vmem:[%s7875 + $0x128] sm:$0xf]
      %v7921 = vld [vmem:[%s7875 + $0x12c] sm:$0xff]
      %v7922 = vld [vmem:[%s7875 + $0x134] sm:$0xff]
      %v7923 = vld [vmem:[%s7875 + $0x13c] sm:$0xf]
      %v7924 = vld [vmem:[%s7875 + $0x140] sm:$0xff]
      %v7925 = vld [vmem:[%s7875 + $0x148] sm:$0xff]
      %v7926 = vld [vmem:[%s7875 + $0x150] sm:$0xf]
      %v7927 = vld [vmem:[%s7875 + $0x154] sm:$0xff]
      %v7928 = vld [vmem:[%s7875 + $0x15c] sm:$0xff]
      %v7929 = vld [vmem:[%s7875 + $0x164] sm:$0xf]
      %v7930 = vld [vmem:[%s7875 + $0x168] sm:$0xff]
      %v7931 = vld [vmem:[%s7875 + $0x170] sm:$0xff]
      %v7932 = vld [vmem:[%s7875 + $0x178] sm:$0xf]
      %v7933 = vld [vmem:[%s7875 + $0x17c] sm:$0xff]
      %v7934 = vld [vmem:[%s7875 + $0x184] sm:$0xff]
      %v7935 = vld [vmem:[%s7875 + $0x18c] sm:$0xf]
      %v7936 = vld [vmem:[%s7875 + $0x190] sm:$0xff]
      %v7937 = vld [vmem:[%s7875 + $0x198] sm:$0xff]
      %v7938 = vld [vmem:[%s7875 + $0x1a0] sm:$0xf]
      %v7939 = vld [vmem:[%s7875 + $0x1a4] sm:$0xff]
      %v7940 = vld [vmem:[%s7875 + $0x1ac] sm:$0xff]
      %v7941 = vld [vmem:[%s7875 + $0x1b4] sm:$0xf]
      %v7942 = vld [vmem:[%s7875 + $0x1b8] sm:$0xff]
      %v7943 = vld [vmem:[%s7875 + $0x1c0] sm:$0xff]
      %v7944 = vld [vmem:[%s7875 + $0x1c8] sm:$0xf]
      %v7945 = vld [vmem:[%s7875 + $0x1cc] sm:$0xff]
      %v7946 = vld [vmem:[%s7875 + $0x1d4] sm:$0xff]
      %v7947 = vld [vmem:[%s7875 + $0x1dc] sm:$0xf]
      %v7948 = vld [vmem:[%s7875 + $0x1e0] sm:$0xff]
      %v7949 = vld [vmem:[%s7875 + $0x1e8] sm:$0xff]
      %v7950 = vld [vmem:[%s7875 + $0x1f0] sm:$0xf]
      %v7951 = vld [vmem:[%s7875 + $0x1f4] sm:$0xff]
      %v7952 = vld [vmem:[%s7875 + $0x1fc] sm:$0xff]
      %v7953 = vld [vmem:[%s7875 + $0x204] sm:$0xf]
      %v7954 = vld [vmem:[%s7875 + $0x208] sm:$0xff]
      %v7955 = vld [vmem:[%s7875 + $0x210] sm:$0xff]
      %v7956 = vld [vmem:[%s7875 + $0x218] sm:$0xf]
      %v7957 = vld [vmem:[%s7875 + $0x21c] sm:$0xff]
      %v7958 = vld [vmem:[%s7875 + $0x224] sm:$0xff]
      %v7959 = vld [vmem:[%s7875 + $0x22c] sm:$0xf]
      %v7960 = vld [vmem:[%s7875 + $0x230] sm:$0xff]
      %v7961 = vld [vmem:[%s7875 + $0x238] sm:$0xff]
      %v7962 = vld [vmem:[%s7875 + $0x240] sm:$0xf]
      %v7963 = vld [vmem:[%s7875 + $0x244] sm:$0xff]
      %v7964 = vld [vmem:[%s7875 + $0x24c] sm:$0xff]
      %v7965 = vld [vmem:[%s7875 + $0x254] sm:$0xf]
      %v7966 = vld [vmem:[%s7875 + $0x258] sm:$0xff]
      %v7967 = vld [vmem:[%s7875 + $0x260] sm:$0xff]
      %v7968 = vld [vmem:[%s7875 + $0x268] sm:$0xf]
      %v7969 = vld [vmem:[%s7875 + $0x26c] sm:$0xff]
      %v7970 = vld [vmem:[%s7875 + $0x274] sm:$0xff]
      %v7971 = vld [vmem:[%s7875 + $0x27c] sm:$0xf]
      %v7972 = vld [vmem:[%s7875 + $0x280] sm:$0xff]
      %v7973 = vld [vmem:[%s7875 + $0x288] sm:$0xff]
      %v7974 = vld [vmem:[%s7875 + $0x290] sm:$0xf]
      %v7975 = vld [vmem:[%s7875 + $0x294] sm:$0xff]
      %v7976 = vld [vmem:[%s7875 + $0x29c] sm:$0xff]
      %v7977 = vld [vmem:[%s7875 + $0x2a4] sm:$0xf]
      %v7978 = vld [vmem:[%s7875 + $0x2a8] sm:$0xff]
      %v7979 = vld [vmem:[%s7875 + $0x2b0] sm:$0xff]
      %v7980 = vld [vmem:[%s7875 + $0x2b8] sm:$0xf]
      %v7981 = vld [vmem:[%s7875 + $0x2bc] sm:$0xff]
      %v7982 = vld [vmem:[%s7875 + $0x2c4] sm:$0xff]
      %v7983 = vld [vmem:[%s7875 + $0x2cc] sm:$0xf]
      %v7984 = vld [vmem:[%s7875 + $0x2d0] sm:$0xff]
      %v7985 = vld [vmem:[%s7875 + $0x2d8] sm:$0xff]
      %v7986 = vld [vmem:[%s7875 + $0x2e0] sm:$0xf]
      %v7987 = vld [vmem:[%s7875 + $0x2e4] sm:$0xff]
      %v7988 = vld [vmem:[%s7875 + $0x2ec] sm:$0xff]
      %v7989 = vld [vmem:[%s7875 + $0x2f4] sm:$0xf]
      %v7990 = vld [vmem:[%s7875 + $0x2f8] sm:$0xff]
      %v7991 = vld [vmem:[%s7875 + $0x300] sm:$0xff]
      %v7992 = vld [vmem:[%s7875 + $0x308] sm:$0xf]
      %v7993 = vld [vmem:[%s7875 + $0x30c] sm:$0xff]
      %v7994 = vld [vmem:[%s7875 + $0x314] sm:$0xff]
      %v7995 = vld [vmem:[%s7875 + $0x31c] sm:$0xf]
      %v7996 = vld [vmem:[%s7875 + $0x320] sm:$0xff]
      %v7997 = vld [vmem:[%s7875 + $0x328] sm:$0xff]
      %v7998 = vld [vmem:[%s7875 + $0x330] sm:$0xf]
      %v7999 = vld [vmem:[%s7875 + $0x334] sm:$0xff]
      %v8000 = vld [vmem:[%s7875 + $0x33c] sm:$0xff]
      %v8001 = vld [vmem:[%s7875 + $0x344] sm:$0xf]
      %v8002 = vld [vmem:[%s7875 + $0x348] sm:$0xff]
      %v8003 = vld [vmem:[%s7875 + $0x350] sm:$0xff]
      %v8004 = vld [vmem:[%s7875 + $0x358] sm:$0xf]
      %v8005 = vld [vmem:[%s7875 + $0x35c] sm:$0xff]
      %v8006 = vld [vmem:[%s7875 + $0x364] sm:$0xff]
      %v8007 = vld [vmem:[%s7875 + $0x36c] sm:$0xf]
      %v8008 = vld [vmem:[%s7875 + $0x370] sm:$0xff]
      %v8009 = vld [vmem:[%s7875 + $0x378] sm:$0xff]
      %v8010 = vld [vmem:[%s7875 + $0x380] sm:$0xf]
      %v8011 = vld [vmem:[%s7875 + $0x384] sm:$0xff]
      %v8012 = vld [vmem:[%s7875 + $0x38c] sm:$0xff]
      %v8013 = vld [vmem:[%s7875 + $0x394] sm:$0xf]
      %v8014 = vld [vmem:[%s7875 + $0x398] sm:$0xff]
      %v8015 = vld [vmem:[%s7875 + $0x3a0] sm:$0xff]
      %v8016 = vld [vmem:[%s7875 + $0x3a8] sm:$0xf]
      %v8017 = vld [vmem:[%s7875 + $0x3ac] sm:$0xff]
      %v8018 = vld [vmem:[%s7875 + $0x3b4] sm:$0xff]
      %v8019 = vld [vmem:[%s7875 + $0x3bc] sm:$0xf]
      %v8020 = vld [vmem:[%s7875 + $0x3c0] sm:$0xff]
      %v8021 = vld [vmem:[%s7875 + $0x3c8] sm:$0xff]
      %v8022 = vld [vmem:[%s7875 + $0x3d0] sm:$0xf]
      %v8023 = vld [vmem:[%s7875 + $0x3d4] sm:$0xff]
      %v8024 = vld [vmem:[%s7875 + $0x3dc] sm:$0xff]
      %v8025 = vld [vmem:[%s7875 + $0x3e4] sm:$0xf]
      %v8026 = vld [vmem:[%s7875 + $0x3e8] sm:$0xff]
      %v8027 = vld [vmem:[%s7875 + $0x3f0] sm:$0xff]
      %v8028 = vld [vmem:[%s7875 + $0x3f8] sm:$0xf]
      %v8029 = vld [vmem:[%s7875 + $0x3fc] sm:$0xff]
      %v8030 = vld [vmem:[%s7875 + $0x404] sm:$0xff]
      %v8031 = vld [vmem:[%s7875 + $0x40c] sm:$0xf]
      %v8032 = vld [vmem:[%s7875 + $0x410] sm:$0xff]
      %v8033 = vld [vmem:[%s7875 + $0x418] sm:$0xff]
      %v8034 = vld [vmem:[%s7875 + $0x420] sm:$0xf]
      %v8035 = vld [vmem:[%s7875 + $0x424] sm:$0xff]
      %v8036 = vld [vmem:[%s7875 + $0x42c] sm:$0xff]
      %v8037 = vld [vmem:[%s7875 + $0x434] sm:$0xf]
      %v8038 = vld [vmem:[%s7875 + $0x438] sm:$0xff]
      %v8039 = vld [vmem:[%s7875 + $0x440] sm:$0xff]
      %v8040 = vld [vmem:[%s7875 + $0x448] sm:$0xf]
      %v8041 = vld [vmem:[%s7875 + $0x44c] sm:$0xff]
      %v8042 = vld [vmem:[%s7875 + $0x454] sm:$0xff]
      %v8043 = vld [vmem:[%s7875 + $0x45c] sm:$0xf]
      %v8044 = vld [vmem:[%s7875 + $0x460] sm:$0xff]
      %v8045 = vld [vmem:[%s7875 + $0x468] sm:$0xff]
      %v8046 = vld [vmem:[%s7875 + $0x470] sm:$0xf]
      %v8047 = vld [vmem:[%s7875 + $0x474] sm:$0xff]
      %v8048 = vld [vmem:[%s7875 + $0x47c] sm:$0xff]
      %v8049 = vld [vmem:[%s7875 + $0x484] sm:$0xf]
      %v8050 = vld [vmem:[%s7875 + $0x488] sm:$0xff]
      %v8051 = vld [vmem:[%s7875 + $0x490] sm:$0xff]
      %v8052 = vld [vmem:[%s7875 + $0x498] sm:$0xf]
      %v8053 = vld [vmem:[%s7875 + $0x49c] sm:$0xff]
      %v8054 = vld [vmem:[%s7875 + $0x4a4] sm:$0xff]
      %v8055 = vld [vmem:[%s7875 + $0x4ac] sm:$0xf]
      %v8056 = vld [vmem:[%s7875 + $0x4b0] sm:$0xff]
      %v8057 = vld [vmem:[%s7875 + $0x4b8] sm:$0xff]
      %v8058 = vld [vmem:[%s7875 + $0x4c0] sm:$0xf]
      %v8059 = vld [vmem:[%s7875 + $0x4c4] sm:$0xff]
      %v8060 = vld [vmem:[%s7875 + $0x4cc] sm:$0xff]
      %v8061 = vld [vmem:[%s7875 + $0x4d4] sm:$0xf]
      %v8062 = vld [vmem:[%s7875 + $0x4d8] sm:$0xff]
      %v8063 = vld [vmem:[%s7875 + $0x4e0] sm:$0xff]
      %v8064 = vld [vmem:[%s7875 + $0x4e8] sm:$0xf]
      %v8065 = vld [vmem:[%s7875 + $0x4ec] sm:$0xff]
      %v8066 = vld [vmem:[%s7875 + $0x4f4] sm:$0xff]
      %v8067 = vld [vmem:[%s7875 + $0x4fc] sm:$0xf]
      %v8260 = vunpack.c.l.b16 %v7876
      %v8261 = vunpack.c.h.b16 %v7876
      %v8262 = vunpack.c.l.b16 %v7877
      %v8263 = vunpack.c.h.b16 %v7877
      %v8264 = vunpack.c.l.b16 %v7878
      %v8265 = vunpack.c.l.b16 %v7879
      %v8266 = vunpack.c.h.b16 %v7879
      %v8267 = vunpack.c.l.b16 %v7880
      %v8268 = vunpack.c.h.b16 %v7880
      %v8269 = vunpack.c.l.b16 %v7881
      %v8270 = vunpack.c.l.b16 %v7882
      %v8271 = vunpack.c.h.b16 %v7882
      %v8272 = vunpack.c.l.b16 %v7883
      %v8273 = vunpack.c.h.b16 %v7883
      %v8274 = vunpack.c.l.b16 %v7884
      %v8275 = vunpack.c.l.b16 %v7885
      %v8276 = vunpack.c.h.b16 %v7885
      %v8277 = vunpack.c.l.b16 %v7886
      %v8278 = vunpack.c.h.b16 %v7886
      %v8279 = vunpack.c.l.b16 %v7887
      %v8280 = vunpack.c.l.b16 %v7888
      %v8281 = vunpack.c.h.b16 %v7888
      %v8282 = vunpack.c.l.b16 %v7889
      %v8283 = vunpack.c.h.b16 %v7889
      %v8284 = vunpack.c.l.b16 %v7890
      %v8285 = vunpack.c.l.b16 %v7891
      %v8286 = vunpack.c.h.b16 %v7891
      %v8287 = vunpack.c.l.b16 %v7892
      %v8288 = vunpack.c.h.b16 %v7892
      %v8289 = vunpack.c.l.b16 %v7893
      %v8290 = vunpack.c.l.b16 %v7894
      %v8291 = vunpack.c.h.b16 %v7894
      %v8292 = vunpack.c.l.b16 %v7895
      %v8293 = vunpack.c.h.b16 %v7895
      %v8294 = vunpack.c.l.b16 %v7896
      %v8295 = vunpack.c.l.b16 %v7897
      %v8296 = vunpack.c.h.b16 %v7897
      %v8297 = vunpack.c.l.b16 %v7898
      %v8298 = vunpack.c.h.b16 %v7898
      %v8299 = vunpack.c.l.b16 %v7899
      %v8300 = vunpack.c.l.b16 %v7900
      %v8301 = vunpack.c.h.b16 %v7900
      %v8302 = vunpack.c.l.b16 %v7901
      %v8303 = vunpack.c.h.b16 %v7901
      %v8304 = vunpack.c.l.b16 %v7902
      %v8305 = vunpack.c.l.b16 %v7903
      %v8306 = vunpack.c.h.b16 %v7903
      %v8307 = vunpack.c.l.b16 %v7904
      %v8308 = vunpack.c.h.b16 %v7904
      %v8309 = vunpack.c.l.b16 %v7905
      %v8310 = vunpack.c.l.b16 %v7906
      %v8311 = vunpack.c.h.b16 %v7906
      %v8312 = vunpack.c.l.b16 %v7907
      %v8313 = vunpack.c.h.b16 %v7907
      %v8314 = vunpack.c.l.b16 %v7908
      %v8315 = vunpack.c.l.b16 %v7909
      %v8316 = vunpack.c.h.b16 %v7909
      %v8317 = vunpack.c.l.b16 %v7910
      %v8318 = vunpack.c.h.b16 %v7910
      %v8319 = vunpack.c.l.b16 %v7911
      %v8320 = vunpack.c.l.b16 %v7912
      %v8321 = vunpack.c.h.b16 %v7912
      %v8322 = vunpack.c.l.b16 %v7913
      %v8323 = vunpack.c.h.b16 %v7913
      %v8324 = vunpack.c.l.b16 %v7914
      %v8325 = vunpack.c.l.b16 %v7915
      %v8326 = vunpack.c.h.b16 %v7915
      %v8327 = vunpack.c.l.b16 %v7916
      %v8328 = vunpack.c.h.b16 %v7916
      %v8329 = vunpack.c.l.b16 %v7917
      %v8330 = vunpack.c.l.b16 %v7918
      %v8331 = vunpack.c.h.b16 %v7918
      %v8332 = vunpack.c.l.b16 %v7919
      %v8333 = vunpack.c.h.b16 %v7919
      %v8334 = vunpack.c.l.b16 %v7920
      %v8335 = vunpack.c.l.b16 %v7921
      %v8336 = vunpack.c.h.b16 %v7921
      %v8337 = vunpack.c.l.b16 %v7922
      %v8338 = vunpack.c.h.b16 %v7922
      %v8339 = vunpack.c.l.b16 %v7923
      %v8340 = vunpack.c.l.b16 %v7924
      %v8341 = vunpack.c.h.b16 %v7924
      %v8342 = vunpack.c.l.b16 %v7925
      %v8343 = vunpack.c.h.b16 %v7925
      %v8344 = vunpack.c.l.b16 %v7926
      %v8345 = vunpack.c.l.b16 %v7927
      %v8346 = vunpack.c.h.b16 %v7927
      %v8347 = vunpack.c.l.b16 %v7928
      %v8348 = vunpack.c.h.b16 %v7928
      %v8349 = vunpack.c.l.b16 %v7929
      %v8350 = vunpack.c.l.b16 %v7930
      %v8351 = vunpack.c.h.b16 %v7930
      %v8352 = vunpack.c.l.b16 %v7931
      %v8353 = vunpack.c.h.b16 %v7931
      %v8354 = vunpack.c.l.b16 %v7932
      %v8355 = vunpack.c.l.b16 %v7933
      %v8356 = vunpack.c.h.b16 %v7933
      %v8357 = vunpack.c.l.b16 %v7934
      %v8358 = vunpack.c.h.b16 %v7934
      %v8359 = vunpack.c.l.b16 %v7935
      %v8360 = vunpack.c.l.b16 %v7936
      %v8361 = vunpack.c.h.b16 %v7936
      %v8362 = vunpack.c.l.b16 %v7937
      %v8363 = vunpack.c.h.b16 %v7937
      %v8364 = vunpack.c.l.b16 %v7938
      %v8365 = vunpack.c.l.b16 %v7939
      %v8366 = vunpack.c.h.b16 %v7939
      %v8367 = vunpack.c.l.b16 %v7940
      %v8368 = vunpack.c.h.b16 %v7940
      %v8369 = vunpack.c.l.b16 %v7941
      %v8370 = vunpack.c.l.b16 %v7942
      %v8371 = vunpack.c.h.b16 %v7942
      %v8372 = vunpack.c.l.b16 %v7943
      %v8373 = vunpack.c.h.b16 %v7943
      %v8374 = vunpack.c.l.b16 %v7944
      %v8375 = vunpack.c.l.b16 %v7945
      %v8376 = vunpack.c.h.b16 %v7945
      %v8377 = vunpack.c.l.b16 %v7946
      %v8378 = vunpack.c.h.b16 %v7946
      %v8379 = vunpack.c.l.b16 %v7947
      %v8380 = vunpack.c.l.b16 %v7948
      %v8381 = vunpack.c.h.b16 %v7948
      %v8382 = vunpack.c.l.b16 %v7949
      %v8383 = vunpack.c.h.b16 %v7949
      %v8384 = vunpack.c.l.b16 %v7950
      %v8385 = vunpack.c.l.b16 %v7951
      %v8386 = vunpack.c.h.b16 %v7951
      %v8387 = vunpack.c.l.b16 %v7952
      %v8388 = vunpack.c.h.b16 %v7952
      %v8389 = vunpack.c.l.b16 %v7953
      %v8390 = vunpack.c.l.b16 %v7954
      %v8391 = vunpack.c.h.b16 %v7954
      %v8392 = vunpack.c.l.b16 %v7955
      %v8393 = vunpack.c.h.b16 %v7955
      %v8394 = vunpack.c.l.b16 %v7956
      %v8395 = vunpack.c.l.b16 %v7957
      %v8396 = vunpack.c.h.b16 %v7957
      %v8397 = vunpack.c.l.b16 %v7958
      %v8398 = vunpack.c.h.b16 %v7958
      %v8399 = vunpack.c.l.b16 %v7959
      %v8400 = vunpack.c.l.b16 %v7960
      %v8401 = vunpack.c.h.b16 %v7960
      %v8402 = vunpack.c.l.b16 %v7961
      %v8403 = vunpack.c.h.b16 %v7961
      %v8404 = vunpack.c.l.b16 %v7962
      %v8405 = vunpack.c.l.b16 %v7963
      %v8406 = vunpack.c.h.b16 %v7963
      %v8407 = vunpack.c.l.b16 %v7964
      %v8408 = vunpack.c.h.b16 %v7964
      %v8409 = vunpack.c.l.b16 %v7965
      %v8410 = vunpack.c.l.b16 %v7966
      %v8411 = vunpack.c.h.b16 %v7966
      %v8412 = vunpack.c.l.b16 %v7967
      %v8413 = vunpack.c.h.b16 %v7967
      %v8414 = vunpack.c.l.b16 %v7968
      %v8415 = vunpack.c.l.b16 %v7969
      %v8416 = vunpack.c.h.b16 %v7969
      %v8417 = vunpack.c.l.b16 %v7970
      %v8418 = vunpack.c.h.b16 %v7970
      %v8419 = vunpack.c.l.b16 %v7971
      %v8420 = vunpack.c.l.b16 %v7972
      %v8421 = vunpack.c.h.b16 %v7972
      %v8422 = vunpack.c.l.b16 %v7973
      %v8423 = vunpack.c.h.b16 %v7973
      %v8424 = vunpack.c.l.b16 %v7974
      %v8425 = vunpack.c.l.b16 %v7975
      %v8426 = vunpack.c.h.b16 %v7975
      %v8427 = vunpack.c.l.b16 %v7976
      %v8428 = vunpack.c.h.b16 %v7976
      %v8429 = vunpack.c.l.b16 %v7977
      %v8430 = vunpack.c.l.b16 %v7978
      %v8431 = vunpack.c.h.b16 %v7978
      %v8432 = vunpack.c.l.b16 %v7979
      %v8433 = vunpack.c.h.b16 %v7979
      %v8434 = vunpack.c.l.b16 %v7980
      %v8435 = vunpack.c.l.b16 %v7981
      %v8436 = vunpack.c.h.b16 %v7981
      %v8437 = vunpack.c.l.b16 %v7982
      %v8438 = vunpack.c.h.b16 %v7982
      %v8439 = vunpack.c.l.b16 %v7983
      %v8440 = vunpack.c.l.b16 %v7984
      %v8441 = vunpack.c.h.b16 %v7984
      %v8442 = vunpack.c.l.b16 %v7985
      %v8443 = vunpack.c.h.b16 %v7985
      %v8444 = vunpack.c.l.b16 %v7986
      %v8445 = vunpack.c.l.b16 %v7987
      %v8446 = vunpack.c.h.b16 %v7987
      %v8447 = vunpack.c.l.b16 %v7988
      %v8448 = vunpack.c.h.b16 %v7988
      %v8449 = vunpack.c.l.b16 %v7989
      %v8450 = vunpack.c.l.b16 %v7990
      %v8451 = vunpack.c.h.b16 %v7990
      %v8452 = vunpack.c.l.b16 %v7991
      %v8453 = vunpack.c.h.b16 %v7991
      %v8454 = vunpack.c.l.b16 %v7992
      %v8455 = vunpack.c.l.b16 %v7993
      %v8456 = vunpack.c.h.b16 %v7993
      %v8457 = vunpack.c.l.b16 %v7994
      %v8458 = vunpack.c.h.b16 %v7994
      %v8459 = vunpack.c.l.b16 %v7995
      %v8460 = vunpack.c.l.b16 %v7996
      %v8461 = vunpack.c.h.b16 %v7996
      %v8462 = vunpack.c.l.b16 %v7997
      %v8463 = vunpack.c.h.b16 %v7997
      %v8464 = vunpack.c.l.b16 %v7998
      %v8465 = vunpack.c.l.b16 %v7999
      %v8466 = vunpack.c.h.b16 %v7999
      %v8467 = vunpack.c.l.b16 %v8000
      %v8468 = vunpack.c.h.b16 %v8000
      %v8469 = vunpack.c.l.b16 %v8001
      %v8470 = vunpack.c.l.b16 %v8002
      %v8471 = vunpack.c.h.b16 %v8002
      %v8472 = vunpack.c.l.b16 %v8003
      %v8473 = vunpack.c.h.b16 %v8003
      %v8474 = vunpack.c.l.b16 %v8004
      %v8475 = vunpack.c.l.b16 %v8005
      %v8476 = vunpack.c.h.b16 %v8005
      %v8477 = vunpack.c.l.b16 %v8006
      %v8478 = vunpack.c.h.b16 %v8006
      %v8479 = vunpack.c.l.b16 %v8007
      %v8480 = vunpack.c.l.b16 %v8008
      %v8481 = vunpack.c.h.b16 %v8008
      %v8482 = vunpack.c.l.b16 %v8009
      %v8483 = vunpack.c.h.b16 %v8009
      %v8484 = vunpack.c.l.b16 %v8010
      %v8485 = vunpack.c.l.b16 %v8011
      %v8486 = vunpack.c.h.b16 %v8011
      %v8487 = vunpack.c.l.b16 %v8012
      %v8488 = vunpack.c.h.b16 %v8012
      %v8489 = vunpack.c.l.b16 %v8013
      %v8490 = vunpack.c.l.b16 %v8014
      %v8491 = vunpack.c.h.b16 %v8014
      %v8492 = vunpack.c.l.b16 %v8015
      %v8493 = vunpack.c.h.b16 %v8015
      %v8494 = vunpack.c.l.b16 %v8016
      %v8495 = vunpack.c.l.b16 %v8017
      %v8496 = vunpack.c.h.b16 %v8017
      %v8497 = vunpack.c.l.b16 %v8018
      %v8498 = vunpack.c.h.b16 %v8018
      %v8499 = vunpack.c.l.b16 %v8019
      %v8500 = vunpack.c.l.b16 %v8020
      %v8501 = vunpack.c.h.b16 %v8020
      %v8502 = vunpack.c.l.b16 %v8021
      %v8503 = vunpack.c.h.b16 %v8021
      %v8504 = vunpack.c.l.b16 %v8022
      %v8505 = vunpack.c.l.b16 %v8023
      %v8506 = vunpack.c.h.b16 %v8023
      %v8507 = vunpack.c.l.b16 %v8024
      %v8508 = vunpack.c.h.b16 %v8024
      %v8509 = vunpack.c.l.b16 %v8025
      %v8510 = vunpack.c.l.b16 %v8026
      %v8511 = vunpack.c.h.b16 %v8026
      %v8512 = vunpack.c.l.b16 %v8027
      %v8513 = vunpack.c.h.b16 %v8027
      %v8514 = vunpack.c.l.b16 %v8028
      %v8515 = vunpack.c.l.b16 %v8029
      %v8516 = vunpack.c.h.b16 %v8029
      %v8517 = vunpack.c.l.b16 %v8030
      %v8518 = vunpack.c.h.b16 %v8030
      %v8519 = vunpack.c.l.b16 %v8031
      %v8520 = vunpack.c.l.b16 %v8032
      %v8521 = vunpack.c.h.b16 %v8032
      %v8522 = vunpack.c.l.b16 %v8033
      %v8523 = vunpack.c.h.b16 %v8033
      %v8524 = vunpack.c.l.b16 %v8034
      %v8525 = vunpack.c.l.b16 %v8035
      %v8526 = vunpack.c.h.b16 %v8035
      %v8527 = vunpack.c.l.b16 %v8036
      %v8528 = vunpack.c.h.b16 %v8036
      %v8529 = vunpack.c.l.b16 %v8037
      %v8530 = vunpack.c.l.b16 %v8038
      %v8531 = vunpack.c.h.b16 %v8038
      %v8532 = vunpack.c.l.b16 %v8039
      %v8533 = vunpack.c.h.b16 %v8039
      %v8534 = vunpack.c.l.b16 %v8040
      %v8535 = vunpack.c.l.b16 %v8041
      %v8536 = vunpack.c.h.b16 %v8041
      %v8537 = vunpack.c.l.b16 %v8042
      %v8538 = vunpack.c.h.b16 %v8042
      %v8539 = vunpack.c.l.b16 %v8043
      %v8540 = vunpack.c.l.b16 %v8044
      %v8541 = vunpack.c.h.b16 %v8044
      %v8542 = vunpack.c.l.b16 %v8045
      %v8543 = vunpack.c.h.b16 %v8045
      %v8544 = vunpack.c.l.b16 %v8046
      %v8545 = vunpack.c.l.b16 %v8047
      %v8546 = vunpack.c.h.b16 %v8047
      %v8547 = vunpack.c.l.b16 %v8048
      %v8548 = vunpack.c.h.b16 %v8048
      %v8549 = vunpack.c.l.b16 %v8049
      %v8550 = vunpack.c.l.b16 %v8050
      %v8551 = vunpack.c.h.b16 %v8050
      %v8552 = vunpack.c.l.b16 %v8051
      %v8553 = vunpack.c.h.b16 %v8051
      %v8554 = vunpack.c.l.b16 %v8052
      %v8555 = vunpack.c.l.b16 %v8053
      %v8556 = vunpack.c.h.b16 %v8053
      %v8557 = vunpack.c.l.b16 %v8054
      %v8558 = vunpack.c.h.b16 %v8054
      %v8559 = vunpack.c.l.b16 %v8055
      %v8560 = vunpack.c.l.b16 %v8056
      %v8561 = vunpack.c.h.b16 %v8056
      %v8562 = vunpack.c.l.b16 %v8057
      %v8563 = vunpack.c.h.b16 %v8057
      %v8564 = vunpack.c.l.b16 %v8058
      %v8565 = vunpack.c.l.b16 %v8059
      %v8566 = vunpack.c.h.b16 %v8059
      %v8567 = vunpack.c.l.b16 %v8060
      %v8568 = vunpack.c.h.b16 %v8060
      %v8569 = vunpack.c.l.b16 %v8061
      %v8570 = vunpack.c.l.b16 %v8062
      %v8571 = vunpack.c.h.b16 %v8062
      %v8572 = vunpack.c.l.b16 %v8063
      %v8573 = vunpack.c.h.b16 %v8063
      %v8574 = vunpack.c.l.b16 %v8064
      %v8575 = vunpack.c.l.b16 %v8065
      %v8576 = vunpack.c.h.b16 %v8065
      %v8577 = vunpack.c.l.b16 %v8066
      %v8578 = vunpack.c.h.b16 %v8066
      %v8579 = vunpack.c.l.b16 %v8067
      %v8580 = vpack.c.b16 %v8265, %v8260
      %v8581 = vpack.c.b16 %v8266, %v8261
      %v8582 = vpack.c.b16 %v8267, %v8262
      %v8583 = vpack.c.b16 %v8268, %v8263
      %v8584 = vpack.c.b16 %v8269, %v8264
      %v8585 = vpack.c.b16 %v8275, %v8270
      %v8586 = vpack.c.b16 %v8276, %v8271
      %v8587 = vpack.c.b16 %v8277, %v8272
      %v8588 = vpack.c.b16 %v8278, %v8273
      %v8589 = vpack.c.b16 %v8279, %v8274
      %v8590 = vpack.c.b16 %v8285, %v8280
      %v8591 = vpack.c.b16 %v8286, %v8281
      %v8592 = vpack.c.b16 %v8287, %v8282
      %v8593 = vpack.c.b16 %v8288, %v8283
      %v8594 = vpack.c.b16 %v8289, %v8284
      %v8595 = vpack.c.b16 %v8295, %v8290
      %v8596 = vpack.c.b16 %v8296, %v8291
      %v8597 = vpack.c.b16 %v8297, %v8292
      %v8598 = vpack.c.b16 %v8298, %v8293
      %v8599 = vpack.c.b16 %v8299, %v8294
      %v8600 = vpack.c.b16 %v8305, %v8300
      %v8601 = vpack.c.b16 %v8306, %v8301
      %v8602 = vpack.c.b16 %v8307, %v8302
      %v8603 = vpack.c.b16 %v8308, %v8303
      %v8604 = vpack.c.b16 %v8309, %v8304
      %v8605 = vpack.c.b16 %v8315, %v8310
      %v8606 = vpack.c.b16 %v8316, %v8311
      %v8607 = vpack.c.b16 %v8317, %v8312
      %v8608 = vpack.c.b16 %v8318, %v8313
      %v8609 = vpack.c.b16 %v8319, %v8314
      %v8610 = vpack.c.b16 %v8325, %v8320
      %v8611 = vpack.c.b16 %v8326, %v8321
      %v8612 = vpack.c.b16 %v8327, %v8322
      %v8613 = vpack.c.b16 %v8328, %v8323
      %v8614 = vpack.c.b16 %v8329, %v8324
      %v8615 = vpack.c.b16 %v8335, %v8330
      %v8616 = vpack.c.b16 %v8336, %v8331
      %v8617 = vpack.c.b16 %v8337, %v8332
      %v8618 = vpack.c.b16 %v8338, %v8333
      %v8619 = vpack.c.b16 %v8339, %v8334
      %v8620 = vpack.c.b16 %v8345, %v8340
      %v8621 = vpack.c.b16 %v8346, %v8341
      %v8622 = vpack.c.b16 %v8347, %v8342
      %v8623 = vpack.c.b16 %v8348, %v8343
      %v8624 = vpack.c.b16 %v8349, %v8344
      %v8625 = vpack.c.b16 %v8355, %v8350
      %v8626 = vpack.c.b16 %v8356, %v8351
      %v8627 = vpack.c.b16 %v8357, %v8352
      %v8628 = vpack.c.b16 %v8358, %v8353
      %v8629 = vpack.c.b16 %v8359, %v8354
      %v8630 = vpack.c.b16 %v8365, %v8360
      %v8631 = vpack.c.b16 %v8366, %v8361
      %v8632 = vpack.c.b16 %v8367, %v8362
      %v8633 = vpack.c.b16 %v8368, %v8363
      %v8634 = vpack.c.b16 %v8369, %v8364
      %v8635 = vpack.c.b16 %v8375, %v8370
      %v8636 = vpack.c.b16 %v8376, %v8371
      %v8637 = vpack.c.b16 %v8377, %v8372
      %v8638 = vpack.c.b16 %v8378, %v8373
      %v8639 = vpack.c.b16 %v8379, %v8374
      %v8640 = vpack.c.b16 %v8385, %v8380
      %v8641 = vpack.c.b16 %v8386, %v8381
      %v8642 = vpack.c.b16 %v8387, %v8382
      %v8643 = vpack.c.b16 %v8388, %v8383
      %v8644 = vpack.c.b16 %v8389, %v8384
      %v8645 = vpack.c.b16 %v8395, %v8390
      %v8646 = vpack.c.b16 %v8396, %v8391
      %v8647 = vpack.c.b16 %v8397, %v8392
      %v8648 = vpack.c.b16 %v8398, %v8393
      %v8649 = vpack.c.b16 %v8399, %v8394
      %v8650 = vpack.c.b16 %v8405, %v8400
      %v8651 = vpack.c.b16 %v8406, %v8401
      %v8652 = vpack.c.b16 %v8407, %v8402
      %v8653 = vpack.c.b16 %v8408, %v8403
      %v8654 = vpack.c.b16 %v8409, %v8404
      %v8655 = vpack.c.b16 %v8415, %v8410
      %v8656 = vpack.c.b16 %v8416, %v8411
      %v8657 = vpack.c.b16 %v8417, %v8412
      %v8658 = vpack.c.b16 %v8418, %v8413
      %v8659 = vpack.c.b16 %v8419, %v8414
      %v8660 = vpack.c.b16 %v8425, %v8420
      %v8661 = vpack.c.b16 %v8426, %v8421
      %v8662 = vpack.c.b16 %v8427, %v8422
      %v8663 = vpack.c.b16 %v8428, %v8423
      %v8664 = vpack.c.b16 %v8429, %v8424
      %v8665 = vpack.c.b16 %v8435, %v8430
      %v8666 = vpack.c.b16 %v8436, %v8431
      %v8667 = vpack.c.b16 %v8437, %v8432
      %v8668 = vpack.c.b16 %v8438, %v8433
      %v8669 = vpack.c.b16 %v8439, %v8434
      %v8670 = vpack.c.b16 %v8445, %v8440
      %v8671 = vpack.c.b16 %v8446, %v8441
      %v8672 = vpack.c.b16 %v8447, %v8442
      %v8673 = vpack.c.b16 %v8448, %v8443
      %v8674 = vpack.c.b16 %v8449, %v8444
      %v8675 = vpack.c.b16 %v8455, %v8450
      %v8676 = vpack.c.b16 %v8456, %v8451
      %v8677 = vpack.c.b16 %v8457, %v8452
      %v8678 = vpack.c.b16 %v8458, %v8453
      %v8679 = vpack.c.b16 %v8459, %v8454
      %v8680 = vpack.c.b16 %v8465, %v8460
      %v8681 = vpack.c.b16 %v8466, %v8461
      %v8682 = vpack.c.b16 %v8467, %v8462
      %v8683 = vpack.c.b16 %v8468, %v8463
      %v8684 = vpack.c.b16 %v8469, %v8464
      %v8685 = vpack.c.b16 %v8475, %v8470
      %v8686 = vpack.c.b16 %v8476, %v8471
      %v8687 = vpack.c.b16 %v8477, %v8472
      %v8688 = vpack.c.b16 %v8478, %v8473
      %v8689 = vpack.c.b16 %v8479, %v8474
      %v8690 = vpack.c.b16 %v8485, %v8480
      %v8691 = vpack.c.b16 %v8486, %v8481
      %v8692 = vpack.c.b16 %v8487, %v8482
      %v8693 = vpack.c.b16 %v8488, %v8483
      %v8694 = vpack.c.b16 %v8489, %v8484
      %v8695 = vpack.c.b16 %v8495, %v8490
      %v8696 = vpack.c.b16 %v8496, %v8491
      %v8697 = vpack.c.b16 %v8497, %v8492
      %v8698 = vpack.c.b16 %v8498, %v8493
      %v8699 = vpack.c.b16 %v8499, %v8494
      %v8700 = vpack.c.b16 %v8505, %v8500
      %v8701 = vpack.c.b16 %v8506, %v8501
      %v8702 = vpack.c.b16 %v8507, %v8502
      %v8703 = vpack.c.b16 %v8508, %v8503
      %v8704 = vpack.c.b16 %v8509, %v8504
      %v8705 = vpack.c.b16 %v8515, %v8510
      %v8706 = vpack.c.b16 %v8516, %v8511
      %v8707 = vpack.c.b16 %v8517, %v8512
      %v8708 = vpack.c.b16 %v8518, %v8513
      %v8709 = vpack.c.b16 %v8519, %v8514
      %v8710 = vpack.c.b16 %v8525, %v8520
      %v8711 = vpack.c.b16 %v8526, %v8521
      %v8712 = vpack.c.b16 %v8527, %v8522
      %v8713 = vpack.c.b16 %v8528, %v8523
      %v8714 = vpack.c.b16 %v8529, %v8524
      %v8715 = vpack.c.b16 %v8535, %v8530
      %v8716 = vpack.c.b16 %v8536, %v8531
      %v8717 = vpack.c.b16 %v8537, %v8532
      %v8718 = vpack.c.b16 %v8538, %v8533
      %v8719 = vpack.c.b16 %v8539, %v8534
      %v8720 = vpack.c.b16 %v8545, %v8540
      %v8721 = vpack.c.b16 %v8546, %v8541
      %v8722 = vpack.c.b16 %v8547, %v8542
      %v8723 = vpack.c.b16 %v8548, %v8543
      %v8724 = vpack.c.b16 %v8549, %v8544
      %v8725 = vpack.c.b16 %v8555, %v8550
      %v8726 = vpack.c.b16 %v8556, %v8551
      %v8727 = vpack.c.b16 %v8557, %v8552
      %v8728 = vpack.c.b16 %v8558, %v8553
      %v8729 = vpack.c.b16 %v8559, %v8554
      %v8730 = vpack.c.b16 %v8565, %v8560
      %v8731 = vpack.c.b16 %v8566, %v8561
      %v8732 = vpack.c.b16 %v8567, %v8562
      %v8733 = vpack.c.b16 %v8568, %v8563
      %v8734 = vpack.c.b16 %v8569, %v8564
      %v8735 = vpack.c.b16 %v8575, %v8570
      %v8736 = vpack.c.b16 %v8576, %v8571
      %v8737 = vpack.c.b16 %v8577, %v8572
      %v8738 = vpack.c.b16 %v8578, %v8573
      %v8739 = vpack.c.b16 %v8579, %v8574
      %8900 = vmatpush.bf16.msra.mxu0 %v8615
      %8901 = vmatpush.bf16.msra.mxu0 %v8610
      %8902 = vmatpush.bf16.msra.mxu0 %v8605
      %8903 = vmatpush.bf16.msra.mxu0 %v8600
      %8904 = vmatpush.bf16.msra.mxu0 %v8595
      %8905 = vmatpush.bf16.msra.mxu0 %v8590
      %8906 = vmatpush.bf16.msra.mxu0 %v8585
      %8907 = vmatpush.bf16.msra.mxu0 %v8580
      %8908 = vmatmul.bf16.gmra.mxu0 %v4900
      %v8909 = vpop.f32.mrf.mxu0
      %v8910 = vadd.f32 0.0, %v8909
      %v8911 = vpop.f32.mrf.mxu0
      %v8912 = vadd.f32 0.0, %v8911
      %8913 = vdwg.mxu0
      %8914 = vmatpush.bf16.msra.mxu0 %v8655
      %8915 = vmatpush.bf16.msra.mxu0 %v8650
      %8916 = vmatpush.bf16.msra.mxu0 %v8645
      %8917 = vmatpush.bf16.msra.mxu0 %v8640
      %8918 = vmatpush.bf16.msra.mxu0 %v8635
      %8919 = vmatpush.bf16.msra.mxu0 %v8630
      %8920 = vmatpush.bf16.msra.mxu0 %v8625
      %8921 = vmatpush.bf16.msra.mxu0 %v8620
      %8922 = vmatmul.bf16.gmra.mxu0 %v4901
      %v8923 = vpop.f32.mrf.mxu0
      %v8924 = vadd.f32 %v8910, %v8923
      %v8925 = vpop.f32.mrf.mxu0
      %v8926 = vadd.f32 %v8912, %v8925
      %8927 = vdwg.mxu0
      %8928 = vmatpush.bf16.msra.mxu0 %v8695
      %8929 = vmatpush.bf16.msra.mxu0 %v8690
      %8930 = vmatpush.bf16.msra.mxu0 %v8685
      %8931 = vmatpush.bf16.msra.mxu0 %v8680
      %8932 = vmatpush.bf16.msra.mxu0 %v8675
      %8933 = vmatpush.bf16.msra.mxu0 %v8670
      %8934 = vmatpush.bf16.msra.mxu0 %v8665
      %8935 = vmatpush.bf16.msra.mxu0 %v8660
      %8936 = vmatmul.bf16.gmra.mxu0 %v4902
      %v8937 = vpop.f32.mrf.mxu0
      %v8938 = vadd.f32 %v8924, %v8937
      %v8939 = vpop.f32.mrf.mxu0
      %v8940 = vadd.f32 %v8926, %v8939
      %8941 = vdwg.mxu0
      %8942 = vmatpush.bf16.msra.mxu0 %v8735
      %8943 = vmatpush.bf16.msra.mxu0 %v8730
      %8944 = vmatpush.bf16.msra.mxu0 %v8725
      %8945 = vmatpush.bf16.msra.mxu0 %v8720
      %8946 = vmatpush.bf16.msra.mxu0 %v8715
      %8947 = vmatpush.bf16.msra.mxu0 %v8710
      %8948 = vmatpush.bf16.msra.mxu0 %v8705
      %8949 = vmatpush.bf16.msra.mxu0 %v8700
      %8950 = vmatmul.bf16.gmra.mxu0 %v4903
      %v8951 = vpop.f32.mrf.mxu0
      %v8952 = vadd.f32 %v8938, %v8951
      %v8953 = vpop.f32.mrf.mxu0
      %v8954 = vadd.f32 %v8940, %v8953
      %8955 = vdwg.mxu0
      %8956 = vmatpush.bf16.msra.mxu0 %v8616
      %8957 = vmatpush.bf16.msra.mxu0 %v8611
      %8958 = vmatpush.bf16.msra.mxu0 %v8606
      %8959 = vmatpush.bf16.msra.mxu0 %v8601
      %8960 = vmatpush.bf16.msra.mxu0 %v8596
      %8961 = vmatpush.bf16.msra.mxu0 %v8591
      %8962 = vmatpush.bf16.msra.mxu0 %v8586
      %8963 = vmatpush.bf16.msra.mxu0 %v8581
      %8964 = vmatmul.bf16.gmra.mxu0 %v4900
      %v8965 = vpop.f32.mrf.mxu0
      %v8966 = vadd.f32 0.0, %v8965
      %v8967 = vpop.f32.mrf.mxu0
      %v8968 = vadd.f32 0.0, %v8967
      %8969 = vdwg.mxu0
      %8970 = vmatpush.bf16.msra.mxu0 %v8656
      %8971 = vmatpush.bf16.msra.mxu0 %v8651
      %8972 = vmatpush.bf16.msra.mxu0 %v8646
      %8973 = vmatpush.bf16.msra.mxu0 %v8641
      %8974 = vmatpush.bf16.msra.mxu0 %v8636
      %8975 = vmatpush.bf16.msra.mxu0 %v8631
      %8976 = vmatpush.bf16.msra.mxu0 %v8626
      %8977 = vmatpush.bf16.msra.mxu0 %v8621
      %8978 = vmatmul.bf16.gmra.mxu0 %v4901
      %v8979 = vpop.f32.mrf.mxu0
      %v8980 = vadd.f32 %v8966, %v8979
      %v8981 = vpop.f32.mrf.mxu0
      %v8982 = vadd.f32 %v8968, %v8981
      %8983 = vdwg.mxu0
      %8984 = vmatpush.bf16.msra.mxu0 %v8696
      %8985 = vmatpush.bf16.msra.mxu0 %v8691
      %8986 = vmatpush.bf16.msra.mxu0 %v8686
      %8987 = vmatpush.bf16.msra.mxu0 %v8681
      %8988 = vmatpush.bf16.msra.mxu0 %v8676
      %8989 = vmatpush.bf16.msra.mxu0 %v8671
      %8990 = vmatpush.bf16.msra.mxu0 %v8666
      %8991 = vmatpush.bf16.msra.mxu0 %v8661
      %8992 = vmatmul.bf16.gmra.mxu0 %v4902
      %v8993 = vpop.f32.mrf.mxu0
      %v8994 = vadd.f32 %v8980, %v8993
      %v8995 = vpop.f32.mrf.mxu0
      %v8996 = vadd.f32 %v8982, %v8995
      %8997 = vdwg.mxu0
      %8998 = vmatpush.bf16.msra.mxu0 %v8736
      %8999 = vmatpush.bf16.msra.mxu0 %v8731
      %9000 = vmatpush.bf16.msra.mxu0 %v8726
      %9001 = vmatpush.bf16.msra.mxu0 %v8721
      %9002 = vmatpush.bf16.msra.mxu0 %v8716
      %9003 = vmatpush.bf16.msra.mxu0 %v8711
      %9004 = vmatpush.bf16.msra.mxu0 %v8706
      %9005 = vmatpush.bf16.msra.mxu0 %v8701
      %9006 = vmatmul.bf16.gmra.mxu0 %v4903
      %v9007 = vpop.f32.mrf.mxu0
      %v9008 = vadd.f32 %v8994, %v9007
      %v9009 = vpop.f32.mrf.mxu0
      %v9010 = vadd.f32 %v8996, %v9009
      %9011 = vdwg.mxu0
      %9012 = vmatpush.bf16.msra.mxu0 %v8617
      %9013 = vmatpush.bf16.msra.mxu0 %v8612
      %9014 = vmatpush.bf16.msra.mxu0 %v8607
      %9015 = vmatpush.bf16.msra.mxu0 %v8602
      %9016 = vmatpush.bf16.msra.mxu0 %v8597
      %9017 = vmatpush.bf16.msra.mxu0 %v8592
      %9018 = vmatpush.bf16.msra.mxu0 %v8587
      %9019 = vmatpush.bf16.msra.mxu0 %v8582
      %9020 = vmatmul.bf16.gmra.mxu0 %v4900
      %v9021 = vpop.f32.mrf.mxu0
      %v9022 = vadd.f32 0.0, %v9021
      %v9023 = vpop.f32.mrf.mxu0
      %v9024 = vadd.f32 0.0, %v9023
      %9025 = vdwg.mxu0
      %9026 = vmatpush.bf16.msra.mxu0 %v8657
      %9027 = vmatpush.bf16.msra.mxu0 %v8652
      %9028 = vmatpush.bf16.msra.mxu0 %v8647
      %9029 = vmatpush.bf16.msra.mxu0 %v8642
      %9030 = vmatpush.bf16.msra.mxu0 %v8637
      %9031 = vmatpush.bf16.msra.mxu0 %v8632
      %9032 = vmatpush.bf16.msra.mxu0 %v8627
      %9033 = vmatpush.bf16.msra.mxu0 %v8622
      %9034 = vmatmul.bf16.gmra.mxu0 %v4901
      %v9035 = vpop.f32.mrf.mxu0
      %v9036 = vadd.f32 %v9022, %v9035
      %v9037 = vpop.f32.mrf.mxu0
      %v9038 = vadd.f32 %v9024, %v9037
      %9039 = vdwg.mxu0
      %9040 = vmatpush.bf16.msra.mxu0 %v8697
      %9041 = vmatpush.bf16.msra.mxu0 %v8692
      %9042 = vmatpush.bf16.msra.mxu0 %v8687
      %9043 = vmatpush.bf16.msra.mxu0 %v8682
      %9044 = vmatpush.bf16.msra.mxu0 %v8677
      %9045 = vmatpush.bf16.msra.mxu0 %v8672
      %9046 = vmatpush.bf16.msra.mxu0 %v8667
      %9047 = vmatpush.bf16.msra.mxu0 %v8662
      %9048 = vmatmul.bf16.gmra.mxu0 %v4902
      %v9049 = vpop.f32.mrf.mxu0
      %v9050 = vadd.f32 %v9036, %v9049
      %v9051 = vpop.f32.mrf.mxu0
      %v9052 = vadd.f32 %v9038, %v9051
      %9053 = vdwg.mxu0
      %9054 = vmatpush.bf16.msra.mxu0 %v8737
      %9055 = vmatpush.bf16.msra.mxu0 %v8732
      %9056 = vmatpush.bf16.msra.mxu0 %v8727
      %9057 = vmatpush.bf16.msra.mxu0 %v8722
      %9058 = vmatpush.bf16.msra.mxu0 %v8717
      %9059 = vmatpush.bf16.msra.mxu0 %v8712
      %9060 = vmatpush.bf16.msra.mxu0 %v8707
      %9061 = vmatpush.bf16.msra.mxu0 %v8702
      %9062 = vmatmul.bf16.gmra.mxu0 %v4903
      %v9063 = vpop.f32.mrf.mxu0
      %v9064 = vadd.f32 %v9050, %v9063
      %v9065 = vpop.f32.mrf.mxu0
      %v9066 = vadd.f32 %v9052, %v9065
      %9067 = vdwg.mxu0
      %9068 = vmatpush.bf16.msra.mxu0 %v8618
      %9069 = vmatpush.bf16.msra.mxu0 %v8613
      %9070 = vmatpush.bf16.msra.mxu0 %v8608
      %9071 = vmatpush.bf16.msra.mxu0 %v8603
      %9072 = vmatpush.bf16.msra.mxu0 %v8598
      %9073 = vmatpush.bf16.msra.mxu0 %v8593
      %9074 = vmatpush.bf16.msra.mxu0 %v8588
      %9075 = vmatpush.bf16.msra.mxu0 %v8583
      %9076 = vmatmul.bf16.gmra.mxu0 %v4900
      %v9077 = vpop.f32.mrf.mxu0
      %v9078 = vadd.f32 0.0, %v9077
      %v9079 = vpop.f32.mrf.mxu0
      %v9080 = vadd.f32 0.0, %v9079
      %9081 = vdwg.mxu0
      %9082 = vmatpush.bf16.msra.mxu0 %v8658
      %9083 = vmatpush.bf16.msra.mxu0 %v8653
      %9084 = vmatpush.bf16.msra.mxu0 %v8648
      %9085 = vmatpush.bf16.msra.mxu0 %v8643
      %9086 = vmatpush.bf16.msra.mxu0 %v8638
      %9087 = vmatpush.bf16.msra.mxu0 %v8633
      %9088 = vmatpush.bf16.msra.mxu0 %v8628
      %9089 = vmatpush.bf16.msra.mxu0 %v8623
      %9090 = vmatmul.bf16.gmra.mxu0 %v4901
      %v9091 = vpop.f32.mrf.mxu0
      %v9092 = vadd.f32 %v9078, %v9091
      %v9093 = vpop.f32.mrf.mxu0
      %v9094 = vadd.f32 %v9080, %v9093
      %9095 = vdwg.mxu0
      %9096 = vmatpush.bf16.msra.mxu0 %v8698
      %9097 = vmatpush.bf16.msra.mxu0 %v8693
      %9098 = vmatpush.bf16.msra.mxu0 %v8688
      %9099 = vmatpush.bf16.msra.mxu0 %v8683
      %9100 = vmatpush.bf16.msra.mxu0 %v8678
      %9101 = vmatpush.bf16.msra.mxu0 %v8673
      %9102 = vmatpush.bf16.msra.mxu0 %v8668
      %9103 = vmatpush.bf16.msra.mxu0 %v8663
      %9104 = vmatmul.bf16.gmra.mxu0 %v4902
      %v9105 = vpop.f32.mrf.mxu0
      %v9106 = vadd.f32 %v9092, %v9105
      %v9107 = vpop.f32.mrf.mxu0
      %v9108 = vadd.f32 %v9094, %v9107
      %9109 = vdwg.mxu0
      %9110 = vmatpush.bf16.msra.mxu0 %v8738
      %9111 = vmatpush.bf16.msra.mxu0 %v8733
      %9112 = vmatpush.bf16.msra.mxu0 %v8728
      %9113 = vmatpush.bf16.msra.mxu0 %v8723
      %9114 = vmatpush.bf16.msra.mxu0 %v8718
      %9115 = vmatpush.bf16.msra.mxu0 %v8713
      %9116 = vmatpush.bf16.msra.mxu0 %v8708
      %9117 = vmatpush.bf16.msra.mxu0 %v8703
      %9118 = vmatmul.bf16.gmra.mxu0 %v4903
      %v9119 = vpop.f32.mrf.mxu0
      %v9120 = vadd.f32 %v9106, %v9119
      %v9121 = vpop.f32.mrf.mxu0
      %v9122 = vadd.f32 %v9108, %v9121
      %9123 = vdwg.mxu0
      %9124 = vmatpush.bf16.msra.mxu0 %v8619
      %9125 = vmatpush.bf16.msra.mxu0 %v8614
      %9126 = vmatpush.bf16.msra.mxu0 %v8609
      %9127 = vmatpush.bf16.msra.mxu0 %v8604
      %9128 = vmatpush.bf16.msra.mxu0 %v8599
      %9129 = vmatpush.bf16.msra.mxu0 %v8594
      %9130 = vmatpush.bf16.msra.mxu0 %v8589
      %9131 = vmatpush.bf16.msra.mxu0 %v8584
      %9132 = vmatmul.bf16.gmra.mxu0 %v4900
      %v9133 = vpop.f32.mrf.mxu0
      %v9134 = vadd.f32 0.0, %v9133
      %v9135 = vpop.f32.mrf.mxu0
      %v9136 = vadd.f32 0.0, %v9135
      %9137 = vdwg.mxu0
      %9138 = vmatpush.bf16.msra.mxu0 %v8659
      %9139 = vmatpush.bf16.msra.mxu0 %v8654
      %9140 = vmatpush.bf16.msra.mxu0 %v8649
      %9141 = vmatpush.bf16.msra.mxu0 %v8644
      %9142 = vmatpush.bf16.msra.mxu0 %v8639
      %9143 = vmatpush.bf16.msra.mxu0 %v8634
      %9144 = vmatpush.bf16.msra.mxu0 %v8629
      %9145 = vmatpush.bf16.msra.mxu0 %v8624
      %9146 = vmatmul.bf16.gmra.mxu0 %v4901
      %v9147 = vpop.f32.mrf.mxu0
      %v9148 = vadd.f32 %v9134, %v9147
      %v9149 = vpop.f32.mrf.mxu0
      %v9150 = vadd.f32 %v9136, %v9149
      %9151 = vdwg.mxu0
      %9152 = vmatpush.bf16.msra.mxu0 %v8699
      %9153 = vmatpush.bf16.msra.mxu0 %v8694
      %9154 = vmatpush.bf16.msra.mxu0 %v8689
      %9155 = vmatpush.bf16.msra.mxu0 %v8684
      %9156 = vmatpush.bf16.msra.mxu0 %v8679
      %9157 = vmatpush.bf16.msra.mxu0 %v8674
      %9158 = vmatpush.bf16.msra.mxu0 %v8669
      %9159 = vmatpush.bf16.msra.mxu0 %v8664
      %9160 = vmatmul.bf16.gmra.mxu0 %v4902
      %v9161 = vpop.f32.mrf.mxu0
      %v9162 = vadd.f32 %v9148, %v9161
      %v9163 = vpop.f32.mrf.mxu0
      %v9164 = vadd.f32 %v9150, %v9163
      %9165 = vdwg.mxu0
      %9166 = vmatpush.bf16.msra.mxu0 %v8739
      %9167 = vmatpush.bf16.msra.mxu0 %v8734
      %9168 = vmatpush.bf16.msra.mxu0 %v8729
      %9169 = vmatpush.bf16.msra.mxu0 %v8724
      %9170 = vmatpush.bf16.msra.mxu0 %v8719
      %9171 = vmatpush.bf16.msra.mxu0 %v8714
      %9172 = vmatpush.bf16.msra.mxu0 %v8709
      %9173 = vmatpush.bf16.msra.mxu0 %v8704
      %9174 = vmatmul.bf16.gmra.mxu0 %v4903
      %v9175 = vpop.f32.mrf.mxu0
      %v9176 = vadd.f32 %v9162, %v9175
      %v9177 = vpop.f32.mrf.mxu0
      %v9178 = vadd.f32 %v9164, %v9177
      %9179 = vdwg.mxu0
      %s9180 = scalar_lea.vmem %s7, 80
      %v9181 = vld [vmem:[%s9180] sm:$0xff]
      %v9182 = vld [vmem:[%s9180 + $0x8] sm:$0xff]
      %v9183 = vld [vmem:[%s9180 + $0x10] sm:$0xff]
      %v9184 = vld [vmem:[%s9180 + $0x18] sm:$0xff]
      %v9185 = vld [vmem:[%s9180 + $0x20] sm:$0x3]
      %v9187 = vsel %vm7524, %v9181, 0
      %v9190 = vsel %vm7524, %v9182, 0
      %v9193 = vsel %vm7524, %v9183, 0
      %v9196 = vsel %vm7524, %v9184, 0
      %v9199 = vsel %vm7524, %v9185, 0
      %9201 = vmatpush.msra.mxu0 0.0
      %9202 = vmatpush.msra.mxu0 0.0
      %9203 = vmatpush.msra.mxu0 0.0
      %9204 = vmatpush.msra.mxu0 0.0
      %9205 = vmatpush.msra.mxu0 0.0
      %9206 = vmatpush.msra.mxu0 0.0
      %9207 = vmatpush.msra.mxu0 0.0
      %9208 = vmatpush.msra.mxu0 0.0
      %9209 = vmatpush.msra.mxu0 0.0
      %9210 = vmatpush.msra.mxu0 0.0
      %9211 = vmatpush.msra.mxu0 0.0
      %9212 = vmatpush.msra.mxu0 0.0
      %9213 = vmatpush.msra.mxu0 0.0
      %9214 = vmatpush.msra.mxu0 0.0
      %9215 = vmatpush.msra.mxu0 %v8954
      %9216 = vmatpush.msra.mxu0 %v8952
      %9217 = vmatmul.f32.gmra.mxu0 %v9187
      %v9218 = vpop.f32.mrf.mxu0
      %v9219 = vadd.f32 0.0, %v9218
      %9220 = vmatmul.f32.gmra.mxu0 %v9190
      %v9221 = vpop.f32.mrf.mxu0
      %v9222 = vadd.f32 0.0, %v9221
      %9223 = vmatmul.f32.gmra.mxu0 %v9193
      %v9224 = vpop.f32.mrf.mxu0
      %v9225 = vadd.f32 0.0, %v9224
      %9226 = vmatmul.f32.gmra.mxu0 %v9196
      %v9227 = vpop.f32.mrf.mxu0
      %v9228 = vadd.f32 0.0, %v9227
      %9229 = vmatmul.f32.gmra.mxu0 %v9199
      %v9230 = vpop.f32.mrf.mxu0
      %v9231 = vadd.f32 0.0, %v9230
      %9232 = vdwg.mxu0
      %9233 = vmatpush.msra.mxu0 0.0
      %9234 = vmatpush.msra.mxu0 0.0
      %9235 = vmatpush.msra.mxu0 0.0
      %9236 = vmatpush.msra.mxu0 0.0
      %9237 = vmatpush.msra.mxu0 0.0
      %9238 = vmatpush.msra.mxu0 0.0
      %9239 = vmatpush.msra.mxu0 0.0
      %9240 = vmatpush.msra.mxu0 0.0
      %9241 = vmatpush.msra.mxu0 0.0
      %9242 = vmatpush.msra.mxu0 0.0
      %9243 = vmatpush.msra.mxu0 0.0
      %9244 = vmatpush.msra.mxu0 0.0
      %9245 = vmatpush.msra.mxu0 0.0
      %9246 = vmatpush.msra.mxu0 0.0
      %9247 = vmatpush.msra.mxu0 %v9010
      %9248 = vmatpush.msra.mxu0 %v9008
      %9249 = vmatmul.f32.gmra.mxu0 %v9187
      %v9250 = vpop.f32.mrf.mxu0
      %v9251 = vadd.f32 0.0, %v9250
      %9252 = vmatmul.f32.gmra.mxu0 %v9190
      %v9253 = vpop.f32.mrf.mxu0
      %v9254 = vadd.f32 0.0, %v9253
      %9255 = vmatmul.f32.gmra.mxu0 %v9193
      %v9256 = vpop.f32.mrf.mxu0
      %v9257 = vadd.f32 0.0, %v9256
      %9258 = vmatmul.f32.gmra.mxu0 %v9196
      %v9259 = vpop.f32.mrf.mxu0
      %v9260 = vadd.f32 0.0, %v9259
      %9261 = vmatmul.f32.gmra.mxu0 %v9199
      %v9262 = vpop.f32.mrf.mxu0
      %v9263 = vadd.f32 0.0, %v9262
      %9264 = vdwg.mxu0
      %9265 = vmatpush.msra.mxu0 0.0
      %9266 = vmatpush.msra.mxu0 0.0
      %9267 = vmatpush.msra.mxu0 0.0
      %9268 = vmatpush.msra.mxu0 0.0
      %9269 = vmatpush.msra.mxu0 0.0
      %9270 = vmatpush.msra.mxu0 0.0
      %9271 = vmatpush.msra.mxu0 0.0
      %9272 = vmatpush.msra.mxu0 0.0
      %9273 = vmatpush.msra.mxu0 0.0
      %9274 = vmatpush.msra.mxu0 0.0
      %9275 = vmatpush.msra.mxu0 0.0
      %9276 = vmatpush.msra.mxu0 0.0
      %9277 = vmatpush.msra.mxu0 0.0
      %9278 = vmatpush.msra.mxu0 0.0
      %9279 = vmatpush.msra.mxu0 %v9066
      %9280 = vmatpush.msra.mxu0 %v9064
      %9281 = vmatmul.f32.gmra.mxu0 %v9187
      %v9282 = vpop.f32.mrf.mxu0
      %v9283 = vadd.f32 0.0, %v9282
      %9284 = vmatmul.f32.gmra.mxu0 %v9190
      %v9285 = vpop.f32.mrf.mxu0
      %v9286 = vadd.f32 0.0, %v9285
      %9287 = vmatmul.f32.gmra.mxu0 %v9193
      %v9288 = vpop.f32.mrf.mxu0
      %v9289 = vadd.f32 0.0, %v9288
      %9290 = vmatmul.f32.gmra.mxu0 %v9196
      %v9291 = vpop.f32.mrf.mxu0
      %v9292 = vadd.f32 0.0, %v9291
      %9293 = vmatmul.f32.gmra.mxu0 %v9199
      %v9294 = vpop.f32.mrf.mxu0
      %v9295 = vadd.f32 0.0, %v9294
      %9296 = vdwg.mxu0
      %9297 = vmatpush.msra.mxu0 0.0
      %9298 = vmatpush.msra.mxu0 0.0
      %9299 = vmatpush.msra.mxu0 0.0
      %9300 = vmatpush.msra.mxu0 0.0
      %9301 = vmatpush.msra.mxu0 0.0
      %9302 = vmatpush.msra.mxu0 0.0
      %9303 = vmatpush.msra.mxu0 0.0
      %9304 = vmatpush.msra.mxu0 0.0
      %9305 = vmatpush.msra.mxu0 0.0
      %9306 = vmatpush.msra.mxu0 0.0
      %9307 = vmatpush.msra.mxu0 0.0
      %9308 = vmatpush.msra.mxu0 0.0
      %9309 = vmatpush.msra.mxu0 0.0
      %9310 = vmatpush.msra.mxu0 0.0
      %9311 = vmatpush.msra.mxu0 %v9122
      %9312 = vmatpush.msra.mxu0 %v9120
      %9313 = vmatmul.f32.gmra.mxu0 %v9187
      %v9314 = vpop.f32.mrf.mxu0
      %v9315 = vadd.f32 0.0, %v9314
      %9316 = vmatmul.f32.gmra.mxu0 %v9190
      %v9317 = vpop.f32.mrf.mxu0
      %v9318 = vadd.f32 0.0, %v9317
      %9319 = vmatmul.f32.gmra.mxu0 %v9193
      %v9320 = vpop.f32.mrf.mxu0
      %v9321 = vadd.f32 0.0, %v9320
      %9322 = vmatmul.f32.gmra.mxu0 %v9196
      %v9323 = vpop.f32.mrf.mxu0
      %v9324 = vadd.f32 0.0, %v9323
      %9325 = vmatmul.f32.gmra.mxu0 %v9199
      %v9326 = vpop.f32.mrf.mxu0
      %v9327 = vadd.f32 0.0, %v9326
      %9328 = vdwg.mxu0
      %9329 = vmatpush.msra.mxu0 0.0
      %9330 = vmatpush.msra.mxu0 0.0
      %9331 = vmatpush.msra.mxu0 0.0
      %9332 = vmatpush.msra.mxu0 0.0
      %9333 = vmatpush.msra.mxu0 0.0
      %9334 = vmatpush.msra.mxu0 0.0
      %9335 = vmatpush.msra.mxu0 0.0
      %9336 = vmatpush.msra.mxu0 0.0
      %9337 = vmatpush.msra.mxu0 0.0
      %9338 = vmatpush.msra.mxu0 0.0
      %9339 = vmatpush.msra.mxu0 0.0
      %9340 = vmatpush.msra.mxu0 0.0
      %9341 = vmatpush.msra.mxu0 0.0
      %9342 = vmatpush.msra.mxu0 0.0
      %9343 = vmatpush.msra.mxu0 %v9178
      %9344 = vmatpush.msra.mxu0 %v9176
      %9345 = vmatmul.f32.gmra.mxu0 %v9187
      %v9346 = vpop.f32.mrf.mxu0
      %v9347 = vadd.f32 0.0, %v9346
      %9348 = vmatmul.f32.gmra.mxu0 %v9190
      %v9349 = vpop.f32.mrf.mxu0
      %v9350 = vadd.f32 0.0, %v9349
      %9351 = vmatmul.f32.gmra.mxu0 %v9193
      %v9352 = vpop.f32.mrf.mxu0
      %v9353 = vadd.f32 0.0, %v9352
      %9354 = vmatmul.f32.gmra.mxu0 %v9196
      %v9355 = vpop.f32.mrf.mxu0
      %v9356 = vadd.f32 0.0, %v9355
      %9357 = vmatmul.f32.gmra.mxu0 %v9199
      %v9358 = vpop.f32.mrf.mxu0
      %v9359 = vadd.f32 0.0, %v9358
      %9360 = vdwg.mxu0
      %v9361 = vadd.f32 %v7733, %v9219
      %v9362 = vadd.f32 %v7765, %v9251
      %v9363 = vadd.f32 %v7797, %v9283
      %v9364 = vadd.f32 %v7829, %v9315
      %v9365 = vadd.f32 %v7861, %v9347
      %v9366 = vadd.f32 %v7736, %v9222
      %v9367 = vadd.f32 %v7768, %v9254
      %v9368 = vadd.f32 %v7800, %v9286
      %v9369 = vadd.f32 %v7832, %v9318
      %v9370 = vadd.f32 %v7864, %v9350
      %v9371 = vadd.f32 %v7739, %v9225
      %v9372 = vadd.f32 %v7771, %v9257
      %v9373 = vadd.f32 %v7803, %v9289
      %v9374 = vadd.f32 %v7835, %v9321
      %v9375 = vadd.f32 %v7867, %v9353
      %v9376 = vadd.f32 %v7742, %v9228
      %v9377 = vadd.f32 %v7774, %v9260
      %v9378 = vadd.f32 %v7806, %v9292
      %v9379 = vadd.f32 %v7838, %v9324
      %v9380 = vadd.f32 %v7870, %v9356
      %v9381 = vadd.f32 %v7745, %v9231
      %v9382 = vadd.f32 %v7777, %v9263
      %v9383 = vadd.f32 %v7809, %v9295
      %v9384 = vadd.f32 %v7841, %v9327
      %v9385 = vadd.f32 %v7873, %v9359
      %s9386 = scalar_lea.vmem %s6, 3840
      %v9387 = vld [vmem:[%s9386] sm:$0xff]
      %v9388 = vld [vmem:[%s9386 + $0x8] sm:$0xff]
      %v9389 = vld [vmem:[%s9386 + $0x10] sm:$0xf]
      %v9390 = vld [vmem:[%s9386 + $0x14] sm:$0xff]
      %v9391 = vld [vmem:[%s9386 + $0x1c] sm:$0xff]
      %v9392 = vld [vmem:[%s9386 + $0x24] sm:$0xf]
      %v9393 = vld [vmem:[%s9386 + $0x28] sm:$0xff]
      %v9394 = vld [vmem:[%s9386 + $0x30] sm:$0xff]
      %v9395 = vld [vmem:[%s9386 + $0x38] sm:$0xf]
      %v9396 = vld [vmem:[%s9386 + $0x3c] sm:$0xff]
      %v9397 = vld [vmem:[%s9386 + $0x44] sm:$0xff]
      %v9398 = vld [vmem:[%s9386 + $0x4c] sm:$0xf]
      %v9399 = vld [vmem:[%s9386 + $0x50] sm:$0xff]
      %v9400 = vld [vmem:[%s9386 + $0x58] sm:$0xff]
      %v9401 = vld [vmem:[%s9386 + $0x60] sm:$0xf]
      %v9402 = vld [vmem:[%s9386 + $0x64] sm:$0xff]
      %v9403 = vld [vmem:[%s9386 + $0x6c] sm:$0xff]
      %v9404 = vld [vmem:[%s9386 + $0x74] sm:$0xf]
      %v9405 = vld [vmem:[%s9386 + $0x78] sm:$0xff]
      %v9406 = vld [vmem:[%s9386 + $0x80] sm:$0xff]
      %v9407 = vld [vmem:[%s9386 + $0x88] sm:$0xf]
      %v9408 = vld [vmem:[%s9386 + $0x8c] sm:$0xff]
      %v9409 = vld [vmem:[%s9386 + $0x94] sm:$0xff]
      %v9410 = vld [vmem:[%s9386 + $0x9c] sm:$0xf]
      %v9411 = vld [vmem:[%s9386 + $0xa0] sm:$0xff]
      %v9412 = vld [vmem:[%s9386 + $0xa8] sm:$0xff]
      %v9413 = vld [vmem:[%s9386 + $0xb0] sm:$0xf]
      %v9414 = vld [vmem:[%s9386 + $0xb4] sm:$0xff]
      %v9415 = vld [vmem:[%s9386 + $0xbc] sm:$0xff]
      %v9416 = vld [vmem:[%s9386 + $0xc4] sm:$0xf]
      %v9417 = vld [vmem:[%s9386 + $0xc8] sm:$0xff]
      %v9418 = vld [vmem:[%s9386 + $0xd0] sm:$0xff]
      %v9419 = vld [vmem:[%s9386 + $0xd8] sm:$0xf]
      %v9420 = vld [vmem:[%s9386 + $0xdc] sm:$0xff]
      %v9421 = vld [vmem:[%s9386 + $0xe4] sm:$0xff]
      %v9422 = vld [vmem:[%s9386 + $0xec] sm:$0xf]
      %v9423 = vld [vmem:[%s9386 + $0xf0] sm:$0xff]
      %v9424 = vld [vmem:[%s9386 + $0xf8] sm:$0xff]
      %v9425 = vld [vmem:[%s9386 + $0x100] sm:$0xf]
      %v9426 = vld [vmem:[%s9386 + $0x104] sm:$0xff]
      %v9427 = vld [vmem:[%s9386 + $0x10c] sm:$0xff]
      %v9428 = vld [vmem:[%s9386 + $0x114] sm:$0xf]
      %v9429 = vld [vmem:[%s9386 + $0x118] sm:$0xff]
      %v9430 = vld [vmem:[%s9386 + $0x120] sm:$0xff]
      %v9431 = vld [vmem:[%s9386 + $0x128] sm:$0xf]
      %v9432 = vld [vmem:[%s9386 + $0x12c] sm:$0xff]
      %v9433 = vld [vmem:[%s9386 + $0x134] sm:$0xff]
      %v9434 = vld [vmem:[%s9386 + $0x13c] sm:$0xf]
      %v9435 = vld [vmem:[%s9386 + $0x140] sm:$0xff]
      %v9436 = vld [vmem:[%s9386 + $0x148] sm:$0xff]
      %v9437 = vld [vmem:[%s9386 + $0x150] sm:$0xf]
      %v9438 = vld [vmem:[%s9386 + $0x154] sm:$0xff]
      %v9439 = vld [vmem:[%s9386 + $0x15c] sm:$0xff]
      %v9440 = vld [vmem:[%s9386 + $0x164] sm:$0xf]
      %v9441 = vld [vmem:[%s9386 + $0x168] sm:$0xff]
      %v9442 = vld [vmem:[%s9386 + $0x170] sm:$0xff]
      %v9443 = vld [vmem:[%s9386 + $0x178] sm:$0xf]
      %v9444 = vld [vmem:[%s9386 + $0x17c] sm:$0xff]
      %v9445 = vld [vmem:[%s9386 + $0x184] sm:$0xff]
      %v9446 = vld [vmem:[%s9386 + $0x18c] sm:$0xf]
      %v9447 = vld [vmem:[%s9386 + $0x190] sm:$0xff]
      %v9448 = vld [vmem:[%s9386 + $0x198] sm:$0xff]
      %v9449 = vld [vmem:[%s9386 + $0x1a0] sm:$0xf]
      %v9450 = vld [vmem:[%s9386 + $0x1a4] sm:$0xff]
      %v9451 = vld [vmem:[%s9386 + $0x1ac] sm:$0xff]
      %v9452 = vld [vmem:[%s9386 + $0x1b4] sm:$0xf]
      %v9453 = vld [vmem:[%s9386 + $0x1b8] sm:$0xff]
      %v9454 = vld [vmem:[%s9386 + $0x1c0] sm:$0xff]
      %v9455 = vld [vmem:[%s9386 + $0x1c8] sm:$0xf]
      %v9456 = vld [vmem:[%s9386 + $0x1cc] sm:$0xff]
      %v9457 = vld [vmem:[%s9386 + $0x1d4] sm:$0xff]
      %v9458 = vld [vmem:[%s9386 + $0x1dc] sm:$0xf]
      %v9459 = vld [vmem:[%s9386 + $0x1e0] sm:$0xff]
      %v9460 = vld [vmem:[%s9386 + $0x1e8] sm:$0xff]
      %v9461 = vld [vmem:[%s9386 + $0x1f0] sm:$0xf]
      %v9462 = vld [vmem:[%s9386 + $0x1f4] sm:$0xff]
      %v9463 = vld [vmem:[%s9386 + $0x1fc] sm:$0xff]
      %v9464 = vld [vmem:[%s9386 + $0x204] sm:$0xf]
      %v9465 = vld [vmem:[%s9386 + $0x208] sm:$0xff]
      %v9466 = vld [vmem:[%s9386 + $0x210] sm:$0xff]
      %v9467 = vld [vmem:[%s9386 + $0x218] sm:$0xf]
      %v9468 = vld [vmem:[%s9386 + $0x21c] sm:$0xff]
      %v9469 = vld [vmem:[%s9386 + $0x224] sm:$0xff]
      %v9470 = vld [vmem:[%s9386 + $0x22c] sm:$0xf]
      %v9471 = vld [vmem:[%s9386 + $0x230] sm:$0xff]
      %v9472 = vld [vmem:[%s9386 + $0x238] sm:$0xff]
      %v9473 = vld [vmem:[%s9386 + $0x240] sm:$0xf]
      %v9474 = vld [vmem:[%s9386 + $0x244] sm:$0xff]
      %v9475 = vld [vmem:[%s9386 + $0x24c] sm:$0xff]
      %v9476 = vld [vmem:[%s9386 + $0x254] sm:$0xf]
      %v9477 = vld [vmem:[%s9386 + $0x258] sm:$0xff]
      %v9478 = vld [vmem:[%s9386 + $0x260] sm:$0xff]
      %v9479 = vld [vmem:[%s9386 + $0x268] sm:$0xf]
      %v9480 = vld [vmem:[%s9386 + $0x26c] sm:$0xff]
      %v9481 = vld [vmem:[%s9386 + $0x274] sm:$0xff]
      %v9482 = vld [vmem:[%s9386 + $0x27c] sm:$0xf]
      %v9483 = vld [vmem:[%s9386 + $0x280] sm:$0xff]
      %v9484 = vld [vmem:[%s9386 + $0x288] sm:$0xff]
      %v9485 = vld [vmem:[%s9386 + $0x290] sm:$0xf]
      %v9486 = vld [vmem:[%s9386 + $0x294] sm:$0xff]
      %v9487 = vld [vmem:[%s9386 + $0x29c] sm:$0xff]
      %v9488 = vld [vmem:[%s9386 + $0x2a4] sm:$0xf]
      %v9489 = vld [vmem:[%s9386 + $0x2a8] sm:$0xff]
      %v9490 = vld [vmem:[%s9386 + $0x2b0] sm:$0xff]
      %v9491 = vld [vmem:[%s9386 + $0x2b8] sm:$0xf]
      %v9492 = vld [vmem:[%s9386 + $0x2bc] sm:$0xff]
      %v9493 = vld [vmem:[%s9386 + $0x2c4] sm:$0xff]
      %v9494 = vld [vmem:[%s9386 + $0x2cc] sm:$0xf]
      %v9495 = vld [vmem:[%s9386 + $0x2d0] sm:$0xff]
      %v9496 = vld [vmem:[%s9386 + $0x2d8] sm:$0xff]
      %v9497 = vld [vmem:[%s9386 + $0x2e0] sm:$0xf]
      %v9498 = vld [vmem:[%s9386 + $0x2e4] sm:$0xff]
      %v9499 = vld [vmem:[%s9386 + $0x2ec] sm:$0xff]
      %v9500 = vld [vmem:[%s9386 + $0x2f4] sm:$0xf]
      %v9501 = vld [vmem:[%s9386 + $0x2f8] sm:$0xff]
      %v9502 = vld [vmem:[%s9386 + $0x300] sm:$0xff]
      %v9503 = vld [vmem:[%s9386 + $0x308] sm:$0xf]
      %v9504 = vld [vmem:[%s9386 + $0x30c] sm:$0xff]
      %v9505 = vld [vmem:[%s9386 + $0x314] sm:$0xff]
      %v9506 = vld [vmem:[%s9386 + $0x31c] sm:$0xf]
      %v9507 = vld [vmem:[%s9386 + $0x320] sm:$0xff]
      %v9508 = vld [vmem:[%s9386 + $0x328] sm:$0xff]
      %v9509 = vld [vmem:[%s9386 + $0x330] sm:$0xf]
      %v9510 = vld [vmem:[%s9386 + $0x334] sm:$0xff]
      %v9511 = vld [vmem:[%s9386 + $0x33c] sm:$0xff]
      %v9512 = vld [vmem:[%s9386 + $0x344] sm:$0xf]
      %v9513 = vld [vmem:[%s9386 + $0x348] sm:$0xff]
      %v9514 = vld [vmem:[%s9386 + $0x350] sm:$0xff]
      %v9515 = vld [vmem:[%s9386 + $0x358] sm:$0xf]
      %v9516 = vld [vmem:[%s9386 + $0x35c] sm:$0xff]
      %v9517 = vld [vmem:[%s9386 + $0x364] sm:$0xff]
      %v9518 = vld [vmem:[%s9386 + $0x36c] sm:$0xf]
      %v9519 = vld [vmem:[%s9386 + $0x370] sm:$0xff]
      %v9520 = vld [vmem:[%s9386 + $0x378] sm:$0xff]
      %v9521 = vld [vmem:[%s9386 + $0x380] sm:$0xf]
      %v9522 = vld [vmem:[%s9386 + $0x384] sm:$0xff]
      %v9523 = vld [vmem:[%s9386 + $0x38c] sm:$0xff]
      %v9524 = vld [vmem:[%s9386 + $0x394] sm:$0xf]
      %v9525 = vld [vmem:[%s9386 + $0x398] sm:$0xff]
      %v9526 = vld [vmem:[%s9386 + $0x3a0] sm:$0xff]
      %v9527 = vld [vmem:[%s9386 + $0x3a8] sm:$0xf]
      %v9528 = vld [vmem:[%s9386 + $0x3ac] sm:$0xff]
      %v9529 = vld [vmem:[%s9386 + $0x3b4] sm:$0xff]
      %v9530 = vld [vmem:[%s9386 + $0x3bc] sm:$0xf]
      %v9531 = vld [vmem:[%s9386 + $0x3c0] sm:$0xff]
      %v9532 = vld [vmem:[%s9386 + $0x3c8] sm:$0xff]
      %v9533 = vld [vmem:[%s9386 + $0x3d0] sm:$0xf]
      %v9534 = vld [vmem:[%s9386 + $0x3d4] sm:$0xff]
      %v9535 = vld [vmem:[%s9386 + $0x3dc] sm:$0xff]
      %v9536 = vld [vmem:[%s9386 + $0x3e4] sm:$0xf]
      %v9537 = vld [vmem:[%s9386 + $0x3e8] sm:$0xff]
      %v9538 = vld [vmem:[%s9386 + $0x3f0] sm:$0xff]
      %v9539 = vld [vmem:[%s9386 + $0x3f8] sm:$0xf]
      %v9540 = vld [vmem:[%s9386 + $0x3fc] sm:$0xff]
      %v9541 = vld [vmem:[%s9386 + $0x404] sm:$0xff]
      %v9542 = vld [vmem:[%s9386 + $0x40c] sm:$0xf]
      %v9543 = vld [vmem:[%s9386 + $0x410] sm:$0xff]
      %v9544 = vld [vmem:[%s9386 + $0x418] sm:$0xff]
      %v9545 = vld [vmem:[%s9386 + $0x420] sm:$0xf]
      %v9546 = vld [vmem:[%s9386 + $0x424] sm:$0xff]
      %v9547 = vld [vmem:[%s9386 + $0x42c] sm:$0xff]
      %v9548 = vld [vmem:[%s9386 + $0x434] sm:$0xf]
      %v9549 = vld [vmem:[%s9386 + $0x438] sm:$0xff]
      %v9550 = vld [vmem:[%s9386 + $0x440] sm:$0xff]
      %v9551 = vld [vmem:[%s9386 + $0x448] sm:$0xf]
      %v9552 = vld [vmem:[%s9386 + $0x44c] sm:$0xff]
      %v9553 = vld [vmem:[%s9386 + $0x454] sm:$0xff]
      %v9554 = vld [vmem:[%s9386 + $0x45c] sm:$0xf]
      %v9555 = vld [vmem:[%s9386 + $0x460] sm:$0xff]
      %v9556 = vld [vmem:[%s9386 + $0x468] sm:$0xff]
      %v9557 = vld [vmem:[%s9386 + $0x470] sm:$0xf]
      %v9558 = vld [vmem:[%s9386 + $0x474] sm:$0xff]
      %v9559 = vld [vmem:[%s9386 + $0x47c] sm:$0xff]
      %v9560 = vld [vmem:[%s9386 + $0x484] sm:$0xf]
      %v9561 = vld [vmem:[%s9386 + $0x488] sm:$0xff]
      %v9562 = vld [vmem:[%s9386 + $0x490] sm:$0xff]
      %v9563 = vld [vmem:[%s9386 + $0x498] sm:$0xf]
      %v9564 = vld [vmem:[%s9386 + $0x49c] sm:$0xff]
      %v9565 = vld [vmem:[%s9386 + $0x4a4] sm:$0xff]
      %v9566 = vld [vmem:[%s9386 + $0x4ac] sm:$0xf]
      %v9567 = vld [vmem:[%s9386 + $0x4b0] sm:$0xff]
      %v9568 = vld [vmem:[%s9386 + $0x4b8] sm:$0xff]
      %v9569 = vld [vmem:[%s9386 + $0x4c0] sm:$0xf]
      %v9570 = vld [vmem:[%s9386 + $0x4c4] sm:$0xff]
      %v9571 = vld [vmem:[%s9386 + $0x4cc] sm:$0xff]
      %v9572 = vld [vmem:[%s9386 + $0x4d4] sm:$0xf]
      %v9573 = vld [vmem:[%s9386 + $0x4d8] sm:$0xff]
      %v9574 = vld [vmem:[%s9386 + $0x4e0] sm:$0xff]
      %v9575 = vld [vmem:[%s9386 + $0x4e8] sm:$0xf]
      %v9576 = vld [vmem:[%s9386 + $0x4ec] sm:$0xff]
      %v9577 = vld [vmem:[%s9386 + $0x4f4] sm:$0xff]
      %v9578 = vld [vmem:[%s9386 + $0x4fc] sm:$0xf]
      %v9771 = vunpack.c.l.b16 %v9387
      %v9772 = vunpack.c.h.b16 %v9387
      %v9773 = vunpack.c.l.b16 %v9388
      %v9774 = vunpack.c.h.b16 %v9388
      %v9775 = vunpack.c.l.b16 %v9389
      %v9776 = vunpack.c.l.b16 %v9390
      %v9777 = vunpack.c.h.b16 %v9390
      %v9778 = vunpack.c.l.b16 %v9391
      %v9779 = vunpack.c.h.b16 %v9391
      %v9780 = vunpack.c.l.b16 %v9392
      %v9781 = vunpack.c.l.b16 %v9393
      %v9782 = vunpack.c.h.b16 %v9393
      %v9783 = vunpack.c.l.b16 %v9394
      %v9784 = vunpack.c.h.b16 %v9394
      %v9785 = vunpack.c.l.b16 %v9395
      %v9786 = vunpack.c.l.b16 %v9396
      %v9787 = vunpack.c.h.b16 %v9396
      %v9788 = vunpack.c.l.b16 %v9397
      %v9789 = vunpack.c.h.b16 %v9397
      %v9790 = vunpack.c.l.b16 %v9398
      %v9791 = vunpack.c.l.b16 %v9399
      %v9792 = vunpack.c.h.b16 %v9399
      %v9793 = vunpack.c.l.b16 %v9400
      %v9794 = vunpack.c.h.b16 %v9400
      %v9795 = vunpack.c.l.b16 %v9401
      %v9796 = vunpack.c.l.b16 %v9402
      %v9797 = vunpack.c.h.b16 %v9402
      %v9798 = vunpack.c.l.b16 %v9403
      %v9799 = vunpack.c.h.b16 %v9403
      %v9800 = vunpack.c.l.b16 %v9404
      %v9801 = vunpack.c.l.b16 %v9405
      %v9802 = vunpack.c.h.b16 %v9405
      %v9803 = vunpack.c.l.b16 %v9406
      %v9804 = vunpack.c.h.b16 %v9406
      %v9805 = vunpack.c.l.b16 %v9407
      %v9806 = vunpack.c.l.b16 %v9408
      %v9807 = vunpack.c.h.b16 %v9408
      %v9808 = vunpack.c.l.b16 %v9409
      %v9809 = vunpack.c.h.b16 %v9409
      %v9810 = vunpack.c.l.b16 %v9410
      %v9811 = vunpack.c.l.b16 %v9411
      %v9812 = vunpack.c.h.b16 %v9411
      %v9813 = vunpack.c.l.b16 %v9412
      %v9814 = vunpack.c.h.b16 %v9412
      %v9815 = vunpack.c.l.b16 %v9413
      %v9816 = vunpack.c.l.b16 %v9414
      %v9817 = vunpack.c.h.b16 %v9414
      %v9818 = vunpack.c.l.b16 %v9415
      %v9819 = vunpack.c.h.b16 %v9415
      %v9820 = vunpack.c.l.b16 %v9416
      %v9821 = vunpack.c.l.b16 %v9417
      %v9822 = vunpack.c.h.b16 %v9417
      %v9823 = vunpack.c.l.b16 %v9418
      %v9824 = vunpack.c.h.b16 %v9418
      %v9825 = vunpack.c.l.b16 %v9419
      %v9826 = vunpack.c.l.b16 %v9420
      %v9827 = vunpack.c.h.b16 %v9420
      %v9828 = vunpack.c.l.b16 %v9421
      %v9829 = vunpack.c.h.b16 %v9421
      %v9830 = vunpack.c.l.b16 %v9422
      %v9831 = vunpack.c.l.b16 %v9423
      %v9832 = vunpack.c.h.b16 %v9423
      %v9833 = vunpack.c.l.b16 %v9424
      %v9834 = vunpack.c.h.b16 %v9424
      %v9835 = vunpack.c.l.b16 %v9425
      %v9836 = vunpack.c.l.b16 %v9426
      %v9837 = vunpack.c.h.b16 %v9426
      %v9838 = vunpack.c.l.b16 %v9427
      %v9839 = vunpack.c.h.b16 %v9427
      %v9840 = vunpack.c.l.b16 %v9428
      %v9841 = vunpack.c.l.b16 %v9429
      %v9842 = vunpack.c.h.b16 %v9429
      %v9843 = vunpack.c.l.b16 %v9430
      %v9844 = vunpack.c.h.b16 %v9430
      %v9845 = vunpack.c.l.b16 %v9431
      %v9846 = vunpack.c.l.b16 %v9432
      %v9847 = vunpack.c.h.b16 %v9432
      %v9848 = vunpack.c.l.b16 %v9433
      %v9849 = vunpack.c.h.b16 %v9433
      %v9850 = vunpack.c.l.b16 %v9434
      %v9851 = vunpack.c.l.b16 %v9435
      %v9852 = vunpack.c.h.b16 %v9435
      %v9853 = vunpack.c.l.b16 %v9436
      %v9854 = vunpack.c.h.b16 %v9436
      %v9855 = vunpack.c.l.b16 %v9437
      %v9856 = vunpack.c.l.b16 %v9438
      %v9857 = vunpack.c.h.b16 %v9438
      %v9858 = vunpack.c.l.b16 %v9439
      %v9859 = vunpack.c.h.b16 %v9439
      %v9860 = vunpack.c.l.b16 %v9440
      %v9861 = vunpack.c.l.b16 %v9441
      %v9862 = vunpack.c.h.b16 %v9441
      %v9863 = vunpack.c.l.b16 %v9442
      %v9864 = vunpack.c.h.b16 %v9442
      %v9865 = vunpack.c.l.b16 %v9443
      %v9866 = vunpack.c.l.b16 %v9444
      %v9867 = vunpack.c.h.b16 %v9444
      %v9868 = vunpack.c.l.b16 %v9445
      %v9869 = vunpack.c.h.b16 %v9445
      %v9870 = vunpack.c.l.b16 %v9446
      %v9871 = vunpack.c.l.b16 %v9447
      %v9872 = vunpack.c.h.b16 %v9447
      %v9873 = vunpack.c.l.b16 %v9448
      %v9874 = vunpack.c.h.b16 %v9448
      %v9875 = vunpack.c.l.b16 %v9449
      %v9876 = vunpack.c.l.b16 %v9450
      %v9877 = vunpack.c.h.b16 %v9450
      %v9878 = vunpack.c.l.b16 %v9451
      %v9879 = vunpack.c.h.b16 %v9451
      %v9880 = vunpack.c.l.b16 %v9452
      %v9881 = vunpack.c.l.b16 %v9453
      %v9882 = vunpack.c.h.b16 %v9453
      %v9883 = vunpack.c.l.b16 %v9454
      %v9884 = vunpack.c.h.b16 %v9454
      %v9885 = vunpack.c.l.b16 %v9455
      %v9886 = vunpack.c.l.b16 %v9456
      %v9887 = vunpack.c.h.b16 %v9456
      %v9888 = vunpack.c.l.b16 %v9457
      %v9889 = vunpack.c.h.b16 %v9457
      %v9890 = vunpack.c.l.b16 %v9458
      %v9891 = vunpack.c.l.b16 %v9459
      %v9892 = vunpack.c.h.b16 %v9459
      %v9893 = vunpack.c.l.b16 %v9460
      %v9894 = vunpack.c.h.b16 %v9460
      %v9895 = vunpack.c.l.b16 %v9461
      %v9896 = vunpack.c.l.b16 %v9462
      %v9897 = vunpack.c.h.b16 %v9462
      %v9898 = vunpack.c.l.b16 %v9463
      %v9899 = vunpack.c.h.b16 %v9463
      %v9900 = vunpack.c.l.b16 %v9464
      %v9901 = vunpack.c.l.b16 %v9465
      %v9902 = vunpack.c.h.b16 %v9465
      %v9903 = vunpack.c.l.b16 %v9466
      %v9904 = vunpack.c.h.b16 %v9466
      %v9905 = vunpack.c.l.b16 %v9467
      %v9906 = vunpack.c.l.b16 %v9468
      %v9907 = vunpack.c.h.b16 %v9468
      %v9908 = vunpack.c.l.b16 %v9469
      %v9909 = vunpack.c.h.b16 %v9469
      %v9910 = vunpack.c.l.b16 %v9470
      %v9911 = vunpack.c.l.b16 %v9471
      %v9912 = vunpack.c.h.b16 %v9471
      %v9913 = vunpack.c.l.b16 %v9472
      %v9914 = vunpack.c.h.b16 %v9472
      %v9915 = vunpack.c.l.b16 %v9473
      %v9916 = vunpack.c.l.b16 %v9474
      %v9917 = vunpack.c.h.b16 %v9474
      %v9918 = vunpack.c.l.b16 %v9475
      %v9919 = vunpack.c.h.b16 %v9475
      %v9920 = vunpack.c.l.b16 %v9476
      %v9921 = vunpack.c.l.b16 %v9477
      %v9922 = vunpack.c.h.b16 %v9477
      %v9923 = vunpack.c.l.b16 %v9478
      %v9924 = vunpack.c.h.b16 %v9478
      %v9925 = vunpack.c.l.b16 %v9479
      %v9926 = vunpack.c.l.b16 %v9480
      %v9927 = vunpack.c.h.b16 %v9480
      %v9928 = vunpack.c.l.b16 %v9481
      %v9929 = vunpack.c.h.b16 %v9481
      %v9930 = vunpack.c.l.b16 %v9482
      %v9931 = vunpack.c.l.b16 %v9483
      %v9932 = vunpack.c.h.b16 %v9483
      %v9933 = vunpack.c.l.b16 %v9484
      %v9934 = vunpack.c.h.b16 %v9484
      %v9935 = vunpack.c.l.b16 %v9485
      %v9936 = vunpack.c.l.b16 %v9486
      %v9937 = vunpack.c.h.b16 %v9486
      %v9938 = vunpack.c.l.b16 %v9487
      %v9939 = vunpack.c.h.b16 %v9487
      %v9940 = vunpack.c.l.b16 %v9488
      %v9941 = vunpack.c.l.b16 %v9489
      %v9942 = vunpack.c.h.b16 %v9489
      %v9943 = vunpack.c.l.b16 %v9490
      %v9944 = vunpack.c.h.b16 %v9490
      %v9945 = vunpack.c.l.b16 %v9491
      %v9946 = vunpack.c.l.b16 %v9492
      %v9947 = vunpack.c.h.b16 %v9492
      %v9948 = vunpack.c.l.b16 %v9493
      %v9949 = vunpack.c.h.b16 %v9493
      %v9950 = vunpack.c.l.b16 %v9494
      %v9951 = vunpack.c.l.b16 %v9495
      %v9952 = vunpack.c.h.b16 %v9495
      %v9953 = vunpack.c.l.b16 %v9496
      %v9954 = vunpack.c.h.b16 %v9496
      %v9955 = vunpack.c.l.b16 %v9497
      %v9956 = vunpack.c.l.b16 %v9498
      %v9957 = vunpack.c.h.b16 %v9498
      %v9958 = vunpack.c.l.b16 %v9499
      %v9959 = vunpack.c.h.b16 %v9499
      %v9960 = vunpack.c.l.b16 %v9500
      %v9961 = vunpack.c.l.b16 %v9501
      %v9962 = vunpack.c.h.b16 %v9501
      %v9963 = vunpack.c.l.b16 %v9502
      %v9964 = vunpack.c.h.b16 %v9502
      %v9965 = vunpack.c.l.b16 %v9503
      %v9966 = vunpack.c.l.b16 %v9504
      %v9967 = vunpack.c.h.b16 %v9504
      %v9968 = vunpack.c.l.b16 %v9505
      %v9969 = vunpack.c.h.b16 %v9505
      %v9970 = vunpack.c.l.b16 %v9506
      %v9971 = vunpack.c.l.b16 %v9507
      %v9972 = vunpack.c.h.b16 %v9507
      %v9973 = vunpack.c.l.b16 %v9508
      %v9974 = vunpack.c.h.b16 %v9508
      %v9975 = vunpack.c.l.b16 %v9509
      %v9976 = vunpack.c.l.b16 %v9510
      %v9977 = vunpack.c.h.b16 %v9510
      %v9978 = vunpack.c.l.b16 %v9511
      %v9979 = vunpack.c.h.b16 %v9511
      %v9980 = vunpack.c.l.b16 %v9512
      %v9981 = vunpack.c.l.b16 %v9513
      %v9982 = vunpack.c.h.b16 %v9513
      %v9983 = vunpack.c.l.b16 %v9514
      %v9984 = vunpack.c.h.b16 %v9514
      %v9985 = vunpack.c.l.b16 %v9515
      %v9986 = vunpack.c.l.b16 %v9516
      %v9987 = vunpack.c.h.b16 %v9516
      %v9988 = vunpack.c.l.b16 %v9517
      %v9989 = vunpack.c.h.b16 %v9517
      %v9990 = vunpack.c.l.b16 %v9518
      %v9991 = vunpack.c.l.b16 %v9519
      %v9992 = vunpack.c.h.b16 %v9519
      %v9993 = vunpack.c.l.b16 %v9520
      %v9994 = vunpack.c.h.b16 %v9520
      %v9995 = vunpack.c.l.b16 %v9521
      %v9996 = vunpack.c.l.b16 %v9522
      %v9997 = vunpack.c.h.b16 %v9522
      %v9998 = vunpack.c.l.b16 %v9523
      %v9999 = vunpack.c.h.b16 %v9523
      %v10000 = vunpack.c.l.b16 %v9524
      %v10001 = vunpack.c.l.b16 %v9525
      %v10002 = vunpack.c.h.b16 %v9525
      %v10003 = vunpack.c.l.b16 %v9526
      %v10004 = vunpack.c.h.b16 %v9526
      %v10005 = vunpack.c.l.b16 %v9527
      %v10006 = vunpack.c.l.b16 %v9528
      %v10007 = vunpack.c.h.b16 %v9528
      %v10008 = vunpack.c.l.b16 %v9529
      %v10009 = vunpack.c.h.b16 %v9529
      %v10010 = vunpack.c.l.b16 %v9530
      %v10011 = vunpack.c.l.b16 %v9531
      %v10012 = vunpack.c.h.b16 %v9531
      %v10013 = vunpack.c.l.b16 %v9532
      %v10014 = vunpack.c.h.b16 %v9532
      %v10015 = vunpack.c.l.b16 %v9533
      %v10016 = vunpack.c.l.b16 %v9534
      %v10017 = vunpack.c.h.b16 %v9534
      %v10018 = vunpack.c.l.b16 %v9535
      %v10019 = vunpack.c.h.b16 %v9535
      %v10020 = vunpack.c.l.b16 %v9536
      %v10021 = vunpack.c.l.b16 %v9537
      %v10022 = vunpack.c.h.b16 %v9537
      %v10023 = vunpack.c.l.b16 %v9538
      %v10024 = vunpack.c.h.b16 %v9538
      %v10025 = vunpack.c.l.b16 %v9539
      %v10026 = vunpack.c.l.b16 %v9540
      %v10027 = vunpack.c.h.b16 %v9540
      %v10028 = vunpack.c.l.b16 %v9541
      %v10029 = vunpack.c.h.b16 %v9541
      %v10030 = vunpack.c.l.b16 %v9542
      %v10031 = vunpack.c.l.b16 %v9543
      %v10032 = vunpack.c.h.b16 %v9543
      %v10033 = vunpack.c.l.b16 %v9544
      %v10034 = vunpack.c.h.b16 %v9544
      %v10035 = vunpack.c.l.b16 %v9545
      %v10036 = vunpack.c.l.b16 %v9546
      %v10037 = vunpack.c.h.b16 %v9546
      %v10038 = vunpack.c.l.b16 %v9547
      %v10039 = vunpack.c.h.b16 %v9547
      %v10040 = vunpack.c.l.b16 %v9548
      %v10041 = vunpack.c.l.b16 %v9549
      %v10042 = vunpack.c.h.b16 %v9549
      %v10043 = vunpack.c.l.b16 %v9550
      %v10044 = vunpack.c.h.b16 %v9550
      %v10045 = vunpack.c.l.b16 %v9551
      %v10046 = vunpack.c.l.b16 %v9552
      %v10047 = vunpack.c.h.b16 %v9552
      %v10048 = vunpack.c.l.b16 %v9553
      %v10049 = vunpack.c.h.b16 %v9553
      %v10050 = vunpack.c.l.b16 %v9554
      %v10051 = vunpack.c.l.b16 %v9555
      %v10052 = vunpack.c.h.b16 %v9555
      %v10053 = vunpack.c.l.b16 %v9556
      %v10054 = vunpack.c.h.b16 %v9556
      %v10055 = vunpack.c.l.b16 %v9557
      %v10056 = vunpack.c.l.b16 %v9558
      %v10057 = vunpack.c.h.b16 %v9558
      %v10058 = vunpack.c.l.b16 %v9559
      %v10059 = vunpack.c.h.b16 %v9559
      %v10060 = vunpack.c.l.b16 %v9560
      %v10061 = vunpack.c.l.b16 %v9561
      %v10062 = vunpack.c.h.b16 %v9561
      %v10063 = vunpack.c.l.b16 %v9562
      %v10064 = vunpack.c.h.b16 %v9562
      %v10065 = vunpack.c.l.b16 %v9563
      %v10066 = vunpack.c.l.b16 %v9564
      %v10067 = vunpack.c.h.b16 %v9564
      %v10068 = vunpack.c.l.b16 %v9565
      %v10069 = vunpack.c.h.b16 %v9565
      %v10070 = vunpack.c.l.b16 %v9566
      %v10071 = vunpack.c.l.b16 %v9567
      %v10072 = vunpack.c.h.b16 %v9567
      %v10073 = vunpack.c.l.b16 %v9568
      %v10074 = vunpack.c.h.b16 %v9568
      %v10075 = vunpack.c.l.b16 %v9569
      %v10076 = vunpack.c.l.b16 %v9570
      %v10077 = vunpack.c.h.b16 %v9570
      %v10078 = vunpack.c.l.b16 %v9571
      %v10079 = vunpack.c.h.b16 %v9571
      %v10080 = vunpack.c.l.b16 %v9572
      %v10081 = vunpack.c.l.b16 %v9573
      %v10082 = vunpack.c.h.b16 %v9573
      %v10083 = vunpack.c.l.b16 %v9574
      %v10084 = vunpack.c.h.b16 %v9574
      %v10085 = vunpack.c.l.b16 %v9575
      %v10086 = vunpack.c.l.b16 %v9576
      %v10087 = vunpack.c.h.b16 %v9576
      %v10088 = vunpack.c.l.b16 %v9577
      %v10089 = vunpack.c.h.b16 %v9577
      %v10090 = vunpack.c.l.b16 %v9578
      %v10091 = vpack.c.b16 %v9776, %v9771
      %v10092 = vpack.c.b16 %v9777, %v9772
      %v10093 = vpack.c.b16 %v9778, %v9773
      %v10094 = vpack.c.b16 %v9779, %v9774
      %v10095 = vpack.c.b16 %v9780, %v9775
      %v10096 = vpack.c.b16 %v9786, %v9781
      %v10097 = vpack.c.b16 %v9787, %v9782
      %v10098 = vpack.c.b16 %v9788, %v9783
      %v10099 = vpack.c.b16 %v9789, %v9784
      %v10100 = vpack.c.b16 %v9790, %v9785
      %v10101 = vpack.c.b16 %v9796, %v9791
      %v10102 = vpack.c.b16 %v9797, %v9792
      %v10103 = vpack.c.b16 %v9798, %v9793
      %v10104 = vpack.c.b16 %v9799, %v9794
      %v10105 = vpack.c.b16 %v9800, %v9795
      %v10106 = vpack.c.b16 %v9806, %v9801
      %v10107 = vpack.c.b16 %v9807, %v9802
      %v10108 = vpack.c.b16 %v9808, %v9803
      %v10109 = vpack.c.b16 %v9809, %v9804
      %v10110 = vpack.c.b16 %v9810, %v9805
      %v10111 = vpack.c.b16 %v9816, %v9811
      %v10112 = vpack.c.b16 %v9817, %v9812
      %v10113 = vpack.c.b16 %v9818, %v9813
      %v10114 = vpack.c.b16 %v9819, %v9814
      %v10115 = vpack.c.b16 %v9820, %v9815
      %v10116 = vpack.c.b16 %v9826, %v9821
      %v10117 = vpack.c.b16 %v9827, %v9822
      %v10118 = vpack.c.b16 %v9828, %v9823
      %v10119 = vpack.c.b16 %v9829, %v9824
      %v10120 = vpack.c.b16 %v9830, %v9825
      %v10121 = vpack.c.b16 %v9836, %v9831
      %v10122 = vpack.c.b16 %v9837, %v9832
      %v10123 = vpack.c.b16 %v9838, %v9833
      %v10124 = vpack.c.b16 %v9839, %v9834
      %v10125 = vpack.c.b16 %v9840, %v9835
      %v10126 = vpack.c.b16 %v9846, %v9841
      %v10127 = vpack.c.b16 %v9847, %v9842
      %v10128 = vpack.c.b16 %v9848, %v9843
      %v10129 = vpack.c.b16 %v9849, %v9844
      %v10130 = vpack.c.b16 %v9850, %v9845
      %v10131 = vpack.c.b16 %v9856, %v9851
      %v10132 = vpack.c.b16 %v9857, %v9852
      %v10133 = vpack.c.b16 %v9858, %v9853
      %v10134 = vpack.c.b16 %v9859, %v9854
      %v10135 = vpack.c.b16 %v9860, %v9855
      %v10136 = vpack.c.b16 %v9866, %v9861
      %v10137 = vpack.c.b16 %v9867, %v9862
      %v10138 = vpack.c.b16 %v9868, %v9863
      %v10139 = vpack.c.b16 %v9869, %v9864
      %v10140 = vpack.c.b16 %v9870, %v9865
      %v10141 = vpack.c.b16 %v9876, %v9871
      %v10142 = vpack.c.b16 %v9877, %v9872
      %v10143 = vpack.c.b16 %v9878, %v9873
      %v10144 = vpack.c.b16 %v9879, %v9874
      %v10145 = vpack.c.b16 %v9880, %v9875
      %v10146 = vpack.c.b16 %v9886, %v9881
      %v10147 = vpack.c.b16 %v9887, %v9882
      %v10148 = vpack.c.b16 %v9888, %v9883
      %v10149 = vpack.c.b16 %v9889, %v9884
      %v10150 = vpack.c.b16 %v9890, %v9885
      %v10151 = vpack.c.b16 %v9896, %v9891
      %v10152 = vpack.c.b16 %v9897, %v9892
      %v10153 = vpack.c.b16 %v9898, %v9893
      %v10154 = vpack.c.b16 %v9899, %v9894
      %v10155 = vpack.c.b16 %v9900, %v9895
      %v10156 = vpack.c.b16 %v9906, %v9901
      %v10157 = vpack.c.b16 %v9907, %v9902
      %v10158 = vpack.c.b16 %v9908, %v9903
      %v10159 = vpack.c.b16 %v9909, %v9904
      %v10160 = vpack.c.b16 %v9910, %v9905
      %v10161 = vpack.c.b16 %v9916, %v9911
      %v10162 = vpack.c.b16 %v9917, %v9912
      %v10163 = vpack.c.b16 %v9918, %v9913
      %v10164 = vpack.c.b16 %v9919, %v9914
      %v10165 = vpack.c.b16 %v9920, %v9915
      %v10166 = vpack.c.b16 %v9926, %v9921
      %v10167 = vpack.c.b16 %v9927, %v9922
      %v10168 = vpack.c.b16 %v9928, %v9923
      %v10169 = vpack.c.b16 %v9929, %v9924
      %v10170 = vpack.c.b16 %v9930, %v9925
      %v10171 = vpack.c.b16 %v9936, %v9931
      %v10172 = vpack.c.b16 %v9937, %v9932
      %v10173 = vpack.c.b16 %v9938, %v9933
      %v10174 = vpack.c.b16 %v9939, %v9934
      %v10175 = vpack.c.b16 %v9940, %v9935
      %v10176 = vpack.c.b16 %v9946, %v9941
      %v10177 = vpack.c.b16 %v9947, %v9942
      %v10178 = vpack.c.b16 %v9948, %v9943
      %v10179 = vpack.c.b16 %v9949, %v9944
      %v10180 = vpack.c.b16 %v9950, %v9945
      %v10181 = vpack.c.b16 %v9956, %v9951
      %v10182 = vpack.c.b16 %v9957, %v9952
      %v10183 = vpack.c.b16 %v9958, %v9953
      %v10184 = vpack.c.b16 %v9959, %v9954
      %v10185 = vpack.c.b16 %v9960, %v9955
      %v10186 = vpack.c.b16 %v9966, %v9961
      %v10187 = vpack.c.b16 %v9967, %v9962
      %v10188 = vpack.c.b16 %v9968, %v9963
      %v10189 = vpack.c.b16 %v9969, %v9964
      %v10190 = vpack.c.b16 %v9970, %v9965
      %v10191 = vpack.c.b16 %v9976, %v9971
      %v10192 = vpack.c.b16 %v9977, %v9972
      %v10193 = vpack.c.b16 %v9978, %v9973
      %v10194 = vpack.c.b16 %v9979, %v9974
      %v10195 = vpack.c.b16 %v9980, %v9975
      %v10196 = vpack.c.b16 %v9986, %v9981
      %v10197 = vpack.c.b16 %v9987, %v9982
      %v10198 = vpack.c.b16 %v9988, %v9983
      %v10199 = vpack.c.b16 %v9989, %v9984
      %v10200 = vpack.c.b16 %v9990, %v9985
      %v10201 = vpack.c.b16 %v9996, %v9991
      %v10202 = vpack.c.b16 %v9997, %v9992
      %v10203 = vpack.c.b16 %v9998, %v9993
      %v10204 = vpack.c.b16 %v9999, %v9994
      %v10205 = vpack.c.b16 %v10000, %v9995
      %v10206 = vpack.c.b16 %v10006, %v10001
      %v10207 = vpack.c.b16 %v10007, %v10002
      %v10208 = vpack.c.b16 %v10008, %v10003
      %v10209 = vpack.c.b16 %v10009, %v10004
      %v10210 = vpack.c.b16 %v10010, %v10005
      %v10211 = vpack.c.b16 %v10016, %v10011
      %v10212 = vpack.c.b16 %v10017, %v10012
      %v10213 = vpack.c.b16 %v10018, %v10013
      %v10214 = vpack.c.b16 %v10019, %v10014
      %v10215 = vpack.c.b16 %v10020, %v10015
      %v10216 = vpack.c.b16 %v10026, %v10021
      %v10217 = vpack.c.b16 %v10027, %v10022
      %v10218 = vpack.c.b16 %v10028, %v10023
      %v10219 = vpack.c.b16 %v10029, %v10024
      %v10220 = vpack.c.b16 %v10030, %v10025
      %v10221 = vpack.c.b16 %v10036, %v10031
      %v10222 = vpack.c.b16 %v10037, %v10032
      %v10223 = vpack.c.b16 %v10038, %v10033
      %v10224 = vpack.c.b16 %v10039, %v10034
      %v10225 = vpack.c.b16 %v10040, %v10035
      %v10226 = vpack.c.b16 %v10046, %v10041
      %v10227 = vpack.c.b16 %v10047, %v10042
      %v10228 = vpack.c.b16 %v10048, %v10043
      %v10229 = vpack.c.b16 %v10049, %v10044
      %v10230 = vpack.c.b16 %v10050, %v10045
      %v10231 = vpack.c.b16 %v10056, %v10051
      %v10232 = vpack.c.b16 %v10057, %v10052
      %v10233 = vpack.c.b16 %v10058, %v10053
      %v10234 = vpack.c.b16 %v10059, %v10054
      %v10235 = vpack.c.b16 %v10060, %v10055
      %v10236 = vpack.c.b16 %v10066, %v10061
      %v10237 = vpack.c.b16 %v10067, %v10062
      %v10238 = vpack.c.b16 %v10068, %v10063
      %v10239 = vpack.c.b16 %v10069, %v10064
      %v10240 = vpack.c.b16 %v10070, %v10065
      %v10241 = vpack.c.b16 %v10076, %v10071
      %v10242 = vpack.c.b16 %v10077, %v10072
      %v10243 = vpack.c.b16 %v10078, %v10073
      %v10244 = vpack.c.b16 %v10079, %v10074
      %v10245 = vpack.c.b16 %v10080, %v10075
      %v10246 = vpack.c.b16 %v10086, %v10081
      %v10247 = vpack.c.b16 %v10087, %v10082
      %v10248 = vpack.c.b16 %v10088, %v10083
      %v10249 = vpack.c.b16 %v10089, %v10084
      %v10250 = vpack.c.b16 %v10090, %v10085
      %10411 = vmatpush.bf16.msra.mxu0 %v10126
      %10412 = vmatpush.bf16.msra.mxu0 %v10121
      %10413 = vmatpush.bf16.msra.mxu0 %v10116
      %10414 = vmatpush.bf16.msra.mxu0 %v10111
      %10415 = vmatpush.bf16.msra.mxu0 %v10106
      %10416 = vmatpush.bf16.msra.mxu0 %v10101
      %10417 = vmatpush.bf16.msra.mxu0 %v10096
      %10418 = vmatpush.bf16.msra.mxu0 %v10091
      %10419 = vmatmul.bf16.gmra.mxu0 %v4900
      %v10420 = vpop.f32.mrf.mxu0
      %v10421 = vadd.f32 0.0, %v10420
      %v10422 = vpop.f32.mrf.mxu0
      %v10423 = vadd.f32 0.0, %v10422
      %10424 = vdwg.mxu0
      %10425 = vmatpush.bf16.msra.mxu0 %v10166
      %10426 = vmatpush.bf16.msra.mxu0 %v10161
      %10427 = vmatpush.bf16.msra.mxu0 %v10156
      %10428 = vmatpush.bf16.msra.mxu0 %v10151
      %10429 = vmatpush.bf16.msra.mxu0 %v10146
      %10430 = vmatpush.bf16.msra.mxu0 %v10141
      %10431 = vmatpush.bf16.msra.mxu0 %v10136
      %10432 = vmatpush.bf16.msra.mxu0 %v10131
      %10433 = vmatmul.bf16.gmra.mxu0 %v4901
      %v10434 = vpop.f32.mrf.mxu0
      %v10435 = vadd.f32 %v10421, %v10434
      %v10436 = vpop.f32.mrf.mxu0
      %v10437 = vadd.f32 %v10423, %v10436
      %10438 = vdwg.mxu0
      %10439 = vmatpush.bf16.msra.mxu0 %v10206
      %10440 = vmatpush.bf16.msra.mxu0 %v10201
      %10441 = vmatpush.bf16.msra.mxu0 %v10196
      %10442 = vmatpush.bf16.msra.mxu0 %v10191
      %10443 = vmatpush.bf16.msra.mxu0 %v10186
      %10444 = vmatpush.bf16.msra.mxu0 %v10181
      %10445 = vmatpush.bf16.msra.mxu0 %v10176
      %10446 = vmatpush.bf16.msra.mxu0 %v10171
      %10447 = vmatmul.bf16.gmra.mxu0 %v4902
      %v10448 = vpop.f32.mrf.mxu0
      %v10449 = vadd.f32 %v10435, %v10448
      %v10450 = vpop.f32.mrf.mxu0
      %v10451 = vadd.f32 %v10437, %v10450
      %10452 = vdwg.mxu0
      %10453 = vmatpush.bf16.msra.mxu0 %v10246
      %10454 = vmatpush.bf16.msra.mxu0 %v10241
      %10455 = vmatpush.bf16.msra.mxu0 %v10236
      %10456 = vmatpush.bf16.msra.mxu0 %v10231
      %10457 = vmatpush.bf16.msra.mxu0 %v10226
      %10458 = vmatpush.bf16.msra.mxu0 %v10221
      %10459 = vmatpush.bf16.msra.mxu0 %v10216
      %10460 = vmatpush.bf16.msra.mxu0 %v10211
      %10461 = vmatmul.bf16.gmra.mxu0 %v4903
      %v10462 = vpop.f32.mrf.mxu0
      %v10463 = vadd.f32 %v10449, %v10462
      %v10464 = vpop.f32.mrf.mxu0
      %v10465 = vadd.f32 %v10451, %v10464
      %10466 = vdwg.mxu0
      %10467 = vmatpush.bf16.msra.mxu0 %v10127
      %10468 = vmatpush.bf16.msra.mxu0 %v10122
      %10469 = vmatpush.bf16.msra.mxu0 %v10117
      %10470 = vmatpush.bf16.msra.mxu0 %v10112
      %10471 = vmatpush.bf16.msra.mxu0 %v10107
      %10472 = vmatpush.bf16.msra.mxu0 %v10102
      %10473 = vmatpush.bf16.msra.mxu0 %v10097
      %10474 = vmatpush.bf16.msra.mxu0 %v10092
      %10475 = vmatmul.bf16.gmra.mxu0 %v4900
      %v10476 = vpop.f32.mrf.mxu0
      %v10477 = vadd.f32 0.0, %v10476
      %v10478 = vpop.f32.mrf.mxu0
      %v10479 = vadd.f32 0.0, %v10478
      %10480 = vdwg.mxu0
      %10481 = vmatpush.bf16.msra.mxu0 %v10167
      %10482 = vmatpush.bf16.msra.mxu0 %v10162
      %10483 = vmatpush.bf16.msra.mxu0 %v10157
      %10484 = vmatpush.bf16.msra.mxu0 %v10152
      %10485 = vmatpush.bf16.msra.mxu0 %v10147
      %10486 = vmatpush.bf16.msra.mxu0 %v10142
      %10487 = vmatpush.bf16.msra.mxu0 %v10137
      %10488 = vmatpush.bf16.msra.mxu0 %v10132
      %10489 = vmatmul.bf16.gmra.mxu0 %v4901
      %v10490 = vpop.f32.mrf.mxu0
      %v10491 = vadd.f32 %v10477, %v10490
      %v10492 = vpop.f32.mrf.mxu0
      %v10493 = vadd.f32 %v10479, %v10492
      %10494 = vdwg.mxu0
      %10495 = vmatpush.bf16.msra.mxu0 %v10207
      %10496 = vmatpush.bf16.msra.mxu0 %v10202
      %10497 = vmatpush.bf16.msra.mxu0 %v10197
      %10498 = vmatpush.bf16.msra.mxu0 %v10192
      %10499 = vmatpush.bf16.msra.mxu0 %v10187
      %10500 = vmatpush.bf16.msra.mxu0 %v10182
      %10501 = vmatpush.bf16.msra.mxu0 %v10177
      %10502 = vmatpush.bf16.msra.mxu0 %v10172
      %10503 = vmatmul.bf16.gmra.mxu0 %v4902
      %v10504 = vpop.f32.mrf.mxu0
      %v10505 = vadd.f32 %v10491, %v10504
      %v10506 = vpop.f32.mrf.mxu0
      %v10507 = vadd.f32 %v10493, %v10506
      %10508 = vdwg.mxu0
      %10509 = vmatpush.bf16.msra.mxu0 %v10247
      %10510 = vmatpush.bf16.msra.mxu0 %v10242
      %10511 = vmatpush.bf16.msra.mxu0 %v10237
      %10512 = vmatpush.bf16.msra.mxu0 %v10232
      %10513 = vmatpush.bf16.msra.mxu0 %v10227
      %10514 = vmatpush.bf16.msra.mxu0 %v10222
      %10515 = vmatpush.bf16.msra.mxu0 %v10217
      %10516 = vmatpush.bf16.msra.mxu0 %v10212
      %10517 = vmatmul.bf16.gmra.mxu0 %v4903
      %v10518 = vpop.f32.mrf.mxu0
      %v10519 = vadd.f32 %v10505, %v10518
      %v10520 = vpop.f32.mrf.mxu0
      %v10521 = vadd.f32 %v10507, %v10520
      %10522 = vdwg.mxu0
      %10523 = vmatpush.bf16.msra.mxu0 %v10128
      %10524 = vmatpush.bf16.msra.mxu0 %v10123
      %10525 = vmatpush.bf16.msra.mxu0 %v10118
      %10526 = vmatpush.bf16.msra.mxu0 %v10113
      %10527 = vmatpush.bf16.msra.mxu0 %v10108
      %10528 = vmatpush.bf16.msra.mxu0 %v10103
      %10529 = vmatpush.bf16.msra.mxu0 %v10098
      %10530 = vmatpush.bf16.msra.mxu0 %v10093
      %10531 = vmatmul.bf16.gmra.mxu0 %v4900
      %v10532 = vpop.f32.mrf.mxu0
      %v10533 = vadd.f32 0.0, %v10532
      %v10534 = vpop.f32.mrf.mxu0
      %v10535 = vadd.f32 0.0, %v10534
      %10536 = vdwg.mxu0
      %10537 = vmatpush.bf16.msra.mxu0 %v10168
      %10538 = vmatpush.bf16.msra.mxu0 %v10163
      %10539 = vmatpush.bf16.msra.mxu0 %v10158
      %10540 = vmatpush.bf16.msra.mxu0 %v10153
      %10541 = vmatpush.bf16.msra.mxu0 %v10148
      %10542 = vmatpush.bf16.msra.mxu0 %v10143
      %10543 = vmatpush.bf16.msra.mxu0 %v10138
      %10544 = vmatpush.bf16.msra.mxu0 %v10133
      %10545 = vmatmul.bf16.gmra.mxu0 %v4901
      %v10546 = vpop.f32.mrf.mxu0
      %v10547 = vadd.f32 %v10533, %v10546
      %v10548 = vpop.f32.mrf.mxu0
      %v10549 = vadd.f32 %v10535, %v10548
      %10550 = vdwg.mxu0
      %10551 = vmatpush.bf16.msra.mxu0 %v10208
      %10552 = vmatpush.bf16.msra.mxu0 %v10203
      %10553 = vmatpush.bf16.msra.mxu0 %v10198
      %10554 = vmatpush.bf16.msra.mxu0 %v10193
      %10555 = vmatpush.bf16.msra.mxu0 %v10188
      %10556 = vmatpush.bf16.msra.mxu0 %v10183
      %10557 = vmatpush.bf16.msra.mxu0 %v10178
      %10558 = vmatpush.bf16.msra.mxu0 %v10173
      %10559 = vmatmul.bf16.gmra.mxu0 %v4902
      %v10560 = vpop.f32.mrf.mxu0
      %v10561 = vadd.f32 %v10547, %v10560
      %v10562 = vpop.f32.mrf.mxu0
      %v10563 = vadd.f32 %v10549, %v10562
      %10564 = vdwg.mxu0
      %10565 = vmatpush.bf16.msra.mxu0 %v10248
      %10566 = vmatpush.bf16.msra.mxu0 %v10243
      %10567 = vmatpush.bf16.msra.mxu0 %v10238
      %10568 = vmatpush.bf16.msra.mxu0 %v10233
      %10569 = vmatpush.bf16.msra.mxu0 %v10228
      %10570 = vmatpush.bf16.msra.mxu0 %v10223
      %10571 = vmatpush.bf16.msra.mxu0 %v10218
      %10572 = vmatpush.bf16.msra.mxu0 %v10213
      %10573 = vmatmul.bf16.gmra.mxu0 %v4903
      %v10574 = vpop.f32.mrf.mxu0
      %v10575 = vadd.f32 %v10561, %v10574
      %v10576 = vpop.f32.mrf.mxu0
      %v10577 = vadd.f32 %v10563, %v10576
      %10578 = vdwg.mxu0
      %10579 = vmatpush.bf16.msra.mxu0 %v10129
      %10580 = vmatpush.bf16.msra.mxu0 %v10124
      %10581 = vmatpush.bf16.msra.mxu0 %v10119
      %10582 = vmatpush.bf16.msra.mxu0 %v10114
      %10583 = vmatpush.bf16.msra.mxu0 %v10109
      %10584 = vmatpush.bf16.msra.mxu0 %v10104
      %10585 = vmatpush.bf16.msra.mxu0 %v10099
      %10586 = vmatpush.bf16.msra.mxu0 %v10094
      %10587 = vmatmul.bf16.gmra.mxu0 %v4900
      %v10588 = vpop.f32.mrf.mxu0
      %v10589 = vadd.f32 0.0, %v10588
      %v10590 = vpop.f32.mrf.mxu0
      %v10591 = vadd.f32 0.0, %v10590
      %10592 = vdwg.mxu0
      %10593 = vmatpush.bf16.msra.mxu0 %v10169
      %10594 = vmatpush.bf16.msra.mxu0 %v10164
      %10595 = vmatpush.bf16.msra.mxu0 %v10159
      %10596 = vmatpush.bf16.msra.mxu0 %v10154
      %10597 = vmatpush.bf16.msra.mxu0 %v10149
      %10598 = vmatpush.bf16.msra.mxu0 %v10144
      %10599 = vmatpush.bf16.msra.mxu0 %v10139
      %10600 = vmatpush.bf16.msra.mxu0 %v10134
      %10601 = vmatmul.bf16.gmra.mxu0 %v4901
      %v10602 = vpop.f32.mrf.mxu0
      %v10603 = vadd.f32 %v10589, %v10602
      %v10604 = vpop.f32.mrf.mxu0
      %v10605 = vadd.f32 %v10591, %v10604
      %10606 = vdwg.mxu0
      %10607 = vmatpush.bf16.msra.mxu0 %v10209
      %10608 = vmatpush.bf16.msra.mxu0 %v10204
      %10609 = vmatpush.bf16.msra.mxu0 %v10199
      %10610 = vmatpush.bf16.msra.mxu0 %v10194
      %10611 = vmatpush.bf16.msra.mxu0 %v10189
      %10612 = vmatpush.bf16.msra.mxu0 %v10184
      %10613 = vmatpush.bf16.msra.mxu0 %v10179
      %10614 = vmatpush.bf16.msra.mxu0 %v10174
      %10615 = vmatmul.bf16.gmra.mxu0 %v4902
      %v10616 = vpop.f32.mrf.mxu0
      %v10617 = vadd.f32 %v10603, %v10616
      %v10618 = vpop.f32.mrf.mxu0
      %v10619 = vadd.f32 %v10605, %v10618
      %10620 = vdwg.mxu0
      %10621 = vmatpush.bf16.msra.mxu0 %v10249
      %10622 = vmatpush.bf16.msra.mxu0 %v10244
      %10623 = vmatpush.bf16.msra.mxu0 %v10239
      %10624 = vmatpush.bf16.msra.mxu0 %v10234
      %10625 = vmatpush.bf16.msra.mxu0 %v10229
      %10626 = vmatpush.bf16.msra.mxu0 %v10224
      %10627 = vmatpush.bf16.msra.mxu0 %v10219
      %10628 = vmatpush.bf16.msra.mxu0 %v10214
      %10629 = vmatmul.bf16.gmra.mxu0 %v4903
      %v10630 = vpop.f32.mrf.mxu0
      %v10631 = vadd.f32 %v10617, %v10630
      %v10632 = vpop.f32.mrf.mxu0
      %v10633 = vadd.f32 %v10619, %v10632
      %10634 = vdwg.mxu0
      %10635 = vmatpush.bf16.msra.mxu0 %v10130
      %10636 = vmatpush.bf16.msra.mxu0 %v10125
      %10637 = vmatpush.bf16.msra.mxu0 %v10120
      %10638 = vmatpush.bf16.msra.mxu0 %v10115
      %10639 = vmatpush.bf16.msra.mxu0 %v10110
      %10640 = vmatpush.bf16.msra.mxu0 %v10105
      %10641 = vmatpush.bf16.msra.mxu0 %v10100
      %10642 = vmatpush.bf16.msra.mxu0 %v10095
      %10643 = vmatmul.bf16.gmra.mxu0 %v4900
      %v10644 = vpop.f32.mrf.mxu0
      %v10645 = vadd.f32 0.0, %v10644
      %v10646 = vpop.f32.mrf.mxu0
      %v10647 = vadd.f32 0.0, %v10646
      %10648 = vdwg.mxu0
      %10649 = vmatpush.bf16.msra.mxu0 %v10170
      %10650 = vmatpush.bf16.msra.mxu0 %v10165
      %10651 = vmatpush.bf16.msra.mxu0 %v10160
      %10652 = vmatpush.bf16.msra.mxu0 %v10155
      %10653 = vmatpush.bf16.msra.mxu0 %v10150
      %10654 = vmatpush.bf16.msra.mxu0 %v10145
      %10655 = vmatpush.bf16.msra.mxu0 %v10140
      %10656 = vmatpush.bf16.msra.mxu0 %v10135
      %10657 = vmatmul.bf16.gmra.mxu0 %v4901
      %v10658 = vpop.f32.mrf.mxu0
      %v10659 = vadd.f32 %v10645, %v10658
      %v10660 = vpop.f32.mrf.mxu0
      %v10661 = vadd.f32 %v10647, %v10660
      %10662 = vdwg.mxu0
      %10663 = vmatpush.bf16.msra.mxu0 %v10210
      %10664 = vmatpush.bf16.msra.mxu0 %v10205
      %10665 = vmatpush.bf16.msra.mxu0 %v10200
      %10666 = vmatpush.bf16.msra.mxu0 %v10195
      %10667 = vmatpush.bf16.msra.mxu0 %v10190
      %10668 = vmatpush.bf16.msra.mxu0 %v10185
      %10669 = vmatpush.bf16.msra.mxu0 %v10180
      %10670 = vmatpush.bf16.msra.mxu0 %v10175
      %10671 = vmatmul.bf16.gmra.mxu0 %v4902
      %v10672 = vpop.f32.mrf.mxu0
      %v10673 = vadd.f32 %v10659, %v10672
      %v10674 = vpop.f32.mrf.mxu0
      %v10675 = vadd.f32 %v10661, %v10674
      %10676 = vdwg.mxu0
      %10677 = vmatpush.bf16.msra.mxu0 %v10250
      %10678 = vmatpush.bf16.msra.mxu0 %v10245
      %10679 = vmatpush.bf16.msra.mxu0 %v10240
      %10680 = vmatpush.bf16.msra.mxu0 %v10235
      %10681 = vmatpush.bf16.msra.mxu0 %v10230
      %10682 = vmatpush.bf16.msra.mxu0 %v10225
      %10683 = vmatpush.bf16.msra.mxu0 %v10220
      %10684 = vmatpush.bf16.msra.mxu0 %v10215
      %10685 = vmatmul.bf16.gmra.mxu0 %v4903
      %v10686 = vpop.f32.mrf.mxu0
      %v10687 = vadd.f32 %v10673, %v10686
      %v10688 = vpop.f32.mrf.mxu0
      %v10689 = vadd.f32 %v10675, %v10688
      %10690 = vdwg.mxu0
      %s10691 = scalar_lea.vmem %s7, 120
      %v10692 = vld [vmem:[%s10691] sm:$0xff]
      %v10693 = vld [vmem:[%s10691 + $0x8] sm:$0xff]
      %v10694 = vld [vmem:[%s10691 + $0x10] sm:$0xff]
      %v10695 = vld [vmem:[%s10691 + $0x18] sm:$0xff]
      %v10696 = vld [vmem:[%s10691 + $0x20] sm:$0x3]
      %v10698 = vsel %vm7524, %v10692, 0
      %v10701 = vsel %vm7524, %v10693, 0
      %v10704 = vsel %vm7524, %v10694, 0
      %v10707 = vsel %vm7524, %v10695, 0
      %v10710 = vsel %vm7524, %v10696, 0
      %10712 = vmatpush.msra.mxu0 0.0
      %10713 = vmatpush.msra.mxu0 0.0
      %10714 = vmatpush.msra.mxu0 0.0
      %10715 = vmatpush.msra.mxu0 0.0
      %10716 = vmatpush.msra.mxu0 0.0
      %10717 = vmatpush.msra.mxu0 0.0
      %10718 = vmatpush.msra.mxu0 0.0
      %10719 = vmatpush.msra.mxu0 0.0
      %10720 = vmatpush.msra.mxu0 0.0
      %10721 = vmatpush.msra.mxu0 0.0
      %10722 = vmatpush.msra.mxu0 0.0
      %10723 = vmatpush.msra.mxu0 0.0
      %10724 = vmatpush.msra.mxu0 0.0
      %10725 = vmatpush.msra.mxu0 0.0
      %10726 = vmatpush.msra.mxu0 %v10465
      %10727 = vmatpush.msra.mxu0 %v10463
      %10728 = vmatmul.f32.gmra.mxu0 %v10698
      %v10729 = vpop.f32.mrf.mxu0
      %v10730 = vadd.f32 0.0, %v10729
      %10731 = vmatmul.f32.gmra.mxu0 %v10701
      %v10732 = vpop.f32.mrf.mxu0
      %v10733 = vadd.f32 0.0, %v10732
      %10734 = vmatmul.f32.gmra.mxu0 %v10704
      %v10735 = vpop.f32.mrf.mxu0
      %v10736 = vadd.f32 0.0, %v10735
      %10737 = vmatmul.f32.gmra.mxu0 %v10707
      %v10738 = vpop.f32.mrf.mxu0
      %v10739 = vadd.f32 0.0, %v10738
      %10740 = vmatmul.f32.gmra.mxu0 %v10710
      %v10741 = vpop.f32.mrf.mxu0
      %v10742 = vadd.f32 0.0, %v10741
      %10743 = vdwg.mxu0
      %10744 = vmatpush.msra.mxu0 0.0
      %10745 = vmatpush.msra.mxu0 0.0
      %10746 = vmatpush.msra.mxu0 0.0
      %10747 = vmatpush.msra.mxu0 0.0
      %10748 = vmatpush.msra.mxu0 0.0
      %10749 = vmatpush.msra.mxu0 0.0
      %10750 = vmatpush.msra.mxu0 0.0
      %10751 = vmatpush.msra.mxu0 0.0
      %10752 = vmatpush.msra.mxu0 0.0
      %10753 = vmatpush.msra.mxu0 0.0
      %10754 = vmatpush.msra.mxu0 0.0
      %10755 = vmatpush.msra.mxu0 0.0
      %10756 = vmatpush.msra.mxu0 0.0
      %10757 = vmatpush.msra.mxu0 0.0
      %10758 = vmatpush.msra.mxu0 %v10521
      %10759 = vmatpush.msra.mxu0 %v10519
      %10760 = vmatmul.f32.gmra.mxu0 %v10698
      %v10761 = vpop.f32.mrf.mxu0
      %v10762 = vadd.f32 0.0, %v10761
      %10763 = vmatmul.f32.gmra.mxu0 %v10701
      %v10764 = vpop.f32.mrf.mxu0
      %v10765 = vadd.f32 0.0, %v10764
      %10766 = vmatmul.f32.gmra.mxu0 %v10704
      %v10767 = vpop.f32.mrf.mxu0
      %v10768 = vadd.f32 0.0, %v10767
      %10769 = vmatmul.f32.gmra.mxu0 %v10707
      %v10770 = vpop.f32.mrf.mxu0
      %v10771 = vadd.f32 0.0, %v10770
      %10772 = vmatmul.f32.gmra.mxu0 %v10710
      %v10773 = vpop.f32.mrf.mxu0
      %v10774 = vadd.f32 0.0, %v10773
      %10775 = vdwg.mxu0
      %10776 = vmatpush.msra.mxu0 0.0
      %10777 = vmatpush.msra.mxu0 0.0
      %10778 = vmatpush.msra.mxu0 0.0
      %10779 = vmatpush.msra.mxu0 0.0
      %10780 = vmatpush.msra.mxu0 0.0
      %10781 = vmatpush.msra.mxu0 0.0
      %10782 = vmatpush.msra.mxu0 0.0
      %10783 = vmatpush.msra.mxu0 0.0
      %10784 = vmatpush.msra.mxu0 0.0
      %10785 = vmatpush.msra.mxu0 0.0
      %10786 = vmatpush.msra.mxu0 0.0
      %10787 = vmatpush.msra.mxu0 0.0
      %10788 = vmatpush.msra.mxu0 0.0
      %10789 = vmatpush.msra.mxu0 0.0
      %10790 = vmatpush.msra.mxu0 %v10577
      %10791 = vmatpush.msra.mxu0 %v10575
      %10792 = vmatmul.f32.gmra.mxu0 %v10698
      %v10793 = vpop.f32.mrf.mxu0
      %v10794 = vadd.f32 0.0, %v10793
      %10795 = vmatmul.f32.gmra.mxu0 %v10701
      %v10796 = vpop.f32.mrf.mxu0
      %v10797 = vadd.f32 0.0, %v10796
      %10798 = vmatmul.f32.gmra.mxu0 %v10704
      %v10799 = vpop.f32.mrf.mxu0
      %v10800 = vadd.f32 0.0, %v10799
      %10801 = vmatmul.f32.gmra.mxu0 %v10707
      %v10802 = vpop.f32.mrf.mxu0
      %v10803 = vadd.f32 0.0, %v10802
      %10804 = vmatmul.f32.gmra.mxu0 %v10710
      %v10805 = vpop.f32.mrf.mxu0
      %v10806 = vadd.f32 0.0, %v10805
      %10807 = vdwg.mxu0
      %10808 = vmatpush.msra.mxu0 0.0
      %10809 = vmatpush.msra.mxu0 0.0
      %10810 = vmatpush.msra.mxu0 0.0
      %10811 = vmatpush.msra.mxu0 0.0
      %10812 = vmatpush.msra.mxu0 0.0
      %10813 = vmatpush.msra.mxu0 0.0
      %10814 = vmatpush.msra.mxu0 0.0
      %10815 = vmatpush.msra.mxu0 0.0
      %10816 = vmatpush.msra.mxu0 0.0
      %10817 = vmatpush.msra.mxu0 0.0
      %10818 = vmatpush.msra.mxu0 0.0
      %10819 = vmatpush.msra.mxu0 0.0
      %10820 = vmatpush.msra.mxu0 0.0
      %10821 = vmatpush.msra.mxu0 0.0
      %10822 = vmatpush.msra.mxu0 %v10633
      %10823 = vmatpush.msra.mxu0 %v10631
      %10824 = vmatmul.f32.gmra.mxu0 %v10698
      %v10825 = vpop.f32.mrf.mxu0
      %v10826 = vadd.f32 0.0, %v10825
      %10827 = vmatmul.f32.gmra.mxu0 %v10701
      %v10828 = vpop.f32.mrf.mxu0
      %v10829 = vadd.f32 0.0, %v10828
      %10830 = vmatmul.f32.gmra.mxu0 %v10704
      %v10831 = vpop.f32.mrf.mxu0
      %v10832 = vadd.f32 0.0, %v10831
      %10833 = vmatmul.f32.gmra.mxu0 %v10707
      %v10834 = vpop.f32.mrf.mxu0
      %v10835 = vadd.f32 0.0, %v10834
      %10836 = vmatmul.f32.gmra.mxu0 %v10710
      %v10837 = vpop.f32.mrf.mxu0
      %v10838 = vadd.f32 0.0, %v10837
      %10839 = vdwg.mxu0
      %10840 = vmatpush.msra.mxu0 0.0
      %10841 = vmatpush.msra.mxu0 0.0
      %10842 = vmatpush.msra.mxu0 0.0
      %10843 = vmatpush.msra.mxu0 0.0
      %10844 = vmatpush.msra.mxu0 0.0
      %10845 = vmatpush.msra.mxu0 0.0
      %10846 = vmatpush.msra.mxu0 0.0
      %10847 = vmatpush.msra.mxu0 0.0
      %10848 = vmatpush.msra.mxu0 0.0
      %10849 = vmatpush.msra.mxu0 0.0
      %10850 = vmatpush.msra.mxu0 0.0
      %10851 = vmatpush.msra.mxu0 0.0
      %10852 = vmatpush.msra.mxu0 0.0
      %10853 = vmatpush.msra.mxu0 0.0
      %10854 = vmatpush.msra.mxu0 %v10689
      %10855 = vmatpush.msra.mxu0 %v10687
      %10856 = vmatmul.f32.gmra.mxu0 %v10698
      %v10857 = vpop.f32.mrf.mxu0
      %v10858 = vadd.f32 0.0, %v10857
      %10859 = vmatmul.f32.gmra.mxu0 %v10701
      %v10860 = vpop.f32.mrf.mxu0
      %v10861 = vadd.f32 0.0, %v10860
      %10862 = vmatmul.f32.gmra.mxu0 %v10704
      %v10863 = vpop.f32.mrf.mxu0
      %v10864 = vadd.f32 0.0, %v10863
      %10865 = vmatmul.f32.gmra.mxu0 %v10707
      %v10866 = vpop.f32.mrf.mxu0
      %v10867 = vadd.f32 0.0, %v10866
      %10868 = vmatmul.f32.gmra.mxu0 %v10710
      %v10869 = vpop.f32.mrf.mxu0
      %v10870 = vadd.f32 0.0, %v10869
      %10871 = vdwg.mxu0
      %v10872 = vadd.f32 %v9361, %v10730
      %v10873 = vadd.f32 %v9362, %v10762
      %v10874 = vadd.f32 %v9363, %v10794
      %v10875 = vadd.f32 %v9364, %v10826
      %v10876 = vadd.f32 %v9365, %v10858
      %v10877 = vadd.f32 %v9366, %v10733
      %v10878 = vadd.f32 %v9367, %v10765
      %v10879 = vadd.f32 %v9368, %v10797
      %v10880 = vadd.f32 %v9369, %v10829
      %v10881 = vadd.f32 %v9370, %v10861
      %v10882 = vadd.f32 %v9371, %v10736
      %v10883 = vadd.f32 %v9372, %v10768
      %v10884 = vadd.f32 %v9373, %v10800
      %v10885 = vadd.f32 %v9374, %v10832
      %v10886 = vadd.f32 %v9375, %v10864
      %v10887 = vadd.f32 %v9376, %v10739
      %v10888 = vadd.f32 %v9377, %v10771
      %v10889 = vadd.f32 %v9378, %v10803
      %v10890 = vadd.f32 %v9379, %v10835
      %v10891 = vadd.f32 %v9380, %v10867
      %v10892 = vadd.f32 %v9381, %v10742
      %v10893 = vadd.f32 %v9382, %v10774
      %v10894 = vadd.f32 %v9383, %v10806
      %v10895 = vadd.f32 %v9384, %v10838
      %v10896 = vadd.f32 %v9385, %v10870
      %v10897 = vld [vmem:[%s8] sm:$0x1f]
      %v10899 = vperm.slane %v10897, 0
      %v10900 = vperm.slane %v10897, 1
      %v10901 = vperm.slane %v10897, 2
      %v10902 = vperm.slane %v10897, 3
      %v10903 = vperm.slane %v10897, 4
      %v10909 = vadd.f32 %v10872, %v10899
      %v10910 = vadd.f32 %v10873, %v10900
      %v10911 = vadd.f32 %v10874, %v10901
      %v10912 = vadd.f32 %v10875, %v10902
      %v10913 = vadd.f32 %v10876, %v10903
      %v10914 = vadd.f32 %v10877, %v10899
      %v10915 = vadd.f32 %v10878, %v10900
      %v10916 = vadd.f32 %v10879, %v10901
      %v10917 = vadd.f32 %v10880, %v10902
      %v10918 = vadd.f32 %v10881, %v10903
      %v10919 = vadd.f32 %v10882, %v10899
      %v10920 = vadd.f32 %v10883, %v10900
      %v10921 = vadd.f32 %v10884, %v10901
      %v10922 = vadd.f32 %v10885, %v10902
      %v10923 = vadd.f32 %v10886, %v10903
      %v10924 = vadd.f32 %v10887, %v10899
      %v10925 = vadd.f32 %v10888, %v10900
      %v10926 = vadd.f32 %v10889, %v10901
      %v10927 = vadd.f32 %v10890, %v10902
      %v10928 = vadd.f32 %v10891, %v10903
      %v10929 = vadd.f32 %v10892, %v10899
      %v10930 = vadd.f32 %v10893, %v10900
      %v10931 = vadd.f32 %v10894, %v10901
      %v10932 = vadd.f32 %v10895, %v10902
      %v10933 = vadd.f32 %v10896, %v10903
      %v10934 = vmax.f32 %v10909, 0.0
      %v10935 = vmax.f32 %v10910, 0.0
      %v10936 = vmax.f32 %v10911, 0.0
      %v10937 = vmax.f32 %v10912, 0.0
      %v10938 = vmax.f32 %v10913, 0.0
      %v10939 = vmax.f32 %v10914, 0.0
      %v10940 = vmax.f32 %v10915, 0.0
      %v10941 = vmax.f32 %v10916, 0.0
      %v10942 = vmax.f32 %v10917, 0.0
      %v10943 = vmax.f32 %v10918, 0.0
      %v10944 = vmax.f32 %v10919, 0.0
      %v10945 = vmax.f32 %v10920, 0.0
      %v10946 = vmax.f32 %v10921, 0.0
      %v10947 = vmax.f32 %v10922, 0.0
      %v10948 = vmax.f32 %v10923, 0.0
      %v10949 = vmax.f32 %v10924, 0.0
      %v10950 = vmax.f32 %v10925, 0.0
      %v10951 = vmax.f32 %v10926, 0.0
      %v10952 = vmax.f32 %v10927, 0.0
      %v10953 = vmax.f32 %v10928, 0.0
      %v10954 = vmax.f32 %v10929, 0.0
      %v10955 = vmax.f32 %v10930, 0.0
      %v10956 = vmax.f32 %v10931, 0.0
      %v10957 = vmax.f32 %v10932, 0.0
      %v10958 = vmax.f32 %v10933, 0.0
      %v10959 = vpack.c.bf16 %v10939, %v10934
      %v10960 = vpack.c.bf16 %v10940, %v10935
      %v10961 = vpack.c.bf16 %v10941, %v10936
      %v10962 = vpack.c.bf16 %v10942, %v10937
      %v10963 = vpack.c.bf16 %v10943, %v10938
      %v10964 = vpack.c.bf16 %v10949, %v10944
      %v10965 = vpack.c.bf16 %v10950, %v10945
      %v10966 = vpack.c.bf16 %v10951, %v10946
      %v10967 = vpack.c.bf16 %v10952, %v10947
      %v10968 = vpack.c.bf16 %v10953, %v10948
      %v10969 = vpack.c.bf16 %v10954, %v10954
      %v10970 = vpack.c.bf16 %v10955, %v10955
      %v10971 = vpack.c.bf16 %v10956, %v10956
      %v10972 = vpack.c.bf16 %v10957, %v10957
      %v10973 = vpack.c.bf16 %v10958, %v10958
      %v10974 = vld [vmem:[%s9] sm:$0xf]
      %v10975 = vld [vmem:[%s9 + $0x4] sm:$0xf]
      %v10976 = vld [vmem:[%s9 + $0x8] sm:$0xf]
      %v10977 = vld [vmem:[%s9 + $0xc] sm:$0xf]
      %v10978 = vld [vmem:[%s9 + $0x10] sm:$0xf]
      %v10979 = vld [vmem:[%s9 + $0x14] sm:$0xf]
      %v10980 = vld [vmem:[%s9 + $0x18] sm:$0xf]
      %v10981 = vld [vmem:[%s9 + $0x1c] sm:$0xf]
      %v10982 = vld [vmem:[%s9 + $0x20] sm:$0xf]
      %v10983 = vld [vmem:[%s9 + $0x24] sm:$0xf]
      %v10984 = vld [vmem:[%s9 + $0x28] sm:$0xf]
      %v10985 = vld [vmem:[%s9 + $0x2c] sm:$0xf]
      %v10986 = vld [vmem:[%s9 + $0x30] sm:$0xf]
      %v10987 = vld [vmem:[%s9 + $0x34] sm:$0xf]
      %v10988 = vld [vmem:[%s9 + $0x38] sm:$0xf]
      %v10989 = vld [vmem:[%s9 + $0x3c] sm:$0xf]
      %v10990 = vld [vmem:[%s9 + $0x40] sm:$0xf]
      %v10991 = vld [vmem:[%s9 + $0x44] sm:$0xf]
      %v10992 = vld [vmem:[%s9 + $0x48] sm:$0xf]
      %v10993 = vld [vmem:[%s9 + $0x4c] sm:$0xf]
      %v10994 = vld [vmem:[%s9 + $0x50] sm:$0xf]
      %v10995 = vld [vmem:[%s9 + $0x54] sm:$0xf]
      %v10996 = vld [vmem:[%s9 + $0x58] sm:$0xf]
      %v10997 = vld [vmem:[%s9 + $0x5c] sm:$0xf]
      %v10998 = vld [vmem:[%s9 + $0x60] sm:$0xf]
      %v10999 = vld [vmem:[%s9 + $0x64] sm:$0xf]
      %v11000 = vld [vmem:[%s9 + $0x68] sm:$0xf]
      %v11001 = vld [vmem:[%s9 + $0x6c] sm:$0xf]
      %v11002 = vld [vmem:[%s9 + $0x70] sm:$0xf]
      %v11003 = vld [vmem:[%s9 + $0x74] sm:$0xf]
      %v11004 = vld [vmem:[%s9 + $0x78] sm:$0xf]
      %v11005 = vld [vmem:[%s9 + $0x7c] sm:$0xf]
      %v11006 = vld [vmem:[%s9 + $0x80] sm:$0xf]
      %v11007 = vld [vmem:[%s9 + $0x84] sm:$0xf]
      %v11008 = vld [vmem:[%s9 + $0x88] sm:$0xf]
      %v11009 = vld [vmem:[%s9 + $0x8c] sm:$0xf]
      %v11010 = vld [vmem:[%s9 + $0x90] sm:$0xf]
      %v11011 = vld [vmem:[%s9 + $0x94] sm:$0xf]
      %v11012 = vld [vmem:[%s9 + $0x98] sm:$0xf]
      %v11013 = vld [vmem:[%s9 + $0x9c] sm:$0xf]
      %v11014 = vld [vmem:[%s9 + $0xa0] sm:$0xf]
      %v11015 = vld [vmem:[%s9 + $0xa4] sm:$0xf]
      %v11016 = vld [vmem:[%s9 + $0xa8] sm:$0xf]
      %v11017 = vld [vmem:[%s9 + $0xac] sm:$0xf]
      %v11018 = vld [vmem:[%s9 + $0xb0] sm:$0xf]
      %v11019 = vld [vmem:[%s9 + $0xb4] sm:$0xf]
      %v11020 = vld [vmem:[%s9 + $0xb8] sm:$0xf]
      %v11021 = vld [vmem:[%s9 + $0xbc] sm:$0xf]
      %v11022 = vld [vmem:[%s9 + $0xc0] sm:$0xf]
      %v11023 = vld [vmem:[%s9 + $0xc4] sm:$0xf]
      %v11024 = vld [vmem:[%s9 + $0xc8] sm:$0xf]
      %v11025 = vld [vmem:[%s9 + $0xcc] sm:$0xf]
      %v11026 = vld [vmem:[%s9 + $0xd0] sm:$0xf]
      %v11027 = vld [vmem:[%s9 + $0xd4] sm:$0xf]
      %v11028 = vld [vmem:[%s9 + $0xd8] sm:$0xf]
      %v11029 = vld [vmem:[%s9 + $0xdc] sm:$0xf]
      %v11030 = vld [vmem:[%s9 + $0xe0] sm:$0xf]
      %v11031 = vld [vmem:[%s9 + $0xe4] sm:$0xf]
      %v11032 = vld [vmem:[%s9 + $0xe8] sm:$0xf]
      %v11033 = vld [vmem:[%s9 + $0xec] sm:$0xf]
      %v11034 = vld [vmem:[%s9 + $0xf0] sm:$0xf]
      %v11035 = vld [vmem:[%s9 + $0xf4] sm:$0xf]
      %v11036 = vld [vmem:[%s9 + $0xf8] sm:$0xf]
      %v11037 = vld [vmem:[%s9 + $0xfc] sm:$0xf]
      %v11038 = vld [vmem:[%s9 + $0x100] sm:$0xf]
      %v11039 = vld [vmem:[%s9 + $0x104] sm:$0xf]
      %v11040 = vld [vmem:[%s9 + $0x108] sm:$0xf]
      %v11041 = vld [vmem:[%s9 + $0x10c] sm:$0xf]
      %v11110 = vunpack.c.l.b16 %v10974
      %v11111 = vunpack.c.l.b16 %v10975
      %v11112 = vunpack.c.l.b16 %v10976
      %v11113 = vunpack.c.l.b16 %v10977
      %v11114 = vunpack.c.l.b16 %v10978
      %v11115 = vunpack.c.l.b16 %v10979
      %v11116 = vunpack.c.l.b16 %v10980
      %v11117 = vunpack.c.l.b16 %v10981
      %v11118 = vunpack.c.l.b16 %v10982
      %v11119 = vunpack.c.l.b16 %v10983
      %v11120 = vunpack.c.l.b16 %v10984
      %v11121 = vunpack.c.l.b16 %v10985
      %v11122 = vunpack.c.l.b16 %v10986
      %v11123 = vunpack.c.l.b16 %v10987
      %v11124 = vunpack.c.l.b16 %v10988
      %v11125 = vunpack.c.l.b16 %v10989
      %v11126 = vunpack.c.l.b16 %v10990
      %v11127 = vunpack.c.l.b16 %v10991
      %v11128 = vunpack.c.l.b16 %v10992
      %v11129 = vunpack.c.l.b16 %v10993
      %v11130 = vunpack.c.l.b16 %v10994
      %v11131 = vunpack.c.l.b16 %v10995
      %v11132 = vunpack.c.l.b16 %v10996
      %v11133 = vunpack.c.l.b16 %v10997
      %v11134 = vunpack.c.l.b16 %v10998
      %v11135 = vunpack.c.l.b16 %v10999
      %v11136 = vunpack.c.l.b16 %v11000
      %v11137 = vunpack.c.l.b16 %v11001
      %v11138 = vunpack.c.l.b16 %v11002
      %v11139 = vunpack.c.l.b16 %v11003
      %v11140 = vunpack.c.l.b16 %v11004
      %v11141 = vunpack.c.l.b16 %v11005
      %v11142 = vunpack.c.l.b16 %v11006
      %v11143 = vunpack.c.l.b16 %v11007
      %v11144 = vunpack.c.l.b16 %v11008
      %v11145 = vunpack.c.l.b16 %v11009
      %v11146 = vunpack.c.l.b16 %v11010
      %v11147 = vunpack.c.l.b16 %v11011
      %v11148 = vunpack.c.l.b16 %v11012
      %v11149 = vunpack.c.l.b16 %v11013
      %v11150 = vunpack.c.l.b16 %v11014
      %v11151 = vunpack.c.l.b16 %v11015
      %v11152 = vunpack.c.l.b16 %v11016
      %v11153 = vunpack.c.l.b16 %v11017
      %v11154 = vunpack.c.l.b16 %v11018
      %v11155 = vunpack.c.l.b16 %v11019
      %v11156 = vunpack.c.l.b16 %v11020
      %v11157 = vunpack.c.l.b16 %v11021
      %v11158 = vunpack.c.l.b16 %v11022
      %v11159 = vunpack.c.l.b16 %v11023
      %v11160 = vunpack.c.l.b16 %v11024
      %v11161 = vunpack.c.l.b16 %v11025
      %v11162 = vunpack.c.l.b16 %v11026
      %v11163 = vunpack.c.l.b16 %v11027
      %v11164 = vunpack.c.l.b16 %v11028
      %v11165 = vunpack.c.l.b16 %v11029
      %v11166 = vunpack.c.l.b16 %v11030
      %v11167 = vunpack.c.l.b16 %v11031
      %v11168 = vunpack.c.l.b16 %v11032
      %v11169 = vunpack.c.l.b16 %v11033
      %v11170 = vunpack.c.l.b16 %v11034
      %v11171 = vunpack.c.l.b16 %v11035
      %v11172 = vunpack.c.l.b16 %v11036
      %v11173 = vunpack.c.l.b16 %v11037
      %v11174 = vunpack.c.l.b16 %v11038
      %v11175 = vunpack.c.l.b16 %v11039
      %v11176 = vunpack.c.l.b16 %v11040
      %v11177 = vunpack.c.l.b16 %v11041
      %v11178 = vpack.c.b16 %v11111, %v11110
      %v11179 = vpack.c.b16 %v11113, %v11112
      %v11180 = vpack.c.b16 %v11115, %v11114
      %v11181 = vpack.c.b16 %v11117, %v11116
      %v11182 = vpack.c.b16 %v11119, %v11118
      %v11183 = vpack.c.b16 %v11121, %v11120
      %v11184 = vpack.c.b16 %v11123, %v11122
      %v11185 = vpack.c.b16 %v11125, %v11124
      %v11186 = vpack.c.b16 %v11127, %v11126
      %v11187 = vpack.c.b16 %v11129, %v11128
      %v11188 = vpack.c.b16 %v11131, %v11130
      %v11189 = vpack.c.b16 %v11133, %v11132
      %v11190 = vpack.c.b16 %v11135, %v11134
      %v11191 = vpack.c.b16 %v11137, %v11136
      %v11192 = vpack.c.b16 %v11139, %v11138
      %v11193 = vpack.c.b16 %v11141, %v11140
      %v11194 = vpack.c.b16 %v11143, %v11142
      %v11195 = vpack.c.b16 %v11145, %v11144
      %v11196 = vpack.c.b16 %v11147, %v11146
      %v11197 = vpack.c.b16 %v11149, %v11148
      %v11198 = vpack.c.b16 %v11151, %v11150
      %v11199 = vpack.c.b16 %v11153, %v11152
      %v11200 = vpack.c.b16 %v11155, %v11154
      %v11201 = vpack.c.b16 %v11157, %v11156
      %v11202 = vpack.c.b16 %v11159, %v11158
      %v11203 = vpack.c.b16 %v11161, %v11160
      %v11204 = vpack.c.b16 %v11163, %v11162
      %v11205 = vpack.c.b16 %v11165, %v11164
      %v11206 = vpack.c.b16 %v11167, %v11166
      %v11207 = vpack.c.b16 %v11169, %v11168
      %v11208 = vpack.c.b16 %v11171, %v11170
      %v11209 = vpack.c.b16 %v11173, %v11172
      %v11210 = vpack.c.b16 %v11175, %v11174
      %v11211 = vpack.c.b16 %v11177, %v11176
      %vm11246 = vcmask 261120
      %v11248 = vsel %vm11246, %v10963, 0
      %v11251 = vsel %vm11246, %v10968, 0
      %v11254 = vsel %vm11246, %v10973, 0
      %11256 = vmatpush.bf16.msra.mxu0 %v11185
      %11257 = vmatpush.bf16.msra.mxu0 %v11184
      %11258 = vmatpush.bf16.msra.mxu0 %v11183
      %11259 = vmatpush.bf16.msra.mxu0 %v11182
      %11260 = vmatpush.bf16.msra.mxu0 %v11181
      %11261 = vmatpush.bf16.msra.mxu0 %v11180
      %11262 = vmatpush.bf16.msra.mxu0 %v11179
      %11263 = vmatpush.bf16.msra.mxu0 %v11178
      %11264 = vmatmul.bf16.gmra.mxu0 %v10959
      %v11265 = vpop.f32.mrf.mxu0
      %v11266 = vadd.f32 0.0, %v11265
      %v11267 = vpop.f32.mrf.mxu0
      %v11268 = vadd.f32 0.0, %v11267
      %11269 = vmatmul.bf16.gmra.mxu0 %v10964
      %v11270 = vpop.f32.mrf.mxu0
      %v11271 = vadd.f32 0.0, %v11270
      %v11272 = vpop.f32.mrf.mxu0
      %v11273 = vadd.f32 0.0, %v11272
      %11274 = vmatmul.bf16.gmra.mxu0 %v10969
      %v11275 = vpop.f32.mrf.mxu0
      %v11276 = vadd.f32 0.0, %v11275
      %v11277 = vpop.f32.mrf.mxu0
      %11278 = vdwg.mxu0
      %11279 = vmatpush.bf16.msra.mxu0 %v11193
      %11280 = vmatpush.bf16.msra.mxu0 %v11192
      %11281 = vmatpush.bf16.msra.mxu0 %v11191
      %11282 = vmatpush.bf16.msra.mxu0 %v11190
      %11283 = vmatpush.bf16.msra.mxu0 %v11189
      %11284 = vmatpush.bf16.msra.mxu0 %v11188
      %11285 = vmatpush.bf16.msra.mxu0 %v11187
      %11286 = vmatpush.bf16.msra.mxu0 %v11186
      %11287 = vmatmul.bf16.gmra.mxu0 %v10960
      %v11288 = vpop.f32.mrf.mxu0
      %v11289 = vadd.f32 %v11266, %v11288
      %v11290 = vpop.f32.mrf.mxu0
      %v11291 = vadd.f32 %v11268, %v11290
      %11292 = vmatmul.bf16.gmra.mxu0 %v10965
      %v11293 = vpop.f32.mrf.mxu0
      %v11294 = vadd.f32 %v11271, %v11293
      %v11295 = vpop.f32.mrf.mxu0
      %v11296 = vadd.f32 %v11273, %v11295
      %11297 = vmatmul.bf16.gmra.mxu0 %v10970
      %v11298 = vpop.f32.mrf.mxu0
      %v11299 = vadd.f32 %v11276, %v11298
      %v11300 = vpop.f32.mrf.mxu0
      %11301 = vdwg.mxu0
      %11302 = vmatpush.bf16.msra.mxu0 %v11201
      %11303 = vmatpush.bf16.msra.mxu0 %v11200
      %11304 = vmatpush.bf16.msra.mxu0 %v11199
      %11305 = vmatpush.bf16.msra.mxu0 %v11198
      %11306 = vmatpush.bf16.msra.mxu0 %v11197
      %11307 = vmatpush.bf16.msra.mxu0 %v11196
      %11308 = vmatpush.bf16.msra.mxu0 %v11195
      %11309 = vmatpush.bf16.msra.mxu0 %v11194
      %11310 = vmatmul.bf16.gmra.mxu0 %v10961
      %v11311 = vpop.f32.mrf.mxu0
      %v11312 = vadd.f32 %v11289, %v11311
      %v11313 = vpop.f32.mrf.mxu0
      %v11314 = vadd.f32 %v11291, %v11313
      %11315 = vmatmul.bf16.gmra.mxu0 %v10966
      %v11316 = vpop.f32.mrf.mxu0
      %v11317 = vadd.f32 %v11294, %v11316
      %v11318 = vpop.f32.mrf.mxu0
      %v11319 = vadd.f32 %v11296, %v11318
      %11320 = vmatmul.bf16.gmra.mxu0 %v10971
      %v11321 = vpop.f32.mrf.mxu0
      %v11322 = vadd.f32 %v11299, %v11321
      %v11323 = vpop.f32.mrf.mxu0
      %11324 = vdwg.mxu0
      %11325 = vmatpush.bf16.msra.mxu0 %v11209
      %11326 = vmatpush.bf16.msra.mxu0 %v11208
      %11327 = vmatpush.bf16.msra.mxu0 %v11207
      %11328 = vmatpush.bf16.msra.mxu0 %v11206
      %11329 = vmatpush.bf16.msra.mxu0 %v11205
      %11330 = vmatpush.bf16.msra.mxu0 %v11204
      %11331 = vmatpush.bf16.msra.mxu0 %v11203
      %11332 = vmatpush.bf16.msra.mxu0 %v11202
      %11333 = vmatmul.bf16.gmra.mxu0 %v10962
      %v11334 = vpop.f32.mrf.mxu0
      %v11335 = vadd.f32 %v11312, %v11334
      %v11336 = vpop.f32.mrf.mxu0
      %v11337 = vadd.f32 %v11314, %v11336
      %11338 = vmatmul.bf16.gmra.mxu0 %v10967
      %v11339 = vpop.f32.mrf.mxu0
      %v11340 = vadd.f32 %v11317, %v11339
      %v11341 = vpop.f32.mrf.mxu0
      %v11342 = vadd.f32 %v11319, %v11341
      %11343 = vmatmul.bf16.gmra.mxu0 %v10972
      %v11344 = vpop.f32.mrf.mxu0
      %v11345 = vadd.f32 %v11322, %v11344
      %v11346 = vpop.f32.mrf.mxu0
      %11347 = vdwg.mxu0
      %11348 = vmatpush.bf16.msra.mxu0 0
      %11349 = vmatpush.bf16.msra.mxu0 0
      %11350 = vmatpush.bf16.msra.mxu0 0
      %11351 = vmatpush.bf16.msra.mxu0 0
      %11352 = vmatpush.bf16.msra.mxu0 0
      %11353 = vmatpush.bf16.msra.mxu0 0
      %11354 = vmatpush.bf16.msra.mxu0 %v11211
      %11355 = vmatpush.bf16.msra.mxu0 %v11210
      %11356 = vmatmul.bf16.gmra.mxu0 %v11248
      %v11357 = vpop.f32.mrf.mxu0
      %v11358 = vadd.f32 %v11335, %v11357
      %v11359 = vpop.f32.mrf.mxu0
      %v11360 = vadd.f32 %v11337, %v11359
      %11361 = vmatmul.bf16.gmra.mxu0 %v11251
      %v11362 = vpop.f32.mrf.mxu0
      %v11363 = vadd.f32 %v11340, %v11362
      %v11364 = vpop.f32.mrf.mxu0
      %v11365 = vadd.f32 %v11342, %v11364
      %11366 = vmatmul.bf16.gmra.mxu0 %v11254
      %v11367 = vpop.f32.mrf.mxu0
      %v11368 = vadd.f32 %v11345, %v11367
      %v11369 = vpop.f32.mrf.mxu0
      %11370 = vdwg.mxu0
      %v11371 = vld [vmem:[%s10] sm:$0xff]
      %v11372 = vld [vmem:[%s10 + $0x8] sm:$0xff]
      %v11373 = vld [vmem:[%s10 + $0x10] sm:$0xff]
      %v11374 = vld [vmem:[%s10 + $0x18] sm:$0xf]
      %s11375 = scalar_lea.vmem %s9, 272
      %v11376 = vld [vmem:[%s11375] sm:$0xf]
      %v11377 = vld [vmem:[%s11375 + $0x4] sm:$0xf]
      %v11378 = vld [vmem:[%s11375 + $0x8] sm:$0xf]
      %v11379 = vld [vmem:[%s11375 + $0xc] sm:$0xf]
      %v11380 = vld [vmem:[%s11375 + $0x10] sm:$0xf]
      %v11381 = vld [vmem:[%s11375 + $0x14] sm:$0xf]
      %v11382 = vld [vmem:[%s11375 + $0x18] sm:$0xf]
      %v11383 = vld [vmem:[%s11375 + $0x1c] sm:$0xf]
      %v11384 = vld [vmem:[%s11375 + $0x20] sm:$0xf]
      %v11385 = vld [vmem:[%s11375 + $0x24] sm:$0xf]
      %v11386 = vld [vmem:[%s11375 + $0x28] sm:$0xf]
      %v11387 = vld [vmem:[%s11375 + $0x2c] sm:$0xf]
      %v11388 = vld [vmem:[%s11375 + $0x30] sm:$0xf]
      %v11389 = vld [vmem:[%s11375 + $0x34] sm:$0xf]
      %v11390 = vld [vmem:[%s11375 + $0x38] sm:$0xf]
      %v11391 = vld [vmem:[%s11375 + $0x3c] sm:$0xf]
      %v11392 = vld [vmem:[%s11375 + $0x40] sm:$0xf]
      %v11393 = vld [vmem:[%s11375 + $0x44] sm:$0xf]
      %v11394 = vld [vmem:[%s11375 + $0x48] sm:$0xf]
      %v11395 = vld [vmem:[%s11375 + $0x4c] sm:$0xf]
      %v11396 = vld [vmem:[%s11375 + $0x50] sm:$0xf]
      %v11397 = vld [vmem:[%s11375 + $0x54] sm:$0xf]
      %v11398 = vld [vmem:[%s11375 + $0x58] sm:$0xf]
      %v11399 = vld [vmem:[%s11375 + $0x5c] sm:$0xf]
      %v11400 = vld [vmem:[%s11375 + $0x60] sm:$0xf]
      %v11401 = vld [vmem:[%s11375 + $0x64] sm:$0xf]
      %v11402 = vld [vmem:[%s11375 + $0x68] sm:$0xf]
      %v11403 = vld [vmem:[%s11375 + $0x6c] sm:$0xf]
      %v11404 = vld [vmem:[%s11375 + $0x70] sm:$0xf]
      %v11405 = vld [vmem:[%s11375 + $0x74] sm:$0xf]
      %v11406 = vld [vmem:[%s11375 + $0x78] sm:$0xf]
      %v11407 = vld [vmem:[%s11375 + $0x7c] sm:$0xf]
      %v11408 = vld [vmem:[%s11375 + $0x80] sm:$0xf]
      %v11409 = vld [vmem:[%s11375 + $0x84] sm:$0xf]
      %v11410 = vld [vmem:[%s11375 + $0x88] sm:$0xf]
      %v11411 = vld [vmem:[%s11375 + $0x8c] sm:$0xf]
      %v11412 = vld [vmem:[%s11375 + $0x90] sm:$0xf]
      %v11413 = vld [vmem:[%s11375 + $0x94] sm:$0xf]
      %v11414 = vld [vmem:[%s11375 + $0x98] sm:$0xf]
      %v11415 = vld [vmem:[%s11375 + $0x9c] sm:$0xf]
      %v11416 = vld [vmem:[%s11375 + $0xa0] sm:$0xf]
      %v11417 = vld [vmem:[%s11375 + $0xa4] sm:$0xf]
      %v11418 = vld [vmem:[%s11375 + $0xa8] sm:$0xf]
      %v11419 = vld [vmem:[%s11375 + $0xac] sm:$0xf]
      %v11420 = vld [vmem:[%s11375 + $0xb0] sm:$0xf]
      %v11421 = vld [vmem:[%s11375 + $0xb4] sm:$0xf]
      %v11422 = vld [vmem:[%s11375 + $0xb8] sm:$0xf]
      %v11423 = vld [vmem:[%s11375 + $0xbc] sm:$0xf]
      %v11424 = vld [vmem:[%s11375 + $0xc0] sm:$0xf]
      %v11425 = vld [vmem:[%s11375 + $0xc4] sm:$0xf]
      %v11426 = vld [vmem:[%s11375 + $0xc8] sm:$0xf]
      %v11427 = vld [vmem:[%s11375 + $0xcc] sm:$0xf]
      %v11428 = vld [vmem:[%s11375 + $0xd0] sm:$0xf]
      %v11429 = vld [vmem:[%s11375 + $0xd4] sm:$0xf]
      %v11430 = vld [vmem:[%s11375 + $0xd8] sm:$0xf]
      %v11431 = vld [vmem:[%s11375 + $0xdc] sm:$0xf]
      %v11432 = vld [vmem:[%s11375 + $0xe0] sm:$0xf]
      %v11433 = vld [vmem:[%s11375 + $0xe4] sm:$0xf]
      %v11434 = vld [vmem:[%s11375 + $0xe8] sm:$0xf]
      %v11435 = vld [vmem:[%s11375 + $0xec] sm:$0xf]
      %v11436 = vld [vmem:[%s11375 + $0xf0] sm:$0xf]
      %v11437 = vld [vmem:[%s11375 + $0xf4] sm:$0xf]
      %v11438 = vld [vmem:[%s11375 + $0xf8] sm:$0xf]
      %v11439 = vld [vmem:[%s11375 + $0xfc] sm:$0xf]
      %v11440 = vld [vmem:[%s11375 + $0x100] sm:$0xf]
      %v11441 = vld [vmem:[%s11375 + $0x104] sm:$0xf]
      %v11442 = vld [vmem:[%s11375 + $0x108] sm:$0xf]
      %v11443 = vld [vmem:[%s11375 + $0x10c] sm:$0xf]
      %v11512 = vunpack.c.l.b16 %v11376
      %v11513 = vunpack.c.l.b16 %v11377
      %v11514 = vunpack.c.l.b16 %v11378
      %v11515 = vunpack.c.l.b16 %v11379
      %v11516 = vunpack.c.l.b16 %v11380
      %v11517 = vunpack.c.l.b16 %v11381
      %v11518 = vunpack.c.l.b16 %v11382
      %v11519 = vunpack.c.l.b16 %v11383
      %v11520 = vunpack.c.l.b16 %v11384
      %v11521 = vunpack.c.l.b16 %v11385
      %v11522 = vunpack.c.l.b16 %v11386
      %v11523 = vunpack.c.l.b16 %v11387
      %v11524 = vunpack.c.l.b16 %v11388
      %v11525 = vunpack.c.l.b16 %v11389
      %v11526 = vunpack.c.l.b16 %v11390
      %v11527 = vunpack.c.l.b16 %v11391
      %v11528 = vunpack.c.l.b16 %v11392
      %v11529 = vunpack.c.l.b16 %v11393
      %v11530 = vunpack.c.l.b16 %v11394
      %v11531 = vunpack.c.l.b16 %v11395
      %v11532 = vunpack.c.l.b16 %v11396
      %v11533 = vunpack.c.l.b16 %v11397
      %v11534 = vunpack.c.l.b16 %v11398
      %v11535 = vunpack.c.l.b16 %v11399
      %v11536 = vunpack.c.l.b16 %v11400
      %v11537 = vunpack.c.l.b16 %v11401
      %v11538 = vunpack.c.l.b16 %v11402
      %v11539 = vunpack.c.l.b16 %v11403
      %v11540 = vunpack.c.l.b16 %v11404
      %v11541 = vunpack.c.l.b16 %v11405
      %v11542 = vunpack.c.l.b16 %v11406
      %v11543 = vunpack.c.l.b16 %v11407
      %v11544 = vunpack.c.l.b16 %v11408
      %v11545 = vunpack.c.l.b16 %v11409
      %v11546 = vunpack.c.l.b16 %v11410
      %v11547 = vunpack.c.l.b16 %v11411
      %v11548 = vunpack.c.l.b16 %v11412
      %v11549 = vunpack.c.l.b16 %v11413
      %v11550 = vunpack.c.l.b16 %v11414
      %v11551 = vunpack.c.l.b16 %v11415
      %v11552 = vunpack.c.l.b16 %v11416
      %v11553 = vunpack.c.l.b16 %v11417
      %v11554 = vunpack.c.l.b16 %v11418
      %v11555 = vunpack.c.l.b16 %v11419
      %v11556 = vunpack.c.l.b16 %v11420
      %v11557 = vunpack.c.l.b16 %v11421
      %v11558 = vunpack.c.l.b16 %v11422
      %v11559 = vunpack.c.l.b16 %v11423
      %v11560 = vunpack.c.l.b16 %v11424
      %v11561 = vunpack.c.l.b16 %v11425
      %v11562 = vunpack.c.l.b16 %v11426
      %v11563 = vunpack.c.l.b16 %v11427
      %v11564 = vunpack.c.l.b16 %v11428
      %v11565 = vunpack.c.l.b16 %v11429
      %v11566 = vunpack.c.l.b16 %v11430
      %v11567 = vunpack.c.l.b16 %v11431
      %v11568 = vunpack.c.l.b16 %v11432
      %v11569 = vunpack.c.l.b16 %v11433
      %v11570 = vunpack.c.l.b16 %v11434
      %v11571 = vunpack.c.l.b16 %v11435
      %v11572 = vunpack.c.l.b16 %v11436
      %v11573 = vunpack.c.l.b16 %v11437
      %v11574 = vunpack.c.l.b16 %v11438
      %v11575 = vunpack.c.l.b16 %v11439
      %v11576 = vunpack.c.l.b16 %v11440
      %v11577 = vunpack.c.l.b16 %v11441
      %v11578 = vunpack.c.l.b16 %v11442
      %v11579 = vunpack.c.l.b16 %v11443
      %v11580 = vpack.c.b16 %v11513, %v11512
      %v11581 = vpack.c.b16 %v11515, %v11514
      %v11582 = vpack.c.b16 %v11517, %v11516
      %v11583 = vpack.c.b16 %v11519, %v11518
      %v11584 = vpack.c.b16 %v11521, %v11520
      %v11585 = vpack.c.b16 %v11523, %v11522
      %v11586 = vpack.c.b16 %v11525, %v11524
      %v11587 = vpack.c.b16 %v11527, %v11526
      %v11588 = vpack.c.b16 %v11529, %v11528
      %v11589 = vpack.c.b16 %v11531, %v11530
      %v11590 = vpack.c.b16 %v11533, %v11532
      %v11591 = vpack.c.b16 %v11535, %v11534
      %v11592 = vpack.c.b16 %v11537, %v11536
      %v11593 = vpack.c.b16 %v11539, %v11538
      %v11594 = vpack.c.b16 %v11541, %v11540
      %v11595 = vpack.c.b16 %v11543, %v11542
      %v11596 = vpack.c.b16 %v11545, %v11544
      %v11597 = vpack.c.b16 %v11547, %v11546
      %v11598 = vpack.c.b16 %v11549, %v11548
      %v11599 = vpack.c.b16 %v11551, %v11550
      %v11600 = vpack.c.b16 %v11553, %v11552
      %v11601 = vpack.c.b16 %v11555, %v11554
      %v11602 = vpack.c.b16 %v11557, %v11556
      %v11603 = vpack.c.b16 %v11559, %v11558
      %v11604 = vpack.c.b16 %v11561, %v11560
      %v11605 = vpack.c.b16 %v11563, %v11562
      %v11606 = vpack.c.b16 %v11565, %v11564
      %v11607 = vpack.c.b16 %v11567, %v11566
      %v11608 = vpack.c.b16 %v11569, %v11568
      %v11609 = vpack.c.b16 %v11571, %v11570
      %v11610 = vpack.c.b16 %v11573, %v11572
      %v11611 = vpack.c.b16 %v11575, %v11574
      %v11612 = vpack.c.b16 %v11577, %v11576
      %v11613 = vpack.c.b16 %v11579, %v11578
      %11648 = vmatpush.bf16.msra.mxu0 %v11587
      %11649 = vmatpush.bf16.msra.mxu0 %v11586
      %11650 = vmatpush.bf16.msra.mxu0 %v11585
      %11651 = vmatpush.bf16.msra.mxu0 %v11584
      %11652 = vmatpush.bf16.msra.mxu0 %v11583
      %11653 = vmatpush.bf16.msra.mxu0 %v11582
      %11654 = vmatpush.bf16.msra.mxu0 %v11581
      %11655 = vmatpush.bf16.msra.mxu0 %v11580
      %11656 = vmatmul.bf16.gmra.mxu0 %v10959
      %v11657 = vpop.f32.mrf.mxu0
      %v11658 = vadd.f32 0.0, %v11657
      %v11659 = vpop.f32.mrf.mxu0
      %v11660 = vadd.f32 0.0, %v11659
      %11661 = vmatmul.bf16.gmra.mxu0 %v10964
      %v11662 = vpop.f32.mrf.mxu0
      %v11663 = vadd.f32 0.0, %v11662
      %v11664 = vpop.f32.mrf.mxu0
      %v11665 = vadd.f32 0.0, %v11664
      %11666 = vmatmul.bf16.gmra.mxu0 %v10969
      %v11667 = vpop.f32.mrf.mxu0
      %v11668 = vadd.f32 0.0, %v11667
      %v11669 = vpop.f32.mrf.mxu0
      %11670 = vdwg.mxu0
      %11671 = vmatpush.bf16.msra.mxu0 %v11595
      %11672 = vmatpush.bf16.msra.mxu0 %v11594
      %11673 = vmatpush.bf16.msra.mxu0 %v11593
      %11674 = vmatpush.bf16.msra.mxu0 %v11592
      %11675 = vmatpush.bf16.msra.mxu0 %v11591
      %11676 = vmatpush.bf16.msra.mxu0 %v11590
      %11677 = vmatpush.bf16.msra.mxu0 %v11589
      %11678 = vmatpush.bf16.msra.mxu0 %v11588
      %11679 = vmatmul.bf16.gmra.mxu0 %v10960
      %v11680 = vpop.f32.mrf.mxu0
      %v11681 = vadd.f32 %v11658, %v11680
      %v11682 = vpop.f32.mrf.mxu0
      %v11683 = vadd.f32 %v11660, %v11682
      %11684 = vmatmul.bf16.gmra.mxu0 %v10965
      %v11685 = vpop.f32.mrf.mxu0
      %v11686 = vadd.f32 %v11663, %v11685
      %v11687 = vpop.f32.mrf.mxu0
      %v11688 = vadd.f32 %v11665, %v11687
      %11689 = vmatmul.bf16.gmra.mxu0 %v10970
      %v11690 = vpop.f32.mrf.mxu0
      %v11691 = vadd.f32 %v11668, %v11690
      %v11692 = vpop.f32.mrf.mxu0
      %11693 = vdwg.mxu0
      %11694 = vmatpush.bf16.msra.mxu0 %v11603
      %11695 = vmatpush.bf16.msra.mxu0 %v11602
      %11696 = vmatpush.bf16.msra.mxu0 %v11601
      %11697 = vmatpush.bf16.msra.mxu0 %v11600
      %11698 = vmatpush.bf16.msra.mxu0 %v11599
      %11699 = vmatpush.bf16.msra.mxu0 %v11598
      %11700 = vmatpush.bf16.msra.mxu0 %v11597
      %11701 = vmatpush.bf16.msra.mxu0 %v11596
      %11702 = vmatmul.bf16.gmra.mxu0 %v10961
      %v11703 = vpop.f32.mrf.mxu0
      %v11704 = vadd.f32 %v11681, %v11703
      %v11705 = vpop.f32.mrf.mxu0
      %v11706 = vadd.f32 %v11683, %v11705
      %11707 = vmatmul.bf16.gmra.mxu0 %v10966
      %v11708 = vpop.f32.mrf.mxu0
      %v11709 = vadd.f32 %v11686, %v11708
      %v11710 = vpop.f32.mrf.mxu0
      %v11711 = vadd.f32 %v11688, %v11710
      %11712 = vmatmul.bf16.gmra.mxu0 %v10971
      %v11713 = vpop.f32.mrf.mxu0
      %v11714 = vadd.f32 %v11691, %v11713
      %v11715 = vpop.f32.mrf.mxu0
      %11716 = vdwg.mxu0
      %11717 = vmatpush.bf16.msra.mxu0 %v11611
      %11718 = vmatpush.bf16.msra.mxu0 %v11610
      %11719 = vmatpush.bf16.msra.mxu0 %v11609
      %11720 = vmatpush.bf16.msra.mxu0 %v11608
      %11721 = vmatpush.bf16.msra.mxu0 %v11607
      %11722 = vmatpush.bf16.msra.mxu0 %v11606
      %11723 = vmatpush.bf16.msra.mxu0 %v11605
      %11724 = vmatpush.bf16.msra.mxu0 %v11604
      %11725 = vmatmul.bf16.gmra.mxu0 %v10962
      %v11726 = vpop.f32.mrf.mxu0
      %v11727 = vadd.f32 %v11704, %v11726
      %v11728 = vpop.f32.mrf.mxu0
      %v11729 = vadd.f32 %v11706, %v11728
      %11730 = vmatmul.bf16.gmra.mxu0 %v10967
      %v11731 = vpop.f32.mrf.mxu0
      %v11732 = vadd.f32 %v11709, %v11731
      %v11733 = vpop.f32.mrf.mxu0
      %v11734 = vadd.f32 %v11711, %v11733
      %11735 = vmatmul.bf16.gmra.mxu0 %v10972
      %v11736 = vpop.f32.mrf.mxu0
      %v11737 = vadd.f32 %v11714, %v11736
      %v11738 = vpop.f32.mrf.mxu0
      %11739 = vdwg.mxu0
      %11740 = vmatpush.bf16.msra.mxu0 0
      %11741 = vmatpush.bf16.msra.mxu0 0
      %11742 = vmatpush.bf16.msra.mxu0 0
      %11743 = vmatpush.bf16.msra.mxu0 0
      %11744 = vmatpush.bf16.msra.mxu0 0
      %11745 = vmatpush.bf16.msra.mxu0 0
      %11746 = vmatpush.bf16.msra.mxu0 %v11613
      %11747 = vmatpush.bf16.msra.mxu0 %v11612
      %11748 = vmatmul.bf16.gmra.mxu0 %v11248
      %v11749 = vpop.f32.mrf.mxu0
      %v11750 = vadd.f32 %v11727, %v11749
      %v11751 = vpop.f32.mrf.mxu0
      %v11752 = vadd.f32 %v11729, %v11751
      %11753 = vmatmul.bf16.gmra.mxu0 %v11251
      %v11754 = vpop.f32.mrf.mxu0
      %v11755 = vadd.f32 %v11732, %v11754
      %v11756 = vpop.f32.mrf.mxu0
      %v11757 = vadd.f32 %v11734, %v11756
      %11758 = vmatmul.bf16.gmra.mxu0 %v11254
      %v11759 = vpop.f32.mrf.mxu0
      %v11760 = vadd.f32 %v11737, %v11759
      %v11761 = vpop.f32.mrf.mxu0
      %11762 = vdwg.mxu0
      %s11763 = scalar_lea.vmem %s10, 32
      %v11764 = vld [vmem:[%s11763] sm:$0xff]
      %v11765 = vld [vmem:[%s11763 + $0x8] sm:$0xff]
      %v11766 = vld [vmem:[%s11763 + $0x10] sm:$0xff]
      %v11767 = vld [vmem:[%s11763 + $0x18] sm:$0xf]
      %vm11768 = vcmask 277504
      %v11770 = vsel %vm11768, %v11764, 0
      %v11773 = vsel %vm11768, %v11765, 0
      %v11776 = vsel %vm11768, %v11766, 0
      %v11779 = vsel %vm11768, %v11767, 0
      %vm11781 = vcmask 1041408
      %v11783 = vsel %vm11781, %v11760, 0
      %11785 = vmatpush.msra.mxu0 0.0
      %11786 = vmatpush.msra.mxu0 0.0
      %11787 = vmatpush.msra.mxu0 0.0
      %11788 = vmatpush.msra.mxu0 0.0
      %11789 = vmatpush.msra.mxu0 0.0
      %11790 = vmatpush.msra.mxu0 0.0
      %11791 = vmatpush.msra.mxu0 0.0
      %11792 = vmatpush.msra.mxu0 0.0
      %11793 = vmatpush.msra.mxu0 0.0
      %11794 = vmatpush.msra.mxu0 0.0
      %11795 = vmatpush.msra.mxu0 0.0
      %11796 = vmatpush.msra.mxu0 %v11783
      %11797 = vmatpush.msra.mxu0 %v11757
      %11798 = vmatpush.msra.mxu0 %v11755
      %11799 = vmatpush.msra.mxu0 %v11752
      %11800 = vmatpush.msra.mxu0 %v11750
      %11801 = vmatmul.f32.gmra.mxu0 %v11770
      %v11802 = vpop.f32.mrf.mxu0
      %v11803 = vadd.f32 0.0, %v11802
      %11804 = vmatmul.f32.gmra.mxu0 %v11773
      %v11805 = vpop.f32.mrf.mxu0
      %v11806 = vadd.f32 0.0, %v11805
      %11807 = vmatmul.f32.gmra.mxu0 %v11776
      %v11808 = vpop.f32.mrf.mxu0
      %v11809 = vadd.f32 0.0, %v11808
      %11810 = vmatmul.f32.gmra.mxu0 %v11779
      %v11811 = vpop.f32.mrf.mxu0
      %v11812 = vadd.f32 0.0, %v11811
      %11813 = vdwg.mxu0
      %v11815 = vsel %vm11768, %v11371, 0
      %v11818 = vsel %vm11768, %v11372, 0
      %v11821 = vsel %vm11768, %v11373, 0
      %v11824 = vsel %vm11768, %v11374, 0
      %v11827 = vsel %vm11781, %v11368, 0
      %11829 = vmatpush.msra.mxu0 0.0
      %11830 = vmatpush.msra.mxu0 0.0
      %11831 = vmatpush.msra.mxu0 0.0
      %11832 = vmatpush.msra.mxu0 0.0
      %11833 = vmatpush.msra.mxu0 0.0
      %11834 = vmatpush.msra.mxu0 0.0
      %11835 = vmatpush.msra.mxu0 0.0
      %11836 = vmatpush.msra.mxu0 0.0
      %11837 = vmatpush.msra.mxu0 0.0
      %11838 = vmatpush.msra.mxu0 0.0
      %11839 = vmatpush.msra.mxu0 0.0
      %11840 = vmatpush.msra.mxu0 %v11827
      %11841 = vmatpush.msra.mxu0 %v11365
      %11842 = vmatpush.msra.mxu0 %v11363
      %11843 = vmatpush.msra.mxu0 %v11360
      %11844 = vmatpush.msra.mxu0 %v11358
      %11845 = vmatmul.f32.gmra.mxu0 %v11815
      %v11846 = vpop.f32.mrf.mxu0
      %v11847 = vadd.f32 %v11803, %v11846
      %11848 = vmatmul.f32.gmra.mxu0 %v11818
      %v11849 = vpop.f32.mrf.mxu0
      %v11850 = vadd.f32 %v11806, %v11849
      %11851 = vmatmul.f32.gmra.mxu0 %v11821
      %v11852 = vpop.f32.mrf.mxu0
      %v11853 = vadd.f32 %v11809, %v11852
      %11854 = vmatmul.f32.gmra.mxu0 %v11824
      %v11855 = vpop.f32.mrf.mxu0
      %v11856 = vadd.f32 %v11812, %v11855
      %11857 = vdwg.mxu0
      %s11858 = scalar_lea.vmem %s9, 544
      %v11859 = vld [vmem:[%s11858] sm:$0xf]
      %v11860 = vld [vmem:[%s11858 + $0x4] sm:$0xf]
      %v11861 = vld [vmem:[%s11858 + $0x8] sm:$0xf]
      %v11862 = vld [vmem:[%s11858 + $0xc] sm:$0xf]
      %v11863 = vld [vmem:[%s11858 + $0x10] sm:$0xf]
      %v11864 = vld [vmem:[%s11858 + $0x14] sm:$0xf]
      %v11865 = vld [vmem:[%s11858 + $0x18] sm:$0xf]
      %v11866 = vld [vmem:[%s11858 + $0x1c] sm:$0xf]
      %v11867 = vld [vmem:[%s11858 + $0x20] sm:$0xf]
      %v11868 = vld [vmem:[%s11858 + $0x24] sm:$0xf]
      %v11869 = vld [vmem:[%s11858 + $0x28] sm:$0xf]
      %v11870 = vld [vmem:[%s11858 + $0x2c] sm:$0xf]
      %v11871 = vld [vmem:[%s11858 + $0x30] sm:$0xf]
      %v11872 = vld [vmem:[%s11858 + $0x34] sm:$0xf]
      %v11873 = vld [vmem:[%s11858 + $0x38] sm:$0xf]
      %v11874 = vld [vmem:[%s11858 + $0x3c] sm:$0xf]
      %v11875 = vld [vmem:[%s11858 + $0x40] sm:$0xf]
      %v11876 = vld [vmem:[%s11858 + $0x44] sm:$0xf]
      %v11877 = vld [vmem:[%s11858 + $0x48] sm:$0xf]
      %v11878 = vld [vmem:[%s11858 + $0x4c] sm:$0xf]
      %v11879 = vld [vmem:[%s11858 + $0x50] sm:$0xf]
      %v11880 = vld [vmem:[%s11858 + $0x54] sm:$0xf]
      %v11881 = vld [vmem:[%s11858 + $0x58] sm:$0xf]
      %v11882 = vld [vmem:[%s11858 + $0x5c] sm:$0xf]
      %v11883 = vld [vmem:[%s11858 + $0x60] sm:$0xf]
      %v11884 = vld [vmem:[%s11858 + $0x64] sm:$0xf]
      %v11885 = vld [vmem:[%s11858 + $0x68] sm:$0xf]
      %v11886 = vld [vmem:[%s11858 + $0x6c] sm:$0xf]
      %v11887 = vld [vmem:[%s11858 + $0x70] sm:$0xf]
      %v11888 = vld [vmem:[%s11858 + $0x74] sm:$0xf]
      %v11889 = vld [vmem:[%s11858 + $0x78] sm:$0xf]
      %v11890 = vld [vmem:[%s11858 + $0x7c] sm:$0xf]
      %v11891 = vld [vmem:[%s11858 + $0x80] sm:$0xf]
      %v11892 = vld [vmem:[%s11858 + $0x84] sm:$0xf]
      %v11893 = vld [vmem:[%s11858 + $0x88] sm:$0xf]
      %v11894 = vld [vmem:[%s11858 + $0x8c] sm:$0xf]
      %v11895 = vld [vmem:[%s11858 + $0x90] sm:$0xf]
      %v11896 = vld [vmem:[%s11858 + $0x94] sm:$0xf]
      %v11897 = vld [vmem:[%s11858 + $0x98] sm:$0xf]
      %v11898 = vld [vmem:[%s11858 + $0x9c] sm:$0xf]
      %v11899 = vld [vmem:[%s11858 + $0xa0] sm:$0xf]
      %v11900 = vld [vmem:[%s11858 + $0xa4] sm:$0xf]
      %v11901 = vld [vmem:[%s11858 + $0xa8] sm:$0xf]
      %v11902 = vld [vmem:[%s11858 + $0xac] sm:$0xf]
      %v11903 = vld [vmem:[%s11858 + $0xb0] sm:$0xf]
      %v11904 = vld [vmem:[%s11858 + $0xb4] sm:$0xf]
      %v11905 = vld [vmem:[%s11858 + $0xb8] sm:$0xf]
      %v11906 = vld [vmem:[%s11858 + $0xbc] sm:$0xf]
      %v11907 = vld [vmem:[%s11858 + $0xc0] sm:$0xf]
      %v11908 = vld [vmem:[%s11858 + $0xc4] sm:$0xf]
      %v11909 = vld [vmem:[%s11858 + $0xc8] sm:$0xf]
      %v11910 = vld [vmem:[%s11858 + $0xcc] sm:$0xf]
      %v11911 = vld [vmem:[%s11858 + $0xd0] sm:$0xf]
      %v11912 = vld [vmem:[%s11858 + $0xd4] sm:$0xf]
      %v11913 = vld [vmem:[%s11858 + $0xd8] sm:$0xf]
      %v11914 = vld [vmem:[%s11858 + $0xdc] sm:$0xf]
      %v11915 = vld [vmem:[%s11858 + $0xe0] sm:$0xf]
      %v11916 = vld [vmem:[%s11858 + $0xe4] sm:$0xf]
      %v11917 = vld [vmem:[%s11858 + $0xe8] sm:$0xf]
      %v11918 = vld [vmem:[%s11858 + $0xec] sm:$0xf]
      %v11919 = vld [vmem:[%s11858 + $0xf0] sm:$0xf]
      %v11920 = vld [vmem:[%s11858 + $0xf4] sm:$0xf]
      %v11921 = vld [vmem:[%s11858 + $0xf8] sm:$0xf]
      %v11922 = vld [vmem:[%s11858 + $0xfc] sm:$0xf]
      %v11923 = vld [vmem:[%s11858 + $0x100] sm:$0xf]
      %v11924 = vld [vmem:[%s11858 + $0x104] sm:$0xf]
      %v11925 = vld [vmem:[%s11858 + $0x108] sm:$0xf]
      %v11926 = vld [vmem:[%s11858 + $0x10c] sm:$0xf]
      %v11995 = vunpack.c.l.b16 %v11859
      %v11996 = vunpack.c.l.b16 %v11860
      %v11997 = vunpack.c.l.b16 %v11861
      %v11998 = vunpack.c.l.b16 %v11862
      %v11999 = vunpack.c.l.b16 %v11863
      %v12000 = vunpack.c.l.b16 %v11864
      %v12001 = vunpack.c.l.b16 %v11865
      %v12002 = vunpack.c.l.b16 %v11866
      %v12003 = vunpack.c.l.b16 %v11867
      %v12004 = vunpack.c.l.b16 %v11868
      %v12005 = vunpack.c.l.b16 %v11869
      %v12006 = vunpack.c.l.b16 %v11870
      %v12007 = vunpack.c.l.b16 %v11871
      %v12008 = vunpack.c.l.b16 %v11872
      %v12009 = vunpack.c.l.b16 %v11873
      %v12010 = vunpack.c.l.b16 %v11874
      %v12011 = vunpack.c.l.b16 %v11875
      %v12012 = vunpack.c.l.b16 %v11876
      %v12013 = vunpack.c.l.b16 %v11877
      %v12014 = vunpack.c.l.b16 %v11878
      %v12015 = vunpack.c.l.b16 %v11879
      %v12016 = vunpack.c.l.b16 %v11880
      %v12017 = vunpack.c.l.b16 %v11881
      %v12018 = vunpack.c.l.b16 %v11882
      %v12019 = vunpack.c.l.b16 %v11883
      %v12020 = vunpack.c.l.b16 %v11884
      %v12021 = vunpack.c.l.b16 %v11885
      %v12022 = vunpack.c.l.b16 %v11886
      %v12023 = vunpack.c.l.b16 %v11887
      %v12024 = vunpack.c.l.b16 %v11888
      %v12025 = vunpack.c.l.b16 %v11889
      %v12026 = vunpack.c.l.b16 %v11890
      %v12027 = vunpack.c.l.b16 %v11891
      %v12028 = vunpack.c.l.b16 %v11892
      %v12029 = vunpack.c.l.b16 %v11893
      %v12030 = vunpack.c.l.b16 %v11894
      %v12031 = vunpack.c.l.b16 %v11895
      %v12032 = vunpack.c.l.b16 %v11896
      %v12033 = vunpack.c.l.b16 %v11897
      %v12034 = vunpack.c.l.b16 %v11898
      %v12035 = vunpack.c.l.b16 %v11899
      %v12036 = vunpack.c.l.b16 %v11900
      %v12037 = vunpack.c.l.b16 %v11901
      %v12038 = vunpack.c.l.b16 %v11902
      %v12039 = vunpack.c.l.b16 %v11903
      %v12040 = vunpack.c.l.b16 %v11904
      %v12041 = vunpack.c.l.b16 %v11905
      %v12042 = vunpack.c.l.b16 %v11906
      %v12043 = vunpack.c.l.b16 %v11907
      %v12044 = vunpack.c.l.b16 %v11908
      %v12045 = vunpack.c.l.b16 %v11909
      %v12046 = vunpack.c.l.b16 %v11910
      %v12047 = vunpack.c.l.b16 %v11911
      %v12048 = vunpack.c.l.b16 %v11912
      %v12049 = vunpack.c.l.b16 %v11913
      %v12050 = vunpack.c.l.b16 %v11914
      %v12051 = vunpack.c.l.b16 %v11915
      %v12052 = vunpack.c.l.b16 %v11916
      %v12053 = vunpack.c.l.b16 %v11917
      %v12054 = vunpack.c.l.b16 %v11918
      %v12055 = vunpack.c.l.b16 %v11919
      %v12056 = vunpack.c.l.b16 %v11920
      %v12057 = vunpack.c.l.b16 %v11921
      %v12058 = vunpack.c.l.b16 %v11922
      %v12059 = vunpack.c.l.b16 %v11923
      %v12060 = vunpack.c.l.b16 %v11924
      %v12061 = vunpack.c.l.b16 %v11925
      %v12062 = vunpack.c.l.b16 %v11926
      %v12063 = vpack.c.b16 %v11996, %v11995
      %v12064 = vpack.c.b16 %v11998, %v11997
      %v12065 = vpack.c.b16 %v12000, %v11999
      %v12066 = vpack.c.b16 %v12002, %v12001
      %v12067 = vpack.c.b16 %v12004, %v12003
      %v12068 = vpack.c.b16 %v12006, %v12005
      %v12069 = vpack.c.b16 %v12008, %v12007
      %v12070 = vpack.c.b16 %v12010, %v12009
      %v12071 = vpack.c.b16 %v12012, %v12011
      %v12072 = vpack.c.b16 %v12014, %v12013
      %v12073 = vpack.c.b16 %v12016, %v12015
      %v12074 = vpack.c.b16 %v12018, %v12017
      %v12075 = vpack.c.b16 %v12020, %v12019
      %v12076 = vpack.c.b16 %v12022, %v12021
      %v12077 = vpack.c.b16 %v12024, %v12023
      %v12078 = vpack.c.b16 %v12026, %v12025
      %v12079 = vpack.c.b16 %v12028, %v12027
      %v12080 = vpack.c.b16 %v12030, %v12029
      %v12081 = vpack.c.b16 %v12032, %v12031
      %v12082 = vpack.c.b16 %v12034, %v12033
      %v12083 = vpack.c.b16 %v12036, %v12035
      %v12084 = vpack.c.b16 %v12038, %v12037
      %v12085 = vpack.c.b16 %v12040, %v12039
      %v12086 = vpack.c.b16 %v12042, %v12041
      %v12087 = vpack.c.b16 %v12044, %v12043
      %v12088 = vpack.c.b16 %v12046, %v12045
      %v12089 = vpack.c.b16 %v12048, %v12047
      %v12090 = vpack.c.b16 %v12050, %v12049
      %v12091 = vpack.c.b16 %v12052, %v12051
      %v12092 = vpack.c.b16 %v12054, %v12053
      %v12093 = vpack.c.b16 %v12056, %v12055
      %v12094 = vpack.c.b16 %v12058, %v12057
      %v12095 = vpack.c.b16 %v12060, %v12059
      %v12096 = vpack.c.b16 %v12062, %v12061
      %12131 = vmatpush.bf16.msra.mxu0 %v12070
      %12132 = vmatpush.bf16.msra.mxu0 %v12069
      %12133 = vmatpush.bf16.msra.mxu0 %v12068
      %12134 = vmatpush.bf16.msra.mxu0 %v12067
      %12135 = vmatpush.bf16.msra.mxu0 %v12066
      %12136 = vmatpush.bf16.msra.mxu0 %v12065
      %12137 = vmatpush.bf16.msra.mxu0 %v12064
      %12138 = vmatpush.bf16.msra.mxu0 %v12063
      %12139 = vmatmul.bf16.gmra.mxu0 %v10959
      %v12140 = vpop.f32.mrf.mxu0
      %v12141 = vadd.f32 0.0, %v12140
      %v12142 = vpop.f32.mrf.mxu0
      %v12143 = vadd.f32 0.0, %v12142
      %12144 = vmatmul.bf16.gmra.mxu0 %v10964
      %v12145 = vpop.f32.mrf.mxu0
      %v12146 = vadd.f32 0.0, %v12145
      %v12147 = vpop.f32.mrf.mxu0
      %v12148 = vadd.f32 0.0, %v12147
      %12149 = vmatmul.bf16.gmra.mxu0 %v10969
      %v12150 = vpop.f32.mrf.mxu0
      %v12151 = vadd.f32 0.0, %v12150
      %v12152 = vpop.f32.mrf.mxu0
      %12153 = vdwg.mxu0
      %12154 = vmatpush.bf16.msra.mxu0 %v12078
      %12155 = vmatpush.bf16.msra.mxu0 %v12077
      %12156 = vmatpush.bf16.msra.mxu0 %v12076
      %12157 = vmatpush.bf16.msra.mxu0 %v12075
      %12158 = vmatpush.bf16.msra.mxu0 %v12074
      %12159 = vmatpush.bf16.msra.mxu0 %v12073
      %12160 = vmatpush.bf16.msra.mxu0 %v12072
      %12161 = vmatpush.bf16.msra.mxu0 %v12071
      %12162 = vmatmul.bf16.gmra.mxu0 %v10960
      %v12163 = vpop.f32.mrf.mxu0
      %v12164 = vadd.f32 %v12141, %v12163
      %v12165 = vpop.f32.mrf.mxu0
      %v12166 = vadd.f32 %v12143, %v12165
      %12167 = vmatmul.bf16.gmra.mxu0 %v10965
      %v12168 = vpop.f32.mrf.mxu0
      %v12169 = vadd.f32 %v12146, %v12168
      %v12170 = vpop.f32.mrf.mxu0
      %v12171 = vadd.f32 %v12148, %v12170
      %12172 = vmatmul.bf16.gmra.mxu0 %v10970
      %v12173 = vpop.f32.mrf.mxu0
      %v12174 = vadd.f32 %v12151, %v12173
      %v12175 = vpop.f32.mrf.mxu0
      %12176 = vdwg.mxu0
      %12177 = vmatpush.bf16.msra.mxu0 %v12086
      %12178 = vmatpush.bf16.msra.mxu0 %v12085
      %12179 = vmatpush.bf16.msra.mxu0 %v12084
      %12180 = vmatpush.bf16.msra.mxu0 %v12083
      %12181 = vmatpush.bf16.msra.mxu0 %v12082
      %12182 = vmatpush.bf16.msra.mxu0 %v12081
      %12183 = vmatpush.bf16.msra.mxu0 %v12080
      %12184 = vmatpush.bf16.msra.mxu0 %v12079
      %12185 = vmatmul.bf16.gmra.mxu0 %v10961
      %v12186 = vpop.f32.mrf.mxu0
      %v12187 = vadd.f32 %v12164, %v12186
      %v12188 = vpop.f32.mrf.mxu0
      %v12189 = vadd.f32 %v12166, %v12188
      %12190 = vmatmul.bf16.gmra.mxu0 %v10966
      %v12191 = vpop.f32.mrf.mxu0
      %v12192 = vadd.f32 %v12169, %v12191
      %v12193 = vpop.f32.mrf.mxu0
      %v12194 = vadd.f32 %v12171, %v12193
      %12195 = vmatmul.bf16.gmra.mxu0 %v10971
      %v12196 = vpop.f32.mrf.mxu0
      %v12197 = vadd.f32 %v12174, %v12196
      %v12198 = vpop.f32.mrf.mxu0
      %12199 = vdwg.mxu0
      %12200 = vmatpush.bf16.msra.mxu0 %v12094
      %12201 = vmatpush.bf16.msra.mxu0 %v12093
      %12202 = vmatpush.bf16.msra.mxu0 %v12092
      %12203 = vmatpush.bf16.msra.mxu0 %v12091
      %12204 = vmatpush.bf16.msra.mxu0 %v12090
      %12205 = vmatpush.bf16.msra.mxu0 %v12089
      %12206 = vmatpush.bf16.msra.mxu0 %v12088
      %12207 = vmatpush.bf16.msra.mxu0 %v12087
      %12208 = vmatmul.bf16.gmra.mxu0 %v10962
      %v12209 = vpop.f32.mrf.mxu0
      %v12210 = vadd.f32 %v12187, %v12209
      %v12211 = vpop.f32.mrf.mxu0
      %v12212 = vadd.f32 %v12189, %v12211
      %12213 = vmatmul.bf16.gmra.mxu0 %v10967
      %v12214 = vpop.f32.mrf.mxu0
      %v12215 = vadd.f32 %v12192, %v12214
      %v12216 = vpop.f32.mrf.mxu0
      %v12217 = vadd.f32 %v12194, %v12216
      %12218 = vmatmul.bf16.gmra.mxu0 %v10972
      %v12219 = vpop.f32.mrf.mxu0
      %v12220 = vadd.f32 %v12197, %v12219
      %v12221 = vpop.f32.mrf.mxu0
      %12222 = vdwg.mxu0
      %12223 = vmatpush.bf16.msra.mxu0 0
      %12224 = vmatpush.bf16.msra.mxu0 0
      %12225 = vmatpush.bf16.msra.mxu0 0
      %12226 = vmatpush.bf16.msra.mxu0 0
      %12227 = vmatpush.bf16.msra.mxu0 0
      %12228 = vmatpush.bf16.msra.mxu0 0
      %12229 = vmatpush.bf16.msra.mxu0 %v12096
      %12230 = vmatpush.bf16.msra.mxu0 %v12095
      %12231 = vmatmul.bf16.gmra.mxu0 %v11248
      %v12232 = vpop.f32.mrf.mxu0
      %v12233 = vadd.f32 %v12210, %v12232
      %v12234 = vpop.f32.mrf.mxu0
      %v12235 = vadd.f32 %v12212, %v12234
      %12236 = vmatmul.bf16.gmra.mxu0 %v11251
      %v12237 = vpop.f32.mrf.mxu0
      %v12238 = vadd.f32 %v12215, %v12237
      %v12239 = vpop.f32.mrf.mxu0
      %v12240 = vadd.f32 %v12217, %v12239
      %12241 = vmatmul.bf16.gmra.mxu0 %v11254
      %v12242 = vpop.f32.mrf.mxu0
      %v12243 = vadd.f32 %v12220, %v12242
      %v12244 = vpop.f32.mrf.mxu0
      %12245 = vdwg.mxu0
      %s12246 = scalar_lea.vmem %s10, 64
      %v12247 = vld [vmem:[%s12246] sm:$0xff]
      %v12248 = vld [vmem:[%s12246 + $0x8] sm:$0xff]
      %v12249 = vld [vmem:[%s12246 + $0x10] sm:$0xff]
      %v12250 = vld [vmem:[%s12246 + $0x18] sm:$0xf]
      %v12252 = vsel %vm11768, %v12247, 0
      %v12255 = vsel %vm11768, %v12248, 0
      %v12258 = vsel %vm11768, %v12249, 0
      %v12261 = vsel %vm11768, %v12250, 0
      %v12264 = vsel %vm11781, %v12243, 0
      %12266 = vmatpush.msra.mxu0 0.0
      %12267 = vmatpush.msra.mxu0 0.0
      %12268 = vmatpush.msra.mxu0 0.0
      %12269 = vmatpush.msra.mxu0 0.0
      %12270 = vmatpush.msra.mxu0 0.0
      %12271 = vmatpush.msra.mxu0 0.0
      %12272 = vmatpush.msra.mxu0 0.0
      %12273 = vmatpush.msra.mxu0 0.0
      %12274 = vmatpush.msra.mxu0 0.0
      %12275 = vmatpush.msra.mxu0 0.0
      %12276 = vmatpush.msra.mxu0 0.0
      %12277 = vmatpush.msra.mxu0 %v12264
      %12278 = vmatpush.msra.mxu0 %v12240
      %12279 = vmatpush.msra.mxu0 %v12238
      %12280 = vmatpush.msra.mxu0 %v12235
      %12281 = vmatpush.msra.mxu0 %v12233
      %12282 = vmatmul.f32.gmra.mxu0 %v12252
      %v12283 = vpop.f32.mrf.mxu0
      %v12284 = vadd.f32 0.0, %v12283
      %12285 = vmatmul.f32.gmra.mxu0 %v12255
      %v12286 = vpop.f32.mrf.mxu0
      %v12287 = vadd.f32 0.0, %v12286
      %12288 = vmatmul.f32.gmra.mxu0 %v12258
      %v12289 = vpop.f32.mrf.mxu0
      %v12290 = vadd.f32 0.0, %v12289
      %12291 = vmatmul.f32.gmra.mxu0 %v12261
      %v12292 = vpop.f32.mrf.mxu0
      %v12293 = vadd.f32 0.0, %v12292
      %12294 = vdwg.mxu0
      %v12295 = vadd.f32 %v11847, %v12284
      %v12296 = vadd.f32 %v11850, %v12287
      %v12297 = vadd.f32 %v11853, %v12290
      %v12298 = vadd.f32 %v11856, %v12293
      %s12299 = scalar_lea.vmem %s9, 816
      %v12300 = vld [vmem:[%s12299] sm:$0xf]
      %v12301 = vld [vmem:[%s12299 + $0x4] sm:$0xf]
      %v12302 = vld [vmem:[%s12299 + $0x8] sm:$0xf]
      %v12303 = vld [vmem:[%s12299 + $0xc] sm:$0xf]
      %v12304 = vld [vmem:[%s12299 + $0x10] sm:$0xf]
      %v12305 = vld [vmem:[%s12299 + $0x14] sm:$0xf]
      %v12306 = vld [vmem:[%s12299 + $0x18] sm:$0xf]
      %v12307 = vld [vmem:[%s12299 + $0x1c] sm:$0xf]
      %v12308 = vld [vmem:[%s12299 + $0x20] sm:$0xf]
      %v12309 = vld [vmem:[%s12299 + $0x24] sm:$0xf]
      %v12310 = vld [vmem:[%s12299 + $0x28] sm:$0xf]
      %v12311 = vld [vmem:[%s12299 + $0x2c] sm:$0xf]
      %v12312 = vld [vmem:[%s12299 + $0x30] sm:$0xf]
      %v12313 = vld [vmem:[%s12299 + $0x34] sm:$0xf]
      %v12314 = vld [vmem:[%s12299 + $0x38] sm:$0xf]
      %v12315 = vld [vmem:[%s12299 + $0x3c] sm:$0xf]
      %v12316 = vld [vmem:[%s12299 + $0x40] sm:$0xf]
      %v12317 = vld [vmem:[%s12299 + $0x44] sm:$0xf]
      %v12318 = vld [vmem:[%s12299 + $0x48] sm:$0xf]
      %v12319 = vld [vmem:[%s12299 + $0x4c] sm:$0xf]
      %v12320 = vld [vmem:[%s12299 + $0x50] sm:$0xf]
      %v12321 = vld [vmem:[%s12299 + $0x54] sm:$0xf]
      %v12322 = vld [vmem:[%s12299 + $0x58] sm:$0xf]
      %v12323 = vld [vmem:[%s12299 + $0x5c] sm:$0xf]
      %v12324 = vld [vmem:[%s12299 + $0x60] sm:$0xf]
      %v12325 = vld [vmem:[%s12299 + $0x64] sm:$0xf]
      %v12326 = vld [vmem:[%s12299 + $0x68] sm:$0xf]
      %v12327 = vld [vmem:[%s12299 + $0x6c] sm:$0xf]
      %v12328 = vld [vmem:[%s12299 + $0x70] sm:$0xf]
      %v12329 = vld [vmem:[%s12299 + $0x74] sm:$0xf]
      %v12330 = vld [vmem:[%s12299 + $0x78] sm:$0xf]
      %v12331 = vld [vmem:[%s12299 + $0x7c] sm:$0xf]
      %v12332 = vld [vmem:[%s12299 + $0x80] sm:$0xf]
      %v12333 = vld [vmem:[%s12299 + $0x84] sm:$0xf]
      %v12334 = vld [vmem:[%s12299 + $0x88] sm:$0xf]
      %v12335 = vld [vmem:[%s12299 + $0x8c] sm:$0xf]
      %v12336 = vld [vmem:[%s12299 + $0x90] sm:$0xf]
      %v12337 = vld [vmem:[%s12299 + $0x94] sm:$0xf]
      %v12338 = vld [vmem:[%s12299 + $0x98] sm:$0xf]
      %v12339 = vld [vmem:[%s12299 + $0x9c] sm:$0xf]
      %v12340 = vld [vmem:[%s12299 + $0xa0] sm:$0xf]
      %v12341 = vld [vmem:[%s12299 + $0xa4] sm:$0xf]
      %v12342 = vld [vmem:[%s12299 + $0xa8] sm:$0xf]
      %v12343 = vld [vmem:[%s12299 + $0xac] sm:$0xf]
      %v12344 = vld [vmem:[%s12299 + $0xb0] sm:$0xf]
      %v12345 = vld [vmem:[%s12299 + $0xb4] sm:$0xf]
      %v12346 = vld [vmem:[%s12299 + $0xb8] sm:$0xf]
      %v12347 = vld [vmem:[%s12299 + $0xbc] sm:$0xf]
      %v12348 = vld [vmem:[%s12299 + $0xc0] sm:$0xf]
      %v12349 = vld [vmem:[%s12299 + $0xc4] sm:$0xf]
      %v12350 = vld [vmem:[%s12299 + $0xc8] sm:$0xf]
      %v12351 = vld [vmem:[%s12299 + $0xcc] sm:$0xf]
      %v12352 = vld [vmem:[%s12299 + $0xd0] sm:$0xf]
      %v12353 = vld [vmem:[%s12299 + $0xd4] sm:$0xf]
      %v12354 = vld [vmem:[%s12299 + $0xd8] sm:$0xf]
      %v12355 = vld [vmem:[%s12299 + $0xdc] sm:$0xf]
      %v12356 = vld [vmem:[%s12299 + $0xe0] sm:$0xf]
      %v12357 = vld [vmem:[%s12299 + $0xe4] sm:$0xf]
      %v12358 = vld [vmem:[%s12299 + $0xe8] sm:$0xf]
      %v12359 = vld [vmem:[%s12299 + $0xec] sm:$0xf]
      %v12360 = vld [vmem:[%s12299 + $0xf0] sm:$0xf]
      %v12361 = vld [vmem:[%s12299 + $0xf4] sm:$0xf]
      %v12362 = vld [vmem:[%s12299 + $0xf8] sm:$0xf]
      %v12363 = vld [vmem:[%s12299 + $0xfc] sm:$0xf]
      %v12364 = vld [vmem:[%s12299 + $0x100] sm:$0xf]
      %v12365 = vld [vmem:[%s12299 + $0x104] sm:$0xf]
      %v12366 = vld [vmem:[%s12299 + $0x108] sm:$0xf]
      %v12367 = vld [vmem:[%s12299 + $0x10c] sm:$0xf]
      %v12436 = vunpack.c.l.b16 %v12300
      %v12437 = vunpack.c.l.b16 %v12301
      %v12438 = vunpack.c.l.b16 %v12302
      %v12439 = vunpack.c.l.b16 %v12303
      %v12440 = vunpack.c.l.b16 %v12304
      %v12441 = vunpack.c.l.b16 %v12305
      %v12442 = vunpack.c.l.b16 %v12306
      %v12443 = vunpack.c.l.b16 %v12307
      %v12444 = vunpack.c.l.b16 %v12308
      %v12445 = vunpack.c.l.b16 %v12309
      %v12446 = vunpack.c.l.b16 %v12310
      %v12447 = vunpack.c.l.b16 %v12311
      %v12448 = vunpack.c.l.b16 %v12312
      %v12449 = vunpack.c.l.b16 %v12313
      %v12450 = vunpack.c.l.b16 %v12314
      %v12451 = vunpack.c.l.b16 %v12315
      %v12452 = vunpack.c.l.b16 %v12316
      %v12453 = vunpack.c.l.b16 %v12317
      %v12454 = vunpack.c.l.b16 %v12318
      %v12455 = vunpack.c.l.b16 %v12319
      %v12456 = vunpack.c.l.b16 %v12320
      %v12457 = vunpack.c.l.b16 %v12321
      %v12458 = vunpack.c.l.b16 %v12322
      %v12459 = vunpack.c.l.b16 %v12323
      %v12460 = vunpack.c.l.b16 %v12324
      %v12461 = vunpack.c.l.b16 %v12325
      %v12462 = vunpack.c.l.b16 %v12326
      %v12463 = vunpack.c.l.b16 %v12327
      %v12464 = vunpack.c.l.b16 %v12328
      %v12465 = vunpack.c.l.b16 %v12329
      %v12466 = vunpack.c.l.b16 %v12330
      %v12467 = vunpack.c.l.b16 %v12331
      %v12468 = vunpack.c.l.b16 %v12332
      %v12469 = vunpack.c.l.b16 %v12333
      %v12470 = vunpack.c.l.b16 %v12334
      %v12471 = vunpack.c.l.b16 %v12335
      %v12472 = vunpack.c.l.b16 %v12336
      %v12473 = vunpack.c.l.b16 %v12337
      %v12474 = vunpack.c.l.b16 %v12338
      %v12475 = vunpack.c.l.b16 %v12339
      %v12476 = vunpack.c.l.b16 %v12340
      %v12477 = vunpack.c.l.b16 %v12341
      %v12478 = vunpack.c.l.b16 %v12342
      %v12479 = vunpack.c.l.b16 %v12343
      %v12480 = vunpack.c.l.b16 %v12344
      %v12481 = vunpack.c.l.b16 %v12345
      %v12482 = vunpack.c.l.b16 %v12346
      %v12483 = vunpack.c.l.b16 %v12347
      %v12484 = vunpack.c.l.b16 %v12348
      %v12485 = vunpack.c.l.b16 %v12349
      %v12486 = vunpack.c.l.b16 %v12350
      %v12487 = vunpack.c.l.b16 %v12351
      %v12488 = vunpack.c.l.b16 %v12352
      %v12489 = vunpack.c.l.b16 %v12353
      %v12490 = vunpack.c.l.b16 %v12354
      %v12491 = vunpack.c.l.b16 %v12355
      %v12492 = vunpack.c.l.b16 %v12356
      %v12493 = vunpack.c.l.b16 %v12357
      %v12494 = vunpack.c.l.b16 %v12358
      %v12495 = vunpack.c.l.b16 %v12359
      %v12496 = vunpack.c.l.b16 %v12360
      %v12497 = vunpack.c.l.b16 %v12361
      %v12498 = vunpack.c.l.b16 %v12362
      %v12499 = vunpack.c.l.b16 %v12363
      %v12500 = vunpack.c.l.b16 %v12364
      %v12501 = vunpack.c.l.b16 %v12365
      %v12502 = vunpack.c.l.b16 %v12366
      %v12503 = vunpack.c.l.b16 %v12367
      %v12504 = vpack.c.b16 %v12437, %v12436
      %v12505 = vpack.c.b16 %v12439, %v12438
      %v12506 = vpack.c.b16 %v12441, %v12440
      %v12507 = vpack.c.b16 %v12443, %v12442
      %v12508 = vpack.c.b16 %v12445, %v12444
      %v12509 = vpack.c.b16 %v12447, %v12446
      %v12510 = vpack.c.b16 %v12449, %v12448
      %v12511 = vpack.c.b16 %v12451, %v12450
      %v12512 = vpack.c.b16 %v12453, %v12452
      %v12513 = vpack.c.b16 %v12455, %v12454
      %v12514 = vpack.c.b16 %v12457, %v12456
      %v12515 = vpack.c.b16 %v12459, %v12458
      %v12516 = vpack.c.b16 %v12461, %v12460
      %v12517 = vpack.c.b16 %v12463, %v12462
      %v12518 = vpack.c.b16 %v12465, %v12464
      %v12519 = vpack.c.b16 %v12467, %v12466
      %v12520 = vpack.c.b16 %v12469, %v12468
      %v12521 = vpack.c.b16 %v12471, %v12470
      %v12522 = vpack.c.b16 %v12473, %v12472
      %v12523 = vpack.c.b16 %v12475, %v12474
      %v12524 = vpack.c.b16 %v12477, %v12476
      %v12525 = vpack.c.b16 %v12479, %v12478
      %v12526 = vpack.c.b16 %v12481, %v12480
      %v12527 = vpack.c.b16 %v12483, %v12482
      %v12528 = vpack.c.b16 %v12485, %v12484
      %v12529 = vpack.c.b16 %v12487, %v12486
      %v12530 = vpack.c.b16 %v12489, %v12488
      %v12531 = vpack.c.b16 %v12491, %v12490
      %v12532 = vpack.c.b16 %v12493, %v12492
      %v12533 = vpack.c.b16 %v12495, %v12494
      %v12534 = vpack.c.b16 %v12497, %v12496
      %v12535 = vpack.c.b16 %v12499, %v12498
      %v12536 = vpack.c.b16 %v12501, %v12500
      %v12537 = vpack.c.b16 %v12503, %v12502
      %12572 = vmatpush.bf16.msra.mxu0 %v12511
      %12573 = vmatpush.bf16.msra.mxu0 %v12510
      %12574 = vmatpush.bf16.msra.mxu0 %v12509
      %12575 = vmatpush.bf16.msra.mxu0 %v12508
      %12576 = vmatpush.bf16.msra.mxu0 %v12507
      %12577 = vmatpush.bf16.msra.mxu0 %v12506
      %12578 = vmatpush.bf16.msra.mxu0 %v12505
      %12579 = vmatpush.bf16.msra.mxu0 %v12504
      %12580 = vmatmul.bf16.gmra.mxu0 %v10959
      %v12581 = vpop.f32.mrf.mxu0
      %v12582 = vadd.f32 0.0, %v12581
      %v12583 = vpop.f32.mrf.mxu0
      %v12584 = vadd.f32 0.0, %v12583
      %12585 = vmatmul.bf16.gmra.mxu0 %v10964
      %v12586 = vpop.f32.mrf.mxu0
      %v12587 = vadd.f32 0.0, %v12586
      %v12588 = vpop.f32.mrf.mxu0
      %v12589 = vadd.f32 0.0, %v12588
      %12590 = vmatmul.bf16.gmra.mxu0 %v10969
      %v12591 = vpop.f32.mrf.mxu0
      %v12592 = vadd.f32 0.0, %v12591
      %v12593 = vpop.f32.mrf.mxu0
      %12594 = vdwg.mxu0
      %12595 = vmatpush.bf16.msra.mxu0 %v12519
      %12596 = vmatpush.bf16.msra.mxu0 %v12518
      %12597 = vmatpush.bf16.msra.mxu0 %v12517
      %12598 = vmatpush.bf16.msra.mxu0 %v12516
      %12599 = vmatpush.bf16.msra.mxu0 %v12515
      %12600 = vmatpush.bf16.msra.mxu0 %v12514
      %12601 = vmatpush.bf16.msra.mxu0 %v12513
      %12602 = vmatpush.bf16.msra.mxu0 %v12512
      %12603 = vmatmul.bf16.gmra.mxu0 %v10960
      %v12604 = vpop.f32.mrf.mxu0
      %v12605 = vadd.f32 %v12582, %v12604
      %v12606 = vpop.f32.mrf.mxu0
      %v12607 = vadd.f32 %v12584, %v12606
      %12608 = vmatmul.bf16.gmra.mxu0 %v10965
      %v12609 = vpop.f32.mrf.mxu0
      %v12610 = vadd.f32 %v12587, %v12609
      %v12611 = vpop.f32.mrf.mxu0
      %v12612 = vadd.f32 %v12589, %v12611
      %12613 = vmatmul.bf16.gmra.mxu0 %v10970
      %v12614 = vpop.f32.mrf.mxu0
      %v12615 = vadd.f32 %v12592, %v12614
      %v12616 = vpop.f32.mrf.mxu0
      %12617 = vdwg.mxu0
      %12618 = vmatpush.bf16.msra.mxu0 %v12527
      %12619 = vmatpush.bf16.msra.mxu0 %v12526
      %12620 = vmatpush.bf16.msra.mxu0 %v12525
      %12621 = vmatpush.bf16.msra.mxu0 %v12524
      %12622 = vmatpush.bf16.msra.mxu0 %v12523
      %12623 = vmatpush.bf16.msra.mxu0 %v12522
      %12624 = vmatpush.bf16.msra.mxu0 %v12521
      %12625 = vmatpush.bf16.msra.mxu0 %v12520
      %12626 = vmatmul.bf16.gmra.mxu0 %v10961
      %v12627 = vpop.f32.mrf.mxu0
      %v12628 = vadd.f32 %v12605, %v12627
      %v12629 = vpop.f32.mrf.mxu0
      %v12630 = vadd.f32 %v12607, %v12629
      %12631 = vmatmul.bf16.gmra.mxu0 %v10966
      %v12632 = vpop.f32.mrf.mxu0
      %v12633 = vadd.f32 %v12610, %v12632
      %v12634 = vpop.f32.mrf.mxu0
      %v12635 = vadd.f32 %v12612, %v12634
      %12636 = vmatmul.bf16.gmra.mxu0 %v10971
      %v12637 = vpop.f32.mrf.mxu0
      %v12638 = vadd.f32 %v12615, %v12637
      %v12639 = vpop.f32.mrf.mxu0
      %12640 = vdwg.mxu0
      %12641 = vmatpush.bf16.msra.mxu0 %v12535
      %12642 = vmatpush.bf16.msra.mxu0 %v12534
      %12643 = vmatpush.bf16.msra.mxu0 %v12533
      %12644 = vmatpush.bf16.msra.mxu0 %v12532
      %12645 = vmatpush.bf16.msra.mxu0 %v12531
      %12646 = vmatpush.bf16.msra.mxu0 %v12530
      %12647 = vmatpush.bf16.msra.mxu0 %v12529
      %12648 = vmatpush.bf16.msra.mxu0 %v12528
      %12649 = vmatmul.bf16.gmra.mxu0 %v10962
      %v12650 = vpop.f32.mrf.mxu0
      %v12651 = vadd.f32 %v12628, %v12650
      %v12652 = vpop.f32.mrf.mxu0
      %v12653 = vadd.f32 %v12630, %v12652
      %12654 = vmatmul.bf16.gmra.mxu0 %v10967
      %v12655 = vpop.f32.mrf.mxu0
      %v12656 = vadd.f32 %v12633, %v12655
      %v12657 = vpop.f32.mrf.mxu0
      %v12658 = vadd.f32 %v12635, %v12657
      %12659 = vmatmul.bf16.gmra.mxu0 %v10972
      %v12660 = vpop.f32.mrf.mxu0
      %v12661 = vadd.f32 %v12638, %v12660
      %v12662 = vpop.f32.mrf.mxu0
      %12663 = vdwg.mxu0
      %12664 = vmatpush.bf16.msra.mxu0 0
      %12665 = vmatpush.bf16.msra.mxu0 0
      %12666 = vmatpush.bf16.msra.mxu0 0
      %12667 = vmatpush.bf16.msra.mxu0 0
      %12668 = vmatpush.bf16.msra.mxu0 0
      %12669 = vmatpush.bf16.msra.mxu0 0
      %12670 = vmatpush.bf16.msra.mxu0 %v12537
      %12671 = vmatpush.bf16.msra.mxu0 %v12536
      %12672 = vmatmul.bf16.gmra.mxu0 %v11248
      %v12673 = vpop.f32.mrf.mxu0
      %v12674 = vadd.f32 %v12651, %v12673
      %v12675 = vpop.f32.mrf.mxu0
      %v12676 = vadd.f32 %v12653, %v12675
      %12677 = vmatmul.bf16.gmra.mxu0 %v11251
      %v12678 = vpop.f32.mrf.mxu0
      %v12679 = vadd.f32 %v12656, %v12678
      %v12680 = vpop.f32.mrf.mxu0
      %v12681 = vadd.f32 %v12658, %v12680
      %12682 = vmatmul.bf16.gmra.mxu0 %v11254
      %v12683 = vpop.f32.mrf.mxu0
      %v12684 = vadd.f32 %v12661, %v12683
      %v12685 = vpop.f32.mrf.mxu0
      %12686 = vdwg.mxu0
      %s12687 = scalar_lea.vmem %s10, 96
      %v12688 = vld [vmem:[%s12687] sm:$0xff]
      %v12689 = vld [vmem:[%s12687 + $0x8] sm:$0xff]
      %v12690 = vld [vmem:[%s12687 + $0x10] sm:$0xff]
      %v12691 = vld [vmem:[%s12687 + $0x18] sm:$0xf]
      %v12693 = vsel %vm11768, %v12688, 0
      %v12696 = vsel %vm11768, %v12689, 0
      %v12699 = vsel %vm11768, %v12690, 0
      %v12702 = vsel %vm11768, %v12691, 0
      %v12705 = vsel %vm11781, %v12684, 0
      %12707 = vmatpush.msra.mxu0 0.0
      %12708 = vmatpush.msra.mxu0 0.0
      %12709 = vmatpush.msra.mxu0 0.0
      %12710 = vmatpush.msra.mxu0 0.0
      %12711 = vmatpush.msra.mxu0 0.0
      %12712 = vmatpush.msra.mxu0 0.0
      %12713 = vmatpush.msra.mxu0 0.0
      %12714 = vmatpush.msra.mxu0 0.0
      %12715 = vmatpush.msra.mxu0 0.0
      %12716 = vmatpush.msra.mxu0 0.0
      %12717 = vmatpush.msra.mxu0 0.0
      %12718 = vmatpush.msra.mxu0 %v12705
      %12719 = vmatpush.msra.mxu0 %v12681
      %12720 = vmatpush.msra.mxu0 %v12679
      %12721 = vmatpush.msra.mxu0 %v12676
      %12722 = vmatpush.msra.mxu0 %v12674
      %12723 = vmatmul.f32.gmra.mxu0 %v12693
      %v12724 = vpop.f32.mrf.mxu0
      %v12725 = vadd.f32 0.0, %v12724
      %12726 = vmatmul.f32.gmra.mxu0 %v12696
      %v12727 = vpop.f32.mrf.mxu0
      %v12728 = vadd.f32 0.0, %v12727
      %12729 = vmatmul.f32.gmra.mxu0 %v12699
      %v12730 = vpop.f32.mrf.mxu0
      %v12731 = vadd.f32 0.0, %v12730
      %12732 = vmatmul.f32.gmra.mxu0 %v12702
      %v12733 = vpop.f32.mrf.mxu0
      %v12734 = vadd.f32 0.0, %v12733
      %12735 = vdwg.mxu0
      %v12736 = vadd.f32 %v12295, %v12725
      %v12737 = vadd.f32 %v12296, %v12728
      %v12738 = vadd.f32 %v12297, %v12731
      %v12739 = vadd.f32 %v12298, %v12734
      %s12740 = scalar_lea.vmem %s9, 1088
      %v12741 = vld [vmem:[%s12740] sm:$0xf]
      %v12742 = vld [vmem:[%s12740 + $0x4] sm:$0xf]
      %v12743 = vld [vmem:[%s12740 + $0x8] sm:$0xf]
      %v12744 = vld [vmem:[%s12740 + $0xc] sm:$0xf]
      %v12745 = vld [vmem:[%s12740 + $0x10] sm:$0xf]
      %v12746 = vld [vmem:[%s12740 + $0x14] sm:$0xf]
      %v12747 = vld [vmem:[%s12740 + $0x18] sm:$0xf]
      %v12748 = vld [vmem:[%s12740 + $0x1c] sm:$0xf]
      %v12749 = vld [vmem:[%s12740 + $0x20] sm:$0xf]
      %v12750 = vld [vmem:[%s12740 + $0x24] sm:$0xf]
      %v12751 = vld [vmem:[%s12740 + $0x28] sm:$0xf]
      %v12752 = vld [vmem:[%s12740 + $0x2c] sm:$0xf]
      %v12753 = vld [vmem:[%s12740 + $0x30] sm:$0xf]
      %v12754 = vld [vmem:[%s12740 + $0x34] sm:$0xf]
      %v12755 = vld [vmem:[%s12740 + $0x38] sm:$0xf]
      %v12756 = vld [vmem:[%s12740 + $0x3c] sm:$0xf]
      %v12757 = vld [vmem:[%s12740 + $0x40] sm:$0xf]
      %v12758 = vld [vmem:[%s12740 + $0x44] sm:$0xf]
      %v12759 = vld [vmem:[%s12740 + $0x48] sm:$0xf]
      %v12760 = vld [vmem:[%s12740 + $0x4c] sm:$0xf]
      %v12761 = vld [vmem:[%s12740 + $0x50] sm:$0xf]
      %v12762 = vld [vmem:[%s12740 + $0x54] sm:$0xf]
      %v12763 = vld [vmem:[%s12740 + $0x58] sm:$0xf]
      %v12764 = vld [vmem:[%s12740 + $0x5c] sm:$0xf]
      %v12765 = vld [vmem:[%s12740 + $0x60] sm:$0xf]
      %v12766 = vld [vmem:[%s12740 + $0x64] sm:$0xf]
      %v12767 = vld [vmem:[%s12740 + $0x68] sm:$0xf]
      %v12768 = vld [vmem:[%s12740 + $0x6c] sm:$0xf]
      %v12769 = vld [vmem:[%s12740 + $0x70] sm:$0xf]
      %v12770 = vld [vmem:[%s12740 + $0x74] sm:$0xf]
      %v12771 = vld [vmem:[%s12740 + $0x78] sm:$0xf]
      %v12772 = vld [vmem:[%s12740 + $0x7c] sm:$0xf]
      %v12773 = vld [vmem:[%s12740 + $0x80] sm:$0xf]
      %v12774 = vld [vmem:[%s12740 + $0x84] sm:$0xf]
      %v12775 = vld [vmem:[%s12740 + $0x88] sm:$0xf]
      %v12776 = vld [vmem:[%s12740 + $0x8c] sm:$0xf]
      %v12777 = vld [vmem:[%s12740 + $0x90] sm:$0xf]
      %v12778 = vld [vmem:[%s12740 + $0x94] sm:$0xf]
      %v12779 = vld [vmem:[%s12740 + $0x98] sm:$0xf]
      %v12780 = vld [vmem:[%s12740 + $0x9c] sm:$0xf]
      %v12781 = vld [vmem:[%s12740 + $0xa0] sm:$0xf]
      %v12782 = vld [vmem:[%s12740 + $0xa4] sm:$0xf]
      %v12783 = vld [vmem:[%s12740 + $0xa8] sm:$0xf]
      %v12784 = vld [vmem:[%s12740 + $0xac] sm:$0xf]
      %v12785 = vld [vmem:[%s12740 + $0xb0] sm:$0xf]
      %v12786 = vld [vmem:[%s12740 + $0xb4] sm:$0xf]
      %v12787 = vld [vmem:[%s12740 + $0xb8] sm:$0xf]
      %v12788 = vld [vmem:[%s12740 + $0xbc] sm:$0xf]
      %v12789 = vld [vmem:[%s12740 + $0xc0] sm:$0xf]
      %v12790 = vld [vmem:[%s12740 + $0xc4] sm:$0xf]
      %v12791 = vld [vmem:[%s12740 + $0xc8] sm:$0xf]
      %v12792 = vld [vmem:[%s12740 + $0xcc] sm:$0xf]
      %v12793 = vld [vmem:[%s12740 + $0xd0] sm:$0xf]
      %v12794 = vld [vmem:[%s12740 + $0xd4] sm:$0xf]
      %v12795 = vld [vmem:[%s12740 + $0xd8] sm:$0xf]
      %v12796 = vld [vmem:[%s12740 + $0xdc] sm:$0xf]
      %v12797 = vld [vmem:[%s12740 + $0xe0] sm:$0xf]
      %v12798 = vld [vmem:[%s12740 + $0xe4] sm:$0xf]
      %v12799 = vld [vmem:[%s12740 + $0xe8] sm:$0xf]
      %v12800 = vld [vmem:[%s12740 + $0xec] sm:$0xf]
      %v12801 = vld [vmem:[%s12740 + $0xf0] sm:$0xf]
      %v12802 = vld [vmem:[%s12740 + $0xf4] sm:$0xf]
      %v12803 = vld [vmem:[%s12740 + $0xf8] sm:$0xf]
      %v12804 = vld [vmem:[%s12740 + $0xfc] sm:$0xf]
      %v12805 = vld [vmem:[%s12740 + $0x100] sm:$0xf]
      %v12806 = vld [vmem:[%s12740 + $0x104] sm:$0xf]
      %v12807 = vld [vmem:[%s12740 + $0x108] sm:$0xf]
      %v12808 = vld [vmem:[%s12740 + $0x10c] sm:$0xf]
      %v12877 = vunpack.c.l.b16 %v12741
      %v12878 = vunpack.c.l.b16 %v12742
      %v12879 = vunpack.c.l.b16 %v12743
      %v12880 = vunpack.c.l.b16 %v12744
      %v12881 = vunpack.c.l.b16 %v12745
      %v12882 = vunpack.c.l.b16 %v12746
      %v12883 = vunpack.c.l.b16 %v12747
      %v12884 = vunpack.c.l.b16 %v12748
      %v12885 = vunpack.c.l.b16 %v12749
      %v12886 = vunpack.c.l.b16 %v12750
      %v12887 = vunpack.c.l.b16 %v12751
      %v12888 = vunpack.c.l.b16 %v12752
      %v12889 = vunpack.c.l.b16 %v12753
      %v12890 = vunpack.c.l.b16 %v12754
      %v12891 = vunpack.c.l.b16 %v12755
      %v12892 = vunpack.c.l.b16 %v12756
      %v12893 = vunpack.c.l.b16 %v12757
      %v12894 = vunpack.c.l.b16 %v12758
      %v12895 = vunpack.c.l.b16 %v12759
      %v12896 = vunpack.c.l.b16 %v12760
      %v12897 = vunpack.c.l.b16 %v12761
      %v12898 = vunpack.c.l.b16 %v12762
      %v12899 = vunpack.c.l.b16 %v12763
      %v12900 = vunpack.c.l.b16 %v12764
      %v12901 = vunpack.c.l.b16 %v12765
      %v12902 = vunpack.c.l.b16 %v12766
      %v12903 = vunpack.c.l.b16 %v12767
      %v12904 = vunpack.c.l.b16 %v12768
      %v12905 = vunpack.c.l.b16 %v12769
      %v12906 = vunpack.c.l.b16 %v12770
      %v12907 = vunpack.c.l.b16 %v12771
      %v12908 = vunpack.c.l.b16 %v12772
      %v12909 = vunpack.c.l.b16 %v12773
      %v12910 = vunpack.c.l.b16 %v12774
      %v12911 = vunpack.c.l.b16 %v12775
      %v12912 = vunpack.c.l.b16 %v12776
      %v12913 = vunpack.c.l.b16 %v12777
      %v12914 = vunpack.c.l.b16 %v12778
      %v12915 = vunpack.c.l.b16 %v12779
      %v12916 = vunpack.c.l.b16 %v12780
      %v12917 = vunpack.c.l.b16 %v12781
      %v12918 = vunpack.c.l.b16 %v12782
      %v12919 = vunpack.c.l.b16 %v12783
      %v12920 = vunpack.c.l.b16 %v12784
      %v12921 = vunpack.c.l.b16 %v12785
      %v12922 = vunpack.c.l.b16 %v12786
      %v12923 = vunpack.c.l.b16 %v12787
      %v12924 = vunpack.c.l.b16 %v12788
      %v12925 = vunpack.c.l.b16 %v12789
      %v12926 = vunpack.c.l.b16 %v12790
      %v12927 = vunpack.c.l.b16 %v12791
      %v12928 = vunpack.c.l.b16 %v12792
      %v12929 = vunpack.c.l.b16 %v12793
      %v12930 = vunpack.c.l.b16 %v12794
      %v12931 = vunpack.c.l.b16 %v12795
      %v12932 = vunpack.c.l.b16 %v12796
      %v12933 = vunpack.c.l.b16 %v12797
      %v12934 = vunpack.c.l.b16 %v12798
      %v12935 = vunpack.c.l.b16 %v12799
      %v12936 = vunpack.c.l.b16 %v12800
      %v12937 = vunpack.c.l.b16 %v12801
      %v12938 = vunpack.c.l.b16 %v12802
      %v12939 = vunpack.c.l.b16 %v12803
      %v12940 = vunpack.c.l.b16 %v12804
      %v12941 = vunpack.c.l.b16 %v12805
      %v12942 = vunpack.c.l.b16 %v12806
      %v12943 = vunpack.c.l.b16 %v12807
      %v12944 = vunpack.c.l.b16 %v12808
      %v12945 = vpack.c.b16 %v12878, %v12877
      %v12946 = vpack.c.b16 %v12880, %v12879
      %v12947 = vpack.c.b16 %v12882, %v12881
      %v12948 = vpack.c.b16 %v12884, %v12883
      %v12949 = vpack.c.b16 %v12886, %v12885
      %v12950 = vpack.c.b16 %v12888, %v12887
      %v12951 = vpack.c.b16 %v12890, %v12889
      %v12952 = vpack.c.b16 %v12892, %v12891
      %v12953 = vpack.c.b16 %v12894, %v12893
      %v12954 = vpack.c.b16 %v12896, %v12895
      %v12955 = vpack.c.b16 %v12898, %v12897
      %v12956 = vpack.c.b16 %v12900, %v12899
      %v12957 = vpack.c.b16 %v12902, %v12901
      %v12958 = vpack.c.b16 %v12904, %v12903
      %v12959 = vpack.c.b16 %v12906, %v12905
      %v12960 = vpack.c.b16 %v12908, %v12907
      %v12961 = vpack.c.b16 %v12910, %v12909
      %v12962 = vpack.c.b16 %v12912, %v12911
      %v12963 = vpack.c.b16 %v12914, %v12913
      %v12964 = vpack.c.b16 %v12916, %v12915
      %v12965 = vpack.c.b16 %v12918, %v12917
      %v12966 = vpack.c.b16 %v12920, %v12919
      %v12967 = vpack.c.b16 %v12922, %v12921
      %v12968 = vpack.c.b16 %v12924, %v12923
      %v12969 = vpack.c.b16 %v12926, %v12925
      %v12970 = vpack.c.b16 %v12928, %v12927
      %v12971 = vpack.c.b16 %v12930, %v12929
      %v12972 = vpack.c.b16 %v12932, %v12931
      %v12973 = vpack.c.b16 %v12934, %v12933
      %v12974 = vpack.c.b16 %v12936, %v12935
      %v12975 = vpack.c.b16 %v12938, %v12937
      %v12976 = vpack.c.b16 %v12940, %v12939
      %v12977 = vpack.c.b16 %v12942, %v12941
      %v12978 = vpack.c.b16 %v12944, %v12943
      %13013 = vmatpush.bf16.msra.mxu0 %v12952
      %13014 = vmatpush.bf16.msra.mxu0 %v12951
      %13015 = vmatpush.bf16.msra.mxu0 %v12950
      %13016 = vmatpush.bf16.msra.mxu0 %v12949
      %13017 = vmatpush.bf16.msra.mxu0 %v12948
      %13018 = vmatpush.bf16.msra.mxu0 %v12947
      %13019 = vmatpush.bf16.msra.mxu0 %v12946
      %13020 = vmatpush.bf16.msra.mxu0 %v12945
      %13021 = vmatmul.bf16.gmra.mxu0 %v10959
      %v13022 = vpop.f32.mrf.mxu0
      %v13023 = vadd.f32 0.0, %v13022
      %v13024 = vpop.f32.mrf.mxu0
      %v13025 = vadd.f32 0.0, %v13024
      %13026 = vmatmul.bf16.gmra.mxu0 %v10964
      %v13027 = vpop.f32.mrf.mxu0
      %v13028 = vadd.f32 0.0, %v13027
      %v13029 = vpop.f32.mrf.mxu0
      %v13030 = vadd.f32 0.0, %v13029
      %13031 = vmatmul.bf16.gmra.mxu0 %v10969
      %v13032 = vpop.f32.mrf.mxu0
      %v13033 = vadd.f32 0.0, %v13032
      %v13034 = vpop.f32.mrf.mxu0
      %13035 = vdwg.mxu0
      %13036 = vmatpush.bf16.msra.mxu0 %v12960
      %13037 = vmatpush.bf16.msra.mxu0 %v12959
      %13038 = vmatpush.bf16.msra.mxu0 %v12958
      %13039 = vmatpush.bf16.msra.mxu0 %v12957
      %13040 = vmatpush.bf16.msra.mxu0 %v12956
      %13041 = vmatpush.bf16.msra.mxu0 %v12955
      %13042 = vmatpush.bf16.msra.mxu0 %v12954
      %13043 = vmatpush.bf16.msra.mxu0 %v12953
      %13044 = vmatmul.bf16.gmra.mxu0 %v10960
      %v13045 = vpop.f32.mrf.mxu0
      %v13046 = vadd.f32 %v13023, %v13045
      %v13047 = vpop.f32.mrf.mxu0
      %v13048 = vadd.f32 %v13025, %v13047
      %13049 = vmatmul.bf16.gmra.mxu0 %v10965
      %v13050 = vpop.f32.mrf.mxu0
      %v13051 = vadd.f32 %v13028, %v13050
      %v13052 = vpop.f32.mrf.mxu0
      %v13053 = vadd.f32 %v13030, %v13052
      %13054 = vmatmul.bf16.gmra.mxu0 %v10970
      %v13055 = vpop.f32.mrf.mxu0
      %v13056 = vadd.f32 %v13033, %v13055
      %v13057 = vpop.f32.mrf.mxu0
      %13058 = vdwg.mxu0
      %13059 = vmatpush.bf16.msra.mxu0 %v12968
      %13060 = vmatpush.bf16.msra.mxu0 %v12967
      %13061 = vmatpush.bf16.msra.mxu0 %v12966
      %13062 = vmatpush.bf16.msra.mxu0 %v12965
      %13063 = vmatpush.bf16.msra.mxu0 %v12964
      %13064 = vmatpush.bf16.msra.mxu0 %v12963
      %13065 = vmatpush.bf16.msra.mxu0 %v12962
      %13066 = vmatpush.bf16.msra.mxu0 %v12961
      %13067 = vmatmul.bf16.gmra.mxu0 %v10961
      %v13068 = vpop.f32.mrf.mxu0
      %v13069 = vadd.f32 %v13046, %v13068
      %v13070 = vpop.f32.mrf.mxu0
      %v13071 = vadd.f32 %v13048, %v13070
      %13072 = vmatmul.bf16.gmra.mxu0 %v10966
      %v13073 = vpop.f32.mrf.mxu0
      %v13074 = vadd.f32 %v13051, %v13073
      %v13075 = vpop.f32.mrf.mxu0
      %v13076 = vadd.f32 %v13053, %v13075
      %13077 = vmatmul.bf16.gmra.mxu0 %v10971
      %v13078 = vpop.f32.mrf.mxu0
      %v13079 = vadd.f32 %v13056, %v13078
      %v13080 = vpop.f32.mrf.mxu0
      %13081 = vdwg.mxu0
      %13082 = vmatpush.bf16.msra.mxu0 %v12976
      %13083 = vmatpush.bf16.msra.mxu0 %v12975
      %13084 = vmatpush.bf16.msra.mxu0 %v12974
      %13085 = vmatpush.bf16.msra.mxu0 %v12973
      %13086 = vmatpush.bf16.msra.mxu0 %v12972
      %13087 = vmatpush.bf16.msra.mxu0 %v12971
      %13088 = vmatpush.bf16.msra.mxu0 %v12970
      %13089 = vmatpush.bf16.msra.mxu0 %v12969
      %13090 = vmatmul.bf16.gmra.mxu0 %v10962
      %v13091 = vpop.f32.mrf.mxu0
      %v13092 = vadd.f32 %v13069, %v13091
      %v13093 = vpop.f32.mrf.mxu0
      %v13094 = vadd.f32 %v13071, %v13093
      %13095 = vmatmul.bf16.gmra.mxu0 %v10967
      %v13096 = vpop.f32.mrf.mxu0
      %v13097 = vadd.f32 %v13074, %v13096
      %v13098 = vpop.f32.mrf.mxu0
      %v13099 = vadd.f32 %v13076, %v13098
      %13100 = vmatmul.bf16.gmra.mxu0 %v10972
      %v13101 = vpop.f32.mrf.mxu0
      %v13102 = vadd.f32 %v13079, %v13101
      %v13103 = vpop.f32.mrf.mxu0
      %13104 = vdwg.mxu0
      %13105 = vmatpush.bf16.msra.mxu0 0
      %13106 = vmatpush.bf16.msra.mxu0 0
      %13107 = vmatpush.bf16.msra.mxu0 0
      %13108 = vmatpush.bf16.msra.mxu0 0
      %13109 = vmatpush.bf16.msra.mxu0 0
      %13110 = vmatpush.bf16.msra.mxu0 0
      %13111 = vmatpush.bf16.msra.mxu0 %v12978
      %13112 = vmatpush.bf16.msra.mxu0 %v12977
      %13113 = vmatmul.bf16.gmra.mxu0 %v11248
      %v13114 = vpop.f32.mrf.mxu0
      %v13115 = vadd.f32 %v13092, %v13114
      %v13116 = vpop.f32.mrf.mxu0
      %v13117 = vadd.f32 %v13094, %v13116
      %13118 = vmatmul.bf16.gmra.mxu0 %v11251
      %v13119 = vpop.f32.mrf.mxu0
      %v13120 = vadd.f32 %v13097, %v13119
      %v13121 = vpop.f32.mrf.mxu0
      %v13122 = vadd.f32 %v13099, %v13121
      %13123 = vmatmul.bf16.gmra.mxu0 %v11254
      %v13124 = vpop.f32.mrf.mxu0
      %v13125 = vadd.f32 %v13102, %v13124
      %v13126 = vpop.f32.mrf.mxu0
      %13127 = vdwg.mxu0
      %s13128 = scalar_lea.vmem %s10, 128
      %v13129 = vld [vmem:[%s13128] sm:$0xff]
      %v13130 = vld [vmem:[%s13128 + $0x8] sm:$0xff]
      %v13131 = vld [vmem:[%s13128 + $0x10] sm:$0xff]
      %v13132 = vld [vmem:[%s13128 + $0x18] sm:$0xf]
      %v13134 = vsel %vm11768, %v13129, 0
      %v13137 = vsel %vm11768, %v13130, 0
      %v13140 = vsel %vm11768, %v13131, 0
      %v13143 = vsel %vm11768, %v13132, 0
      %v13146 = vsel %vm11781, %v13125, 0
      %13148 = vmatpush.msra.mxu0 0.0
      %13149 = vmatpush.msra.mxu0 0.0
      %13150 = vmatpush.msra.mxu0 0.0
      %13151 = vmatpush.msra.mxu0 0.0
      %13152 = vmatpush.msra.mxu0 0.0
      %13153 = vmatpush.msra.mxu0 0.0
      %13154 = vmatpush.msra.mxu0 0.0
      %13155 = vmatpush.msra.mxu0 0.0
      %13156 = vmatpush.msra.mxu0 0.0
      %13157 = vmatpush.msra.mxu0 0.0
      %13158 = vmatpush.msra.mxu0 0.0
      %13159 = vmatpush.msra.mxu0 %v13146
      %13160 = vmatpush.msra.mxu0 %v13122
      %13161 = vmatpush.msra.mxu0 %v13120
      %13162 = vmatpush.msra.mxu0 %v13117
      %13163 = vmatpush.msra.mxu0 %v13115
      %13164 = vmatmul.f32.gmra.mxu0 %v13134
      %v13165 = vpop.f32.mrf.mxu0
      %v13166 = vadd.f32 0.0, %v13165
      %13167 = vmatmul.f32.gmra.mxu0 %v13137
      %v13168 = vpop.f32.mrf.mxu0
      %v13169 = vadd.f32 0.0, %v13168
      %13170 = vmatmul.f32.gmra.mxu0 %v13140
      %v13171 = vpop.f32.mrf.mxu0
      %v13172 = vadd.f32 0.0, %v13171
      %13173 = vmatmul.f32.gmra.mxu0 %v13143
      %v13174 = vpop.f32.mrf.mxu0
      %v13175 = vadd.f32 0.0, %v13174
      %13176 = vdwg.mxu0
      %v13177 = vadd.f32 %v12736, %v13166
      %v13178 = vadd.f32 %v12737, %v13169
      %v13179 = vadd.f32 %v12738, %v13172
      %v13180 = vadd.f32 %v12739, %v13175
      %s13181 = scalar_lea.vmem %s9, 1360
      %v13182 = vld [vmem:[%s13181] sm:$0xf]
      %v13183 = vld [vmem:[%s13181 + $0x4] sm:$0xf]
      %v13184 = vld [vmem:[%s13181 + $0x8] sm:$0xf]
      %v13185 = vld [vmem:[%s13181 + $0xc] sm:$0xf]
      %v13186 = vld [vmem:[%s13181 + $0x10] sm:$0xf]
      %v13187 = vld [vmem:[%s13181 + $0x14] sm:$0xf]
      %v13188 = vld [vmem:[%s13181 + $0x18] sm:$0xf]
      %v13189 = vld [vmem:[%s13181 + $0x1c] sm:$0xf]
      %v13190 = vld [vmem:[%s13181 + $0x20] sm:$0xf]
      %v13191 = vld [vmem:[%s13181 + $0x24] sm:$0xf]
      %v13192 = vld [vmem:[%s13181 + $0x28] sm:$0xf]
      %v13193 = vld [vmem:[%s13181 + $0x2c] sm:$0xf]
      %v13194 = vld [vmem:[%s13181 + $0x30] sm:$0xf]
      %v13195 = vld [vmem:[%s13181 + $0x34] sm:$0xf]
      %v13196 = vld [vmem:[%s13181 + $0x38] sm:$0xf]
      %v13197 = vld [vmem:[%s13181 + $0x3c] sm:$0xf]
      %v13198 = vld [vmem:[%s13181 + $0x40] sm:$0xf]
      %v13199 = vld [vmem:[%s13181 + $0x44] sm:$0xf]
      %v13200 = vld [vmem:[%s13181 + $0x48] sm:$0xf]
      %v13201 = vld [vmem:[%s13181 + $0x4c] sm:$0xf]
      %v13202 = vld [vmem:[%s13181 + $0x50] sm:$0xf]
      %v13203 = vld [vmem:[%s13181 + $0x54] sm:$0xf]
      %v13204 = vld [vmem:[%s13181 + $0x58] sm:$0xf]
      %v13205 = vld [vmem:[%s13181 + $0x5c] sm:$0xf]
      %v13206 = vld [vmem:[%s13181 + $0x60] sm:$0xf]
      %v13207 = vld [vmem:[%s13181 + $0x64] sm:$0xf]
      %v13208 = vld [vmem:[%s13181 + $0x68] sm:$0xf]
      %v13209 = vld [vmem:[%s13181 + $0x6c] sm:$0xf]
      %v13210 = vld [vmem:[%s13181 + $0x70] sm:$0xf]
      %v13211 = vld [vmem:[%s13181 + $0x74] sm:$0xf]
      %v13212 = vld [vmem:[%s13181 + $0x78] sm:$0xf]
      %v13213 = vld [vmem:[%s13181 + $0x7c] sm:$0xf]
      %v13214 = vld [vmem:[%s13181 + $0x80] sm:$0xf]
      %v13215 = vld [vmem:[%s13181 + $0x84] sm:$0xf]
      %v13216 = vld [vmem:[%s13181 + $0x88] sm:$0xf]
      %v13217 = vld [vmem:[%s13181 + $0x8c] sm:$0xf]
      %v13218 = vld [vmem:[%s13181 + $0x90] sm:$0xf]
      %v13219 = vld [vmem:[%s13181 + $0x94] sm:$0xf]
      %v13220 = vld [vmem:[%s13181 + $0x98] sm:$0xf]
      %v13221 = vld [vmem:[%s13181 + $0x9c] sm:$0xf]
      %v13222 = vld [vmem:[%s13181 + $0xa0] sm:$0xf]
      %v13223 = vld [vmem:[%s13181 + $0xa4] sm:$0xf]
      %v13224 = vld [vmem:[%s13181 + $0xa8] sm:$0xf]
      %v13225 = vld [vmem:[%s13181 + $0xac] sm:$0xf]
      %v13226 = vld [vmem:[%s13181 + $0xb0] sm:$0xf]
      %v13227 = vld [vmem:[%s13181 + $0xb4] sm:$0xf]
      %v13228 = vld [vmem:[%s13181 + $0xb8] sm:$0xf]
      %v13229 = vld [vmem:[%s13181 + $0xbc] sm:$0xf]
      %v13230 = vld [vmem:[%s13181 + $0xc0] sm:$0xf]
      %v13231 = vld [vmem:[%s13181 + $0xc4] sm:$0xf]
      %v13232 = vld [vmem:[%s13181 + $0xc8] sm:$0xf]
      %v13233 = vld [vmem:[%s13181 + $0xcc] sm:$0xf]
      %v13234 = vld [vmem:[%s13181 + $0xd0] sm:$0xf]
      %v13235 = vld [vmem:[%s13181 + $0xd4] sm:$0xf]
      %v13236 = vld [vmem:[%s13181 + $0xd8] sm:$0xf]
      %v13237 = vld [vmem:[%s13181 + $0xdc] sm:$0xf]
      %v13238 = vld [vmem:[%s13181 + $0xe0] sm:$0xf]
      %v13239 = vld [vmem:[%s13181 + $0xe4] sm:$0xf]
      %v13240 = vld [vmem:[%s13181 + $0xe8] sm:$0xf]
      %v13241 = vld [vmem:[%s13181 + $0xec] sm:$0xf]
      %v13242 = vld [vmem:[%s13181 + $0xf0] sm:$0xf]
      %v13243 = vld [vmem:[%s13181 + $0xf4] sm:$0xf]
      %v13244 = vld [vmem:[%s13181 + $0xf8] sm:$0xf]
      %v13245 = vld [vmem:[%s13181 + $0xfc] sm:$0xf]
      %v13246 = vld [vmem:[%s13181 + $0x100] sm:$0xf]
      %v13247 = vld [vmem:[%s13181 + $0x104] sm:$0xf]
      %v13248 = vld [vmem:[%s13181 + $0x108] sm:$0xf]
      %v13249 = vld [vmem:[%s13181 + $0x10c] sm:$0xf]
      %v13318 = vunpack.c.l.b16 %v13182
      %v13319 = vunpack.c.l.b16 %v13183
      %v13320 = vunpack.c.l.b16 %v13184
      %v13321 = vunpack.c.l.b16 %v13185
      %v13322 = vunpack.c.l.b16 %v13186
      %v13323 = vunpack.c.l.b16 %v13187
      %v13324 = vunpack.c.l.b16 %v13188
      %v13325 = vunpack.c.l.b16 %v13189
      %v13326 = vunpack.c.l.b16 %v13190
      %v13327 = vunpack.c.l.b16 %v13191
      %v13328 = vunpack.c.l.b16 %v13192
      %v13329 = vunpack.c.l.b16 %v13193
      %v13330 = vunpack.c.l.b16 %v13194
      %v13331 = vunpack.c.l.b16 %v13195
      %v13332 = vunpack.c.l.b16 %v13196
      %v13333 = vunpack.c.l.b16 %v13197
      %v13334 = vunpack.c.l.b16 %v13198
      %v13335 = vunpack.c.l.b16 %v13199
      %v13336 = vunpack.c.l.b16 %v13200
      %v13337 = vunpack.c.l.b16 %v13201
      %v13338 = vunpack.c.l.b16 %v13202
      %v13339 = vunpack.c.l.b16 %v13203
      %v13340 = vunpack.c.l.b16 %v13204
      %v13341 = vunpack.c.l.b16 %v13205
      %v13342 = vunpack.c.l.b16 %v13206
      %v13343 = vunpack.c.l.b16 %v13207
      %v13344 = vunpack.c.l.b16 %v13208
      %v13345 = vunpack.c.l.b16 %v13209
      %v13346 = vunpack.c.l.b16 %v13210
      %v13347 = vunpack.c.l.b16 %v13211
      %v13348 = vunpack.c.l.b16 %v13212
      %v13349 = vunpack.c.l.b16 %v13213
      %v13350 = vunpack.c.l.b16 %v13214
      %v13351 = vunpack.c.l.b16 %v13215
      %v13352 = vunpack.c.l.b16 %v13216
      %v13353 = vunpack.c.l.b16 %v13217
      %v13354 = vunpack.c.l.b16 %v13218
      %v13355 = vunpack.c.l.b16 %v13219
      %v13356 = vunpack.c.l.b16 %v13220
      %v13357 = vunpack.c.l.b16 %v13221
      %v13358 = vunpack.c.l.b16 %v13222
      %v13359 = vunpack.c.l.b16 %v13223
      %v13360 = vunpack.c.l.b16 %v13224
      %v13361 = vunpack.c.l.b16 %v13225
      %v13362 = vunpack.c.l.b16 %v13226
      %v13363 = vunpack.c.l.b16 %v13227
      %v13364 = vunpack.c.l.b16 %v13228
      %v13365 = vunpack.c.l.b16 %v13229
      %v13366 = vunpack.c.l.b16 %v13230
      %v13367 = vunpack.c.l.b16 %v13231
      %v13368 = vunpack.c.l.b16 %v13232
      %v13369 = vunpack.c.l.b16 %v13233
      %v13370 = vunpack.c.l.b16 %v13234
      %v13371 = vunpack.c.l.b16 %v13235
      %v13372 = vunpack.c.l.b16 %v13236
      %v13373 = vunpack.c.l.b16 %v13237
      %v13374 = vunpack.c.l.b16 %v13238
      %v13375 = vunpack.c.l.b16 %v13239
      %v13376 = vunpack.c.l.b16 %v13240
      %v13377 = vunpack.c.l.b16 %v13241
      %v13378 = vunpack.c.l.b16 %v13242
      %v13379 = vunpack.c.l.b16 %v13243
      %v13380 = vunpack.c.l.b16 %v13244
      %v13381 = vunpack.c.l.b16 %v13245
      %v13382 = vunpack.c.l.b16 %v13246
      %v13383 = vunpack.c.l.b16 %v13247
      %v13384 = vunpack.c.l.b16 %v13248
      %v13385 = vunpack.c.l.b16 %v13249
      %v13386 = vpack.c.b16 %v13319, %v13318
      %v13387 = vpack.c.b16 %v13321, %v13320
      %v13388 = vpack.c.b16 %v13323, %v13322
      %v13389 = vpack.c.b16 %v13325, %v13324
      %v13390 = vpack.c.b16 %v13327, %v13326
      %v13391 = vpack.c.b16 %v13329, %v13328
      %v13392 = vpack.c.b16 %v13331, %v13330
      %v13393 = vpack.c.b16 %v13333, %v13332
      %v13394 = vpack.c.b16 %v13335, %v13334
      %v13395 = vpack.c.b16 %v13337, %v13336
      %v13396 = vpack.c.b16 %v13339, %v13338
      %v13397 = vpack.c.b16 %v13341, %v13340
      %v13398 = vpack.c.b16 %v13343, %v13342
      %v13399 = vpack.c.b16 %v13345, %v13344
      %v13400 = vpack.c.b16 %v13347, %v13346
      %v13401 = vpack.c.b16 %v13349, %v13348
      %v13402 = vpack.c.b16 %v13351, %v13350
      %v13403 = vpack.c.b16 %v13353, %v13352
      %v13404 = vpack.c.b16 %v13355, %v13354
      %v13405 = vpack.c.b16 %v13357, %v13356
      %v13406 = vpack.c.b16 %v13359, %v13358
      %v13407 = vpack.c.b16 %v13361, %v13360
      %v13408 = vpack.c.b16 %v13363, %v13362
      %v13409 = vpack.c.b16 %v13365, %v13364
      %v13410 = vpack.c.b16 %v13367, %v13366
      %v13411 = vpack.c.b16 %v13369, %v13368
      %v13412 = vpack.c.b16 %v13371, %v13370
      %v13413 = vpack.c.b16 %v13373, %v13372
      %v13414 = vpack.c.b16 %v13375, %v13374
      %v13415 = vpack.c.b16 %v13377, %v13376
      %v13416 = vpack.c.b16 %v13379, %v13378
      %v13417 = vpack.c.b16 %v13381, %v13380
      %v13418 = vpack.c.b16 %v13383, %v13382
      %v13419 = vpack.c.b16 %v13385, %v13384
      %13454 = vmatpush.bf16.msra.mxu0 %v13393
      %13455 = vmatpush.bf16.msra.mxu0 %v13392
      %13456 = vmatpush.bf16.msra.mxu0 %v13391
      %13457 = vmatpush.bf16.msra.mxu0 %v13390
      %13458 = vmatpush.bf16.msra.mxu0 %v13389
      %13459 = vmatpush.bf16.msra.mxu0 %v13388
      %13460 = vmatpush.bf16.msra.mxu0 %v13387
      %13461 = vmatpush.bf16.msra.mxu0 %v13386
      %13462 = vmatmul.bf16.gmra.mxu0 %v10959
      %v13463 = vpop.f32.mrf.mxu0
      %v13464 = vadd.f32 0.0, %v13463
      %v13465 = vpop.f32.mrf.mxu0
      %v13466 = vadd.f32 0.0, %v13465
      %13467 = vmatmul.bf16.gmra.mxu0 %v10964
      %v13468 = vpop.f32.mrf.mxu0
      %v13469 = vadd.f32 0.0, %v13468
      %v13470 = vpop.f32.mrf.mxu0
      %v13471 = vadd.f32 0.0, %v13470
      %13472 = vmatmul.bf16.gmra.mxu0 %v10969
      %v13473 = vpop.f32.mrf.mxu0
      %v13474 = vadd.f32 0.0, %v13473
      %v13475 = vpop.f32.mrf.mxu0
      %13476 = vdwg.mxu0
      %13477 = vmatpush.bf16.msra.mxu0 %v13401
      %13478 = vmatpush.bf16.msra.mxu0 %v13400
      %13479 = vmatpush.bf16.msra.mxu0 %v13399
      %13480 = vmatpush.bf16.msra.mxu0 %v13398
      %13481 = vmatpush.bf16.msra.mxu0 %v13397
      %13482 = vmatpush.bf16.msra.mxu0 %v13396
      %13483 = vmatpush.bf16.msra.mxu0 %v13395
      %13484 = vmatpush.bf16.msra.mxu0 %v13394
      %13485 = vmatmul.bf16.gmra.mxu0 %v10960
      %v13486 = vpop.f32.mrf.mxu0
      %v13487 = vadd.f32 %v13464, %v13486
      %v13488 = vpop.f32.mrf.mxu0
      %v13489 = vadd.f32 %v13466, %v13488
      %13490 = vmatmul.bf16.gmra.mxu0 %v10965
      %v13491 = vpop.f32.mrf.mxu0
      %v13492 = vadd.f32 %v13469, %v13491
      %v13493 = vpop.f32.mrf.mxu0
      %v13494 = vadd.f32 %v13471, %v13493
      %13495 = vmatmul.bf16.gmra.mxu0 %v10970
      %v13496 = vpop.f32.mrf.mxu0
      %v13497 = vadd.f32 %v13474, %v13496
      %v13498 = vpop.f32.mrf.mxu0
      %13499 = vdwg.mxu0
      %13500 = vmatpush.bf16.msra.mxu0 %v13409
      %13501 = vmatpush.bf16.msra.mxu0 %v13408
      %13502 = vmatpush.bf16.msra.mxu0 %v13407
      %13503 = vmatpush.bf16.msra.mxu0 %v13406
      %13504 = vmatpush.bf16.msra.mxu0 %v13405
      %13505 = vmatpush.bf16.msra.mxu0 %v13404
      %13506 = vmatpush.bf16.msra.mxu0 %v13403
      %13507 = vmatpush.bf16.msra.mxu0 %v13402
      %13508 = vmatmul.bf16.gmra.mxu0 %v10961
      %v13509 = vpop.f32.mrf.mxu0
      %v13510 = vadd.f32 %v13487, %v13509
      %v13511 = vpop.f32.mrf.mxu0
      %v13512 = vadd.f32 %v13489, %v13511
      %13513 = vmatmul.bf16.gmra.mxu0 %v10966
      %v13514 = vpop.f32.mrf.mxu0
      %v13515 = vadd.f32 %v13492, %v13514
      %v13516 = vpop.f32.mrf.mxu0
      %v13517 = vadd.f32 %v13494, %v13516
      %13518 = vmatmul.bf16.gmra.mxu0 %v10971
      %v13519 = vpop.f32.mrf.mxu0
      %v13520 = vadd.f32 %v13497, %v13519
      %v13521 = vpop.f32.mrf.mxu0
      %13522 = vdwg.mxu0
      %13523 = vmatpush.bf16.msra.mxu0 %v13417
      %13524 = vmatpush.bf16.msra.mxu0 %v13416
      %13525 = vmatpush.bf16.msra.mxu0 %v13415
      %13526 = vmatpush.bf16.msra.mxu0 %v13414
      %13527 = vmatpush.bf16.msra.mxu0 %v13413
      %13528 = vmatpush.bf16.msra.mxu0 %v13412
      %13529 = vmatpush.bf16.msra.mxu0 %v13411
      %13530 = vmatpush.bf16.msra.mxu0 %v13410
      %13531 = vmatmul.bf16.gmra.mxu0 %v10962
      %v13532 = vpop.f32.mrf.mxu0
      %v13533 = vadd.f32 %v13510, %v13532
      %v13534 = vpop.f32.mrf.mxu0
      %v13535 = vadd.f32 %v13512, %v13534
      %13536 = vmatmul.bf16.gmra.mxu0 %v10967
      %v13537 = vpop.f32.mrf.mxu0
      %v13538 = vadd.f32 %v13515, %v13537
      %v13539 = vpop.f32.mrf.mxu0
      %v13540 = vadd.f32 %v13517, %v13539
      %13541 = vmatmul.bf16.gmra.mxu0 %v10972
      %v13542 = vpop.f32.mrf.mxu0
      %v13543 = vadd.f32 %v13520, %v13542
      %v13544 = vpop.f32.mrf.mxu0
      %13545 = vdwg.mxu0
      %13546 = vmatpush.bf16.msra.mxu0 0
      %13547 = vmatpush.bf16.msra.mxu0 0
      %13548 = vmatpush.bf16.msra.mxu0 0
      %13549 = vmatpush.bf16.msra.mxu0 0
      %13550 = vmatpush.bf16.msra.mxu0 0
      %13551 = vmatpush.bf16.msra.mxu0 0
      %13552 = vmatpush.bf16.msra.mxu0 %v13419
      %13553 = vmatpush.bf16.msra.mxu0 %v13418
      %13554 = vmatmul.bf16.gmra.mxu0 %v11248
      %v13555 = vpop.f32.mrf.mxu0
      %v13556 = vadd.f32 %v13533, %v13555
      %v13557 = vpop.f32.mrf.mxu0
      %v13558 = vadd.f32 %v13535, %v13557
      %13559 = vmatmul.bf16.gmra.mxu0 %v11251
      %v13560 = vpop.f32.mrf.mxu0
      %v13561 = vadd.f32 %v13538, %v13560
      %v13562 = vpop.f32.mrf.mxu0
      %v13563 = vadd.f32 %v13540, %v13562
      %13564 = vmatmul.bf16.gmra.mxu0 %v11254
      %v13565 = vpop.f32.mrf.mxu0
      %v13566 = vadd.f32 %v13543, %v13565
      %v13567 = vpop.f32.mrf.mxu0
      %13568 = vdwg.mxu0
      %s13569 = scalar_lea.vmem %s10, 160
      %v13570 = vld [vmem:[%s13569] sm:$0xff]
      %v13571 = vld [vmem:[%s13569 + $0x8] sm:$0xff]
      %v13572 = vld [vmem:[%s13569 + $0x10] sm:$0xff]
      %v13573 = vld [vmem:[%s13569 + $0x18] sm:$0xf]
      %v13575 = vsel %vm11768, %v13570, 0
      %v13578 = vsel %vm11768, %v13571, 0
      %v13581 = vsel %vm11768, %v13572, 0
      %v13584 = vsel %vm11768, %v13573, 0
      %v13587 = vsel %vm11781, %v13566, 0
      %13589 = vmatpush.msra.mxu0 0.0
      %13590 = vmatpush.msra.mxu0 0.0
      %13591 = vmatpush.msra.mxu0 0.0
      %13592 = vmatpush.msra.mxu0 0.0
      %13593 = vmatpush.msra.mxu0 0.0
      %13594 = vmatpush.msra.mxu0 0.0
      %13595 = vmatpush.msra.mxu0 0.0
      %13596 = vmatpush.msra.mxu0 0.0
      %13597 = vmatpush.msra.mxu0 0.0
      %13598 = vmatpush.msra.mxu0 0.0
      %13599 = vmatpush.msra.mxu0 0.0
      %13600 = vmatpush.msra.mxu0 %v13587
      %13601 = vmatpush.msra.mxu0 %v13563
      %13602 = vmatpush.msra.mxu0 %v13561
      %13603 = vmatpush.msra.mxu0 %v13558
      %13604 = vmatpush.msra.mxu0 %v13556
      %13605 = vmatmul.f32.gmra.mxu0 %v13575
      %v13606 = vpop.f32.mrf.mxu0
      %v13607 = vadd.f32 0.0, %v13606
      %13608 = vmatmul.f32.gmra.mxu0 %v13578
      %v13609 = vpop.f32.mrf.mxu0
      %v13610 = vadd.f32 0.0, %v13609
      %13611 = vmatmul.f32.gmra.mxu0 %v13581
      %v13612 = vpop.f32.mrf.mxu0
      %v13613 = vadd.f32 0.0, %v13612
      %13614 = vmatmul.f32.gmra.mxu0 %v13584
      %v13615 = vpop.f32.mrf.mxu0
      %v13616 = vadd.f32 0.0, %v13615
      %13617 = vdwg.mxu0
      %v13618 = vadd.f32 %v13177, %v13607
      %v13619 = vadd.f32 %v13178, %v13610
      %v13620 = vadd.f32 %v13179, %v13613
      %v13621 = vadd.f32 %v13180, %v13616
      %s13622 = scalar_lea.vmem %s9, 1632
      %v13623 = vld [vmem:[%s13622] sm:$0xf]
      %v13624 = vld [vmem:[%s13622 + $0x4] sm:$0xf]
      %v13625 = vld [vmem:[%s13622 + $0x8] sm:$0xf]
      %v13626 = vld [vmem:[%s13622 + $0xc] sm:$0xf]
      %v13627 = vld [vmem:[%s13622 + $0x10] sm:$0xf]
      %v13628 = vld [vmem:[%s13622 + $0x14] sm:$0xf]
      %v13629 = vld [vmem:[%s13622 + $0x18] sm:$0xf]
      %v13630 = vld [vmem:[%s13622 + $0x1c] sm:$0xf]
      %v13631 = vld [vmem:[%s13622 + $0x20] sm:$0xf]
      %v13632 = vld [vmem:[%s13622 + $0x24] sm:$0xf]
      %v13633 = vld [vmem:[%s13622 + $0x28] sm:$0xf]
      %v13634 = vld [vmem:[%s13622 + $0x2c] sm:$0xf]
      %v13635 = vld [vmem:[%s13622 + $0x30] sm:$0xf]
      %v13636 = vld [vmem:[%s13622 + $0x34] sm:$0xf]
      %v13637 = vld [vmem:[%s13622 + $0x38] sm:$0xf]
      %v13638 = vld [vmem:[%s13622 + $0x3c] sm:$0xf]
      %v13639 = vld [vmem:[%s13622 + $0x40] sm:$0xf]
      %v13640 = vld [vmem:[%s13622 + $0x44] sm:$0xf]
      %v13641 = vld [vmem:[%s13622 + $0x48] sm:$0xf]
      %v13642 = vld [vmem:[%s13622 + $0x4c] sm:$0xf]
      %v13643 = vld [vmem:[%s13622 + $0x50] sm:$0xf]
      %v13644 = vld [vmem:[%s13622 + $0x54] sm:$0xf]
      %v13645 = vld [vmem:[%s13622 + $0x58] sm:$0xf]
      %v13646 = vld [vmem:[%s13622 + $0x5c] sm:$0xf]
      %v13647 = vld [vmem:[%s13622 + $0x60] sm:$0xf]
      %v13648 = vld [vmem:[%s13622 + $0x64] sm:$0xf]
      %v13649 = vld [vmem:[%s13622 + $0x68] sm:$0xf]
      %v13650 = vld [vmem:[%s13622 + $0x6c] sm:$0xf]
      %v13651 = vld [vmem:[%s13622 + $0x70] sm:$0xf]
      %v13652 = vld [vmem:[%s13622 + $0x74] sm:$0xf]
      %v13653 = vld [vmem:[%s13622 + $0x78] sm:$0xf]
      %v13654 = vld [vmem:[%s13622 + $0x7c] sm:$0xf]
      %v13655 = vld [vmem:[%s13622 + $0x80] sm:$0xf]
      %v13656 = vld [vmem:[%s13622 + $0x84] sm:$0xf]
      %v13657 = vld [vmem:[%s13622 + $0x88] sm:$0xf]
      %v13658 = vld [vmem:[%s13622 + $0x8c] sm:$0xf]
      %v13659 = vld [vmem:[%s13622 + $0x90] sm:$0xf]
      %v13660 = vld [vmem:[%s13622 + $0x94] sm:$0xf]
      %v13661 = vld [vmem:[%s13622 + $0x98] sm:$0xf]
      %v13662 = vld [vmem:[%s13622 + $0x9c] sm:$0xf]
      %v13663 = vld [vmem:[%s13622 + $0xa0] sm:$0xf]
      %v13664 = vld [vmem:[%s13622 + $0xa4] sm:$0xf]
      %v13665 = vld [vmem:[%s13622 + $0xa8] sm:$0xf]
      %v13666 = vld [vmem:[%s13622 + $0xac] sm:$0xf]
      %v13667 = vld [vmem:[%s13622 + $0xb0] sm:$0xf]
      %v13668 = vld [vmem:[%s13622 + $0xb4] sm:$0xf]
      %v13669 = vld [vmem:[%s13622 + $0xb8] sm:$0xf]
      %v13670 = vld [vmem:[%s13622 + $0xbc] sm:$0xf]
      %v13671 = vld [vmem:[%s13622 + $0xc0] sm:$0xf]
      %v13672 = vld [vmem:[%s13622 + $0xc4] sm:$0xf]
      %v13673 = vld [vmem:[%s13622 + $0xc8] sm:$0xf]
      %v13674 = vld [vmem:[%s13622 + $0xcc] sm:$0xf]
      %v13675 = vld [vmem:[%s13622 + $0xd0] sm:$0xf]
      %v13676 = vld [vmem:[%s13622 + $0xd4] sm:$0xf]
      %v13677 = vld [vmem:[%s13622 + $0xd8] sm:$0xf]
      %v13678 = vld [vmem:[%s13622 + $0xdc] sm:$0xf]
      %v13679 = vld [vmem:[%s13622 + $0xe0] sm:$0xf]
      %v13680 = vld [vmem:[%s13622 + $0xe4] sm:$0xf]
      %v13681 = vld [vmem:[%s13622 + $0xe8] sm:$0xf]
      %v13682 = vld [vmem:[%s13622 + $0xec] sm:$0xf]
      %v13683 = vld [vmem:[%s13622 + $0xf0] sm:$0xf]
      %v13684 = vld [vmem:[%s13622 + $0xf4] sm:$0xf]
      %v13685 = vld [vmem:[%s13622 + $0xf8] sm:$0xf]
      %v13686 = vld [vmem:[%s13622 + $0xfc] sm:$0xf]
      %v13687 = vld [vmem:[%s13622 + $0x100] sm:$0xf]
      %v13688 = vld [vmem:[%s13622 + $0x104] sm:$0xf]
      %v13689 = vld [vmem:[%s13622 + $0x108] sm:$0xf]
      %v13690 = vld [vmem:[%s13622 + $0x10c] sm:$0xf]
      %v13759 = vunpack.c.l.b16 %v13623
      %v13760 = vunpack.c.l.b16 %v13624
      %v13761 = vunpack.c.l.b16 %v13625
      %v13762 = vunpack.c.l.b16 %v13626
      %v13763 = vunpack.c.l.b16 %v13627
      %v13764 = vunpack.c.l.b16 %v13628
      %v13765 = vunpack.c.l.b16 %v13629
      %v13766 = vunpack.c.l.b16 %v13630
      %v13767 = vunpack.c.l.b16 %v13631
      %v13768 = vunpack.c.l.b16 %v13632
      %v13769 = vunpack.c.l.b16 %v13633
      %v13770 = vunpack.c.l.b16 %v13634
      %v13771 = vunpack.c.l.b16 %v13635
      %v13772 = vunpack.c.l.b16 %v13636
      %v13773 = vunpack.c.l.b16 %v13637
      %v13774 = vunpack.c.l.b16 %v13638
      %v13775 = vunpack.c.l.b16 %v13639
      %v13776 = vunpack.c.l.b16 %v13640
      %v13777 = vunpack.c.l.b16 %v13641
      %v13778 = vunpack.c.l.b16 %v13642
      %v13779 = vunpack.c.l.b16 %v13643
      %v13780 = vunpack.c.l.b16 %v13644
      %v13781 = vunpack.c.l.b16 %v13645
      %v13782 = vunpack.c.l.b16 %v13646
      %v13783 = vunpack.c.l.b16 %v13647
      %v13784 = vunpack.c.l.b16 %v13648
      %v13785 = vunpack.c.l.b16 %v13649
      %v13786 = vunpack.c.l.b16 %v13650
      %v13787 = vunpack.c.l.b16 %v13651
      %v13788 = vunpack.c.l.b16 %v13652
      %v13789 = vunpack.c.l.b16 %v13653
      %v13790 = vunpack.c.l.b16 %v13654
      %v13791 = vunpack.c.l.b16 %v13655
      %v13792 = vunpack.c.l.b16 %v13656
      %v13793 = vunpack.c.l.b16 %v13657
      %v13794 = vunpack.c.l.b16 %v13658
      %v13795 = vunpack.c.l.b16 %v13659
      %v13796 = vunpack.c.l.b16 %v13660
      %v13797 = vunpack.c.l.b16 %v13661
      %v13798 = vunpack.c.l.b16 %v13662
      %v13799 = vunpack.c.l.b16 %v13663
      %v13800 = vunpack.c.l.b16 %v13664
      %v13801 = vunpack.c.l.b16 %v13665
      %v13802 = vunpack.c.l.b16 %v13666
      %v13803 = vunpack.c.l.b16 %v13667
      %v13804 = vunpack.c.l.b16 %v13668
      %v13805 = vunpack.c.l.b16 %v13669
      %v13806 = vunpack.c.l.b16 %v13670
      %v13807 = vunpack.c.l.b16 %v13671
      %v13808 = vunpack.c.l.b16 %v13672
      %v13809 = vunpack.c.l.b16 %v13673
      %v13810 = vunpack.c.l.b16 %v13674
      %v13811 = vunpack.c.l.b16 %v13675
      %v13812 = vunpack.c.l.b16 %v13676
      %v13813 = vunpack.c.l.b16 %v13677
      %v13814 = vunpack.c.l.b16 %v13678
      %v13815 = vunpack.c.l.b16 %v13679
      %v13816 = vunpack.c.l.b16 %v13680
      %v13817 = vunpack.c.l.b16 %v13681
      %v13818 = vunpack.c.l.b16 %v13682
      %v13819 = vunpack.c.l.b16 %v13683
      %v13820 = vunpack.c.l.b16 %v13684
      %v13821 = vunpack.c.l.b16 %v13685
      %v13822 = vunpack.c.l.b16 %v13686
      %v13823 = vunpack.c.l.b16 %v13687
      %v13824 = vunpack.c.l.b16 %v13688
      %v13825 = vunpack.c.l.b16 %v13689
      %v13826 = vunpack.c.l.b16 %v13690
      %v13827 = vpack.c.b16 %v13760, %v13759
      %v13828 = vpack.c.b16 %v13762, %v13761
      %v13829 = vpack.c.b16 %v13764, %v13763
      %v13830 = vpack.c.b16 %v13766, %v13765
      %v13831 = vpack.c.b16 %v13768, %v13767
      %v13832 = vpack.c.b16 %v13770, %v13769
      %v13833 = vpack.c.b16 %v13772, %v13771
      %v13834 = vpack.c.b16 %v13774, %v13773
      %v13835 = vpack.c.b16 %v13776, %v13775
      %v13836 = vpack.c.b16 %v13778, %v13777
      %v13837 = vpack.c.b16 %v13780, %v13779
      %v13838 = vpack.c.b16 %v13782, %v13781
      %v13839 = vpack.c.b16 %v13784, %v13783
      %v13840 = vpack.c.b16 %v13786, %v13785
      %v13841 = vpack.c.b16 %v13788, %v13787
      %v13842 = vpack.c.b16 %v13790, %v13789
      %v13843 = vpack.c.b16 %v13792, %v13791
      %v13844 = vpack.c.b16 %v13794, %v13793
      %v13845 = vpack.c.b16 %v13796, %v13795
      %v13846 = vpack.c.b16 %v13798, %v13797
      %v13847 = vpack.c.b16 %v13800, %v13799
      %v13848 = vpack.c.b16 %v13802, %v13801
      %v13849 = vpack.c.b16 %v13804, %v13803
      %v13850 = vpack.c.b16 %v13806, %v13805
      %v13851 = vpack.c.b16 %v13808, %v13807
      %v13852 = vpack.c.b16 %v13810, %v13809
      %v13853 = vpack.c.b16 %v13812, %v13811
      %v13854 = vpack.c.b16 %v13814, %v13813
      %v13855 = vpack.c.b16 %v13816, %v13815
      %v13856 = vpack.c.b16 %v13818, %v13817
      %v13857 = vpack.c.b16 %v13820, %v13819
      %v13858 = vpack.c.b16 %v13822, %v13821
      %v13859 = vpack.c.b16 %v13824, %v13823
      %v13860 = vpack.c.b16 %v13826, %v13825
      %13895 = vmatpush.bf16.msra.mxu0 %v13834
      %13896 = vmatpush.bf16.msra.mxu0 %v13833
      %13897 = vmatpush.bf16.msra.mxu0 %v13832
      %13898 = vmatpush.bf16.msra.mxu0 %v13831
      %13899 = vmatpush.bf16.msra.mxu0 %v13830
      %13900 = vmatpush.bf16.msra.mxu0 %v13829
      %13901 = vmatpush.bf16.msra.mxu0 %v13828
      %13902 = vmatpush.bf16.msra.mxu0 %v13827
      %13903 = vmatmul.bf16.gmra.mxu0 %v10959
      %v13904 = vpop.f32.mrf.mxu0
      %v13905 = vadd.f32 0.0, %v13904
      %v13906 = vpop.f32.mrf.mxu0
      %v13907 = vadd.f32 0.0, %v13906
      %13908 = vmatmul.bf16.gmra.mxu0 %v10964
      %v13909 = vpop.f32.mrf.mxu0
      %v13910 = vadd.f32 0.0, %v13909
      %v13911 = vpop.f32.mrf.mxu0
      %v13912 = vadd.f32 0.0, %v13911
      %13913 = vmatmul.bf16.gmra.mxu0 %v10969
      %v13914 = vpop.f32.mrf.mxu0
      %v13915 = vadd.f32 0.0, %v13914
      %v13916 = vpop.f32.mrf.mxu0
      %13917 = vdwg.mxu0
      %13918 = vmatpush.bf16.msra.mxu0 %v13842
      %13919 = vmatpush.bf16.msra.mxu0 %v13841
      %13920 = vmatpush.bf16.msra.mxu0 %v13840
      %13921 = vmatpush.bf16.msra.mxu0 %v13839
      %13922 = vmatpush.bf16.msra.mxu0 %v13838
      %13923 = vmatpush.bf16.msra.mxu0 %v13837
      %13924 = vmatpush.bf16.msra.mxu0 %v13836
      %13925 = vmatpush.bf16.msra.mxu0 %v13835
      %13926 = vmatmul.bf16.gmra.mxu0 %v10960
      %v13927 = vpop.f32.mrf.mxu0
      %v13928 = vadd.f32 %v13905, %v13927
      %v13929 = vpop.f32.mrf.mxu0
      %v13930 = vadd.f32 %v13907, %v13929
      %13931 = vmatmul.bf16.gmra.mxu0 %v10965
      %v13932 = vpop.f32.mrf.mxu0
      %v13933 = vadd.f32 %v13910, %v13932
      %v13934 = vpop.f32.mrf.mxu0
      %v13935 = vadd.f32 %v13912, %v13934
      %13936 = vmatmul.bf16.gmra.mxu0 %v10970
      %v13937 = vpop.f32.mrf.mxu0
      %v13938 = vadd.f32 %v13915, %v13937
      %v13939 = vpop.f32.mrf.mxu0
      %13940 = vdwg.mxu0
      %13941 = vmatpush.bf16.msra.mxu0 %v13850
      %13942 = vmatpush.bf16.msra.mxu0 %v13849
      %13943 = vmatpush.bf16.msra.mxu0 %v13848
      %13944 = vmatpush.bf16.msra.mxu0 %v13847
      %13945 = vmatpush.bf16.msra.mxu0 %v13846
      %13946 = vmatpush.bf16.msra.mxu0 %v13845
      %13947 = vmatpush.bf16.msra.mxu0 %v13844
      %13948 = vmatpush.bf16.msra.mxu0 %v13843
      %13949 = vmatmul.bf16.gmra.mxu0 %v10961
      %v13950 = vpop.f32.mrf.mxu0
      %v13951 = vadd.f32 %v13928, %v13950
      %v13952 = vpop.f32.mrf.mxu0
      %v13953 = vadd.f32 %v13930, %v13952
      %13954 = vmatmul.bf16.gmra.mxu0 %v10966
      %v13955 = vpop.f32.mrf.mxu0
      %v13956 = vadd.f32 %v13933, %v13955
      %v13957 = vpop.f32.mrf.mxu0
      %v13958 = vadd.f32 %v13935, %v13957
      %13959 = vmatmul.bf16.gmra.mxu0 %v10971
      %v13960 = vpop.f32.mrf.mxu0
      %v13961 = vadd.f32 %v13938, %v13960
      %v13962 = vpop.f32.mrf.mxu0
      %13963 = vdwg.mxu0
      %13964 = vmatpush.bf16.msra.mxu0 %v13858
      %13965 = vmatpush.bf16.msra.mxu0 %v13857
      %13966 = vmatpush.bf16.msra.mxu0 %v13856
      %13967 = vmatpush.bf16.msra.mxu0 %v13855
      %13968 = vmatpush.bf16.msra.mxu0 %v13854
      %13969 = vmatpush.bf16.msra.mxu0 %v13853
      %13970 = vmatpush.bf16.msra.mxu0 %v13852
      %13971 = vmatpush.bf16.msra.mxu0 %v13851
      %13972 = vmatmul.bf16.gmra.mxu0 %v10962
      %v13973 = vpop.f32.mrf.mxu0
      %v13974 = vadd.f32 %v13951, %v13973
      %v13975 = vpop.f32.mrf.mxu0
      %v13976 = vadd.f32 %v13953, %v13975
      %13977 = vmatmul.bf16.gmra.mxu0 %v10967
      %v13978 = vpop.f32.mrf.mxu0
      %v13979 = vadd.f32 %v13956, %v13978
      %v13980 = vpop.f32.mrf.mxu0
      %v13981 = vadd.f32 %v13958, %v13980
      %13982 = vmatmul.bf16.gmra.mxu0 %v10972
      %v13983 = vpop.f32.mrf.mxu0
      %v13984 = vadd.f32 %v13961, %v13983
      %v13985 = vpop.f32.mrf.mxu0
      %13986 = vdwg.mxu0
      %13987 = vmatpush.bf16.msra.mxu0 0
      %13988 = vmatpush.bf16.msra.mxu0 0
      %13989 = vmatpush.bf16.msra.mxu0 0
      %13990 = vmatpush.bf16.msra.mxu0 0
      %13991 = vmatpush.bf16.msra.mxu0 0
      %13992 = vmatpush.bf16.msra.mxu0 0
      %13993 = vmatpush.bf16.msra.mxu0 %v13860
      %13994 = vmatpush.bf16.msra.mxu0 %v13859
      %13995 = vmatmul.bf16.gmra.mxu0 %v11248
      %v13996 = vpop.f32.mrf.mxu0
      %v13997 = vadd.f32 %v13974, %v13996
      %v13998 = vpop.f32.mrf.mxu0
      %v13999 = vadd.f32 %v13976, %v13998
      %14000 = vmatmul.bf16.gmra.mxu0 %v11251
      %v14001 = vpop.f32.mrf.mxu0
      %v14002 = vadd.f32 %v13979, %v14001
      %v14003 = vpop.f32.mrf.mxu0
      %v14004 = vadd.f32 %v13981, %v14003
      %14005 = vmatmul.bf16.gmra.mxu0 %v11254
      %v14006 = vpop.f32.mrf.mxu0
      %v14007 = vadd.f32 %v13984, %v14006
      %v14008 = vpop.f32.mrf.mxu0
      %14009 = vdwg.mxu0
      %s14010 = scalar_lea.vmem %s10, 192
      %v14011 = vld [vmem:[%s14010] sm:$0xff]
      %v14012 = vld [vmem:[%s14010 + $0x8] sm:$0xff]
      %v14013 = vld [vmem:[%s14010 + $0x10] sm:$0xff]
      %v14014 = vld [vmem:[%s14010 + $0x18] sm:$0xf]
      %v14016 = vsel %vm11768, %v14011, 0
      %v14019 = vsel %vm11768, %v14012, 0
      %v14022 = vsel %vm11768, %v14013, 0
      %v14025 = vsel %vm11768, %v14014, 0
      %v14028 = vsel %vm11781, %v14007, 0
      %14030 = vmatpush.msra.mxu0 0.0
      %14031 = vmatpush.msra.mxu0 0.0
      %14032 = vmatpush.msra.mxu0 0.0
      %14033 = vmatpush.msra.mxu0 0.0
      %14034 = vmatpush.msra.mxu0 0.0
      %14035 = vmatpush.msra.mxu0 0.0
      %14036 = vmatpush.msra.mxu0 0.0
      %14037 = vmatpush.msra.mxu0 0.0
      %14038 = vmatpush.msra.mxu0 0.0
      %14039 = vmatpush.msra.mxu0 0.0
      %14040 = vmatpush.msra.mxu0 0.0
      %14041 = vmatpush.msra.mxu0 %v14028
      %14042 = vmatpush.msra.mxu0 %v14004
      %14043 = vmatpush.msra.mxu0 %v14002
      %14044 = vmatpush.msra.mxu0 %v13999
      %14045 = vmatpush.msra.mxu0 %v13997
      %14046 = vmatmul.f32.gmra.mxu0 %v14016
      %v14047 = vpop.f32.mrf.mxu0
      %v14048 = vadd.f32 0.0, %v14047
      %14049 = vmatmul.f32.gmra.mxu0 %v14019
      %v14050 = vpop.f32.mrf.mxu0
      %v14051 = vadd.f32 0.0, %v14050
      %14052 = vmatmul.f32.gmra.mxu0 %v14022
      %v14053 = vpop.f32.mrf.mxu0
      %v14054 = vadd.f32 0.0, %v14053
      %14055 = vmatmul.f32.gmra.mxu0 %v14025
      %v14056 = vpop.f32.mrf.mxu0
      %v14057 = vadd.f32 0.0, %v14056
      %14058 = vdwg.mxu0
      %v14059 = vadd.f32 %v13618, %v14048
      %v14060 = vadd.f32 %v13619, %v14051
      %v14061 = vadd.f32 %v13620, %v14054
      %v14062 = vadd.f32 %v13621, %v14057
      %v14063 = vld [vmem:[%s11] sm:$0x1]
      %v14065 = vperm.slane %v14063, 0
      %v14067 = vadd.f32 %v14059, %v14065
      %v14068 = vadd.f32 %v14060, %v14065
      %v14069 = vadd.f32 %v14061, %v14065
      %v14070 = vadd.f32 %v14062, %v14065
      %vm14071 = vcmask 228352
      %14072 = vst.msk [vmem:[%s413] sm:$0xff] %vm14071, %v14067
      %14073 = vst.msk [vmem:[%s413 + $0x8] sm:$0xff] %vm14071, %v14068
      %14074 = vst.msk [vmem:[%s413 + $0x10] sm:$0xff] %vm14071, %v14069
      %vm14075 = vcmask 224256
      %14076 = vst.msk [vmem:[%s413 + $0x18] sm:$0xf] %vm14075, %v14070
      %p14077 = scmp.lt.s32.totalorder %s23, 1
      %s14078 = scalar_select %p14077, %s23, 1
      %s14079 = smul.addr %s14078, 4
      %s14080 = smul.addr %s14079, 8
      %s14081 = scalar_lea.vmem %s12, %s14080
      // Predicated region
      $region69: #{generator_forward.1} parent=67 // pred_check
        %p14082 = pneg %p298
      $region70: #{generator_forward.1} parent=67 // pred_check_branch
        %14084 = sbr.rel (%p14082) target = $region72
      $region71: #{generator_forward.1} parent=67 // pred_region
        _
      $region72: #{generator_forward.1} parent=67 // pred_fallthru
        _
    $region68: #{generator_forward.1} parent=5 // pred_fallthru
      _
    %p14085 = scmp.le.s32.totalorder 2, %s18
    // Predicated region
    $region73: #{generator_forward.1} parent=5 // pred_check
      %p14086 = pneg %p14085
    $region74: #{generator_forward.1} parent=5 // pred_check_branch
      %14088 = sbr.rel (%p14086) target = $region76
    $region75: #{generator_forward.1} parent=5 // pred_region
      %s14089 = ssub.s32 %s18, 2
      // Predicated region
      $region77: #{generator_forward.1} parent=75 // pred_check
        %p14090 = pneg %p304
      $region78: #{generator_forward.1} parent=75 // pred_check_branch
        %14092 = sbr.rel (%p14090) target = $region80
      $region79: #{generator_forward.1} parent=75 // pred_region
        %p14093 = scmp.lt.s32.totalorder %s24, 1
        %s14094 = scalar_select %p14093, %s24, 1
        %s14095 = smul.addr %s14094, 4
        %s14096 = smul.addr %s14095, 8
        %s14097 = scalar_lea.vmem %s12, %s14096
      $region80: #{generator_forward.1} parent=75 // pred_fallthru
        _
    $region76: #{generator_forward.1} parent=5 // pred_fallthru
      _
  $region6: #{generator_forward.1} parent=0 // loop_footer
    %s22 = sadd.s32 1, %s18
  $region7: #{generator_forward.1} parent=0 // loop_footer_branch
    %17 = sbr.rel target = $region3
  $region8: #{generator_forward.1} parent=0 // loop_exit
    _

</llo_original>
